<compile_context>
chip_gen: v7x
topology: tpu7x:2x2x1
jax: 0.10.0
libtpu: 0.0.40
codegen_flags: <defaults>
</compile_context>

<pallas_src>
import jax
import jax.numpy as jnp
from jax import lax
from jax.experimental import pallas as pl
from jax.experimental.pallas import tpu as pltpu

EPS = 1e-5  # nn.InstanceNorm2d default eps


def _instance_norm(h, inv_hw):
    # h: (N, H*W, Cp) -- per (sample, channel) norm over spatial, biased variance.
    # single pass over h: sum and sum-of-squares, var = E[x^2] - mean^2
    s1 = jnp.sum(h, axis=1, keepdims=True)
    s2 = jnp.sum(h * h, axis=1, keepdims=True)
    mean = s1 * inv_hw
    var = s2 * inv_hw - mean * mean
    return (h - mean) * lax.rsqrt(var + EPS)


def _conv3x3(src_ref, w_ref, b_ref, N, H, W, Cp):
    # src_ref: (N, H+2, W+2, Cp) zero-padded activations (VMEM ref)
    # w_ref:   (9*Cp, Cp) im2col weight matrix, rows ordered (dy, dx, cin)
    # one MXU matmul per conv: (N*H*W, 9*Cp) x (9*Cp, Cp)
    M = N * H * W
    cols = []
    for dy in range(3):
        for dx in range(3):
            tap = src_ref[:, dy:dy + H, dx:dx + W, :]      # (N, H, W, Cp) ref-slice load
            cols.append(tap.reshape(M, Cp))                # minor dim unchanged -> free
    patches = jnp.concatenate(cols, axis=1)                # (M, 9*Cp) im2col
    out = jnp.dot(patches, w_ref[...], preferred_element_type=jnp.float32)
    return out + b_ref[...]                                # (M, Cp) + (1, Cp)


def resnet_block_kernel(xpad_ref, w1_ref, b1_ref, w2_ref, b2_ref, o_ref, hpad_ref):
    # xpad_ref: (N, H+2, W+2, Cp) padded NHWC input (channels zero-padded to Cp)
    # o_ref:    (Cp, N*H*W)       lane-dense output slab
    # hpad_ref: (N, H+2, W+2, Cp) VMEM scratch for the padded hidden activation
    N = xpad_ref.shape[0]
    H = xpad_ref.shape[1] - 2
    W = xpad_ref.shape[2] - 2
    Cp = xpad_ref.shape[3]
    HW = H * W
    M = N * HW
    inv_hw = jnp.float32(1.0 / HW)

    # ---- conv1 -> instance-norm -> relu ----
    h = _conv3x3(xpad_ref, w1_ref, b1_ref, N, H, W, Cp)
    h = _instance_norm(h.reshape(N, HW, Cp), inv_hw)
    h = jnp.maximum(h, 0.0)

    # ---- pad hidden activation: zero ONLY the 1-wide border, store interior ----
    zrow = jnp.zeros((N, 1, W + 2, Cp), jnp.float32)
    zcol = jnp.zeros((N, H + 2, 1, Cp), jnp.float32)
    hpad_ref[:, 0:1, :, :] = zrow
    hpad_ref[:, H + 1:H + 2, :, :] = zrow
    hpad_ref[:, :, 0:1, :] = zcol
    hpad_ref[:, :, W + 1:W + 2, :] = zcol
    hpad_ref[:, 1:H + 1, 1:W + 1, :] = h.reshape(N, H, W, Cp)

    # ---- conv2 -> instance-norm ----
    h2 = _conv3x3(hpad_ref, w2_ref, b2_ref, N, H, W, Cp)
    h2 = _instance_norm(h2.reshape(N, HW, Cp), inv_hw)

    # ---- residual add (sliced straight from the input ref), lane-dense store ----
    x_in = xpad_ref[:, 1:H + 1, 1:W + 1, :].reshape(N, HW, Cp)
    res = (h2 + x_in).reshape(M, Cp)
    # one small 2-D f32 transpose so the HBM write is (Cp, N*H*W): last dim 512
    o_ref[...] = jnp.transpose(res, (1, 0)).astype(o_ref.dtype)


def resnet_block(x_nchw, w1, b1, w2, b2):
    """x_nchw: (N, C, H, W); w*: (C, C, 3, 3) PyTorch OIHW; b*: (C,)."""
    N, C, H, W = x_nchw.shape
    Cp = max(8, ((C + 7) // 8) * 8)        # pad channels to a sublane multiple
    M = N * H * W

    # --- layout plumbing (outside the kernel): NCHW -> padded NHWC, pack weights ---
    x_nhwc = jnp.transpose(x_nchw, (0, 2, 3, 1)).astype(jnp.float32)
    xpad = jnp.pad(x_nhwc, ((0, 0), (1, 1), (1, 1), (0, Cp - C)))

    def pack_w(w):
        wk = jnp.transpose(w, (2, 3, 1, 0)).astype(jnp.float32)       # (3,3,Cin,Cout)
        wk = jnp.pad(wk, ((0, 0), (0, 0), (0, Cp - C), (0, Cp - C)))  # (3,3,Cp,Cp)
        return wk.reshape(9 * Cp, Cp)                                 # rows = (dy,dx,cin)

    def pack_b(b):
        return jnp.pad(b.astype(jnp.float32), (0, Cp - C)).reshape(1, Cp)

    # Whole batch fits easily in VMEM at these sizes -> single grid step.
    # TODO(synk): for production sizes (conv_dim 128-256, H=W>=64) tile rows/batch
    # on a "parallel" grid axis and re-derive block sizes for v7x's 64 MiB VMEM.
    out_cm = pl.pallas_call(
        resnet_block_kernel,
        out_shape=jax.ShapeDtypeStruct((Cp, M), jnp.float32),
        grid=(1,),
        in_specs=[
            pl.BlockSpec((N, H + 2, W + 2, Cp), lambda i: (0, 0, 0, 0)),
            pl.BlockSpec((9 * Cp, Cp), lambda i: (0, 0)),
            pl.BlockSpec((1, Cp), lambda i: (0, 0)),
            pl.BlockSpec((9 * Cp, Cp), lambda i: (0, 0)),
            pl.BlockSpec((1, Cp), lambda i: (0, 0)),
        ],
        out_specs=pl.BlockSpec((Cp, M), lambda i: (0, 0)),
        scratch_shapes=[pltpu.VMEM((N, H + 2, W + 2, Cp), jnp.float32)],
        compiler_params=pltpu.CompilerParams(
            dimension_semantics=("parallel",)),
    )(xpad, pack_w(w1), pack_b(b1), pack_w(w2), pack_b(b2))

    # lane-dense (Cp, N*H*W) slab -> (N, C, H, W): slice padded channels + reshape.
    return out_cm[:C].reshape(C, N, H, W).transpose(1, 0, 2, 3)


def resnet_block_ref(x, w1, b1, w2, b2):
    """Pure-JAX reference matching the PyTorch forward (NCHW)."""
    def conv(h, w, b):
        y = lax.conv_general_dilated(
            h, w, window_strides=(1, 1), padding="SAME",
            dimension_numbers=("NCHW", "OIHW", "NCHW"))
        return y + b[None, :, None, None]

    def inorm(h):
        m = h.mean(axis=(2, 3), keepdims=True)
        v = ((h - m) ** 2).mean(axis=(2, 3), keepdims=True)
        return (h - m) / jnp.sqrt(v + EPS)

    h = jax.nn.relu(inorm(conv(x, w1, b1)))
    return inorm(conv(h, w2, b2)) + x


if __name__ == "__main__":
    N, C, H, W = 2, 4, 16, 16          # conv_dim = 4

    key = jax.random.PRNGKey(0)
    kx, k1, kb1, k2, kb2 = jax.random.split(key, 5)
    x = jax.random.normal(kx, (N, C, H, W), dtype=jnp.float32)
    # deterministic synthetic parameters (PyTorch Conv2d shapes: OIHW + bias)
    w1 = 0.1 * jax.random.normal(k1, (C, C, 3, 3), dtype=jnp.float32)
    b1 = 0.1 * jax.random.normal(kb1, (C,), dtype=jnp.float32)
    w2 = 0.1 * jax.random.normal(k2, (C, C, 3, 3), dtype=jnp.float32)
    b2 = 0.1 * jax.random.normal(kb2, (C,), dtype=jnp.float32)

    out = jax.block_until_ready(resnet_block(x, w1, b1, w2, b2))
    ref = jax.block_until_ready(resnet_block_ref(x, w1, b1, w2, b2))

    assert out.shape == (N, C, H, W)
    assert jnp.allclose(out, ref, atol=1e-4, rtol=1e-4), float(jnp.max(jnp.abs(out - ref)))
    print("KERNEL_OK")
</pallas_src>

<mosaic_0001>
module attributes {stable_mosaic.version = 11 : i64} {
  func.func @resnet_block_kernel(%arg0: i32, %arg1: memref<2x18x18x8xf32, #tpu.memory_space<vmem>>, %arg2: memref<72x8xf32, #tpu.memory_space<vmem>>, %arg3: memref<1x8xf32, #tpu.memory_space<vmem>>, %arg4: memref<72x8xf32, #tpu.memory_space<vmem>>, %arg5: memref<1x8xf32, #tpu.memory_space<vmem>>, %arg6: memref<8x512xf32, #tpu.memory_space<vmem>>, %arg7: memref<2x18x18x8xf32, #tpu.memory_space<vmem>>) attributes {dimension_semantics = [#tpu.dimension_semantics<parallel>], iteration_bounds = array<i64: 1>, scalar_prefetch = 0 : i64, scratch_operands = 1 : i64, tpu.core_type = #tpu.core_type<tc>, window_params = [{pipeline_mode = #tpu.pipeline_mode<synchronous>, transform_indices = @transform_0, window_bounds = array<i64: 2, 18, 18, 8>}, {pipeline_mode = #tpu.pipeline_mode<synchronous>, transform_indices = @transform_1, window_bounds = array<i64: 72, 8>}, {pipeline_mode = #tpu.pipeline_mode<synchronous>, transform_indices = @transform_2, window_bounds = array<i64: 1, 8>}, {pipeline_mode = #tpu.pipeline_mode<synchronous>, transform_indices = @transform_3, window_bounds = array<i64: 72, 8>}, {pipeline_mode = #tpu.pipeline_mode<synchronous>, transform_indices = @transform_4, window_bounds = array<i64: 1, 8>}, {pipeline_mode = #tpu.pipeline_mode<synchronous>, transform_indices = @transform_5, window_bounds = array<i64: 8, 512>}]} {
    %c0 = arith.constant 0 : index
    %c0_0 = arith.constant 0 : index
    %c0_1 = arith.constant 0 : index
    %c0_2 = arith.constant 0 : index
    %0 = vector.load %arg1[%c0, %c0_0, %c0_1, %c0_2] : memref<2x18x18x8xf32, #tpu.memory_space<vmem>>, vector<2x16x16x8xf32>
    %1 = vector.shape_cast %0 : vector<2x16x16x8xf32> to vector<512x8xf32>
    %c0_3 = arith.constant 0 : index
    %c0_4 = arith.constant 0 : index
    %c1 = arith.constant 1 : index
    %c0_5 = arith.constant 0 : index
    %2 = vector.load %arg1[%c0_3, %c0_4, %c1, %c0_5] : memref<2x18x18x8xf32, #tpu.memory_space<vmem>>, vector<2x16x16x8xf32>
    %3 = vector.shape_cast %2 : vector<2x16x16x8xf32> to vector<512x8xf32>
    %c0_6 = arith.constant 0 : index
    %c0_7 = arith.constant 0 : index
    %c2 = arith.constant 2 : index
    %c0_8 = arith.constant 0 : index
    %4 = vector.load %arg1[%c0_6, %c0_7, %c2, %c0_8] : memref<2x18x18x8xf32, #tpu.memory_space<vmem>>, vector<2x16x16x8xf32>
    %5 = vector.shape_cast %4 : vector<2x16x16x8xf32> to vector<512x8xf32>
    %c0_9 = arith.constant 0 : index
    %c1_10 = arith.constant 1 : index
    %c0_11 = arith.constant 0 : index
    %c0_12 = arith.constant 0 : index
    %6 = vector.load %arg1[%c0_9, %c1_10, %c0_11, %c0_12] : memref<2x18x18x8xf32, #tpu.memory_space<vmem>>, vector<2x16x16x8xf32>
    %7 = vector.shape_cast %6 : vector<2x16x16x8xf32> to vector<512x8xf32>
    %c0_13 = arith.constant 0 : index
    %c1_14 = arith.constant 1 : index
    %c1_15 = arith.constant 1 : index
    %c0_16 = arith.constant 0 : index
    %8 = vector.load %arg1[%c0_13, %c1_14, %c1_15, %c0_16] : memref<2x18x18x8xf32, #tpu.memory_space<vmem>>, vector<2x16x16x8xf32>
    %9 = vector.shape_cast %8 : vector<2x16x16x8xf32> to vector<512x8xf32>
    %c0_17 = arith.constant 0 : index
    %c1_18 = arith.constant 1 : index
    %c2_19 = arith.constant 2 : index
    %c0_20 = arith.constant 0 : index
    %10 = vector.load %arg1[%c0_17, %c1_18, %c2_19, %c0_20] : memref<2x18x18x8xf32, #tpu.memory_space<vmem>>, vector<2x16x16x8xf32>
    %11 = vector.shape_cast %10 : vector<2x16x16x8xf32> to vector<512x8xf32>
    %c0_21 = arith.constant 0 : index
    %c2_22 = arith.constant 2 : index
    %c0_23 = arith.constant 0 : index
    %c0_24 = arith.constant 0 : index
    %12 = vector.load %arg1[%c0_21, %c2_22, %c0_23, %c0_24] : memref<2x18x18x8xf32, #tpu.memory_space<vmem>>, vector<2x16x16x8xf32>
    %13 = vector.shape_cast %12 : vector<2x16x16x8xf32> to vector<512x8xf32>
    %c0_25 = arith.constant 0 : index
    %c2_26 = arith.constant 2 : index
    %c1_27 = arith.constant 1 : index
    %c0_28 = arith.constant 0 : index
    %14 = vector.load %arg1[%c0_25, %c2_26, %c1_27, %c0_28] : memref<2x18x18x8xf32, #tpu.memory_space<vmem>>, vector<2x16x16x8xf32>
    %15 = vector.shape_cast %14 : vector<2x16x16x8xf32> to vector<512x8xf32>
    %c0_29 = arith.constant 0 : index
    %c2_30 = arith.constant 2 : index
    %c2_31 = arith.constant 2 : index
    %c0_32 = arith.constant 0 : index
    %16 = vector.load %arg1[%c0_29, %c2_30, %c2_31, %c0_32] : memref<2x18x18x8xf32, #tpu.memory_space<vmem>>, vector<2x16x16x8xf32>
    %17 = vector.shape_cast %16 : vector<2x16x16x8xf32> to vector<512x8xf32>
    %18 = tpu.concatenate %1, %3, %5, %7, %9, %11, %13, %15, %17 in 1 : vector<512x8xf32>, vector<512x8xf32>, vector<512x8xf32>, vector<512x8xf32>, vector<512x8xf32>, vector<512x8xf32>, vector<512x8xf32>, vector<512x8xf32>, vector<512x8xf32> -> vector<512x72xf32>
    %c0_33 = arith.constant 0 : index
    %c0_34 = arith.constant 0 : index
    %19 = vector.load %arg2[%c0_33, %c0_34] : memref<72x8xf32, #tpu.memory_space<vmem>>, vector<72x8xf32>
    %cst = arith.constant dense<0.000000e+00> : vector<512x8xf32>
    %20 = tpu.matmul %18, %19, %cst {dimension_numbers = #tpu.dot_dimension_numbers<[1], [0], [0], [1], [0, 0, 1, 1], [], []>} : vector<512x72xf32>, vector<72x8xf32>, vector<512x8xf32> -> vector<512x8xf32>
    %c0_35 = arith.constant 0 : index
    %c0_36 = arith.constant 0 : index
    %21 = vector.load %arg3[%c0_35, %c0_36] : memref<1x8xf32, #tpu.memory_space<vmem>>, vector<1x8xf32>
    %22 = vector.broadcast %21 : vector<1x8xf32> to vector<512x8xf32>
    %23 = arith.addf %20, %22 : vector<512x8xf32>
    %24 = vector.shape_cast %23 : vector<512x8xf32> to vector<2x256x8xf32>
    %cst_37 = arith.constant dense<0.000000e+00> : vector<2x8xf32>
    %25 = vector.multi_reduction <add>, %24, %cst_37 [1] : vector<2x256x8xf32> to vector<2x8xf32>
    %26 = vector.shape_cast %25 : vector<2x8xf32> to vector<2x1x8xf32>
    %27 = arith.mulf %24, %24 : vector<2x256x8xf32>
    %cst_38 = arith.constant dense<0.000000e+00> : vector<2x8xf32>
    %28 = vector.multi_reduction <add>, %27, %cst_38 [1] : vector<2x256x8xf32> to vector<2x8xf32>
    %29 = vector.shape_cast %28 : vector<2x8xf32> to vector<2x1x8xf32>
    %cst_39 = arith.constant 3.906250e-03 : f32
    %30 = vector.broadcast %cst_39 : f32 to vector<2x1x8xf32>
    %31 = arith.mulf %26, %30 : vector<2x1x8xf32>
    %cst_40 = arith.constant 3.906250e-03 : f32
    %32 = vector.broadcast %cst_40 : f32 to vector<2x1x8xf32>
    %33 = arith.mulf %29, %32 : vector<2x1x8xf32>
    %34 = arith.mulf %31, %31 : vector<2x1x8xf32>
    %35 = arith.subf %33, %34 : vector<2x1x8xf32>
    %36 = vector.broadcast %31 : vector<2x1x8xf32> to vector<2x256x8xf32>
    %37 = arith.subf %24, %36 : vector<2x256x8xf32>
    %cst_41 = arith.constant 9.99999974E-6 : f32
    %38 = vector.broadcast %cst_41 : f32 to vector<2x1x8xf32>
    %39 = arith.addf %35, %38 : vector<2x1x8xf32>
    %40 = math.rsqrt %39 : vector<2x1x8xf32>
    %41 = vector.broadcast %40 : vector<2x1x8xf32> to vector<2x256x8xf32>
    %42 = arith.mulf %37, %41 : vector<2x256x8xf32>
    %cst_42 = arith.constant 0.000000e+00 : f32
    %43 = vector.broadcast %cst_42 : f32 to vector<2x256x8xf32>
    %44 = arith.maximumf %42, %43 : vector<2x256x8xf32>
    %cst_43 = arith.constant 0.000000e+00 : f32
    %45 = vector.broadcast %cst_43 : f32 to vector<2x1x18x8xf32>
    %cst_44 = arith.constant 0.000000e+00 : f32
    %46 = vector.broadcast %cst_44 : f32 to vector<2x18x1x8xf32>
    %c0_45 = arith.constant 0 : index
    %c0_46 = arith.constant 0 : index
    %c0_47 = arith.constant 0 : index
    %c0_48 = arith.constant 0 : index
    %47 = vector.load %arg7[%c0_45, %c0_46, %c0_47, %c0_48] : memref<2x18x18x8xf32, #tpu.memory_space<vmem>>, vector<2x1x18x8xf32>
    tpu.vector_store %arg7[%c0_45, %c0_46, %c0_47, %c0_48], %45 {strides = array<i32>} : memref<2x18x18x8xf32, #tpu.memory_space<vmem>>, vector<2x1x18x8xf32>,
    %c0_49 = arith.constant 0 : index
    %c17 = arith.constant 17 : index
    %c0_50 = arith.constant 0 : index
    %c0_51 = arith.constant 0 : index
    %48 = vector.load %arg7[%c0_49, %c17, %c0_50, %c0_51] : memref<2x18x18x8xf32, #tpu.memory_space<vmem>>, vector<2x1x18x8xf32>
    tpu.vector_store %arg7[%c0_49, %c17, %c0_50, %c0_51], %45 {strides = array<i32>} : memref<2x18x18x8xf32, #tpu.memory_space<vmem>>, vector<2x1x18x8xf32>,
    %c0_52 = arith.constant 0 : index
    %c0_53 = arith.constant 0 : index
    %c0_54 = arith.constant 0 : index
    %c0_55 = arith.constant 0 : index
    %49 = vector.load %arg7[%c0_52, %c0_53, %c0_54, %c0_55] : memref<2x18x18x8xf32, #tpu.memory_space<vmem>>, vector<2x18x1x8xf32>
    tpu.vector_store %arg7[%c0_52, %c0_53, %c0_54, %c0_55], %46 {strides = array<i32>} : memref<2x18x18x8xf32, #tpu.memory_space<vmem>>, vector<2x18x1x8xf32>,
    %c0_56 = arith.constant 0 : index
    %c0_57 = arith.constant 0 : index
    %c17_58 = arith.constant 17 : index
    %c0_59 = arith.constant 0 : index
    %50 = vector.load %arg7[%c0_56, %c0_57, %c17_58, %c0_59] : memref<2x18x18x8xf32, #tpu.memory_space<vmem>>, vector<2x18x1x8xf32>
    tpu.vector_store %arg7[%c0_56, %c0_57, %c17_58, %c0_59], %46 {strides = array<i32>} : memref<2x18x18x8xf32, #tpu.memory_space<vmem>>, vector<2x18x1x8xf32>,
    %51 = vector.shape_cast %44 : vector<2x256x8xf32> to vector<2x16x16x8xf32>
    %c0_60 = arith.constant 0 : index
    %c1_61 = arith.constant 1 : index
    %c1_62 = arith.constant 1 : index
    %c0_63 = arith.constant 0 : index
    %52 = vector.load %arg7[%c0_60, %c1_61, %c1_62, %c0_63] : memref<2x18x18x8xf32, #tpu.memory_space<vmem>>, vector<2x16x16x8xf32>
    tpu.vector_store %arg7[%c0_60, %c1_61, %c1_62, %c0_63], %51 {strides = array<i32>} : memref<2x18x18x8xf32, #tpu.memory_space<vmem>>, vector<2x16x16x8xf32>,
    %c0_64 = arith.constant 0 : index
    %c0_65 = arith.constant 0 : index
    %c0_66 = arith.constant 0 : index
    %c0_67 = arith.constant 0 : index
    %53 = vector.load %arg7[%c0_64, %c0_65, %c0_66, %c0_67] : memref<2x18x18x8xf32, #tpu.memory_space<vmem>>, vector<2x16x16x8xf32>
    %54 = vector.shape_cast %53 : vector<2x16x16x8xf32> to vector<512x8xf32>
    %c0_68 = arith.constant 0 : index
    %c0_69 = arith.constant 0 : index
    %c1_70 = arith.constant 1 : index
    %c0_71 = arith.constant 0 : index
    %55 = vector.load %arg7[%c0_68, %c0_69, %c1_70, %c0_71] : memref<2x18x18x8xf32, #tpu.memory_space<vmem>>, vector<2x16x16x8xf32>
    %56 = vector.shape_cast %55 : vector<2x16x16x8xf32> to vector<512x8xf32>
    %c0_72 = arith.constant 0 : index
    %c0_73 = arith.constant 0 : index
    %c2_74 = arith.constant 2 : index
    %c0_75 = arith.constant 0 : index
    %57 = vector.load %arg7[%c0_72, %c0_73, %c2_74, %c0_75] : memref<2x18x18x8xf32, #tpu.memory_space<vmem>>, vector<2x16x16x8xf32>
    %58 = vector.shape_cast %57 : vector<2x16x16x8xf32> to vector<512x8xf32>
    %c0_76 = arith.constant 0 : index
    %c1_77 = arith.constant 1 : index
    %c0_78 = arith.constant 0 : index
    %c0_79 = arith.constant 0 : index
    %59 = vector.load %arg7[%c0_76, %c1_77, %c0_78, %c0_79] : memref<2x18x18x8xf32, #tpu.memory_space<vmem>>, vector<2x16x16x8xf32>
    %60 = vector.shape_cast %59 : vector<2x16x16x8xf32> to vector<512x8xf32>
    %c0_80 = arith.constant 0 : index
    %c1_81 = arith.constant 1 : index
    %c1_82 = arith.constant 1 : index
    %c0_83 = arith.constant 0 : index
    %61 = vector.load %arg7[%c0_80, %c1_81, %c1_82, %c0_83] : memref<2x18x18x8xf32, #tpu.memory_space<vmem>>, vector<2x16x16x8xf32>
    %62 = vector.shape_cast %61 : vector<2x16x16x8xf32> to vector<512x8xf32>
    %c0_84 = arith.constant 0 : index
    %c1_85 = arith.constant 1 : index
    %c2_86 = arith.constant 2 : index
    %c0_87 = arith.constant 0 : index
    %63 = vector.load %arg7[%c0_84, %c1_85, %c2_86, %c0_87] : memref<2x18x18x8xf32, #tpu.memory_space<vmem>>, vector<2x16x16x8xf32>
    %64 = vector.shape_cast %63 : vector<2x16x16x8xf32> to vector<512x8xf32>
    %c0_88 = arith.constant 0 : index
    %c2_89 = arith.constant 2 : index
    %c0_90 = arith.constant 0 : index
    %c0_91 = arith.constant 0 : index
    %65 = vector.load %arg7[%c0_88, %c2_89, %c0_90, %c0_91] : memref<2x18x18x8xf32, #tpu.memory_space<vmem>>, vector<2x16x16x8xf32>
    %66 = vector.shape_cast %65 : vector<2x16x16x8xf32> to vector<512x8xf32>
    %c0_92 = arith.constant 0 : index
    %c2_93 = arith.constant 2 : index
    %c1_94 = arith.constant 1 : index
    %c0_95 = arith.constant 0 : index
    %67 = vector.load %arg7[%c0_92, %c2_93, %c1_94, %c0_95] : memref<2x18x18x8xf32, #tpu.memory_space<vmem>>, vector<2x16x16x8xf32>
    %68 = vector.shape_cast %67 : vector<2x16x16x8xf32> to vector<512x8xf32>
    %c0_96 = arith.constant 0 : index
    %c2_97 = arith.constant 2 : index
    %c2_98 = arith.constant 2 : index
    %c0_99 = arith.constant 0 : index
    %69 = vector.load %arg7[%c0_96, %c2_97, %c2_98, %c0_99] : memref<2x18x18x8xf32, #tpu.memory_space<vmem>>, vector<2x16x16x8xf32>
    %70 = vector.shape_cast %69 : vector<2x16x16x8xf32> to vector<512x8xf32>
    %71 = tpu.concatenate %54, %56, %58, %60, %62, %64, %66, %68, %70 in 1 : vector<512x8xf32>, vector<512x8xf32>, vector<512x8xf32>, vector<512x8xf32>, vector<512x8xf32>, vector<512x8xf32>, vector<512x8xf32>, vector<512x8xf32>, vector<512x8xf32> -> vector<512x72xf32>
    %c0_100 = arith.constant 0 : index
    %c0_101 = arith.constant 0 : index
    %72 = vector.load %arg4[%c0_100, %c0_101] : memref<72x8xf32, #tpu.memory_space<vmem>>, vector<72x8xf32>
    %cst_102 = arith.constant dense<0.000000e+00> : vector<512x8xf32>
    %73 = tpu.matmul %71, %72, %cst_102 {dimension_numbers = #tpu.dot_dimension_numbers<[1], [0], [0], [1], [0, 0, 1, 1], [], []>} : vector<512x72xf32>, vector<72x8xf32>, vector<512x8xf32> -> vector<512x8xf32>
    %c0_103 = arith.constant 0 : index
    %c0_104 = arith.constant 0 : index
    %74 = vector.load %arg5[%c0_103, %c0_104] : memref<1x8xf32, #tpu.memory_space<vmem>>, vector<1x8xf32>
    %75 = vector.broadcast %74 : vector<1x8xf32> to vector<512x8xf32>
    %76 = arith.addf %73, %75 : vector<512x8xf32>
    %77 = vector.shape_cast %76 : vector<512x8xf32> to vector<2x256x8xf32>
    %cst_105 = arith.constant dense<0.000000e+00> : vector<2x8xf32>
    %78 = vector.multi_reduction <add>, %77, %cst_105 [1] : vector<2x256x8xf32> to vector<2x8xf32>
    %79 = vector.shape_cast %78 : vector<2x8xf32> to vector<2x1x8xf32>
    %80 = arith.mulf %77, %77 : vector<2x256x8xf32>
    %cst_106 = arith.constant dense<0.000000e+00> : vector<2x8xf32>
    %81 = vector.multi_reduction <add>, %80, %cst_106 [1] : vector<2x256x8xf32> to vector<2x8xf32>
    %82 = vector.shape_cast %81 : vector<2x8xf32> to vector<2x1x8xf32>
    %cst_107 = arith.constant 3.906250e-03 : f32
    %83 = vector.broadcast %cst_107 : f32 to vector<2x1x8xf32>
    %84 = arith.mulf %79, %83 : vector<2x1x8xf32>
    %cst_108 = arith.constant 3.906250e-03 : f32
    %85 = vector.broadcast %cst_108 : f32 to vector<2x1x8xf32>
    %86 = arith.mulf %82, %85 : vector<2x1x8xf32>
    %87 = arith.mulf %84, %84 : vector<2x1x8xf32>
    %88 = arith.subf %86, %87 : vector<2x1x8xf32>
    %89 = vector.broadcast %84 : vector<2x1x8xf32> to vector<2x256x8xf32>
    %90 = arith.subf %77, %89 : vector<2x256x8xf32>
    %cst_109 = arith.constant 9.99999974E-6 : f32
    %91 = vector.broadcast %cst_109 : f32 to vector<2x1x8xf32>
    %92 = arith.addf %88, %91 : vector<2x1x8xf32>
    %93 = math.rsqrt %92 : vector<2x1x8xf32>
    %94 = vector.broadcast %93 : vector<2x1x8xf32> to vector<2x256x8xf32>
    %95 = arith.mulf %90, %94 : vector<2x256x8xf32>
    %c0_110 = arith.constant 0 : index
    %c1_111 = arith.constant 1 : index
    %c1_112 = arith.constant 1 : index
    %c0_113 = arith.constant 0 : index
    %96 = vector.load %arg1[%c0_110, %c1_111, %c1_112, %c0_113] : memref<2x18x18x8xf32, #tpu.memory_space<vmem>>, vector<2x16x16x8xf32>
    %97 = vector.shape_cast %96 : vector<2x16x16x8xf32> to vector<2x256x8xf32>
    %98 = arith.addf %95, %97 : vector<2x256x8xf32>
    %99 = vector.shape_cast %98 : vector<2x256x8xf32> to vector<512x8xf32>
    %100 = tpu.transpose %99, [1, 0] : vector<512x8xf32> -> vector<8x512xf32>
    %c0_114 = arith.constant 0 : index
    %c0_115 = arith.constant 0 : index
    %101 = vector.load %arg6[%c0_114, %c0_115] : memref<8x512xf32, #tpu.memory_space<vmem>>, vector<8x512xf32>
    tpu.vector_store %arg6[%c0_114, %c0_115], %100 {strides = array<i32>} : memref<8x512xf32, #tpu.memory_space<vmem>>, vector<8x512xf32>,
    return
  }
  func.func @transform_0(%arg0: i32) -> (i32, i32, i32, i32) {
    %c0_i32 = arith.constant 0 : i32
    %c0_i32_0 = arith.constant 0 : i32
    %c0_i32_1 = arith.constant 0 : i32
    %c0_i32_2 = arith.constant 0 : i32
    %c0_i32_3 = arith.constant 0 : i32
    return %c0_i32, %c0_i32_0, %c0_i32_1, %c0_i32_2 : i32, i32, i32, i32
  }
  func.func @transform_1(%arg0: i32) -> (i32, i32) {
    %c0_i32 = arith.constant 0 : i32
    %c0_i32_0 = arith.constant 0 : i32
    %c0_i32_1 = arith.constant 0 : i32
    return %c0_i32, %c0_i32_0 : i32, i32
  }
  func.func @transform_2(%arg0: i32) -> (i32, i32) {
    %c0_i32 = arith.constant 0 : i32
    %c0_i32_0 = arith.constant 0 : i32
    %c0_i32_1 = arith.constant 0 : i32
    return %c0_i32, %c0_i32_0 : i32, i32
  }
  func.func @transform_3(%arg0: i32) -> (i32, i32) {
    %c0_i32 = arith.constant 0 : i32
    %c0_i32_0 = arith.constant 0 : i32
    %c0_i32_1 = arith.constant 0 : i32
    return %c0_i32, %c0_i32_0 : i32, i32
  }
  func.func @transform_4(%arg0: i32) -> (i32, i32) {
    %c0_i32 = arith.constant 0 : i32
    %c0_i32_0 = arith.constant 0 : i32
    %c0_i32_1 = arith.constant 0 : i32
    return %c0_i32, %c0_i32_0 : i32, i32
  }
  func.func @transform_5(%arg0: i32) -> (i32, i32) {
    %c0_i32 = arith.constant 0 : i32
    %c0_i32_0 = arith.constant 0 : i32
    %c0_i32_1 = arith.constant 0 : i32
    return %c0_i32, %c0_i32_0 : i32, i32
  }
}

</mosaic_0001>

<llo_original>
// kernel: tpu_custom_call.1
$region0: #{tpu_custom_call.1}
  #allocation0 [shape = 'u32[]', space=smem, size = 0x4, offset = 0x4, fixed_abs, tag = 'smem constant byte address 0x4 - core index']
  #allocation1 [shape = 'u32[144,128]{1,0:T(1,128)}', space=vmem, size = 0x12000, scoped, tag = 'internal scratch']
  #allocation2 [shape = 'f32[2,18,18,8]{3,2,1,0:T(8,128)}', space=vmem, size = 0x6c000, scoped, tag = 'scratch operand']
  %s0 = inlined_call_operand.vmem [shape: f32[2,18,18,8], index: 0, kind: input, shape index: {}]
  %s1 = inlined_call_operand.vmem [shape: f32[72,8], index: 1, kind: input, shape index: {}]
  %s2 = inlined_call_operand.vmem [shape: f32[1,8], index: 2, kind: input, shape index: {}]
  %s3 = inlined_call_operand.vmem [shape: f32[72,8], index: 3, kind: input, shape index: {}]
  %s4 = inlined_call_operand.vmem [shape: f32[1,8], index: 4, kind: input, shape index: {}]
  %s5 = inlined_call_operand.hbm [shape: f32[8,512], index: 5, kind: output, shape index: {}]
  %s6 = sld [smem:[#allocation0]]
  $region30: #{tpu_custom_call.1} parent=0
    _
  %s8 = ssub.s32 1, %s6
  %s9 = scalar_select 0, %s8, %s6
  $region1: #{tpu_custom_call.1} parent=0
    #allocation3 [shape = 'u8[16384]{0}', space=vmem, size = 0x4000, scoped, tag = 'output window, operand 0, single buffered']
    #allocation4 [shape = 's32[1]{0}', space=sflag, size = 0x4, scoped, tag = 'scoped memory for tpu_custom_call.1']
    %10 = vsyncpa [#allocation4], 0
    // Predicated region
    $region2: #{tpu_custom_call.1} parent=1 // pred_check
      _
    $region3: #{tpu_custom_call.1} parent=1 // pred_check_branch
      %12 = sbr.rel (0) target = $region5
    $region4: #{tpu_custom_call.1} parent=1 // pred_region
      _
    $region5: #{tpu_custom_call.1} parent=1 // pred_fallthru
      _
    // Predicated region
    $region6: #{tpu_custom_call.1} parent=1 // pred_check
      _
    $region7: #{tpu_custom_call.1} parent=1 // pred_check_branch
      %14 = sbr.rel (0) target = $region9
    $region8: #{tpu_custom_call.1} parent=1 // pred_region
      _
    $region9: #{tpu_custom_call.1} parent=1 // pred_fallthru
      _
    // Predicated region
    $region10: #{tpu_custom_call.1} parent=1 // pred_check
      _
    $region11: #{tpu_custom_call.1} parent=1 // pred_check_branch
      %16 = sbr.rel (0) target = $region13
    $region12: #{tpu_custom_call.1} parent=1 // pred_region
      _
    $region13: #{tpu_custom_call.1} parent=1 // pred_fallthru
      _
    // Predicated region
    $region14: #{tpu_custom_call.1} parent=1 // pred_check
      _
    $region15: #{tpu_custom_call.1} parent=1 // pred_check_branch
      %18 = sbr.rel (0) target = $region17
    $region16: #{tpu_custom_call.1} parent=1 // pred_region
      _
    $region17: #{tpu_custom_call.1} parent=1 // pred_fallthru
      _
    // Predicated region
    $region18: #{tpu_custom_call.1} parent=1 // pred_check
      _
    $region19: #{tpu_custom_call.1} parent=1 // pred_check_branch
      %20 = sbr.rel (0) target = $region21
    $region20: #{tpu_custom_call.1} parent=1 // pred_region
      _
    $region21: #{tpu_custom_call.1} parent=1 // pred_fallthru
      _
    %v21 = vld [vmem:[%s0] sm:$0xff]
    %v22 = vld [vmem:[%s0 + $0x8] sm:$0xff]
    %v23 = vld [vmem:[%s0 + $0x18] sm:$0xff]
    %v24 = vld [vmem:[%s0 + $0x20] sm:$0xff]
    %v25 = vld [vmem:[%s0 + $0x30] sm:$0xff]
    %v26 = vld [vmem:[%s0 + $0x38] sm:$0xff]
    %v27 = vld [vmem:[%s0 + $0x48] sm:$0xff]
    %v28 = vld [vmem:[%s0 + $0x50] sm:$0xff]
    %v29 = vld [vmem:[%s0 + $0x60] sm:$0xff]
    %v30 = vld [vmem:[%s0 + $0x68] sm:$0xff]
    %v31 = vld [vmem:[%s0 + $0x78] sm:$0xff]
    %v32 = vld [vmem:[%s0 + $0x80] sm:$0xff]
    %v33 = vld [vmem:[%s0 + $0x90] sm:$0xff]
    %v34 = vld [vmem:[%s0 + $0x98] sm:$0xff]
    %v35 = vld [vmem:[%s0 + $0xa8] sm:$0xff]
    %v36 = vld [vmem:[%s0 + $0xb0] sm:$0xff]
    %v37 = vld [vmem:[%s0 + $0xc0] sm:$0xff]
    %v38 = vld [vmem:[%s0 + $0xc8] sm:$0xff]
    %v39 = vld [vmem:[%s0 + $0xd8] sm:$0xff]
    %v40 = vld [vmem:[%s0 + $0xe0] sm:$0xff]
    %v41 = vld [vmem:[%s0 + $0xf0] sm:$0xff]
    %v42 = vld [vmem:[%s0 + $0xf8] sm:$0xff]
    %v43 = vld [vmem:[%s0 + $0x108] sm:$0xff]
    %v44 = vld [vmem:[%s0 + $0x110] sm:$0xff]
    %v45 = vld [vmem:[%s0 + $0x120] sm:$0xff]
    %v46 = vld [vmem:[%s0 + $0x128] sm:$0xff]
    %v47 = vld [vmem:[%s0 + $0x138] sm:$0xff]
    %v48 = vld [vmem:[%s0 + $0x140] sm:$0xff]
    %v49 = vld [vmem:[%s0 + $0x150] sm:$0xff]
    %v50 = vld [vmem:[%s0 + $0x158] sm:$0xff]
    %v51 = vld [vmem:[%s0 + $0x168] sm:$0xff]
    %v52 = vld [vmem:[%s0 + $0x170] sm:$0xff]
    %v53 = vld [vmem:[%s0 + $0x1b0] sm:$0xff]
    %v54 = vld [vmem:[%s0 + $0x1b8] sm:$0xff]
    %v55 = vld [vmem:[%s0 + $0x1c8] sm:$0xff]
    %v56 = vld [vmem:[%s0 + $0x1d0] sm:$0xff]
    %v57 = vld [vmem:[%s0 + $0x1e0] sm:$0xff]
    %v58 = vld [vmem:[%s0 + $0x1e8] sm:$0xff]
    %v59 = vld [vmem:[%s0 + $0x1f8] sm:$0xff]
    %v60 = vld [vmem:[%s0 + $0x200] sm:$0xff]
    %v61 = vld [vmem:[%s0 + $0x210] sm:$0xff]
    %v62 = vld [vmem:[%s0 + $0x218] sm:$0xff]
    %v63 = vld [vmem:[%s0 + $0x228] sm:$0xff]
    %v64 = vld [vmem:[%s0 + $0x230] sm:$0xff]
    %v65 = vld [vmem:[%s0 + $0x240] sm:$0xff]
    %v66 = vld [vmem:[%s0 + $0x248] sm:$0xff]
    %v67 = vld [vmem:[%s0 + $0x258] sm:$0xff]
    %v68 = vld [vmem:[%s0 + $0x260] sm:$0xff]
    %v69 = vld [vmem:[%s0 + $0x270] sm:$0xff]
    %v70 = vld [vmem:[%s0 + $0x278] sm:$0xff]
    %v71 = vld [vmem:[%s0 + $0x288] sm:$0xff]
    %v72 = vld [vmem:[%s0 + $0x290] sm:$0xff]
    %v73 = vld [vmem:[%s0 + $0x2a0] sm:$0xff]
    %v74 = vld [vmem:[%s0 + $0x2a8] sm:$0xff]
    %v75 = vld [vmem:[%s0 + $0x2b8] sm:$0xff]
    %v76 = vld [vmem:[%s0 + $0x2c0] sm:$0xff]
    %v77 = vld [vmem:[%s0 + $0x2d0] sm:$0xff]
    %v78 = vld [vmem:[%s0 + $0x2d8] sm:$0xff]
    %v79 = vld [vmem:[%s0 + $0x2e8] sm:$0xff]
    %v80 = vld [vmem:[%s0 + $0x2f0] sm:$0xff]
    %v81 = vld [vmem:[%s0 + $0x300] sm:$0xff]
    %v82 = vld [vmem:[%s0 + $0x308] sm:$0xff]
    %v83 = vld [vmem:[%s0 + $0x318] sm:$0xff]
    %v84 = vld [vmem:[%s0 + $0x320] sm:$0xff]
    %v85 = vld [vmem:[%s0 + $0x1] sm:$0xff]
    %v86 = vld [vmem:[%s0 + $0x9] sm:$0xff]
    %v87 = vld [vmem:[%s0 + $0x19] sm:$0xff]
    %v88 = vld [vmem:[%s0 + $0x21] sm:$0xff]
    %v89 = vld [vmem:[%s0 + $0x31] sm:$0xff]
    %v90 = vld [vmem:[%s0 + $0x39] sm:$0xff]
    %v91 = vld [vmem:[%s0 + $0x49] sm:$0xff]
    %v92 = vld [vmem:[%s0 + $0x51] sm:$0xff]
    %v93 = vld [vmem:[%s0 + $0x61] sm:$0xff]
    %v94 = vld [vmem:[%s0 + $0x69] sm:$0xff]
    %v95 = vld [vmem:[%s0 + $0x79] sm:$0xff]
    %v96 = vld [vmem:[%s0 + $0x81] sm:$0xff]
    %v97 = vld [vmem:[%s0 + $0x91] sm:$0xff]
    %v98 = vld [vmem:[%s0 + $0x99] sm:$0xff]
    %v99 = vld [vmem:[%s0 + $0xa9] sm:$0xff]
    %v100 = vld [vmem:[%s0 + $0xb1] sm:$0xff]
    %v101 = vld [vmem:[%s0 + $0xc1] sm:$0xff]
    %v102 = vld [vmem:[%s0 + $0xc9] sm:$0xff]
    %v103 = vld [vmem:[%s0 + $0xd9] sm:$0xff]
    %v104 = vld [vmem:[%s0 + $0xe1] sm:$0xff]
    %v105 = vld [vmem:[%s0 + $0xf1] sm:$0xff]
    %v106 = vld [vmem:[%s0 + $0xf9] sm:$0xff]
    %v107 = vld [vmem:[%s0 + $0x109] sm:$0xff]
    %v108 = vld [vmem:[%s0 + $0x111] sm:$0xff]
    %v109 = vld [vmem:[%s0 + $0x121] sm:$0xff]
    %v110 = vld [vmem:[%s0 + $0x129] sm:$0xff]
    %v111 = vld [vmem:[%s0 + $0x139] sm:$0xff]
    %v112 = vld [vmem:[%s0 + $0x141] sm:$0xff]
    %v113 = vld [vmem:[%s0 + $0x151] sm:$0xff]
    %v114 = vld [vmem:[%s0 + $0x159] sm:$0xff]
    %v115 = vld [vmem:[%s0 + $0x169] sm:$0xff]
    %v116 = vld [vmem:[%s0 + $0x171] sm:$0xff]
    %v117 = vld [vmem:[%s0 + $0x1b1] sm:$0xff]
    %v118 = vld [vmem:[%s0 + $0x1b9] sm:$0xff]
    %v119 = vld [vmem:[%s0 + $0x1c9] sm:$0xff]
    %v120 = vld [vmem:[%s0 + $0x1d1] sm:$0xff]
    %v121 = vld [vmem:[%s0 + $0x1e1] sm:$0xff]
    %v122 = vld [vmem:[%s0 + $0x1e9] sm:$0xff]
    %v123 = vld [vmem:[%s0 + $0x1f9] sm:$0xff]
    %v124 = vld [vmem:[%s0 + $0x201] sm:$0xff]
    %v125 = vld [vmem:[%s0 + $0x211] sm:$0xff]
    %v126 = vld [vmem:[%s0 + $0x219] sm:$0xff]
    %v127 = vld [vmem:[%s0 + $0x229] sm:$0xff]
    %v128 = vld [vmem:[%s0 + $0x231] sm:$0xff]
    %v129 = vld [vmem:[%s0 + $0x241] sm:$0xff]
    %v130 = vld [vmem:[%s0 + $0x249] sm:$0xff]
    %v131 = vld [vmem:[%s0 + $0x259] sm:$0xff]
    %v132 = vld [vmem:[%s0 + $0x261] sm:$0xff]
    %v133 = vld [vmem:[%s0 + $0x271] sm:$0xff]
    %v134 = vld [vmem:[%s0 + $0x279] sm:$0xff]
    %v135 = vld [vmem:[%s0 + $0x289] sm:$0xff]
    %v136 = vld [vmem:[%s0 + $0x291] sm:$0xff]
    %v137 = vld [vmem:[%s0 + $0x2a1] sm:$0xff]
    %v138 = vld [vmem:[%s0 + $0x2a9] sm:$0xff]
    %v139 = vld [vmem:[%s0 + $0x2b9] sm:$0xff]
    %v140 = vld [vmem:[%s0 + $0x2c1] sm:$0xff]
    %v141 = vld [vmem:[%s0 + $0x2d1] sm:$0xff]
    %v142 = vld [vmem:[%s0 + $0x2d9] sm:$0xff]
    %v143 = vld [vmem:[%s0 + $0x2e9] sm:$0xff]
    %v144 = vld [vmem:[%s0 + $0x2f1] sm:$0xff]
    %v145 = vld [vmem:[%s0 + $0x301] sm:$0xff]
    %v146 = vld [vmem:[%s0 + $0x309] sm:$0xff]
    %v147 = vld [vmem:[%s0 + $0x319] sm:$0xff]
    %v148 = vld [vmem:[%s0 + $0x321] sm:$0xff]
    %v149 = vld [vmem:[%s0 + $0x2] sm:$0xff]
    %v150 = vld [vmem:[%s0 + $0xa] sm:$0xff]
    %v151 = vld [vmem:[%s0 + $0x1a] sm:$0xff]
    %v152 = vld [vmem:[%s0 + $0x22] sm:$0xff]
    %v153 = vld [vmem:[%s0 + $0x32] sm:$0xff]
    %v154 = vld [vmem:[%s0 + $0x3a] sm:$0xff]
    %v155 = vld [vmem:[%s0 + $0x4a] sm:$0xff]
    %v156 = vld [vmem:[%s0 + $0x52] sm:$0xff]
    %v157 = vld [vmem:[%s0 + $0x62] sm:$0xff]
    %v158 = vld [vmem:[%s0 + $0x6a] sm:$0xff]
    %v159 = vld [vmem:[%s0 + $0x7a] sm:$0xff]
    %v160 = vld [vmem:[%s0 + $0x82] sm:$0xff]
    %v161 = vld [vmem:[%s0 + $0x92] sm:$0xff]
    %v162 = vld [vmem:[%s0 + $0x9a] sm:$0xff]
    %v163 = vld [vmem:[%s0 + $0xaa] sm:$0xff]
    %v164 = vld [vmem:[%s0 + $0xb2] sm:$0xff]
    %v165 = vld [vmem:[%s0 + $0xc2] sm:$0xff]
    %v166 = vld [vmem:[%s0 + $0xca] sm:$0xff]
    %v167 = vld [vmem:[%s0 + $0xda] sm:$0xff]
    %v168 = vld [vmem:[%s0 + $0xe2] sm:$0xff]
    %v169 = vld [vmem:[%s0 + $0xf2] sm:$0xff]
    %v170 = vld [vmem:[%s0 + $0xfa] sm:$0xff]
    %v171 = vld [vmem:[%s0 + $0x10a] sm:$0xff]
    %v172 = vld [vmem:[%s0 + $0x112] sm:$0xff]
    %v173 = vld [vmem:[%s0 + $0x122] sm:$0xff]
    %v174 = vld [vmem:[%s0 + $0x12a] sm:$0xff]
    %v175 = vld [vmem:[%s0 + $0x13a] sm:$0xff]
    %v176 = vld [vmem:[%s0 + $0x142] sm:$0xff]
    %v177 = vld [vmem:[%s0 + $0x152] sm:$0xff]
    %v178 = vld [vmem:[%s0 + $0x15a] sm:$0xff]
    %v179 = vld [vmem:[%s0 + $0x16a] sm:$0xff]
    %v180 = vld [vmem:[%s0 + $0x172] sm:$0xff]
    %v181 = vld [vmem:[%s0 + $0x1b2] sm:$0xff]
    %v182 = vld [vmem:[%s0 + $0x1ba] sm:$0xff]
    %v183 = vld [vmem:[%s0 + $0x1ca] sm:$0xff]
    %v184 = vld [vmem:[%s0 + $0x1d2] sm:$0xff]
    %v185 = vld [vmem:[%s0 + $0x1e2] sm:$0xff]
    %v186 = vld [vmem:[%s0 + $0x1ea] sm:$0xff]
    %v187 = vld [vmem:[%s0 + $0x1fa] sm:$0xff]
    %v188 = vld [vmem:[%s0 + $0x202] sm:$0xff]
    %v189 = vld [vmem:[%s0 + $0x212] sm:$0xff]
    %v190 = vld [vmem:[%s0 + $0x21a] sm:$0xff]
    %v191 = vld [vmem:[%s0 + $0x22a] sm:$0xff]
    %v192 = vld [vmem:[%s0 + $0x232] sm:$0xff]
    %v193 = vld [vmem:[%s0 + $0x242] sm:$0xff]
    %v194 = vld [vmem:[%s0 + $0x24a] sm:$0xff]
    %v195 = vld [vmem:[%s0 + $0x25a] sm:$0xff]
    %v196 = vld [vmem:[%s0 + $0x262] sm:$0xff]
    %v197 = vld [vmem:[%s0 + $0x272] sm:$0xff]
    %v198 = vld [vmem:[%s0 + $0x27a] sm:$0xff]
    %v199 = vld [vmem:[%s0 + $0x28a] sm:$0xff]
    %v200 = vld [vmem:[%s0 + $0x292] sm:$0xff]
    %v201 = vld [vmem:[%s0 + $0x2a2] sm:$0xff]
    %v202 = vld [vmem:[%s0 + $0x2aa] sm:$0xff]
    %v203 = vld [vmem:[%s0 + $0x2ba] sm:$0xff]
    %v204 = vld [vmem:[%s0 + $0x2c2] sm:$0xff]
    %v205 = vld [vmem:[%s0 + $0x2d2] sm:$0xff]
    %v206 = vld [vmem:[%s0 + $0x2da] sm:$0xff]
    %v207 = vld [vmem:[%s0 + $0x2ea] sm:$0xff]
    %v208 = vld [vmem:[%s0 + $0x2f2] sm:$0xff]
    %v209 = vld [vmem:[%s0 + $0x302] sm:$0xff]
    %v210 = vld [vmem:[%s0 + $0x30a] sm:$0xff]
    %v211 = vld [vmem:[%s0 + $0x31a] sm:$0xff]
    %v212 = vld [vmem:[%s0 + $0x322] sm:$0xff]
    %s213 = scalar_lea.vmem %s0, 24
    %v214 = vld [vmem:[%s213] sm:$0xff]
    %v215 = vld [vmem:[%s213 + $0x8] sm:$0xff]
    %v216 = vld [vmem:[%s213 + $0x18] sm:$0xff]
    %v217 = vld [vmem:[%s213 + $0x20] sm:$0xff]
    %v218 = vld [vmem:[%s213 + $0x30] sm:$0xff]
    %v219 = vld [vmem:[%s213 + $0x38] sm:$0xff]
    %v220 = vld [vmem:[%s213 + $0x48] sm:$0xff]
    %v221 = vld [vmem:[%s213 + $0x50] sm:$0xff]
    %v222 = vld [vmem:[%s213 + $0x60] sm:$0xff]
    %v223 = vld [vmem:[%s213 + $0x68] sm:$0xff]
    %v224 = vld [vmem:[%s213 + $0x78] sm:$0xff]
    %v225 = vld [vmem:[%s213 + $0x80] sm:$0xff]
    %v226 = vld [vmem:[%s213 + $0x90] sm:$0xff]
    %v227 = vld [vmem:[%s213 + $0x98] sm:$0xff]
    %v228 = vld [vmem:[%s213 + $0xa8] sm:$0xff]
    %v229 = vld [vmem:[%s213 + $0xb0] sm:$0xff]
    %v230 = vld [vmem:[%s213 + $0xc0] sm:$0xff]
    %v231 = vld [vmem:[%s213 + $0xc8] sm:$0xff]
    %v232 = vld [vmem:[%s213 + $0xd8] sm:$0xff]
    %v233 = vld [vmem:[%s213 + $0xe0] sm:$0xff]
    %v234 = vld [vmem:[%s213 + $0xf0] sm:$0xff]
    %v235 = vld [vmem:[%s213 + $0xf8] sm:$0xff]
    %v236 = vld [vmem:[%s213 + $0x108] sm:$0xff]
    %v237 = vld [vmem:[%s213 + $0x110] sm:$0xff]
    %v238 = vld [vmem:[%s213 + $0x120] sm:$0xff]
    %v239 = vld [vmem:[%s213 + $0x128] sm:$0xff]
    %v240 = vld [vmem:[%s213 + $0x138] sm:$0xff]
    %v241 = vld [vmem:[%s213 + $0x140] sm:$0xff]
    %v242 = vld [vmem:[%s213 + $0x150] sm:$0xff]
    %v243 = vld [vmem:[%s213 + $0x158] sm:$0xff]
    %v244 = vld [vmem:[%s213 + $0x168] sm:$0xff]
    %v245 = vld [vmem:[%s213 + $0x170] sm:$0xff]
    %v246 = vld [vmem:[%s213 + $0x1b0] sm:$0xff]
    %v247 = vld [vmem:[%s213 + $0x1b8] sm:$0xff]
    %v248 = vld [vmem:[%s213 + $0x1c8] sm:$0xff]
    %v249 = vld [vmem:[%s213 + $0x1d0] sm:$0xff]
    %v250 = vld [vmem:[%s213 + $0x1e0] sm:$0xff]
    %v251 = vld [vmem:[%s213 + $0x1e8] sm:$0xff]
    %v252 = vld [vmem:[%s213 + $0x1f8] sm:$0xff]
    %v253 = vld [vmem:[%s213 + $0x200] sm:$0xff]
    %v254 = vld [vmem:[%s213 + $0x210] sm:$0xff]
    %v255 = vld [vmem:[%s213 + $0x218] sm:$0xff]
    %v256 = vld [vmem:[%s213 + $0x228] sm:$0xff]
    %v257 = vld [vmem:[%s213 + $0x230] sm:$0xff]
    %v258 = vld [vmem:[%s213 + $0x240] sm:$0xff]
    %v259 = vld [vmem:[%s213 + $0x248] sm:$0xff]
    %v260 = vld [vmem:[%s213 + $0x258] sm:$0xff]
    %v261 = vld [vmem:[%s213 + $0x260] sm:$0xff]
    %v262 = vld [vmem:[%s213 + $0x270] sm:$0xff]
    %v263 = vld [vmem:[%s213 + $0x278] sm:$0xff]
    %v264 = vld [vmem:[%s213 + $0x288] sm:$0xff]
    %v265 = vld [vmem:[%s213 + $0x290] sm:$0xff]
    %v266 = vld [vmem:[%s213 + $0x2a0] sm:$0xff]
    %v267 = vld [vmem:[%s213 + $0x2a8] sm:$0xff]
    %v268 = vld [vmem:[%s213 + $0x2b8] sm:$0xff]
    %v269 = vld [vmem:[%s213 + $0x2c0] sm:$0xff]
    %v270 = vld [vmem:[%s213 + $0x2d0] sm:$0xff]
    %v271 = vld [vmem:[%s213 + $0x2d8] sm:$0xff]
    %v272 = vld [vmem:[%s213 + $0x2e8] sm:$0xff]
    %v273 = vld [vmem:[%s213 + $0x2f0] sm:$0xff]
    %v274 = vld [vmem:[%s213 + $0x300] sm:$0xff]
    %v275 = vld [vmem:[%s213 + $0x308] sm:$0xff]
    %v276 = vld [vmem:[%s213 + $0x318] sm:$0xff]
    %v277 = vld [vmem:[%s213 + $0x320] sm:$0xff]
    %v278 = vld [vmem:[%s213 + $0x1] sm:$0xff]
    %v279 = vld [vmem:[%s213 + $0x9] sm:$0xff]
    %v280 = vld [vmem:[%s213 + $0x19] sm:$0xff]
    %v281 = vld [vmem:[%s213 + $0x21] sm:$0xff]
    %v282 = vld [vmem:[%s213 + $0x31] sm:$0xff]
    %v283 = vld [vmem:[%s213 + $0x39] sm:$0xff]
    %v284 = vld [vmem:[%s213 + $0x49] sm:$0xff]
    %v285 = vld [vmem:[%s213 + $0x51] sm:$0xff]
    %v286 = vld [vmem:[%s213 + $0x61] sm:$0xff]
    %v287 = vld [vmem:[%s213 + $0x69] sm:$0xff]
    %v288 = vld [vmem:[%s213 + $0x79] sm:$0xff]
    %v289 = vld [vmem:[%s213 + $0x81] sm:$0xff]
    %v290 = vld [vmem:[%s213 + $0x91] sm:$0xff]
    %v291 = vld [vmem:[%s213 + $0x99] sm:$0xff]
    %v292 = vld [vmem:[%s213 + $0xa9] sm:$0xff]
    %v293 = vld [vmem:[%s213 + $0xb1] sm:$0xff]
    %v294 = vld [vmem:[%s213 + $0xc1] sm:$0xff]
    %v295 = vld [vmem:[%s213 + $0xc9] sm:$0xff]
    %v296 = vld [vmem:[%s213 + $0xd9] sm:$0xff]
    %v297 = vld [vmem:[%s213 + $0xe1] sm:$0xff]
    %v298 = vld [vmem:[%s213 + $0xf1] sm:$0xff]
    %v299 = vld [vmem:[%s213 + $0xf9] sm:$0xff]
    %v300 = vld [vmem:[%s213 + $0x109] sm:$0xff]
    %v301 = vld [vmem:[%s213 + $0x111] sm:$0xff]
    %v302 = vld [vmem:[%s213 + $0x121] sm:$0xff]
    %v303 = vld [vmem:[%s213 + $0x129] sm:$0xff]
    %v304 = vld [vmem:[%s213 + $0x139] sm:$0xff]
    %v305 = vld [vmem:[%s213 + $0x141] sm:$0xff]
    %v306 = vld [vmem:[%s213 + $0x151] sm:$0xff]
    %v307 = vld [vmem:[%s213 + $0x159] sm:$0xff]
    %v308 = vld [vmem:[%s213 + $0x169] sm:$0xff]
    %v309 = vld [vmem:[%s213 + $0x171] sm:$0xff]
    %v310 = vld [vmem:[%s213 + $0x1b1] sm:$0xff]
    %v311 = vld [vmem:[%s213 + $0x1b9] sm:$0xff]
    %v312 = vld [vmem:[%s213 + $0x1c9] sm:$0xff]
    %v313 = vld [vmem:[%s213 + $0x1d1] sm:$0xff]
    %v314 = vld [vmem:[%s213 + $0x1e1] sm:$0xff]
    %v315 = vld [vmem:[%s213 + $0x1e9] sm:$0xff]
    %v316 = vld [vmem:[%s213 + $0x1f9] sm:$0xff]
    %v317 = vld [vmem:[%s213 + $0x201] sm:$0xff]
    %v318 = vld [vmem:[%s213 + $0x211] sm:$0xff]
    %v319 = vld [vmem:[%s213 + $0x219] sm:$0xff]
    %v320 = vld [vmem:[%s213 + $0x229] sm:$0xff]
    %v321 = vld [vmem:[%s213 + $0x231] sm:$0xff]
    %v322 = vld [vmem:[%s213 + $0x241] sm:$0xff]
    %v323 = vld [vmem:[%s213 + $0x249] sm:$0xff]
    %v324 = vld [vmem:[%s213 + $0x259] sm:$0xff]
    %v325 = vld [vmem:[%s213 + $0x261] sm:$0xff]
    %v326 = vld [vmem:[%s213 + $0x271] sm:$0xff]
    %v327 = vld [vmem:[%s213 + $0x279] sm:$0xff]
    %v328 = vld [vmem:[%s213 + $0x289] sm:$0xff]
    %v329 = vld [vmem:[%s213 + $0x291] sm:$0xff]
    %v330 = vld [vmem:[%s213 + $0x2a1] sm:$0xff]
    %v331 = vld [vmem:[%s213 + $0x2a9] sm:$0xff]
    %v332 = vld [vmem:[%s213 + $0x2b9] sm:$0xff]
    %v333 = vld [vmem:[%s213 + $0x2c1] sm:$0xff]
    %v334 = vld [vmem:[%s213 + $0x2d1] sm:$0xff]
    %v335 = vld [vmem:[%s213 + $0x2d9] sm:$0xff]
    %v336 = vld [vmem:[%s213 + $0x2e9] sm:$0xff]
    %v337 = vld [vmem:[%s213 + $0x2f1] sm:$0xff]
    %v338 = vld [vmem:[%s213 + $0x301] sm:$0xff]
    %v339 = vld [vmem:[%s213 + $0x309] sm:$0xff]
    %v340 = vld [vmem:[%s213 + $0x319] sm:$0xff]
    %v341 = vld [vmem:[%s213 + $0x321] sm:$0xff]
    %v342 = vld [vmem:[%s213 + $0x2] sm:$0xff]
    %v343 = vld [vmem:[%s213 + $0xa] sm:$0xff]
    %v344 = vld [vmem:[%s213 + $0x1a] sm:$0xff]
    %v345 = vld [vmem:[%s213 + $0x22] sm:$0xff]
    %v346 = vld [vmem:[%s213 + $0x32] sm:$0xff]
    %v347 = vld [vmem:[%s213 + $0x3a] sm:$0xff]
    %v348 = vld [vmem:[%s213 + $0x4a] sm:$0xff]
    %v349 = vld [vmem:[%s213 + $0x52] sm:$0xff]
    %v350 = vld [vmem:[%s213 + $0x62] sm:$0xff]
    %v351 = vld [vmem:[%s213 + $0x6a] sm:$0xff]
    %v352 = vld [vmem:[%s213 + $0x7a] sm:$0xff]
    %v353 = vld [vmem:[%s213 + $0x82] sm:$0xff]
    %v354 = vld [vmem:[%s213 + $0x92] sm:$0xff]
    %v355 = vld [vmem:[%s213 + $0x9a] sm:$0xff]
    %v356 = vld [vmem:[%s213 + $0xaa] sm:$0xff]
    %v357 = vld [vmem:[%s213 + $0xb2] sm:$0xff]
    %v358 = vld [vmem:[%s213 + $0xc2] sm:$0xff]
    %v359 = vld [vmem:[%s213 + $0xca] sm:$0xff]
    %v360 = vld [vmem:[%s213 + $0xda] sm:$0xff]
    %v361 = vld [vmem:[%s213 + $0xe2] sm:$0xff]
    %v362 = vld [vmem:[%s213 + $0xf2] sm:$0xff]
    %v363 = vld [vmem:[%s213 + $0xfa] sm:$0xff]
    %v364 = vld [vmem:[%s213 + $0x10a] sm:$0xff]
    %v365 = vld [vmem:[%s213 + $0x112] sm:$0xff]
    %v366 = vld [vmem:[%s213 + $0x122] sm:$0xff]
    %v367 = vld [vmem:[%s213 + $0x12a] sm:$0xff]
    %v368 = vld [vmem:[%s213 + $0x13a] sm:$0xff]
    %v369 = vld [vmem:[%s213 + $0x142] sm:$0xff]
    %v370 = vld [vmem:[%s213 + $0x152] sm:$0xff]
    %v371 = vld [vmem:[%s213 + $0x15a] sm:$0xff]
    %v372 = vld [vmem:[%s213 + $0x16a] sm:$0xff]
    %v373 = vld [vmem:[%s213 + $0x172] sm:$0xff]
    %v374 = vld [vmem:[%s213 + $0x1b2] sm:$0xff]
    %v375 = vld [vmem:[%s213 + $0x1ba] sm:$0xff]
    %v376 = vld [vmem:[%s213 + $0x1ca] sm:$0xff]
    %v377 = vld [vmem:[%s213 + $0x1d2] sm:$0xff]
    %v378 = vld [vmem:[%s213 + $0x1e2] sm:$0xff]
    %v379 = vld [vmem:[%s213 + $0x1ea] sm:$0xff]
    %v380 = vld [vmem:[%s213 + $0x1fa] sm:$0xff]
    %v381 = vld [vmem:[%s213 + $0x202] sm:$0xff]
    %v382 = vld [vmem:[%s213 + $0x212] sm:$0xff]
    %v383 = vld [vmem:[%s213 + $0x21a] sm:$0xff]
    %v384 = vld [vmem:[%s213 + $0x22a] sm:$0xff]
    %v385 = vld [vmem:[%s213 + $0x232] sm:$0xff]
    %v386 = vld [vmem:[%s213 + $0x242] sm:$0xff]
    %v387 = vld [vmem:[%s213 + $0x24a] sm:$0xff]
    %v388 = vld [vmem:[%s213 + $0x25a] sm:$0xff]
    %v389 = vld [vmem:[%s213 + $0x262] sm:$0xff]
    %v390 = vld [vmem:[%s213 + $0x272] sm:$0xff]
    %v391 = vld [vmem:[%s213 + $0x27a] sm:$0xff]
    %v392 = vld [vmem:[%s213 + $0x28a] sm:$0xff]
    %v393 = vld [vmem:[%s213 + $0x292] sm:$0xff]
    %v394 = vld [vmem:[%s213 + $0x2a2] sm:$0xff]
    %v395 = vld [vmem:[%s213 + $0x2aa] sm:$0xff]
    %v396 = vld [vmem:[%s213 + $0x2ba] sm:$0xff]
    %v397 = vld [vmem:[%s213 + $0x2c2] sm:$0xff]
    %v398 = vld [vmem:[%s213 + $0x2d2] sm:$0xff]
    %v399 = vld [vmem:[%s213 + $0x2da] sm:$0xff]
    %v400 = vld [vmem:[%s213 + $0x2ea] sm:$0xff]
    %v401 = vld [vmem:[%s213 + $0x2f2] sm:$0xff]
    %v402 = vld [vmem:[%s213 + $0x302] sm:$0xff]
    %v403 = vld [vmem:[%s213 + $0x30a] sm:$0xff]
    %v404 = vld [vmem:[%s213 + $0x31a] sm:$0xff]
    %v405 = vld [vmem:[%s213 + $0x322] sm:$0xff]
    %s406 = scalar_lea.vmem %s0, 48
    %v407 = vld [vmem:[%s406] sm:$0xff]
    %v408 = vld [vmem:[%s406 + $0x8] sm:$0xff]
    %v409 = vld [vmem:[%s406 + $0x18] sm:$0xff]
    %v410 = vld [vmem:[%s406 + $0x20] sm:$0xff]
    %v411 = vld [vmem:[%s406 + $0x30] sm:$0xff]
    %v412 = vld [vmem:[%s406 + $0x38] sm:$0xff]
    %v413 = vld [vmem:[%s406 + $0x48] sm:$0xff]
    %v414 = vld [vmem:[%s406 + $0x50] sm:$0xff]
    %v415 = vld [vmem:[%s406 + $0x60] sm:$0xff]
    %v416 = vld [vmem:[%s406 + $0x68] sm:$0xff]
    %v417 = vld [vmem:[%s406 + $0x78] sm:$0xff]
    %v418 = vld [vmem:[%s406 + $0x80] sm:$0xff]
    %v419 = vld [vmem:[%s406 + $0x90] sm:$0xff]
    %v420 = vld [vmem:[%s406 + $0x98] sm:$0xff]
    %v421 = vld [vmem:[%s406 + $0xa8] sm:$0xff]
    %v422 = vld [vmem:[%s406 + $0xb0] sm:$0xff]
    %v423 = vld [vmem:[%s406 + $0xc0] sm:$0xff]
    %v424 = vld [vmem:[%s406 + $0xc8] sm:$0xff]
    %v425 = vld [vmem:[%s406 + $0xd8] sm:$0xff]
    %v426 = vld [vmem:[%s406 + $0xe0] sm:$0xff]
    %v427 = vld [vmem:[%s406 + $0xf0] sm:$0xff]
    %v428 = vld [vmem:[%s406 + $0xf8] sm:$0xff]
    %v429 = vld [vmem:[%s406 + $0x108] sm:$0xff]
    %v430 = vld [vmem:[%s406 + $0x110] sm:$0xff]
    %v431 = vld [vmem:[%s406 + $0x120] sm:$0xff]
    %v432 = vld [vmem:[%s406 + $0x128] sm:$0xff]
    %v433 = vld [vmem:[%s406 + $0x138] sm:$0xff]
    %v434 = vld [vmem:[%s406 + $0x140] sm:$0xff]
    %v435 = vld [vmem:[%s406 + $0x150] sm:$0xff]
    %v436 = vld [vmem:[%s406 + $0x158] sm:$0xff]
    %v437 = vld [vmem:[%s406 + $0x168] sm:$0xff]
    %v438 = vld [vmem:[%s406 + $0x170] sm:$0xff]
    %v439 = vld [vmem:[%s406 + $0x1b0] sm:$0xff]
    %v440 = vld [vmem:[%s406 + $0x1b8] sm:$0xff]
    %v441 = vld [vmem:[%s406 + $0x1c8] sm:$0xff]
    %v442 = vld [vmem:[%s406 + $0x1d0] sm:$0xff]
    %v443 = vld [vmem:[%s406 + $0x1e0] sm:$0xff]
    %v444 = vld [vmem:[%s406 + $0x1e8] sm:$0xff]
    %v445 = vld [vmem:[%s406 + $0x1f8] sm:$0xff]
    %v446 = vld [vmem:[%s406 + $0x200] sm:$0xff]
    %v447 = vld [vmem:[%s406 + $0x210] sm:$0xff]
    %v448 = vld [vmem:[%s406 + $0x218] sm:$0xff]
    %v449 = vld [vmem:[%s406 + $0x228] sm:$0xff]
    %v450 = vld [vmem:[%s406 + $0x230] sm:$0xff]
    %v451 = vld [vmem:[%s406 + $0x240] sm:$0xff]
    %v452 = vld [vmem:[%s406 + $0x248] sm:$0xff]
    %v453 = vld [vmem:[%s406 + $0x258] sm:$0xff]
    %v454 = vld [vmem:[%s406 + $0x260] sm:$0xff]
    %v455 = vld [vmem:[%s406 + $0x270] sm:$0xff]
    %v456 = vld [vmem:[%s406 + $0x278] sm:$0xff]
    %v457 = vld [vmem:[%s406 + $0x288] sm:$0xff]
    %v458 = vld [vmem:[%s406 + $0x290] sm:$0xff]
    %v459 = vld [vmem:[%s406 + $0x2a0] sm:$0xff]
    %v460 = vld [vmem:[%s406 + $0x2a8] sm:$0xff]
    %v461 = vld [vmem:[%s406 + $0x2b8] sm:$0xff]
    %v462 = vld [vmem:[%s406 + $0x2c0] sm:$0xff]
    %v463 = vld [vmem:[%s406 + $0x2d0] sm:$0xff]
    %v464 = vld [vmem:[%s406 + $0x2d8] sm:$0xff]
    %v465 = vld [vmem:[%s406 + $0x2e8] sm:$0xff]
    %v466 = vld [vmem:[%s406 + $0x2f0] sm:$0xff]
    %v467 = vld [vmem:[%s406 + $0x300] sm:$0xff]
    %v468 = vld [vmem:[%s406 + $0x308] sm:$0xff]
    %v469 = vld [vmem:[%s406 + $0x318] sm:$0xff]
    %v470 = vld [vmem:[%s406 + $0x320] sm:$0xff]
    %v471 = vld [vmem:[%s406 + $0x1] sm:$0xff]
    %v472 = vld [vmem:[%s406 + $0x9] sm:$0xff]
    %v473 = vld [vmem:[%s406 + $0x19] sm:$0xff]
    %v474 = vld [vmem:[%s406 + $0x21] sm:$0xff]
    %v475 = vld [vmem:[%s406 + $0x31] sm:$0xff]
    %v476 = vld [vmem:[%s406 + $0x39] sm:$0xff]
    %v477 = vld [vmem:[%s406 + $0x49] sm:$0xff]
    %v478 = vld [vmem:[%s406 + $0x51] sm:$0xff]
    %v479 = vld [vmem:[%s406 + $0x61] sm:$0xff]
    %v480 = vld [vmem:[%s406 + $0x69] sm:$0xff]
    %v481 = vld [vmem:[%s406 + $0x79] sm:$0xff]
    %v482 = vld [vmem:[%s406 + $0x81] sm:$0xff]
    %v483 = vld [vmem:[%s406 + $0x91] sm:$0xff]
    %v484 = vld [vmem:[%s406 + $0x99] sm:$0xff]
    %v485 = vld [vmem:[%s406 + $0xa9] sm:$0xff]
    %v486 = vld [vmem:[%s406 + $0xb1] sm:$0xff]
    %v487 = vld [vmem:[%s406 + $0xc1] sm:$0xff]
    %v488 = vld [vmem:[%s406 + $0xc9] sm:$0xff]
    %v489 = vld [vmem:[%s406 + $0xd9] sm:$0xff]
    %v490 = vld [vmem:[%s406 + $0xe1] sm:$0xff]
    %v491 = vld [vmem:[%s406 + $0xf1] sm:$0xff]
    %v492 = vld [vmem:[%s406 + $0xf9] sm:$0xff]
    %v493 = vld [vmem:[%s406 + $0x109] sm:$0xff]
    %v494 = vld [vmem:[%s406 + $0x111] sm:$0xff]
    %v495 = vld [vmem:[%s406 + $0x121] sm:$0xff]
    %v496 = vld [vmem:[%s406 + $0x129] sm:$0xff]
    %v497 = vld [vmem:[%s406 + $0x139] sm:$0xff]
    %v498 = vld [vmem:[%s406 + $0x141] sm:$0xff]
    %v499 = vld [vmem:[%s406 + $0x151] sm:$0xff]
    %v500 = vld [vmem:[%s406 + $0x159] sm:$0xff]
    %v501 = vld [vmem:[%s406 + $0x169] sm:$0xff]
    %v502 = vld [vmem:[%s406 + $0x171] sm:$0xff]
    %v503 = vld [vmem:[%s406 + $0x1b1] sm:$0xff]
    %v504 = vld [vmem:[%s406 + $0x1b9] sm:$0xff]
    %v505 = vld [vmem:[%s406 + $0x1c9] sm:$0xff]
    %v506 = vld [vmem:[%s406 + $0x1d1] sm:$0xff]
    %v507 = vld [vmem:[%s406 + $0x1e1] sm:$0xff]
    %v508 = vld [vmem:[%s406 + $0x1e9] sm:$0xff]
    %v509 = vld [vmem:[%s406 + $0x1f9] sm:$0xff]
    %v510 = vld [vmem:[%s406 + $0x201] sm:$0xff]
    %v511 = vld [vmem:[%s406 + $0x211] sm:$0xff]
    %v512 = vld [vmem:[%s406 + $0x219] sm:$0xff]
    %v513 = vld [vmem:[%s406 + $0x229] sm:$0xff]
    %v514 = vld [vmem:[%s406 + $0x231] sm:$0xff]
    %v515 = vld [vmem:[%s406 + $0x241] sm:$0xff]
    %v516 = vld [vmem:[%s406 + $0x249] sm:$0xff]
    %v517 = vld [vmem:[%s406 + $0x259] sm:$0xff]
    %v518 = vld [vmem:[%s406 + $0x261] sm:$0xff]
    %v519 = vld [vmem:[%s406 + $0x271] sm:$0xff]
    %v520 = vld [vmem:[%s406 + $0x279] sm:$0xff]
    %v521 = vld [vmem:[%s406 + $0x289] sm:$0xff]
    %v522 = vld [vmem:[%s406 + $0x291] sm:$0xff]
    %v523 = vld [vmem:[%s406 + $0x2a1] sm:$0xff]
    %v524 = vld [vmem:[%s406 + $0x2a9] sm:$0xff]
    %v525 = vld [vmem:[%s406 + $0x2b9] sm:$0xff]
    %v526 = vld [vmem:[%s406 + $0x2c1] sm:$0xff]
    %v527 = vld [vmem:[%s406 + $0x2d1] sm:$0xff]
    %v528 = vld [vmem:[%s406 + $0x2d9] sm:$0xff]
    %v529 = vld [vmem:[%s406 + $0x2e9] sm:$0xff]
    %v530 = vld [vmem:[%s406 + $0x2f1] sm:$0xff]
    %v531 = vld [vmem:[%s406 + $0x301] sm:$0xff]
    %v532 = vld [vmem:[%s406 + $0x309] sm:$0xff]
    %v533 = vld [vmem:[%s406 + $0x319] sm:$0xff]
    %v534 = vld [vmem:[%s406 + $0x321] sm:$0xff]
    %v535 = vld [vmem:[%s406 + $0x2] sm:$0xff]
    %v536 = vld [vmem:[%s406 + $0xa] sm:$0xff]
    %v537 = vld [vmem:[%s406 + $0x1a] sm:$0xff]
    %v538 = vld [vmem:[%s406 + $0x22] sm:$0xff]
    %v539 = vld [vmem:[%s406 + $0x32] sm:$0xff]
    %v540 = vld [vmem:[%s406 + $0x3a] sm:$0xff]
    %v541 = vld [vmem:[%s406 + $0x4a] sm:$0xff]
    %v542 = vld [vmem:[%s406 + $0x52] sm:$0xff]
    %v543 = vld [vmem:[%s406 + $0x62] sm:$0xff]
    %v544 = vld [vmem:[%s406 + $0x6a] sm:$0xff]
    %v545 = vld [vmem:[%s406 + $0x7a] sm:$0xff]
    %v546 = vld [vmem:[%s406 + $0x82] sm:$0xff]
    %v547 = vld [vmem:[%s406 + $0x92] sm:$0xff]
    %v548 = vld [vmem:[%s406 + $0x9a] sm:$0xff]
    %v549 = vld [vmem:[%s406 + $0xaa] sm:$0xff]
    %v550 = vld [vmem:[%s406 + $0xb2] sm:$0xff]
    %v551 = vld [vmem:[%s406 + $0xc2] sm:$0xff]
    %v552 = vld [vmem:[%s406 + $0xca] sm:$0xff]
    %v553 = vld [vmem:[%s406 + $0xda] sm:$0xff]
    %v554 = vld [vmem:[%s406 + $0xe2] sm:$0xff]
    %v555 = vld [vmem:[%s406 + $0xf2] sm:$0xff]
    %v556 = vld [vmem:[%s406 + $0xfa] sm:$0xff]
    %v557 = vld [vmem:[%s406 + $0x10a] sm:$0xff]
    %v558 = vld [vmem:[%s406 + $0x112] sm:$0xff]
    %v559 = vld [vmem:[%s406 + $0x122] sm:$0xff]
    %v560 = vld [vmem:[%s406 + $0x12a] sm:$0xff]
    %v561 = vld [vmem:[%s406 + $0x13a] sm:$0xff]
    %v562 = vld [vmem:[%s406 + $0x142] sm:$0xff]
    %v563 = vld [vmem:[%s406 + $0x152] sm:$0xff]
    %v564 = vld [vmem:[%s406 + $0x15a] sm:$0xff]
    %v565 = vld [vmem:[%s406 + $0x16a] sm:$0xff]
    %v566 = vld [vmem:[%s406 + $0x172] sm:$0xff]
    %v567 = vld [vmem:[%s406 + $0x1b2] sm:$0xff]
    %v568 = vld [vmem:[%s406 + $0x1ba] sm:$0xff]
    %v569 = vld [vmem:[%s406 + $0x1ca] sm:$0xff]
    %v570 = vld [vmem:[%s406 + $0x1d2] sm:$0xff]
    %v571 = vld [vmem:[%s406 + $0x1e2] sm:$0xff]
    %v572 = vld [vmem:[%s406 + $0x1ea] sm:$0xff]
    %v573 = vld [vmem:[%s406 + $0x1fa] sm:$0xff]
    %v574 = vld [vmem:[%s406 + $0x202] sm:$0xff]
    %v575 = vld [vmem:[%s406 + $0x212] sm:$0xff]
    %v576 = vld [vmem:[%s406 + $0x21a] sm:$0xff]
    %v577 = vld [vmem:[%s406 + $0x22a] sm:$0xff]
    %v578 = vld [vmem:[%s406 + $0x232] sm:$0xff]
    %v579 = vld [vmem:[%s406 + $0x242] sm:$0xff]
    %v580 = vld [vmem:[%s406 + $0x24a] sm:$0xff]
    %v581 = vld [vmem:[%s406 + $0x25a] sm:$0xff]
    %v582 = vld [vmem:[%s406 + $0x262] sm:$0xff]
    %v583 = vld [vmem:[%s406 + $0x272] sm:$0xff]
    %v584 = vld [vmem:[%s406 + $0x27a] sm:$0xff]
    %v585 = vld [vmem:[%s406 + $0x28a] sm:$0xff]
    %v586 = vld [vmem:[%s406 + $0x292] sm:$0xff]
    %v587 = vld [vmem:[%s406 + $0x2a2] sm:$0xff]
    %v588 = vld [vmem:[%s406 + $0x2aa] sm:$0xff]
    %v589 = vld [vmem:[%s406 + $0x2ba] sm:$0xff]
    %v590 = vld [vmem:[%s406 + $0x2c2] sm:$0xff]
    %v591 = vld [vmem:[%s406 + $0x2d2] sm:$0xff]
    %v592 = vld [vmem:[%s406 + $0x2da] sm:$0xff]
    %v593 = vld [vmem:[%s406 + $0x2ea] sm:$0xff]
    %v594 = vld [vmem:[%s406 + $0x2f2] sm:$0xff]
    %v595 = vld [vmem:[%s406 + $0x302] sm:$0xff]
    %v596 = vld [vmem:[%s406 + $0x30a] sm:$0xff]
    %v597 = vld [vmem:[%s406 + $0x31a] sm:$0xff]
    %v598 = vld [vmem:[%s406 + $0x322] sm:$0xff]
    %663 = vrot.lane.b32.xlu0 %v85, 8
    %v664 = vpop.permute.xlu0 %663
    %665 = vrot.lane.b32.xlu0 %v86, 8
    %v666 = vpop.permute.xlu0 %665
    %667 = vrot.lane.b32.xlu0 %v87, 8
    %v668 = vpop.permute.xlu0 %667
    %669 = vrot.lane.b32.xlu0 %v88, 8
    %v670 = vpop.permute.xlu0 %669
    %671 = vrot.lane.b32.xlu0 %v89, 8
    %v672 = vpop.permute.xlu0 %671
    %673 = vrot.lane.b32.xlu0 %v90, 8
    %v674 = vpop.permute.xlu0 %673
    %675 = vrot.lane.b32.xlu0 %v91, 8
    %v676 = vpop.permute.xlu0 %675
    %677 = vrot.lane.b32.xlu0 %v92, 8
    %v678 = vpop.permute.xlu0 %677
    %679 = vrot.lane.b32.xlu0 %v93, 8
    %v680 = vpop.permute.xlu0 %679
    %681 = vrot.lane.b32.xlu0 %v94, 8
    %v682 = vpop.permute.xlu0 %681
    %683 = vrot.lane.b32.xlu0 %v95, 8
    %v684 = vpop.permute.xlu0 %683
    %685 = vrot.lane.b32.xlu0 %v96, 8
    %v686 = vpop.permute.xlu0 %685
    %687 = vrot.lane.b32.xlu0 %v97, 8
    %v688 = vpop.permute.xlu0 %687
    %689 = vrot.lane.b32.xlu0 %v98, 8
    %v690 = vpop.permute.xlu0 %689
    %691 = vrot.lane.b32.xlu0 %v99, 8
    %v692 = vpop.permute.xlu0 %691
    %693 = vrot.lane.b32.xlu0 %v100, 8
    %v694 = vpop.permute.xlu0 %693
    %695 = vrot.lane.b32.xlu0 %v101, 8
    %v696 = vpop.permute.xlu0 %695
    %697 = vrot.lane.b32.xlu0 %v102, 8
    %v698 = vpop.permute.xlu0 %697
    %699 = vrot.lane.b32.xlu0 %v103, 8
    %v700 = vpop.permute.xlu0 %699
    %701 = vrot.lane.b32.xlu0 %v104, 8
    %v702 = vpop.permute.xlu0 %701
    %703 = vrot.lane.b32.xlu0 %v105, 8
    %v704 = vpop.permute.xlu0 %703
    %705 = vrot.lane.b32.xlu0 %v106, 8
    %v706 = vpop.permute.xlu0 %705
    %707 = vrot.lane.b32.xlu0 %v107, 8
    %v708 = vpop.permute.xlu0 %707
    %709 = vrot.lane.b32.xlu0 %v108, 8
    %v710 = vpop.permute.xlu0 %709
    %711 = vrot.lane.b32.xlu0 %v109, 8
    %v712 = vpop.permute.xlu0 %711
    %713 = vrot.lane.b32.xlu0 %v110, 8
    %v714 = vpop.permute.xlu0 %713
    %715 = vrot.lane.b32.xlu0 %v111, 8
    %v716 = vpop.permute.xlu0 %715
    %717 = vrot.lane.b32.xlu0 %v112, 8
    %v718 = vpop.permute.xlu0 %717
    %719 = vrot.lane.b32.xlu0 %v113, 8
    %v720 = vpop.permute.xlu0 %719
    %721 = vrot.lane.b32.xlu0 %v114, 8
    %v722 = vpop.permute.xlu0 %721
    %723 = vrot.lane.b32.xlu0 %v115, 8
    %v724 = vpop.permute.xlu0 %723
    %725 = vrot.lane.b32.xlu0 %v116, 8
    %v726 = vpop.permute.xlu0 %725
    %727 = vrot.lane.b32.xlu0 %v117, 8
    %v728 = vpop.permute.xlu0 %727
    %729 = vrot.lane.b32.xlu0 %v118, 8
    %v730 = vpop.permute.xlu0 %729
    %731 = vrot.lane.b32.xlu0 %v119, 8
    %v732 = vpop.permute.xlu0 %731
    %733 = vrot.lane.b32.xlu0 %v120, 8
    %v734 = vpop.permute.xlu0 %733
    %735 = vrot.lane.b32.xlu0 %v121, 8
    %v736 = vpop.permute.xlu0 %735
    %737 = vrot.lane.b32.xlu0 %v122, 8
    %v738 = vpop.permute.xlu0 %737
    %739 = vrot.lane.b32.xlu0 %v123, 8
    %v740 = vpop.permute.xlu0 %739
    %741 = vrot.lane.b32.xlu0 %v124, 8
    %v742 = vpop.permute.xlu0 %741
    %743 = vrot.lane.b32.xlu0 %v125, 8
    %v744 = vpop.permute.xlu0 %743
    %745 = vrot.lane.b32.xlu0 %v126, 8
    %v746 = vpop.permute.xlu0 %745
    %747 = vrot.lane.b32.xlu0 %v127, 8
    %v748 = vpop.permute.xlu0 %747
    %749 = vrot.lane.b32.xlu0 %v128, 8
    %v750 = vpop.permute.xlu0 %749
    %751 = vrot.lane.b32.xlu0 %v129, 8
    %v752 = vpop.permute.xlu0 %751
    %753 = vrot.lane.b32.xlu0 %v130, 8
    %v754 = vpop.permute.xlu0 %753
    %755 = vrot.lane.b32.xlu0 %v131, 8
    %v756 = vpop.permute.xlu0 %755
    %757 = vrot.lane.b32.xlu0 %v132, 8
    %v758 = vpop.permute.xlu0 %757
    %759 = vrot.lane.b32.xlu0 %v133, 8
    %v760 = vpop.permute.xlu0 %759
    %761 = vrot.lane.b32.xlu0 %v134, 8
    %v762 = vpop.permute.xlu0 %761
    %763 = vrot.lane.b32.xlu0 %v135, 8
    %v764 = vpop.permute.xlu0 %763
    %765 = vrot.lane.b32.xlu0 %v136, 8
    %v766 = vpop.permute.xlu0 %765
    %767 = vrot.lane.b32.xlu0 %v137, 8
    %v768 = vpop.permute.xlu0 %767
    %769 = vrot.lane.b32.xlu0 %v138, 8
    %v770 = vpop.permute.xlu0 %769
    %771 = vrot.lane.b32.xlu0 %v139, 8
    %v772 = vpop.permute.xlu0 %771
    %773 = vrot.lane.b32.xlu0 %v140, 8
    %v774 = vpop.permute.xlu0 %773
    %775 = vrot.lane.b32.xlu0 %v141, 8
    %v776 = vpop.permute.xlu0 %775
    %777 = vrot.lane.b32.xlu0 %v142, 8
    %v778 = vpop.permute.xlu0 %777
    %779 = vrot.lane.b32.xlu0 %v143, 8
    %v780 = vpop.permute.xlu0 %779
    %781 = vrot.lane.b32.xlu0 %v144, 8
    %v782 = vpop.permute.xlu0 %781
    %783 = vrot.lane.b32.xlu0 %v145, 8
    %v784 = vpop.permute.xlu0 %783
    %785 = vrot.lane.b32.xlu0 %v146, 8
    %v786 = vpop.permute.xlu0 %785
    %787 = vrot.lane.b32.xlu0 %v147, 8
    %v788 = vpop.permute.xlu0 %787
    %789 = vrot.lane.b32.xlu0 %v148, 8
    %v790 = vpop.permute.xlu0 %789
    %919 = vrot.lane.b32.xlu0 %v149, 16
    %v920 = vpop.permute.xlu0 %919
    %921 = vrot.lane.b32.xlu0 %v150, 16
    %v922 = vpop.permute.xlu0 %921
    %923 = vrot.lane.b32.xlu0 %v151, 16
    %v924 = vpop.permute.xlu0 %923
    %925 = vrot.lane.b32.xlu0 %v152, 16
    %v926 = vpop.permute.xlu0 %925
    %927 = vrot.lane.b32.xlu0 %v153, 16
    %v928 = vpop.permute.xlu0 %927
    %929 = vrot.lane.b32.xlu0 %v154, 16
    %v930 = vpop.permute.xlu0 %929
    %931 = vrot.lane.b32.xlu0 %v155, 16
    %v932 = vpop.permute.xlu0 %931
    %933 = vrot.lane.b32.xlu0 %v156, 16
    %v934 = vpop.permute.xlu0 %933
    %935 = vrot.lane.b32.xlu0 %v157, 16
    %v936 = vpop.permute.xlu0 %935
    %937 = vrot.lane.b32.xlu0 %v158, 16
    %v938 = vpop.permute.xlu0 %937
    %939 = vrot.lane.b32.xlu0 %v159, 16
    %v940 = vpop.permute.xlu0 %939
    %941 = vrot.lane.b32.xlu0 %v160, 16
    %v942 = vpop.permute.xlu0 %941
    %943 = vrot.lane.b32.xlu0 %v161, 16
    %v944 = vpop.permute.xlu0 %943
    %945 = vrot.lane.b32.xlu0 %v162, 16
    %v946 = vpop.permute.xlu0 %945
    %947 = vrot.lane.b32.xlu0 %v163, 16
    %v948 = vpop.permute.xlu0 %947
    %949 = vrot.lane.b32.xlu0 %v164, 16
    %v950 = vpop.permute.xlu0 %949
    %951 = vrot.lane.b32.xlu0 %v165, 16
    %v952 = vpop.permute.xlu0 %951
    %953 = vrot.lane.b32.xlu0 %v166, 16
    %v954 = vpop.permute.xlu0 %953
    %955 = vrot.lane.b32.xlu0 %v167, 16
    %v956 = vpop.permute.xlu0 %955
    %957 = vrot.lane.b32.xlu0 %v168, 16
    %v958 = vpop.permute.xlu0 %957
    %959 = vrot.lane.b32.xlu0 %v169, 16
    %v960 = vpop.permute.xlu0 %959
    %961 = vrot.lane.b32.xlu0 %v170, 16
    %v962 = vpop.permute.xlu0 %961
    %963 = vrot.lane.b32.xlu0 %v171, 16
    %v964 = vpop.permute.xlu0 %963
    %965 = vrot.lane.b32.xlu0 %v172, 16
    %v966 = vpop.permute.xlu0 %965
    %967 = vrot.lane.b32.xlu0 %v173, 16
    %v968 = vpop.permute.xlu0 %967
    %969 = vrot.lane.b32.xlu0 %v174, 16
    %v970 = vpop.permute.xlu0 %969
    %971 = vrot.lane.b32.xlu0 %v175, 16
    %v972 = vpop.permute.xlu0 %971
    %973 = vrot.lane.b32.xlu0 %v176, 16
    %v974 = vpop.permute.xlu0 %973
    %975 = vrot.lane.b32.xlu0 %v177, 16
    %v976 = vpop.permute.xlu0 %975
    %977 = vrot.lane.b32.xlu0 %v178, 16
    %v978 = vpop.permute.xlu0 %977
    %979 = vrot.lane.b32.xlu0 %v179, 16
    %v980 = vpop.permute.xlu0 %979
    %981 = vrot.lane.b32.xlu0 %v180, 16
    %v982 = vpop.permute.xlu0 %981
    %983 = vrot.lane.b32.xlu0 %v181, 16
    %v984 = vpop.permute.xlu0 %983
    %985 = vrot.lane.b32.xlu0 %v182, 16
    %v986 = vpop.permute.xlu0 %985
    %987 = vrot.lane.b32.xlu0 %v183, 16
    %v988 = vpop.permute.xlu0 %987
    %989 = vrot.lane.b32.xlu0 %v184, 16
    %v990 = vpop.permute.xlu0 %989
    %991 = vrot.lane.b32.xlu0 %v185, 16
    %v992 = vpop.permute.xlu0 %991
    %993 = vrot.lane.b32.xlu0 %v186, 16
    %v994 = vpop.permute.xlu0 %993
    %995 = vrot.lane.b32.xlu0 %v187, 16
    %v996 = vpop.permute.xlu0 %995
    %997 = vrot.lane.b32.xlu0 %v188, 16
    %v998 = vpop.permute.xlu0 %997
    %999 = vrot.lane.b32.xlu0 %v189, 16
    %v1000 = vpop.permute.xlu0 %999
    %1001 = vrot.lane.b32.xlu0 %v190, 16
    %v1002 = vpop.permute.xlu0 %1001
    %1003 = vrot.lane.b32.xlu0 %v191, 16
    %v1004 = vpop.permute.xlu0 %1003
    %1005 = vrot.lane.b32.xlu0 %v192, 16
    %v1006 = vpop.permute.xlu0 %1005
    %1007 = vrot.lane.b32.xlu0 %v193, 16
    %v1008 = vpop.permute.xlu0 %1007
    %1009 = vrot.lane.b32.xlu0 %v194, 16
    %v1010 = vpop.permute.xlu0 %1009
    %1011 = vrot.lane.b32.xlu0 %v195, 16
    %v1012 = vpop.permute.xlu0 %1011
    %1013 = vrot.lane.b32.xlu0 %v196, 16
    %v1014 = vpop.permute.xlu0 %1013
    %1015 = vrot.lane.b32.xlu0 %v197, 16
    %v1016 = vpop.permute.xlu0 %1015
    %1017 = vrot.lane.b32.xlu0 %v198, 16
    %v1018 = vpop.permute.xlu0 %1017
    %1019 = vrot.lane.b32.xlu0 %v199, 16
    %v1020 = vpop.permute.xlu0 %1019
    %1021 = vrot.lane.b32.xlu0 %v200, 16
    %v1022 = vpop.permute.xlu0 %1021
    %1023 = vrot.lane.b32.xlu0 %v201, 16
    %v1024 = vpop.permute.xlu0 %1023
    %1025 = vrot.lane.b32.xlu0 %v202, 16
    %v1026 = vpop.permute.xlu0 %1025
    %1027 = vrot.lane.b32.xlu0 %v203, 16
    %v1028 = vpop.permute.xlu0 %1027
    %1029 = vrot.lane.b32.xlu0 %v204, 16
    %v1030 = vpop.permute.xlu0 %1029
    %1031 = vrot.lane.b32.xlu0 %v205, 16
    %v1032 = vpop.permute.xlu0 %1031
    %1033 = vrot.lane.b32.xlu0 %v206, 16
    %v1034 = vpop.permute.xlu0 %1033
    %1035 = vrot.lane.b32.xlu0 %v207, 16
    %v1036 = vpop.permute.xlu0 %1035
    %1037 = vrot.lane.b32.xlu0 %v208, 16
    %v1038 = vpop.permute.xlu0 %1037
    %1039 = vrot.lane.b32.xlu0 %v209, 16
    %v1040 = vpop.permute.xlu0 %1039
    %1041 = vrot.lane.b32.xlu0 %v210, 16
    %v1042 = vpop.permute.xlu0 %1041
    %1043 = vrot.lane.b32.xlu0 %v211, 16
    %v1044 = vpop.permute.xlu0 %1043
    %1045 = vrot.lane.b32.xlu0 %v212, 16
    %v1046 = vpop.permute.xlu0 %1045
    %1175 = vrot.lane.b32.xlu0 %v214, 24
    %v1176 = vpop.permute.xlu0 %1175
    %1177 = vrot.lane.b32.xlu0 %v215, 24
    %v1178 = vpop.permute.xlu0 %1177
    %1179 = vrot.lane.b32.xlu0 %v216, 24
    %v1180 = vpop.permute.xlu0 %1179
    %1181 = vrot.lane.b32.xlu0 %v217, 24
    %v1182 = vpop.permute.xlu0 %1181
    %1183 = vrot.lane.b32.xlu0 %v218, 24
    %v1184 = vpop.permute.xlu0 %1183
    %1185 = vrot.lane.b32.xlu0 %v219, 24
    %v1186 = vpop.permute.xlu0 %1185
    %1187 = vrot.lane.b32.xlu0 %v220, 24
    %v1188 = vpop.permute.xlu0 %1187
    %1189 = vrot.lane.b32.xlu0 %v221, 24
    %v1190 = vpop.permute.xlu0 %1189
    %1191 = vrot.lane.b32.xlu0 %v222, 24
    %v1192 = vpop.permute.xlu0 %1191
    %1193 = vrot.lane.b32.xlu0 %v223, 24
    %v1194 = vpop.permute.xlu0 %1193
    %1195 = vrot.lane.b32.xlu0 %v224, 24
    %v1196 = vpop.permute.xlu0 %1195
    %1197 = vrot.lane.b32.xlu0 %v225, 24
    %v1198 = vpop.permute.xlu0 %1197
    %1199 = vrot.lane.b32.xlu0 %v226, 24
    %v1200 = vpop.permute.xlu0 %1199
    %1201 = vrot.lane.b32.xlu0 %v227, 24
    %v1202 = vpop.permute.xlu0 %1201
    %1203 = vrot.lane.b32.xlu0 %v228, 24
    %v1204 = vpop.permute.xlu0 %1203
    %1205 = vrot.lane.b32.xlu0 %v229, 24
    %v1206 = vpop.permute.xlu0 %1205
    %1207 = vrot.lane.b32.xlu0 %v230, 24
    %v1208 = vpop.permute.xlu0 %1207
    %1209 = vrot.lane.b32.xlu0 %v231, 24
    %v1210 = vpop.permute.xlu0 %1209
    %1211 = vrot.lane.b32.xlu0 %v232, 24
    %v1212 = vpop.permute.xlu0 %1211
    %1213 = vrot.lane.b32.xlu0 %v233, 24
    %v1214 = vpop.permute.xlu0 %1213
    %1215 = vrot.lane.b32.xlu0 %v234, 24
    %v1216 = vpop.permute.xlu0 %1215
    %1217 = vrot.lane.b32.xlu0 %v235, 24
    %v1218 = vpop.permute.xlu0 %1217
    %1219 = vrot.lane.b32.xlu0 %v236, 24
    %v1220 = vpop.permute.xlu0 %1219
    %1221 = vrot.lane.b32.xlu0 %v237, 24
    %v1222 = vpop.permute.xlu0 %1221
    %1223 = vrot.lane.b32.xlu0 %v238, 24
    %v1224 = vpop.permute.xlu0 %1223
    %1225 = vrot.lane.b32.xlu0 %v239, 24
    %v1226 = vpop.permute.xlu0 %1225
    %1227 = vrot.lane.b32.xlu0 %v240, 24
    %v1228 = vpop.permute.xlu0 %1227
    %1229 = vrot.lane.b32.xlu0 %v241, 24
    %v1230 = vpop.permute.xlu0 %1229
    %1231 = vrot.lane.b32.xlu0 %v242, 24
    %v1232 = vpop.permute.xlu0 %1231
    %1233 = vrot.lane.b32.xlu0 %v243, 24
    %v1234 = vpop.permute.xlu0 %1233
    %1235 = vrot.lane.b32.xlu0 %v244, 24
    %v1236 = vpop.permute.xlu0 %1235
    %1237 = vrot.lane.b32.xlu0 %v245, 24
    %v1238 = vpop.permute.xlu0 %1237
    %1239 = vrot.lane.b32.xlu0 %v246, 24
    %v1240 = vpop.permute.xlu0 %1239
    %1241 = vrot.lane.b32.xlu0 %v247, 24
    %v1242 = vpop.permute.xlu0 %1241
    %1243 = vrot.lane.b32.xlu0 %v248, 24
    %v1244 = vpop.permute.xlu0 %1243
    %1245 = vrot.lane.b32.xlu0 %v249, 24
    %v1246 = vpop.permute.xlu0 %1245
    %1247 = vrot.lane.b32.xlu0 %v250, 24
    %v1248 = vpop.permute.xlu0 %1247
    %1249 = vrot.lane.b32.xlu0 %v251, 24
    %v1250 = vpop.permute.xlu0 %1249
    %1251 = vrot.lane.b32.xlu0 %v252, 24
    %v1252 = vpop.permute.xlu0 %1251
    %1253 = vrot.lane.b32.xlu0 %v253, 24
    %v1254 = vpop.permute.xlu0 %1253
    %1255 = vrot.lane.b32.xlu0 %v254, 24
    %v1256 = vpop.permute.xlu0 %1255
    %1257 = vrot.lane.b32.xlu0 %v255, 24
    %v1258 = vpop.permute.xlu0 %1257
    %1259 = vrot.lane.b32.xlu0 %v256, 24
    %v1260 = vpop.permute.xlu0 %1259
    %1261 = vrot.lane.b32.xlu0 %v257, 24
    %v1262 = vpop.permute.xlu0 %1261
    %1263 = vrot.lane.b32.xlu0 %v258, 24
    %v1264 = vpop.permute.xlu0 %1263
    %1265 = vrot.lane.b32.xlu0 %v259, 24
    %v1266 = vpop.permute.xlu0 %1265
    %1267 = vrot.lane.b32.xlu0 %v260, 24
    %v1268 = vpop.permute.xlu0 %1267
    %1269 = vrot.lane.b32.xlu0 %v261, 24
    %v1270 = vpop.permute.xlu0 %1269
    %1271 = vrot.lane.b32.xlu0 %v262, 24
    %v1272 = vpop.permute.xlu0 %1271
    %1273 = vrot.lane.b32.xlu0 %v263, 24
    %v1274 = vpop.permute.xlu0 %1273
    %1275 = vrot.lane.b32.xlu0 %v264, 24
    %v1276 = vpop.permute.xlu0 %1275
    %1277 = vrot.lane.b32.xlu0 %v265, 24
    %v1278 = vpop.permute.xlu0 %1277
    %1279 = vrot.lane.b32.xlu0 %v266, 24
    %v1280 = vpop.permute.xlu0 %1279
    %1281 = vrot.lane.b32.xlu0 %v267, 24
    %v1282 = vpop.permute.xlu0 %1281
    %1283 = vrot.lane.b32.xlu0 %v268, 24
    %v1284 = vpop.permute.xlu0 %1283
    %1285 = vrot.lane.b32.xlu0 %v269, 24
    %v1286 = vpop.permute.xlu0 %1285
    %1287 = vrot.lane.b32.xlu0 %v270, 24
    %v1288 = vpop.permute.xlu0 %1287
    %1289 = vrot.lane.b32.xlu0 %v271, 24
    %v1290 = vpop.permute.xlu0 %1289
    %1291 = vrot.lane.b32.xlu0 %v272, 24
    %v1292 = vpop.permute.xlu0 %1291
    %1293 = vrot.lane.b32.xlu0 %v273, 24
    %v1294 = vpop.permute.xlu0 %1293
    %1295 = vrot.lane.b32.xlu0 %v274, 24
    %v1296 = vpop.permute.xlu0 %1295
    %1297 = vrot.lane.b32.xlu0 %v275, 24
    %v1298 = vpop.permute.xlu0 %1297
    %1299 = vrot.lane.b32.xlu0 %v276, 24
    %v1300 = vpop.permute.xlu0 %1299
    %1301 = vrot.lane.b32.xlu0 %v277, 24
    %v1302 = vpop.permute.xlu0 %1301
    %1431 = vrot.lane.b32.xlu0 %v278, 32
    %v1432 = vpop.permute.xlu0 %1431
    %1433 = vrot.lane.b32.xlu0 %v279, 32
    %v1434 = vpop.permute.xlu0 %1433
    %1435 = vrot.lane.b32.xlu0 %v280, 32
    %v1436 = vpop.permute.xlu0 %1435
    %1437 = vrot.lane.b32.xlu0 %v281, 32
    %v1438 = vpop.permute.xlu0 %1437
    %1439 = vrot.lane.b32.xlu0 %v282, 32
    %v1440 = vpop.permute.xlu0 %1439
    %1441 = vrot.lane.b32.xlu0 %v283, 32
    %v1442 = vpop.permute.xlu0 %1441
    %1443 = vrot.lane.b32.xlu0 %v284, 32
    %v1444 = vpop.permute.xlu0 %1443
    %1445 = vrot.lane.b32.xlu0 %v285, 32
    %v1446 = vpop.permute.xlu0 %1445
    %1447 = vrot.lane.b32.xlu0 %v286, 32
    %v1448 = vpop.permute.xlu0 %1447
    %1449 = vrot.lane.b32.xlu0 %v287, 32
    %v1450 = vpop.permute.xlu0 %1449
    %1451 = vrot.lane.b32.xlu0 %v288, 32
    %v1452 = vpop.permute.xlu0 %1451
    %1453 = vrot.lane.b32.xlu0 %v289, 32
    %v1454 = vpop.permute.xlu0 %1453
    %1455 = vrot.lane.b32.xlu0 %v290, 32
    %v1456 = vpop.permute.xlu0 %1455
    %1457 = vrot.lane.b32.xlu0 %v291, 32
    %v1458 = vpop.permute.xlu0 %1457
    %1459 = vrot.lane.b32.xlu0 %v292, 32
    %v1460 = vpop.permute.xlu0 %1459
    %1461 = vrot.lane.b32.xlu0 %v293, 32
    %v1462 = vpop.permute.xlu0 %1461
    %1463 = vrot.lane.b32.xlu0 %v294, 32
    %v1464 = vpop.permute.xlu0 %1463
    %1465 = vrot.lane.b32.xlu0 %v295, 32
    %v1466 = vpop.permute.xlu0 %1465
    %1467 = vrot.lane.b32.xlu0 %v296, 32
    %v1468 = vpop.permute.xlu0 %1467
    %1469 = vrot.lane.b32.xlu0 %v297, 32
    %v1470 = vpop.permute.xlu0 %1469
    %1471 = vrot.lane.b32.xlu0 %v298, 32
    %v1472 = vpop.permute.xlu0 %1471
    %1473 = vrot.lane.b32.xlu0 %v299, 32
    %v1474 = vpop.permute.xlu0 %1473
    %1475 = vrot.lane.b32.xlu0 %v300, 32
    %v1476 = vpop.permute.xlu0 %1475
    %1477 = vrot.lane.b32.xlu0 %v301, 32
    %v1478 = vpop.permute.xlu0 %1477
    %1479 = vrot.lane.b32.xlu0 %v302, 32
    %v1480 = vpop.permute.xlu0 %1479
    %1481 = vrot.lane.b32.xlu0 %v303, 32
    %v1482 = vpop.permute.xlu0 %1481
    %1483 = vrot.lane.b32.xlu0 %v304, 32
    %v1484 = vpop.permute.xlu0 %1483
    %1485 = vrot.lane.b32.xlu0 %v305, 32
    %v1486 = vpop.permute.xlu0 %1485
    %1487 = vrot.lane.b32.xlu0 %v306, 32
    %v1488 = vpop.permute.xlu0 %1487
    %1489 = vrot.lane.b32.xlu0 %v307, 32
    %v1490 = vpop.permute.xlu0 %1489
    %1491 = vrot.lane.b32.xlu0 %v308, 32
    %v1492 = vpop.permute.xlu0 %1491
    %1493 = vrot.lane.b32.xlu0 %v309, 32
    %v1494 = vpop.permute.xlu0 %1493
    %1495 = vrot.lane.b32.xlu0 %v310, 32
    %v1496 = vpop.permute.xlu0 %1495
    %1497 = vrot.lane.b32.xlu0 %v311, 32
    %v1498 = vpop.permute.xlu0 %1497
    %1499 = vrot.lane.b32.xlu0 %v312, 32
    %v1500 = vpop.permute.xlu0 %1499
    %1501 = vrot.lane.b32.xlu0 %v313, 32
    %v1502 = vpop.permute.xlu0 %1501
    %1503 = vrot.lane.b32.xlu0 %v314, 32
    %v1504 = vpop.permute.xlu0 %1503
    %1505 = vrot.lane.b32.xlu0 %v315, 32
    %v1506 = vpop.permute.xlu0 %1505
    %1507 = vrot.lane.b32.xlu0 %v316, 32
    %v1508 = vpop.permute.xlu0 %1507
    %1509 = vrot.lane.b32.xlu0 %v317, 32
    %v1510 = vpop.permute.xlu0 %1509
    %1511 = vrot.lane.b32.xlu0 %v318, 32
    %v1512 = vpop.permute.xlu0 %1511
    %1513 = vrot.lane.b32.xlu0 %v319, 32
    %v1514 = vpop.permute.xlu0 %1513
    %1515 = vrot.lane.b32.xlu0 %v320, 32
    %v1516 = vpop.permute.xlu0 %1515
    %1517 = vrot.lane.b32.xlu0 %v321, 32
    %v1518 = vpop.permute.xlu0 %1517
    %1519 = vrot.lane.b32.xlu0 %v322, 32
    %v1520 = vpop.permute.xlu0 %1519
    %1521 = vrot.lane.b32.xlu0 %v323, 32
    %v1522 = vpop.permute.xlu0 %1521
    %1523 = vrot.lane.b32.xlu0 %v324, 32
    %v1524 = vpop.permute.xlu0 %1523
    %1525 = vrot.lane.b32.xlu0 %v325, 32
    %v1526 = vpop.permute.xlu0 %1525
    %1527 = vrot.lane.b32.xlu0 %v326, 32
    %v1528 = vpop.permute.xlu0 %1527
    %1529 = vrot.lane.b32.xlu0 %v327, 32
    %v1530 = vpop.permute.xlu0 %1529
    %1531 = vrot.lane.b32.xlu0 %v328, 32
    %v1532 = vpop.permute.xlu0 %1531
    %1533 = vrot.lane.b32.xlu0 %v329, 32
    %v1534 = vpop.permute.xlu0 %1533
    %1535 = vrot.lane.b32.xlu0 %v330, 32
    %v1536 = vpop.permute.xlu0 %1535
    %1537 = vrot.lane.b32.xlu0 %v331, 32
    %v1538 = vpop.permute.xlu0 %1537
    %1539 = vrot.lane.b32.xlu0 %v332, 32
    %v1540 = vpop.permute.xlu0 %1539
    %1541 = vrot.lane.b32.xlu0 %v333, 32
    %v1542 = vpop.permute.xlu0 %1541
    %1543 = vrot.lane.b32.xlu0 %v334, 32
    %v1544 = vpop.permute.xlu0 %1543
    %1545 = vrot.lane.b32.xlu0 %v335, 32
    %v1546 = vpop.permute.xlu0 %1545
    %1547 = vrot.lane.b32.xlu0 %v336, 32
    %v1548 = vpop.permute.xlu0 %1547
    %1549 = vrot.lane.b32.xlu0 %v337, 32
    %v1550 = vpop.permute.xlu0 %1549
    %1551 = vrot.lane.b32.xlu0 %v338, 32
    %v1552 = vpop.permute.xlu0 %1551
    %1553 = vrot.lane.b32.xlu0 %v339, 32
    %v1554 = vpop.permute.xlu0 %1553
    %1555 = vrot.lane.b32.xlu0 %v340, 32
    %v1556 = vpop.permute.xlu0 %1555
    %1557 = vrot.lane.b32.xlu0 %v341, 32
    %v1558 = vpop.permute.xlu0 %1557
    %1687 = vrot.lane.b32.xlu0 %v342, 40
    %v1688 = vpop.permute.xlu0 %1687
    %1689 = vrot.lane.b32.xlu0 %v343, 40
    %v1690 = vpop.permute.xlu0 %1689
    %1691 = vrot.lane.b32.xlu0 %v344, 40
    %v1692 = vpop.permute.xlu0 %1691
    %1693 = vrot.lane.b32.xlu0 %v345, 40
    %v1694 = vpop.permute.xlu0 %1693
    %1695 = vrot.lane.b32.xlu0 %v346, 40
    %v1696 = vpop.permute.xlu0 %1695
    %1697 = vrot.lane.b32.xlu0 %v347, 40
    %v1698 = vpop.permute.xlu0 %1697
    %1699 = vrot.lane.b32.xlu0 %v348, 40
    %v1700 = vpop.permute.xlu0 %1699
    %1701 = vrot.lane.b32.xlu0 %v349, 40
    %v1702 = vpop.permute.xlu0 %1701
    %1703 = vrot.lane.b32.xlu0 %v350, 40
    %v1704 = vpop.permute.xlu0 %1703
    %1705 = vrot.lane.b32.xlu0 %v351, 40
    %v1706 = vpop.permute.xlu0 %1705
    %1707 = vrot.lane.b32.xlu0 %v352, 40
    %v1708 = vpop.permute.xlu0 %1707
    %1709 = vrot.lane.b32.xlu0 %v353, 40
    %v1710 = vpop.permute.xlu0 %1709
    %1711 = vrot.lane.b32.xlu0 %v354, 40
    %v1712 = vpop.permute.xlu0 %1711
    %1713 = vrot.lane.b32.xlu0 %v355, 40
    %v1714 = vpop.permute.xlu0 %1713
    %1715 = vrot.lane.b32.xlu0 %v356, 40
    %v1716 = vpop.permute.xlu0 %1715
    %1717 = vrot.lane.b32.xlu0 %v357, 40
    %v1718 = vpop.permute.xlu0 %1717
    %1719 = vrot.lane.b32.xlu0 %v358, 40
    %v1720 = vpop.permute.xlu0 %1719
    %1721 = vrot.lane.b32.xlu0 %v359, 40
    %v1722 = vpop.permute.xlu0 %1721
    %1723 = vrot.lane.b32.xlu0 %v360, 40
    %v1724 = vpop.permute.xlu0 %1723
    %1725 = vrot.lane.b32.xlu0 %v361, 40
    %v1726 = vpop.permute.xlu0 %1725
    %1727 = vrot.lane.b32.xlu0 %v362, 40
    %v1728 = vpop.permute.xlu0 %1727
    %1729 = vrot.lane.b32.xlu0 %v363, 40
    %v1730 = vpop.permute.xlu0 %1729
    %1731 = vrot.lane.b32.xlu0 %v364, 40
    %v1732 = vpop.permute.xlu0 %1731
    %1733 = vrot.lane.b32.xlu0 %v365, 40
    %v1734 = vpop.permute.xlu0 %1733
    %1735 = vrot.lane.b32.xlu0 %v366, 40
    %v1736 = vpop.permute.xlu0 %1735
    %1737 = vrot.lane.b32.xlu0 %v367, 40
    %v1738 = vpop.permute.xlu0 %1737
    %1739 = vrot.lane.b32.xlu0 %v368, 40
    %v1740 = vpop.permute.xlu0 %1739
    %1741 = vrot.lane.b32.xlu0 %v369, 40
    %v1742 = vpop.permute.xlu0 %1741
    %1743 = vrot.lane.b32.xlu0 %v370, 40
    %v1744 = vpop.permute.xlu0 %1743
    %1745 = vrot.lane.b32.xlu0 %v371, 40
    %v1746 = vpop.permute.xlu0 %1745
    %1747 = vrot.lane.b32.xlu0 %v372, 40
    %v1748 = vpop.permute.xlu0 %1747
    %1749 = vrot.lane.b32.xlu0 %v373, 40
    %v1750 = vpop.permute.xlu0 %1749
    %1751 = vrot.lane.b32.xlu0 %v374, 40
    %v1752 = vpop.permute.xlu0 %1751
    %1753 = vrot.lane.b32.xlu0 %v375, 40
    %v1754 = vpop.permute.xlu0 %1753
    %1755 = vrot.lane.b32.xlu0 %v376, 40
    %v1756 = vpop.permute.xlu0 %1755
    %1757 = vrot.lane.b32.xlu0 %v377, 40
    %v1758 = vpop.permute.xlu0 %1757
    %1759 = vrot.lane.b32.xlu0 %v378, 40
    %v1760 = vpop.permute.xlu0 %1759
    %1761 = vrot.lane.b32.xlu0 %v379, 40
    %v1762 = vpop.permute.xlu0 %1761
    %1763 = vrot.lane.b32.xlu0 %v380, 40
    %v1764 = vpop.permute.xlu0 %1763
    %1765 = vrot.lane.b32.xlu0 %v381, 40
    %v1766 = vpop.permute.xlu0 %1765
    %1767 = vrot.lane.b32.xlu0 %v382, 40
    %v1768 = vpop.permute.xlu0 %1767
    %1769 = vrot.lane.b32.xlu0 %v383, 40
    %v1770 = vpop.permute.xlu0 %1769
    %1771 = vrot.lane.b32.xlu0 %v384, 40
    %v1772 = vpop.permute.xlu0 %1771
    %1773 = vrot.lane.b32.xlu0 %v385, 40
    %v1774 = vpop.permute.xlu0 %1773
    %1775 = vrot.lane.b32.xlu0 %v386, 40
    %v1776 = vpop.permute.xlu0 %1775
    %1777 = vrot.lane.b32.xlu0 %v387, 40
    %v1778 = vpop.permute.xlu0 %1777
    %1779 = vrot.lane.b32.xlu0 %v388, 40
    %v1780 = vpop.permute.xlu0 %1779
    %1781 = vrot.lane.b32.xlu0 %v389, 40
    %v1782 = vpop.permute.xlu0 %1781
    %1783 = vrot.lane.b32.xlu0 %v390, 40
    %v1784 = vpop.permute.xlu0 %1783
    %1785 = vrot.lane.b32.xlu0 %v391, 40
    %v1786 = vpop.permute.xlu0 %1785
    %1787 = vrot.lane.b32.xlu0 %v392, 40
    %v1788 = vpop.permute.xlu0 %1787
    %1789 = vrot.lane.b32.xlu0 %v393, 40
    %v1790 = vpop.permute.xlu0 %1789
    %1791 = vrot.lane.b32.xlu0 %v394, 40
    %v1792 = vpop.permute.xlu0 %1791
    %1793 = vrot.lane.b32.xlu0 %v395, 40
    %v1794 = vpop.permute.xlu0 %1793
    %1795 = vrot.lane.b32.xlu0 %v396, 40
    %v1796 = vpop.permute.xlu0 %1795
    %1797 = vrot.lane.b32.xlu0 %v397, 40
    %v1798 = vpop.permute.xlu0 %1797
    %1799 = vrot.lane.b32.xlu0 %v398, 40
    %v1800 = vpop.permute.xlu0 %1799
    %1801 = vrot.lane.b32.xlu0 %v399, 40
    %v1802 = vpop.permute.xlu0 %1801
    %1803 = vrot.lane.b32.xlu0 %v400, 40
    %v1804 = vpop.permute.xlu0 %1803
    %1805 = vrot.lane.b32.xlu0 %v401, 40
    %v1806 = vpop.permute.xlu0 %1805
    %1807 = vrot.lane.b32.xlu0 %v402, 40
    %v1808 = vpop.permute.xlu0 %1807
    %1809 = vrot.lane.b32.xlu0 %v403, 40
    %v1810 = vpop.permute.xlu0 %1809
    %1811 = vrot.lane.b32.xlu0 %v404, 40
    %v1812 = vpop.permute.xlu0 %1811
    %1813 = vrot.lane.b32.xlu0 %v405, 40
    %v1814 = vpop.permute.xlu0 %1813
    %1943 = vrot.lane.b32.xlu0 %v407, 48
    %v1944 = vpop.permute.xlu0 %1943
    %1945 = vrot.lane.b32.xlu0 %v408, 48
    %v1946 = vpop.permute.xlu0 %1945
    %1947 = vrot.lane.b32.xlu0 %v409, 48
    %v1948 = vpop.permute.xlu0 %1947
    %1949 = vrot.lane.b32.xlu0 %v410, 48
    %v1950 = vpop.permute.xlu0 %1949
    %1951 = vrot.lane.b32.xlu0 %v411, 48
    %v1952 = vpop.permute.xlu0 %1951
    %1953 = vrot.lane.b32.xlu0 %v412, 48
    %v1954 = vpop.permute.xlu0 %1953
    %1955 = vrot.lane.b32.xlu0 %v413, 48
    %v1956 = vpop.permute.xlu0 %1955
    %1957 = vrot.lane.b32.xlu0 %v414, 48
    %v1958 = vpop.permute.xlu0 %1957
    %1959 = vrot.lane.b32.xlu0 %v415, 48
    %v1960 = vpop.permute.xlu0 %1959
    %1961 = vrot.lane.b32.xlu0 %v416, 48
    %v1962 = vpop.permute.xlu0 %1961
    %1963 = vrot.lane.b32.xlu0 %v417, 48
    %v1964 = vpop.permute.xlu0 %1963
    %1965 = vrot.lane.b32.xlu0 %v418, 48
    %v1966 = vpop.permute.xlu0 %1965
    %1967 = vrot.lane.b32.xlu0 %v419, 48
    %v1968 = vpop.permute.xlu0 %1967
    %1969 = vrot.lane.b32.xlu0 %v420, 48
    %v1970 = vpop.permute.xlu0 %1969
    %1971 = vrot.lane.b32.xlu0 %v421, 48
    %v1972 = vpop.permute.xlu0 %1971
    %1973 = vrot.lane.b32.xlu0 %v422, 48
    %v1974 = vpop.permute.xlu0 %1973
    %1975 = vrot.lane.b32.xlu0 %v423, 48
    %v1976 = vpop.permute.xlu0 %1975
    %1977 = vrot.lane.b32.xlu0 %v424, 48
    %v1978 = vpop.permute.xlu0 %1977
    %1979 = vrot.lane.b32.xlu0 %v425, 48
    %v1980 = vpop.permute.xlu0 %1979
    %1981 = vrot.lane.b32.xlu0 %v426, 48
    %v1982 = vpop.permute.xlu0 %1981
    %1983 = vrot.lane.b32.xlu0 %v427, 48
    %v1984 = vpop.permute.xlu0 %1983
    %1985 = vrot.lane.b32.xlu0 %v428, 48
    %v1986 = vpop.permute.xlu0 %1985
    %1987 = vrot.lane.b32.xlu0 %v429, 48
    %v1988 = vpop.permute.xlu0 %1987
    %1989 = vrot.lane.b32.xlu0 %v430, 48
    %v1990 = vpop.permute.xlu0 %1989
    %1991 = vrot.lane.b32.xlu0 %v431, 48
    %v1992 = vpop.permute.xlu0 %1991
    %1993 = vrot.lane.b32.xlu0 %v432, 48
    %v1994 = vpop.permute.xlu0 %1993
    %1995 = vrot.lane.b32.xlu0 %v433, 48
    %v1996 = vpop.permute.xlu0 %1995
    %1997 = vrot.lane.b32.xlu0 %v434, 48
    %v1998 = vpop.permute.xlu0 %1997
    %1999 = vrot.lane.b32.xlu0 %v435, 48
    %v2000 = vpop.permute.xlu0 %1999
    %2001 = vrot.lane.b32.xlu0 %v436, 48
    %v2002 = vpop.permute.xlu0 %2001
    %2003 = vrot.lane.b32.xlu0 %v437, 48
    %v2004 = vpop.permute.xlu0 %2003
    %2005 = vrot.lane.b32.xlu0 %v438, 48
    %v2006 = vpop.permute.xlu0 %2005
    %2007 = vrot.lane.b32.xlu0 %v439, 48
    %v2008 = vpop.permute.xlu0 %2007
    %2009 = vrot.lane.b32.xlu0 %v440, 48
    %v2010 = vpop.permute.xlu0 %2009
    %2011 = vrot.lane.b32.xlu0 %v441, 48
    %v2012 = vpop.permute.xlu0 %2011
    %2013 = vrot.lane.b32.xlu0 %v442, 48
    %v2014 = vpop.permute.xlu0 %2013
    %2015 = vrot.lane.b32.xlu0 %v443, 48
    %v2016 = vpop.permute.xlu0 %2015
    %2017 = vrot.lane.b32.xlu0 %v444, 48
    %v2018 = vpop.permute.xlu0 %2017
    %2019 = vrot.lane.b32.xlu0 %v445, 48
    %v2020 = vpop.permute.xlu0 %2019
    %2021 = vrot.lane.b32.xlu0 %v446, 48
    %v2022 = vpop.permute.xlu0 %2021
    %2023 = vrot.lane.b32.xlu0 %v447, 48
    %v2024 = vpop.permute.xlu0 %2023
    %2025 = vrot.lane.b32.xlu0 %v448, 48
    %v2026 = vpop.permute.xlu0 %2025
    %2027 = vrot.lane.b32.xlu0 %v449, 48
    %v2028 = vpop.permute.xlu0 %2027
    %2029 = vrot.lane.b32.xlu0 %v450, 48
    %v2030 = vpop.permute.xlu0 %2029
    %2031 = vrot.lane.b32.xlu0 %v451, 48
    %v2032 = vpop.permute.xlu0 %2031
    %2033 = vrot.lane.b32.xlu0 %v452, 48
    %v2034 = vpop.permute.xlu0 %2033
    %2035 = vrot.lane.b32.xlu0 %v453, 48
    %v2036 = vpop.permute.xlu0 %2035
    %2037 = vrot.lane.b32.xlu0 %v454, 48
    %v2038 = vpop.permute.xlu0 %2037
    %2039 = vrot.lane.b32.xlu0 %v455, 48
    %v2040 = vpop.permute.xlu0 %2039
    %2041 = vrot.lane.b32.xlu0 %v456, 48
    %v2042 = vpop.permute.xlu0 %2041
    %2043 = vrot.lane.b32.xlu0 %v457, 48
    %v2044 = vpop.permute.xlu0 %2043
    %2045 = vrot.lane.b32.xlu0 %v458, 48
    %v2046 = vpop.permute.xlu0 %2045
    %2047 = vrot.lane.b32.xlu0 %v459, 48
    %v2048 = vpop.permute.xlu0 %2047
    %2049 = vrot.lane.b32.xlu0 %v460, 48
    %v2050 = vpop.permute.xlu0 %2049
    %2051 = vrot.lane.b32.xlu0 %v461, 48
    %v2052 = vpop.permute.xlu0 %2051
    %2053 = vrot.lane.b32.xlu0 %v462, 48
    %v2054 = vpop.permute.xlu0 %2053
    %2055 = vrot.lane.b32.xlu0 %v463, 48
    %v2056 = vpop.permute.xlu0 %2055
    %2057 = vrot.lane.b32.xlu0 %v464, 48
    %v2058 = vpop.permute.xlu0 %2057
    %2059 = vrot.lane.b32.xlu0 %v465, 48
    %v2060 = vpop.permute.xlu0 %2059
    %2061 = vrot.lane.b32.xlu0 %v466, 48
    %v2062 = vpop.permute.xlu0 %2061
    %2063 = vrot.lane.b32.xlu0 %v467, 48
    %v2064 = vpop.permute.xlu0 %2063
    %2065 = vrot.lane.b32.xlu0 %v468, 48
    %v2066 = vpop.permute.xlu0 %2065
    %2067 = vrot.lane.b32.xlu0 %v469, 48
    %v2068 = vpop.permute.xlu0 %2067
    %2069 = vrot.lane.b32.xlu0 %v470, 48
    %v2070 = vpop.permute.xlu0 %2069
    %2199 = vrot.lane.b32.xlu0 %v471, 56
    %v2200 = vpop.permute.xlu0 %2199
    %2201 = vrot.lane.b32.xlu0 %v472, 56
    %v2202 = vpop.permute.xlu0 %2201
    %2203 = vrot.lane.b32.xlu0 %v473, 56
    %v2204 = vpop.permute.xlu0 %2203
    %2205 = vrot.lane.b32.xlu0 %v474, 56
    %v2206 = vpop.permute.xlu0 %2205
    %2207 = vrot.lane.b32.xlu0 %v475, 56
    %v2208 = vpop.permute.xlu0 %2207
    %2209 = vrot.lane.b32.xlu0 %v476, 56
    %v2210 = vpop.permute.xlu0 %2209
    %2211 = vrot.lane.b32.xlu0 %v477, 56
    %v2212 = vpop.permute.xlu0 %2211
    %2213 = vrot.lane.b32.xlu0 %v478, 56
    %v2214 = vpop.permute.xlu0 %2213
    %2215 = vrot.lane.b32.xlu0 %v479, 56
    %v2216 = vpop.permute.xlu0 %2215
    %2217 = vrot.lane.b32.xlu0 %v480, 56
    %v2218 = vpop.permute.xlu0 %2217
    %2219 = vrot.lane.b32.xlu0 %v481, 56
    %v2220 = vpop.permute.xlu0 %2219
    %2221 = vrot.lane.b32.xlu0 %v482, 56
    %v2222 = vpop.permute.xlu0 %2221
    %2223 = vrot.lane.b32.xlu0 %v483, 56
    %v2224 = vpop.permute.xlu0 %2223
    %2225 = vrot.lane.b32.xlu0 %v484, 56
    %v2226 = vpop.permute.xlu0 %2225
    %2227 = vrot.lane.b32.xlu0 %v485, 56
    %v2228 = vpop.permute.xlu0 %2227
    %2229 = vrot.lane.b32.xlu0 %v486, 56
    %v2230 = vpop.permute.xlu0 %2229
    %2231 = vrot.lane.b32.xlu0 %v487, 56
    %v2232 = vpop.permute.xlu0 %2231
    %2233 = vrot.lane.b32.xlu0 %v488, 56
    %v2234 = vpop.permute.xlu0 %2233
    %2235 = vrot.lane.b32.xlu0 %v489, 56
    %v2236 = vpop.permute.xlu0 %2235
    %2237 = vrot.lane.b32.xlu0 %v490, 56
    %v2238 = vpop.permute.xlu0 %2237
    %2239 = vrot.lane.b32.xlu0 %v491, 56
    %v2240 = vpop.permute.xlu0 %2239
    %2241 = vrot.lane.b32.xlu0 %v492, 56
    %v2242 = vpop.permute.xlu0 %2241
    %2243 = vrot.lane.b32.xlu0 %v493, 56
    %v2244 = vpop.permute.xlu0 %2243
    %2245 = vrot.lane.b32.xlu0 %v494, 56
    %v2246 = vpop.permute.xlu0 %2245
    %2247 = vrot.lane.b32.xlu0 %v495, 56
    %v2248 = vpop.permute.xlu0 %2247
    %2249 = vrot.lane.b32.xlu0 %v496, 56
    %v2250 = vpop.permute.xlu0 %2249
    %2251 = vrot.lane.b32.xlu0 %v497, 56
    %v2252 = vpop.permute.xlu0 %2251
    %2253 = vrot.lane.b32.xlu0 %v498, 56
    %v2254 = vpop.permute.xlu0 %2253
    %2255 = vrot.lane.b32.xlu0 %v499, 56
    %v2256 = vpop.permute.xlu0 %2255
    %2257 = vrot.lane.b32.xlu0 %v500, 56
    %v2258 = vpop.permute.xlu0 %2257
    %2259 = vrot.lane.b32.xlu0 %v501, 56
    %v2260 = vpop.permute.xlu0 %2259
    %2261 = vrot.lane.b32.xlu0 %v502, 56
    %v2262 = vpop.permute.xlu0 %2261
    %2263 = vrot.lane.b32.xlu0 %v503, 56
    %v2264 = vpop.permute.xlu0 %2263
    %2265 = vrot.lane.b32.xlu0 %v504, 56
    %v2266 = vpop.permute.xlu0 %2265
    %2267 = vrot.lane.b32.xlu0 %v505, 56
    %v2268 = vpop.permute.xlu0 %2267
    %2269 = vrot.lane.b32.xlu0 %v506, 56
    %v2270 = vpop.permute.xlu0 %2269
    %2271 = vrot.lane.b32.xlu0 %v507, 56
    %v2272 = vpop.permute.xlu0 %2271
    %2273 = vrot.lane.b32.xlu0 %v508, 56
    %v2274 = vpop.permute.xlu0 %2273
    %2275 = vrot.lane.b32.xlu0 %v509, 56
    %v2276 = vpop.permute.xlu0 %2275
    %2277 = vrot.lane.b32.xlu0 %v510, 56
    %v2278 = vpop.permute.xlu0 %2277
    %2279 = vrot.lane.b32.xlu0 %v511, 56
    %v2280 = vpop.permute.xlu0 %2279
    %2281 = vrot.lane.b32.xlu0 %v512, 56
    %v2282 = vpop.permute.xlu0 %2281
    %2283 = vrot.lane.b32.xlu0 %v513, 56
    %v2284 = vpop.permute.xlu0 %2283
    %2285 = vrot.lane.b32.xlu0 %v514, 56
    %v2286 = vpop.permute.xlu0 %2285
    %2287 = vrot.lane.b32.xlu0 %v515, 56
    %v2288 = vpop.permute.xlu0 %2287
    %2289 = vrot.lane.b32.xlu0 %v516, 56
    %v2290 = vpop.permute.xlu0 %2289
    %2291 = vrot.lane.b32.xlu0 %v517, 56
    %v2292 = vpop.permute.xlu0 %2291
    %2293 = vrot.lane.b32.xlu0 %v518, 56
    %v2294 = vpop.permute.xlu0 %2293
    %2295 = vrot.lane.b32.xlu0 %v519, 56
    %v2296 = vpop.permute.xlu0 %2295
    %2297 = vrot.lane.b32.xlu0 %v520, 56
    %v2298 = vpop.permute.xlu0 %2297
    %2299 = vrot.lane.b32.xlu0 %v521, 56
    %v2300 = vpop.permute.xlu0 %2299
    %2301 = vrot.lane.b32.xlu0 %v522, 56
    %v2302 = vpop.permute.xlu0 %2301
    %2303 = vrot.lane.b32.xlu0 %v523, 56
    %v2304 = vpop.permute.xlu0 %2303
    %2305 = vrot.lane.b32.xlu0 %v524, 56
    %v2306 = vpop.permute.xlu0 %2305
    %2307 = vrot.lane.b32.xlu0 %v525, 56
    %v2308 = vpop.permute.xlu0 %2307
    %2309 = vrot.lane.b32.xlu0 %v526, 56
    %v2310 = vpop.permute.xlu0 %2309
    %2311 = vrot.lane.b32.xlu0 %v527, 56
    %v2312 = vpop.permute.xlu0 %2311
    %2313 = vrot.lane.b32.xlu0 %v528, 56
    %v2314 = vpop.permute.xlu0 %2313
    %2315 = vrot.lane.b32.xlu0 %v529, 56
    %v2316 = vpop.permute.xlu0 %2315
    %2317 = vrot.lane.b32.xlu0 %v530, 56
    %v2318 = vpop.permute.xlu0 %2317
    %2319 = vrot.lane.b32.xlu0 %v531, 56
    %v2320 = vpop.permute.xlu0 %2319
    %2321 = vrot.lane.b32.xlu0 %v532, 56
    %v2322 = vpop.permute.xlu0 %2321
    %2323 = vrot.lane.b32.xlu0 %v533, 56
    %v2324 = vpop.permute.xlu0 %2323
    %2325 = vrot.lane.b32.xlu0 %v534, 56
    %v2326 = vpop.permute.xlu0 %2325
    %2455 = vrot.lane.b32.xlu0 %v535, 64
    %v2456 = vpop.permute.xlu0 %2455
    %2457 = vrot.lane.b32.xlu0 %v536, 64
    %v2458 = vpop.permute.xlu0 %2457
    %2459 = vrot.lane.b32.xlu0 %v537, 64
    %v2460 = vpop.permute.xlu0 %2459
    %2461 = vrot.lane.b32.xlu0 %v538, 64
    %v2462 = vpop.permute.xlu0 %2461
    %2463 = vrot.lane.b32.xlu0 %v539, 64
    %v2464 = vpop.permute.xlu0 %2463
    %2465 = vrot.lane.b32.xlu0 %v540, 64
    %v2466 = vpop.permute.xlu0 %2465
    %2467 = vrot.lane.b32.xlu0 %v541, 64
    %v2468 = vpop.permute.xlu0 %2467
    %2469 = vrot.lane.b32.xlu0 %v542, 64
    %v2470 = vpop.permute.xlu0 %2469
    %2471 = vrot.lane.b32.xlu0 %v543, 64
    %v2472 = vpop.permute.xlu0 %2471
    %2473 = vrot.lane.b32.xlu0 %v544, 64
    %v2474 = vpop.permute.xlu0 %2473
    %2475 = vrot.lane.b32.xlu0 %v545, 64
    %v2476 = vpop.permute.xlu0 %2475
    %2477 = vrot.lane.b32.xlu0 %v546, 64
    %v2478 = vpop.permute.xlu0 %2477
    %2479 = vrot.lane.b32.xlu0 %v547, 64
    %v2480 = vpop.permute.xlu0 %2479
    %2481 = vrot.lane.b32.xlu0 %v548, 64
    %v2482 = vpop.permute.xlu0 %2481
    %2483 = vrot.lane.b32.xlu0 %v549, 64
    %v2484 = vpop.permute.xlu0 %2483
    %2485 = vrot.lane.b32.xlu0 %v550, 64
    %v2486 = vpop.permute.xlu0 %2485
    %2487 = vrot.lane.b32.xlu0 %v551, 64
    %v2488 = vpop.permute.xlu0 %2487
    %2489 = vrot.lane.b32.xlu0 %v552, 64
    %v2490 = vpop.permute.xlu0 %2489
    %2491 = vrot.lane.b32.xlu0 %v553, 64
    %v2492 = vpop.permute.xlu0 %2491
    %2493 = vrot.lane.b32.xlu0 %v554, 64
    %v2494 = vpop.permute.xlu0 %2493
    %2495 = vrot.lane.b32.xlu0 %v555, 64
    %v2496 = vpop.permute.xlu0 %2495
    %2497 = vrot.lane.b32.xlu0 %v556, 64
    %v2498 = vpop.permute.xlu0 %2497
    %2499 = vrot.lane.b32.xlu0 %v557, 64
    %v2500 = vpop.permute.xlu0 %2499
    %2501 = vrot.lane.b32.xlu0 %v558, 64
    %v2502 = vpop.permute.xlu0 %2501
    %2503 = vrot.lane.b32.xlu0 %v559, 64
    %v2504 = vpop.permute.xlu0 %2503
    %2505 = vrot.lane.b32.xlu0 %v560, 64
    %v2506 = vpop.permute.xlu0 %2505
    %2507 = vrot.lane.b32.xlu0 %v561, 64
    %v2508 = vpop.permute.xlu0 %2507
    %2509 = vrot.lane.b32.xlu0 %v562, 64
    %v2510 = vpop.permute.xlu0 %2509
    %2511 = vrot.lane.b32.xlu0 %v563, 64
    %v2512 = vpop.permute.xlu0 %2511
    %2513 = vrot.lane.b32.xlu0 %v564, 64
    %v2514 = vpop.permute.xlu0 %2513
    %2515 = vrot.lane.b32.xlu0 %v565, 64
    %v2516 = vpop.permute.xlu0 %2515
    %2517 = vrot.lane.b32.xlu0 %v566, 64
    %v2518 = vpop.permute.xlu0 %2517
    %2519 = vrot.lane.b32.xlu0 %v567, 64
    %v2520 = vpop.permute.xlu0 %2519
    %2521 = vrot.lane.b32.xlu0 %v568, 64
    %v2522 = vpop.permute.xlu0 %2521
    %2523 = vrot.lane.b32.xlu0 %v569, 64
    %v2524 = vpop.permute.xlu0 %2523
    %2525 = vrot.lane.b32.xlu0 %v570, 64
    %v2526 = vpop.permute.xlu0 %2525
    %2527 = vrot.lane.b32.xlu0 %v571, 64
    %v2528 = vpop.permute.xlu0 %2527
    %2529 = vrot.lane.b32.xlu0 %v572, 64
    %v2530 = vpop.permute.xlu0 %2529
    %2531 = vrot.lane.b32.xlu0 %v573, 64
    %v2532 = vpop.permute.xlu0 %2531
    %2533 = vrot.lane.b32.xlu0 %v574, 64
    %v2534 = vpop.permute.xlu0 %2533
    %2535 = vrot.lane.b32.xlu0 %v575, 64
    %v2536 = vpop.permute.xlu0 %2535
    %2537 = vrot.lane.b32.xlu0 %v576, 64
    %v2538 = vpop.permute.xlu0 %2537
    %2539 = vrot.lane.b32.xlu0 %v577, 64
    %v2540 = vpop.permute.xlu0 %2539
    %2541 = vrot.lane.b32.xlu0 %v578, 64
    %v2542 = vpop.permute.xlu0 %2541
    %2543 = vrot.lane.b32.xlu0 %v579, 64
    %v2544 = vpop.permute.xlu0 %2543
    %2545 = vrot.lane.b32.xlu0 %v580, 64
    %v2546 = vpop.permute.xlu0 %2545
    %2547 = vrot.lane.b32.xlu0 %v581, 64
    %v2548 = vpop.permute.xlu0 %2547
    %2549 = vrot.lane.b32.xlu0 %v582, 64
    %v2550 = vpop.permute.xlu0 %2549
    %2551 = vrot.lane.b32.xlu0 %v583, 64
    %v2552 = vpop.permute.xlu0 %2551
    %2553 = vrot.lane.b32.xlu0 %v584, 64
    %v2554 = vpop.permute.xlu0 %2553
    %2555 = vrot.lane.b32.xlu0 %v585, 64
    %v2556 = vpop.permute.xlu0 %2555
    %2557 = vrot.lane.b32.xlu0 %v586, 64
    %v2558 = vpop.permute.xlu0 %2557
    %2559 = vrot.lane.b32.xlu0 %v587, 64
    %v2560 = vpop.permute.xlu0 %2559
    %2561 = vrot.lane.b32.xlu0 %v588, 64
    %v2562 = vpop.permute.xlu0 %2561
    %2563 = vrot.lane.b32.xlu0 %v589, 64
    %v2564 = vpop.permute.xlu0 %2563
    %2565 = vrot.lane.b32.xlu0 %v590, 64
    %v2566 = vpop.permute.xlu0 %2565
    %2567 = vrot.lane.b32.xlu0 %v591, 64
    %v2568 = vpop.permute.xlu0 %2567
    %2569 = vrot.lane.b32.xlu0 %v592, 64
    %v2570 = vpop.permute.xlu0 %2569
    %2571 = vrot.lane.b32.xlu0 %v593, 64
    %v2572 = vpop.permute.xlu0 %2571
    %2573 = vrot.lane.b32.xlu0 %v594, 64
    %v2574 = vpop.permute.xlu0 %2573
    %2575 = vrot.lane.b32.xlu0 %v595, 64
    %v2576 = vpop.permute.xlu0 %2575
    %2577 = vrot.lane.b32.xlu0 %v596, 64
    %v2578 = vpop.permute.xlu0 %2577
    %2579 = vrot.lane.b32.xlu0 %v597, 64
    %v2580 = vpop.permute.xlu0 %2579
    %2581 = vrot.lane.b32.xlu0 %v598, 64
    %v2582 = vpop.permute.xlu0 %2581
    %vm2647 = vcmask 64512
    %v2648 = vsel %vm2647, %v21, %v664
    %v2649 = vsel %vm2647, %v22, %v666
    %v2650 = vsel %vm2647, %v23, %v668
    %v2651 = vsel %vm2647, %v24, %v670
    %v2652 = vsel %vm2647, %v25, %v672
    %v2653 = vsel %vm2647, %v26, %v674
    %v2654 = vsel %vm2647, %v27, %v676
    %v2655 = vsel %vm2647, %v28, %v678
    %v2656 = vsel %vm2647, %v29, %v680
    %v2657 = vsel %vm2647, %v30, %v682
    %v2658 = vsel %vm2647, %v31, %v684
    %v2659 = vsel %vm2647, %v32, %v686
    %v2660 = vsel %vm2647, %v33, %v688
    %v2661 = vsel %vm2647, %v34, %v690
    %v2662 = vsel %vm2647, %v35, %v692
    %v2663 = vsel %vm2647, %v36, %v694
    %v2664 = vsel %vm2647, %v37, %v696
    %v2665 = vsel %vm2647, %v38, %v698
    %v2666 = vsel %vm2647, %v39, %v700
    %v2667 = vsel %vm2647, %v40, %v702
    %v2668 = vsel %vm2647, %v41, %v704
    %v2669 = vsel %vm2647, %v42, %v706
    %v2670 = vsel %vm2647, %v43, %v708
    %v2671 = vsel %vm2647, %v44, %v710
    %v2672 = vsel %vm2647, %v45, %v712
    %v2673 = vsel %vm2647, %v46, %v714
    %v2674 = vsel %vm2647, %v47, %v716
    %v2675 = vsel %vm2647, %v48, %v718
    %v2676 = vsel %vm2647, %v49, %v720
    %v2677 = vsel %vm2647, %v50, %v722
    %v2678 = vsel %vm2647, %v51, %v724
    %v2679 = vsel %vm2647, %v52, %v726
    %v2680 = vsel %vm2647, %v53, %v728
    %v2681 = vsel %vm2647, %v54, %v730
    %v2682 = vsel %vm2647, %v55, %v732
    %v2683 = vsel %vm2647, %v56, %v734
    %v2684 = vsel %vm2647, %v57, %v736
    %v2685 = vsel %vm2647, %v58, %v738
    %v2686 = vsel %vm2647, %v59, %v740
    %v2687 = vsel %vm2647, %v60, %v742
    %v2688 = vsel %vm2647, %v61, %v744
    %v2689 = vsel %vm2647, %v62, %v746
    %v2690 = vsel %vm2647, %v63, %v748
    %v2691 = vsel %vm2647, %v64, %v750
    %v2692 = vsel %vm2647, %v65, %v752
    %v2693 = vsel %vm2647, %v66, %v754
    %v2694 = vsel %vm2647, %v67, %v756
    %v2695 = vsel %vm2647, %v68, %v758
    %v2696 = vsel %vm2647, %v69, %v760
    %v2697 = vsel %vm2647, %v70, %v762
    %v2698 = vsel %vm2647, %v71, %v764
    %v2699 = vsel %vm2647, %v72, %v766
    %v2700 = vsel %vm2647, %v73, %v768
    %v2701 = vsel %vm2647, %v74, %v770
    %v2702 = vsel %vm2647, %v75, %v772
    %v2703 = vsel %vm2647, %v76, %v774
    %v2704 = vsel %vm2647, %v77, %v776
    %v2705 = vsel %vm2647, %v78, %v778
    %v2706 = vsel %vm2647, %v79, %v780
    %v2707 = vsel %vm2647, %v80, %v782
    %v2708 = vsel %vm2647, %v81, %v784
    %v2709 = vsel %vm2647, %v82, %v786
    %v2710 = vsel %vm2647, %v83, %v788
    %v2711 = vsel %vm2647, %v84, %v790
    %vm2712 = vcmask 130048
    %v2713 = vsel %vm2712, %v2648, %v920
    %v2714 = vsel %vm2712, %v2649, %v922
    %v2715 = vsel %vm2712, %v2650, %v924
    %v2716 = vsel %vm2712, %v2651, %v926
    %v2717 = vsel %vm2712, %v2652, %v928
    %v2718 = vsel %vm2712, %v2653, %v930
    %v2719 = vsel %vm2712, %v2654, %v932
    %v2720 = vsel %vm2712, %v2655, %v934
    %v2721 = vsel %vm2712, %v2656, %v936
    %v2722 = vsel %vm2712, %v2657, %v938
    %v2723 = vsel %vm2712, %v2658, %v940
    %v2724 = vsel %vm2712, %v2659, %v942
    %v2725 = vsel %vm2712, %v2660, %v944
    %v2726 = vsel %vm2712, %v2661, %v946
    %v2727 = vsel %vm2712, %v2662, %v948
    %v2728 = vsel %vm2712, %v2663, %v950
    %v2729 = vsel %vm2712, %v2664, %v952
    %v2730 = vsel %vm2712, %v2665, %v954
    %v2731 = vsel %vm2712, %v2666, %v956
    %v2732 = vsel %vm2712, %v2667, %v958
    %v2733 = vsel %vm2712, %v2668, %v960
    %v2734 = vsel %vm2712, %v2669, %v962
    %v2735 = vsel %vm2712, %v2670, %v964
    %v2736 = vsel %vm2712, %v2671, %v966
    %v2737 = vsel %vm2712, %v2672, %v968
    %v2738 = vsel %vm2712, %v2673, %v970
    %v2739 = vsel %vm2712, %v2674, %v972
    %v2740 = vsel %vm2712, %v2675, %v974
    %v2741 = vsel %vm2712, %v2676, %v976
    %v2742 = vsel %vm2712, %v2677, %v978
    %v2743 = vsel %vm2712, %v2678, %v980
    %v2744 = vsel %vm2712, %v2679, %v982
    %v2745 = vsel %vm2712, %v2680, %v984
    %v2746 = vsel %vm2712, %v2681, %v986
    %v2747 = vsel %vm2712, %v2682, %v988
    %v2748 = vsel %vm2712, %v2683, %v990
    %v2749 = vsel %vm2712, %v2684, %v992
    %v2750 = vsel %vm2712, %v2685, %v994
    %v2751 = vsel %vm2712, %v2686, %v996
    %v2752 = vsel %vm2712, %v2687, %v998
    %v2753 = vsel %vm2712, %v2688, %v1000
    %v2754 = vsel %vm2712, %v2689, %v1002
    %v2755 = vsel %vm2712, %v2690, %v1004
    %v2756 = vsel %vm2712, %v2691, %v1006
    %v2757 = vsel %vm2712, %v2692, %v1008
    %v2758 = vsel %vm2712, %v2693, %v1010
    %v2759 = vsel %vm2712, %v2694, %v1012
    %v2760 = vsel %vm2712, %v2695, %v1014
    %v2761 = vsel %vm2712, %v2696, %v1016
    %v2762 = vsel %vm2712, %v2697, %v1018
    %v2763 = vsel %vm2712, %v2698, %v1020
    %v2764 = vsel %vm2712, %v2699, %v1022
    %v2765 = vsel %vm2712, %v2700, %v1024
    %v2766 = vsel %vm2712, %v2701, %v1026
    %v2767 = vsel %vm2712, %v2702, %v1028
    %v2768 = vsel %vm2712, %v2703, %v1030
    %v2769 = vsel %vm2712, %v2704, %v1032
    %v2770 = vsel %vm2712, %v2705, %v1034
    %v2771 = vsel %vm2712, %v2706, %v1036
    %v2772 = vsel %vm2712, %v2707, %v1038
    %v2773 = vsel %vm2712, %v2708, %v1040
    %v2774 = vsel %vm2712, %v2709, %v1042
    %v2775 = vsel %vm2712, %v2710, %v1044
    %v2776 = vsel %vm2712, %v2711, %v1046
    %vm2777 = vcmask 195584
    %v2778 = vsel %vm2777, %v2713, %v1176
    %v2779 = vsel %vm2777, %v2714, %v1178
    %v2780 = vsel %vm2777, %v2715, %v1180
    %v2781 = vsel %vm2777, %v2716, %v1182
    %v2782 = vsel %vm2777, %v2717, %v1184
    %v2783 = vsel %vm2777, %v2718, %v1186
    %v2784 = vsel %vm2777, %v2719, %v1188
    %v2785 = vsel %vm2777, %v2720, %v1190
    %v2786 = vsel %vm2777, %v2721, %v1192
    %v2787 = vsel %vm2777, %v2722, %v1194
    %v2788 = vsel %vm2777, %v2723, %v1196
    %v2789 = vsel %vm2777, %v2724, %v1198
    %v2790 = vsel %vm2777, %v2725, %v1200
    %v2791 = vsel %vm2777, %v2726, %v1202
    %v2792 = vsel %vm2777, %v2727, %v1204
    %v2793 = vsel %vm2777, %v2728, %v1206
    %v2794 = vsel %vm2777, %v2729, %v1208
    %v2795 = vsel %vm2777, %v2730, %v1210
    %v2796 = vsel %vm2777, %v2731, %v1212
    %v2797 = vsel %vm2777, %v2732, %v1214
    %v2798 = vsel %vm2777, %v2733, %v1216
    %v2799 = vsel %vm2777, %v2734, %v1218
    %v2800 = vsel %vm2777, %v2735, %v1220
    %v2801 = vsel %vm2777, %v2736, %v1222
    %v2802 = vsel %vm2777, %v2737, %v1224
    %v2803 = vsel %vm2777, %v2738, %v1226
    %v2804 = vsel %vm2777, %v2739, %v1228
    %v2805 = vsel %vm2777, %v2740, %v1230
    %v2806 = vsel %vm2777, %v2741, %v1232
    %v2807 = vsel %vm2777, %v2742, %v1234
    %v2808 = vsel %vm2777, %v2743, %v1236
    %v2809 = vsel %vm2777, %v2744, %v1238
    %v2810 = vsel %vm2777, %v2745, %v1240
    %v2811 = vsel %vm2777, %v2746, %v1242
    %v2812 = vsel %vm2777, %v2747, %v1244
    %v2813 = vsel %vm2777, %v2748, %v1246
    %v2814 = vsel %vm2777, %v2749, %v1248
    %v2815 = vsel %vm2777, %v2750, %v1250
    %v2816 = vsel %vm2777, %v2751, %v1252
    %v2817 = vsel %vm2777, %v2752, %v1254
    %v2818 = vsel %vm2777, %v2753, %v1256
    %v2819 = vsel %vm2777, %v2754, %v1258
    %v2820 = vsel %vm2777, %v2755, %v1260
    %v2821 = vsel %vm2777, %v2756, %v1262
    %v2822 = vsel %vm2777, %v2757, %v1264
    %v2823 = vsel %vm2777, %v2758, %v1266
    %v2824 = vsel %vm2777, %v2759, %v1268
    %v2825 = vsel %vm2777, %v2760, %v1270
    %v2826 = vsel %vm2777, %v2761, %v1272
    %v2827 = vsel %vm2777, %v2762, %v1274
    %v2828 = vsel %vm2777, %v2763, %v1276
    %v2829 = vsel %vm2777, %v2764, %v1278
    %v2830 = vsel %vm2777, %v2765, %v1280
    %v2831 = vsel %vm2777, %v2766, %v1282
    %v2832 = vsel %vm2777, %v2767, %v1284
    %v2833 = vsel %vm2777, %v2768, %v1286
    %v2834 = vsel %vm2777, %v2769, %v1288
    %v2835 = vsel %vm2777, %v2770, %v1290
    %v2836 = vsel %vm2777, %v2771, %v1292
    %v2837 = vsel %vm2777, %v2772, %v1294
    %v2838 = vsel %vm2777, %v2773, %v1296
    %v2839 = vsel %vm2777, %v2774, %v1298
    %v2840 = vsel %vm2777, %v2775, %v1300
    %v2841 = vsel %vm2777, %v2776, %v1302
    %vm2842 = vcmask 261120
    %v2843 = vsel %vm2842, %v2778, %v1432
    %v2844 = vsel %vm2842, %v2779, %v1434
    %v2845 = vsel %vm2842, %v2780, %v1436
    %v2846 = vsel %vm2842, %v2781, %v1438
    %v2847 = vsel %vm2842, %v2782, %v1440
    %v2848 = vsel %vm2842, %v2783, %v1442
    %v2849 = vsel %vm2842, %v2784, %v1444
    %v2850 = vsel %vm2842, %v2785, %v1446
    %v2851 = vsel %vm2842, %v2786, %v1448
    %v2852 = vsel %vm2842, %v2787, %v1450
    %v2853 = vsel %vm2842, %v2788, %v1452
    %v2854 = vsel %vm2842, %v2789, %v1454
    %v2855 = vsel %vm2842, %v2790, %v1456
    %v2856 = vsel %vm2842, %v2791, %v1458
    %v2857 = vsel %vm2842, %v2792, %v1460
    %v2858 = vsel %vm2842, %v2793, %v1462
    %v2859 = vsel %vm2842, %v2794, %v1464
    %v2860 = vsel %vm2842, %v2795, %v1466
    %v2861 = vsel %vm2842, %v2796, %v1468
    %v2862 = vsel %vm2842, %v2797, %v1470
    %v2863 = vsel %vm2842, %v2798, %v1472
    %v2864 = vsel %vm2842, %v2799, %v1474
    %v2865 = vsel %vm2842, %v2800, %v1476
    %v2866 = vsel %vm2842, %v2801, %v1478
    %v2867 = vsel %vm2842, %v2802, %v1480
    %v2868 = vsel %vm2842, %v2803, %v1482
    %v2869 = vsel %vm2842, %v2804, %v1484
    %v2870 = vsel %vm2842, %v2805, %v1486
    %v2871 = vsel %vm2842, %v2806, %v1488
    %v2872 = vsel %vm2842, %v2807, %v1490
    %v2873 = vsel %vm2842, %v2808, %v1492
    %v2874 = vsel %vm2842, %v2809, %v1494
    %v2875 = vsel %vm2842, %v2810, %v1496
    %v2876 = vsel %vm2842, %v2811, %v1498
    %v2877 = vsel %vm2842, %v2812, %v1500
    %v2878 = vsel %vm2842, %v2813, %v1502
    %v2879 = vsel %vm2842, %v2814, %v1504
    %v2880 = vsel %vm2842, %v2815, %v1506
    %v2881 = vsel %vm2842, %v2816, %v1508
    %v2882 = vsel %vm2842, %v2817, %v1510
    %v2883 = vsel %vm2842, %v2818, %v1512
    %v2884 = vsel %vm2842, %v2819, %v1514
    %v2885 = vsel %vm2842, %v2820, %v1516
    %v2886 = vsel %vm2842, %v2821, %v1518
    %v2887 = vsel %vm2842, %v2822, %v1520
    %v2888 = vsel %vm2842, %v2823, %v1522
    %v2889 = vsel %vm2842, %v2824, %v1524
    %v2890 = vsel %vm2842, %v2825, %v1526
    %v2891 = vsel %vm2842, %v2826, %v1528
    %v2892 = vsel %vm2842, %v2827, %v1530
    %v2893 = vsel %vm2842, %v2828, %v1532
    %v2894 = vsel %vm2842, %v2829, %v1534
    %v2895 = vsel %vm2842, %v2830, %v1536
    %v2896 = vsel %vm2842, %v2831, %v1538
    %v2897 = vsel %vm2842, %v2832, %v1540
    %v2898 = vsel %vm2842, %v2833, %v1542
    %v2899 = vsel %vm2842, %v2834, %v1544
    %v2900 = vsel %vm2842, %v2835, %v1546
    %v2901 = vsel %vm2842, %v2836, %v1548
    %v2902 = vsel %vm2842, %v2837, %v1550
    %v2903 = vsel %vm2842, %v2838, %v1552
    %v2904 = vsel %vm2842, %v2839, %v1554
    %v2905 = vsel %vm2842, %v2840, %v1556
    %v2906 = vsel %vm2842, %v2841, %v1558
    %vm2907 = vcmask 326656
    %v2908 = vsel %vm2907, %v2843, %v1688
    %v2909 = vsel %vm2907, %v2844, %v1690
    %v2910 = vsel %vm2907, %v2845, %v1692
    %v2911 = vsel %vm2907, %v2846, %v1694
    %v2912 = vsel %vm2907, %v2847, %v1696
    %v2913 = vsel %vm2907, %v2848, %v1698
    %v2914 = vsel %vm2907, %v2849, %v1700
    %v2915 = vsel %vm2907, %v2850, %v1702
    %v2916 = vsel %vm2907, %v2851, %v1704
    %v2917 = vsel %vm2907, %v2852, %v1706
    %v2918 = vsel %vm2907, %v2853, %v1708
    %v2919 = vsel %vm2907, %v2854, %v1710
    %v2920 = vsel %vm2907, %v2855, %v1712
    %v2921 = vsel %vm2907, %v2856, %v1714
    %v2922 = vsel %vm2907, %v2857, %v1716
    %v2923 = vsel %vm2907, %v2858, %v1718
    %v2924 = vsel %vm2907, %v2859, %v1720
    %v2925 = vsel %vm2907, %v2860, %v1722
    %v2926 = vsel %vm2907, %v2861, %v1724
    %v2927 = vsel %vm2907, %v2862, %v1726
    %v2928 = vsel %vm2907, %v2863, %v1728
    %v2929 = vsel %vm2907, %v2864, %v1730
    %v2930 = vsel %vm2907, %v2865, %v1732
    %v2931 = vsel %vm2907, %v2866, %v1734
    %v2932 = vsel %vm2907, %v2867, %v1736
    %v2933 = vsel %vm2907, %v2868, %v1738
    %v2934 = vsel %vm2907, %v2869, %v1740
    %v2935 = vsel %vm2907, %v2870, %v1742
    %v2936 = vsel %vm2907, %v2871, %v1744
    %v2937 = vsel %vm2907, %v2872, %v1746
    %v2938 = vsel %vm2907, %v2873, %v1748
    %v2939 = vsel %vm2907, %v2874, %v1750
    %v2940 = vsel %vm2907, %v2875, %v1752
    %v2941 = vsel %vm2907, %v2876, %v1754
    %v2942 = vsel %vm2907, %v2877, %v1756
    %v2943 = vsel %vm2907, %v2878, %v1758
    %v2944 = vsel %vm2907, %v2879, %v1760
    %v2945 = vsel %vm2907, %v2880, %v1762
    %v2946 = vsel %vm2907, %v2881, %v1764
    %v2947 = vsel %vm2907, %v2882, %v1766
    %v2948 = vsel %vm2907, %v2883, %v1768
    %v2949 = vsel %vm2907, %v2884, %v1770
    %v2950 = vsel %vm2907, %v2885, %v1772
    %v2951 = vsel %vm2907, %v2886, %v1774
    %v2952 = vsel %vm2907, %v2887, %v1776
    %v2953 = vsel %vm2907, %v2888, %v1778
    %v2954 = vsel %vm2907, %v2889, %v1780
    %v2955 = vsel %vm2907, %v2890, %v1782
    %v2956 = vsel %vm2907, %v2891, %v1784
    %v2957 = vsel %vm2907, %v2892, %v1786
    %v2958 = vsel %vm2907, %v2893, %v1788
    %v2959 = vsel %vm2907, %v2894, %v1790
    %v2960 = vsel %vm2907, %v2895, %v1792
    %v2961 = vsel %vm2907, %v2896, %v1794
    %v2962 = vsel %vm2907, %v2897, %v1796
    %v2963 = vsel %vm2907, %v2898, %v1798
    %v2964 = vsel %vm2907, %v2899, %v1800
    %v2965 = vsel %vm2907, %v2900, %v1802
    %v2966 = vsel %vm2907, %v2901, %v1804
    %v2967 = vsel %vm2907, %v2902, %v1806
    %v2968 = vsel %vm2907, %v2903, %v1808
    %v2969 = vsel %vm2907, %v2904, %v1810
    %v2970 = vsel %vm2907, %v2905, %v1812
    %v2971 = vsel %vm2907, %v2906, %v1814
    %vm2972 = vcmask 392192
    %v2973 = vsel %vm2972, %v2908, %v1944
    %v2974 = vsel %vm2972, %v2909, %v1946
    %v2975 = vsel %vm2972, %v2910, %v1948
    %v2976 = vsel %vm2972, %v2911, %v1950
    %v2977 = vsel %vm2972, %v2912, %v1952
    %v2978 = vsel %vm2972, %v2913, %v1954
    %v2979 = vsel %vm2972, %v2914, %v1956
    %v2980 = vsel %vm2972, %v2915, %v1958
    %v2981 = vsel %vm2972, %v2916, %v1960
    %v2982 = vsel %vm2972, %v2917, %v1962
    %v2983 = vsel %vm2972, %v2918, %v1964
    %v2984 = vsel %vm2972, %v2919, %v1966
    %v2985 = vsel %vm2972, %v2920, %v1968
    %v2986 = vsel %vm2972, %v2921, %v1970
    %v2987 = vsel %vm2972, %v2922, %v1972
    %v2988 = vsel %vm2972, %v2923, %v1974
    %v2989 = vsel %vm2972, %v2924, %v1976
    %v2990 = vsel %vm2972, %v2925, %v1978
    %v2991 = vsel %vm2972, %v2926, %v1980
    %v2992 = vsel %vm2972, %v2927, %v1982
    %v2993 = vsel %vm2972, %v2928, %v1984
    %v2994 = vsel %vm2972, %v2929, %v1986
    %v2995 = vsel %vm2972, %v2930, %v1988
    %v2996 = vsel %vm2972, %v2931, %v1990
    %v2997 = vsel %vm2972, %v2932, %v1992
    %v2998 = vsel %vm2972, %v2933, %v1994
    %v2999 = vsel %vm2972, %v2934, %v1996
    %v3000 = vsel %vm2972, %v2935, %v1998
    %v3001 = vsel %vm2972, %v2936, %v2000
    %v3002 = vsel %vm2972, %v2937, %v2002
    %v3003 = vsel %vm2972, %v2938, %v2004
    %v3004 = vsel %vm2972, %v2939, %v2006
    %v3005 = vsel %vm2972, %v2940, %v2008
    %v3006 = vsel %vm2972, %v2941, %v2010
    %v3007 = vsel %vm2972, %v2942, %v2012
    %v3008 = vsel %vm2972, %v2943, %v2014
    %v3009 = vsel %vm2972, %v2944, %v2016
    %v3010 = vsel %vm2972, %v2945, %v2018
    %v3011 = vsel %vm2972, %v2946, %v2020
    %v3012 = vsel %vm2972, %v2947, %v2022
    %v3013 = vsel %vm2972, %v2948, %v2024
    %v3014 = vsel %vm2972, %v2949, %v2026
    %v3015 = vsel %vm2972, %v2950, %v2028
    %v3016 = vsel %vm2972, %v2951, %v2030
    %v3017 = vsel %vm2972, %v2952, %v2032
    %v3018 = vsel %vm2972, %v2953, %v2034
    %v3019 = vsel %vm2972, %v2954, %v2036
    %v3020 = vsel %vm2972, %v2955, %v2038
    %v3021 = vsel %vm2972, %v2956, %v2040
    %v3022 = vsel %vm2972, %v2957, %v2042
    %v3023 = vsel %vm2972, %v2958, %v2044
    %v3024 = vsel %vm2972, %v2959, %v2046
    %v3025 = vsel %vm2972, %v2960, %v2048
    %v3026 = vsel %vm2972, %v2961, %v2050
    %v3027 = vsel %vm2972, %v2962, %v2052
    %v3028 = vsel %vm2972, %v2963, %v2054
    %v3029 = vsel %vm2972, %v2964, %v2056
    %v3030 = vsel %vm2972, %v2965, %v2058
    %v3031 = vsel %vm2972, %v2966, %v2060
    %v3032 = vsel %vm2972, %v2967, %v2062
    %v3033 = vsel %vm2972, %v2968, %v2064
    %v3034 = vsel %vm2972, %v2969, %v2066
    %v3035 = vsel %vm2972, %v2970, %v2068
    %v3036 = vsel %vm2972, %v2971, %v2070
    %vm3037 = vcmask 457728
    %v3038 = vsel %vm3037, %v2973, %v2200
    %v3039 = vsel %vm3037, %v2974, %v2202
    %v3040 = vsel %vm3037, %v2975, %v2204
    %v3041 = vsel %vm3037, %v2976, %v2206
    %v3042 = vsel %vm3037, %v2977, %v2208
    %v3043 = vsel %vm3037, %v2978, %v2210
    %v3044 = vsel %vm3037, %v2979, %v2212
    %v3045 = vsel %vm3037, %v2980, %v2214
    %v3046 = vsel %vm3037, %v2981, %v2216
    %v3047 = vsel %vm3037, %v2982, %v2218
    %v3048 = vsel %vm3037, %v2983, %v2220
    %v3049 = vsel %vm3037, %v2984, %v2222
    %v3050 = vsel %vm3037, %v2985, %v2224
    %v3051 = vsel %vm3037, %v2986, %v2226
    %v3052 = vsel %vm3037, %v2987, %v2228
    %v3053 = vsel %vm3037, %v2988, %v2230
    %v3054 = vsel %vm3037, %v2989, %v2232
    %v3055 = vsel %vm3037, %v2990, %v2234
    %v3056 = vsel %vm3037, %v2991, %v2236
    %v3057 = vsel %vm3037, %v2992, %v2238
    %v3058 = vsel %vm3037, %v2993, %v2240
    %v3059 = vsel %vm3037, %v2994, %v2242
    %v3060 = vsel %vm3037, %v2995, %v2244
    %v3061 = vsel %vm3037, %v2996, %v2246
    %v3062 = vsel %vm3037, %v2997, %v2248
    %v3063 = vsel %vm3037, %v2998, %v2250
    %v3064 = vsel %vm3037, %v2999, %v2252
    %v3065 = vsel %vm3037, %v3000, %v2254
    %v3066 = vsel %vm3037, %v3001, %v2256
    %v3067 = vsel %vm3037, %v3002, %v2258
    %v3068 = vsel %vm3037, %v3003, %v2260
    %v3069 = vsel %vm3037, %v3004, %v2262
    %v3070 = vsel %vm3037, %v3005, %v2264
    %v3071 = vsel %vm3037, %v3006, %v2266
    %v3072 = vsel %vm3037, %v3007, %v2268
    %v3073 = vsel %vm3037, %v3008, %v2270
    %v3074 = vsel %vm3037, %v3009, %v2272
    %v3075 = vsel %vm3037, %v3010, %v2274
    %v3076 = vsel %vm3037, %v3011, %v2276
    %v3077 = vsel %vm3037, %v3012, %v2278
    %v3078 = vsel %vm3037, %v3013, %v2280
    %v3079 = vsel %vm3037, %v3014, %v2282
    %v3080 = vsel %vm3037, %v3015, %v2284
    %v3081 = vsel %vm3037, %v3016, %v2286
    %v3082 = vsel %vm3037, %v3017, %v2288
    %v3083 = vsel %vm3037, %v3018, %v2290
    %v3084 = vsel %vm3037, %v3019, %v2292
    %v3085 = vsel %vm3037, %v3020, %v2294
    %v3086 = vsel %vm3037, %v3021, %v2296
    %v3087 = vsel %vm3037, %v3022, %v2298
    %v3088 = vsel %vm3037, %v3023, %v2300
    %v3089 = vsel %vm3037, %v3024, %v2302
    %v3090 = vsel %vm3037, %v3025, %v2304
    %v3091 = vsel %vm3037, %v3026, %v2306
    %v3092 = vsel %vm3037, %v3027, %v2308
    %v3093 = vsel %vm3037, %v3028, %v2310
    %v3094 = vsel %vm3037, %v3029, %v2312
    %v3095 = vsel %vm3037, %v3030, %v2314
    %v3096 = vsel %vm3037, %v3031, %v2316
    %v3097 = vsel %vm3037, %v3032, %v2318
    %v3098 = vsel %vm3037, %v3033, %v2320
    %v3099 = vsel %vm3037, %v3034, %v2322
    %v3100 = vsel %vm3037, %v3035, %v2324
    %v3101 = vsel %vm3037, %v3036, %v2326
    %vm3102 = vcmask 523264
    %v3103 = vsel %vm3102, %v3038, %v2456
    %v3104 = vsel %vm3102, %v3039, %v2458
    %v3105 = vsel %vm3102, %v3040, %v2460
    %v3106 = vsel %vm3102, %v3041, %v2462
    %v3107 = vsel %vm3102, %v3042, %v2464
    %v3108 = vsel %vm3102, %v3043, %v2466
    %v3109 = vsel %vm3102, %v3044, %v2468
    %v3110 = vsel %vm3102, %v3045, %v2470
    %v3111 = vsel %vm3102, %v3046, %v2472
    %v3112 = vsel %vm3102, %v3047, %v2474
    %v3113 = vsel %vm3102, %v3048, %v2476
    %v3114 = vsel %vm3102, %v3049, %v2478
    %v3115 = vsel %vm3102, %v3050, %v2480
    %v3116 = vsel %vm3102, %v3051, %v2482
    %v3117 = vsel %vm3102, %v3052, %v2484
    %v3118 = vsel %vm3102, %v3053, %v2486
    %v3119 = vsel %vm3102, %v3054, %v2488
    %v3120 = vsel %vm3102, %v3055, %v2490
    %v3121 = vsel %vm3102, %v3056, %v2492
    %v3122 = vsel %vm3102, %v3057, %v2494
    %v3123 = vsel %vm3102, %v3058, %v2496
    %v3124 = vsel %vm3102, %v3059, %v2498
    %v3125 = vsel %vm3102, %v3060, %v2500
    %v3126 = vsel %vm3102, %v3061, %v2502
    %v3127 = vsel %vm3102, %v3062, %v2504
    %v3128 = vsel %vm3102, %v3063, %v2506
    %v3129 = vsel %vm3102, %v3064, %v2508
    %v3130 = vsel %vm3102, %v3065, %v2510
    %v3131 = vsel %vm3102, %v3066, %v2512
    %v3132 = vsel %vm3102, %v3067, %v2514
    %v3133 = vsel %vm3102, %v3068, %v2516
    %v3134 = vsel %vm3102, %v3069, %v2518
    %v3135 = vsel %vm3102, %v3070, %v2520
    %v3136 = vsel %vm3102, %v3071, %v2522
    %v3137 = vsel %vm3102, %v3072, %v2524
    %v3138 = vsel %vm3102, %v3073, %v2526
    %v3139 = vsel %vm3102, %v3074, %v2528
    %v3140 = vsel %vm3102, %v3075, %v2530
    %v3141 = vsel %vm3102, %v3076, %v2532
    %v3142 = vsel %vm3102, %v3077, %v2534
    %v3143 = vsel %vm3102, %v3078, %v2536
    %v3144 = vsel %vm3102, %v3079, %v2538
    %v3145 = vsel %vm3102, %v3080, %v2540
    %v3146 = vsel %vm3102, %v3081, %v2542
    %v3147 = vsel %vm3102, %v3082, %v2544
    %v3148 = vsel %vm3102, %v3083, %v2546
    %v3149 = vsel %vm3102, %v3084, %v2548
    %v3150 = vsel %vm3102, %v3085, %v2550
    %v3151 = vsel %vm3102, %v3086, %v2552
    %v3152 = vsel %vm3102, %v3087, %v2554
    %v3153 = vsel %vm3102, %v3088, %v2556
    %v3154 = vsel %vm3102, %v3089, %v2558
    %v3155 = vsel %vm3102, %v3090, %v2560
    %v3156 = vsel %vm3102, %v3091, %v2562
    %v3157 = vsel %vm3102, %v3092, %v2564
    %v3158 = vsel %vm3102, %v3093, %v2566
    %v3159 = vsel %vm3102, %v3094, %v2568
    %v3160 = vsel %vm3102, %v3095, %v2570
    %v3161 = vsel %vm3102, %v3096, %v2572
    %v3162 = vsel %vm3102, %v3097, %v2574
    %v3163 = vsel %vm3102, %v3098, %v2576
    %v3164 = vsel %vm3102, %v3099, %v2578
    %v3165 = vsel %vm3102, %v3100, %v2580
    %v3166 = vsel %vm3102, %v3101, %v2582
    %v3167 = vld [vmem:[%s1] sm:$0xff]
    %v3168 = vld [vmem:[%s1 + $0x8] sm:$0xff]
    %v3169 = vld [vmem:[%s1 + $0x10] sm:$0xff]
    %v3170 = vld [vmem:[%s1 + $0x18] sm:$0xff]
    %v3171 = vld [vmem:[%s1 + $0x20] sm:$0xff]
    %v3172 = vld [vmem:[%s1 + $0x28] sm:$0xff]
    %v3173 = vld [vmem:[%s1 + $0x30] sm:$0xff]
    %v3174 = vld [vmem:[%s1 + $0x38] sm:$0xff]
    %v3175 = vld [vmem:[%s1 + $0x40] sm:$0xff]
    %v3176 = vld [vmem:[%s2] sm:$0x1]
    %v3178 = vlaneseq
    %v3179 = vshrl.u32 %v3178, 7
    %v3180 = vsub.s32 0, %v3179
    %v3181 = vrot.slane %v3176, %v3180
    %vm3183 = vcmask 588800
    %v3185 = vsel %vm3183, %v3103, 0
    %v3188 = vsel %vm3183, %v3104, 0
    %v3191 = vsel %vm3183, %v3105, 0
    %v3194 = vsel %vm3183, %v3106, 0
    %v3197 = vsel %vm3183, %v3107, 0
    %v3200 = vsel %vm3183, %v3108, 0
    %v3203 = vsel %vm3183, %v3109, 0
    %v3206 = vsel %vm3183, %v3110, 0
    %v3209 = vsel %vm3183, %v3111, 0
    %v3212 = vsel %vm3183, %v3112, 0
    %v3215 = vsel %vm3183, %v3113, 0
    %v3218 = vsel %vm3183, %v3114, 0
    %v3221 = vsel %vm3183, %v3115, 0
    %v3224 = vsel %vm3183, %v3116, 0
    %v3227 = vsel %vm3183, %v3117, 0
    %v3230 = vsel %vm3183, %v3118, 0
    %v3233 = vsel %vm3183, %v3119, 0
    %v3236 = vsel %vm3183, %v3120, 0
    %v3239 = vsel %vm3183, %v3121, 0
    %v3242 = vsel %vm3183, %v3122, 0
    %v3245 = vsel %vm3183, %v3123, 0
    %v3248 = vsel %vm3183, %v3124, 0
    %v3251 = vsel %vm3183, %v3125, 0
    %v3254 = vsel %vm3183, %v3126, 0
    %v3257 = vsel %vm3183, %v3127, 0
    %v3260 = vsel %vm3183, %v3128, 0
    %v3263 = vsel %vm3183, %v3129, 0
    %v3266 = vsel %vm3183, %v3130, 0
    %v3269 = vsel %vm3183, %v3131, 0
    %v3272 = vsel %vm3183, %v3132, 0
    %v3275 = vsel %vm3183, %v3133, 0
    %v3278 = vsel %vm3183, %v3134, 0
    %v3281 = vsel %vm3183, %v3135, 0
    %v3284 = vsel %vm3183, %v3136, 0
    %v3287 = vsel %vm3183, %v3137, 0
    %v3290 = vsel %vm3183, %v3138, 0
    %v3293 = vsel %vm3183, %v3139, 0
    %v3296 = vsel %vm3183, %v3140, 0
    %v3299 = vsel %vm3183, %v3141, 0
    %v3302 = vsel %vm3183, %v3142, 0
    %v3305 = vsel %vm3183, %v3143, 0
    %v3308 = vsel %vm3183, %v3144, 0
    %v3311 = vsel %vm3183, %v3145, 0
    %v3314 = vsel %vm3183, %v3146, 0
    %v3317 = vsel %vm3183, %v3147, 0
    %v3320 = vsel %vm3183, %v3148, 0
    %v3323 = vsel %vm3183, %v3149, 0
    %v3326 = vsel %vm3183, %v3150, 0
    %v3329 = vsel %vm3183, %v3151, 0
    %v3332 = vsel %vm3183, %v3152, 0
    %v3335 = vsel %vm3183, %v3153, 0
    %v3338 = vsel %vm3183, %v3154, 0
    %v3341 = vsel %vm3183, %v3155, 0
    %v3344 = vsel %vm3183, %v3156, 0
    %v3347 = vsel %vm3183, %v3157, 0
    %v3350 = vsel %vm3183, %v3158, 0
    %v3353 = vsel %vm3183, %v3159, 0
    %v3356 = vsel %vm3183, %v3160, 0
    %v3359 = vsel %vm3183, %v3161, 0
    %v3362 = vsel %vm3183, %v3162, 0
    %v3365 = vsel %vm3183, %v3163, 0
    %v3368 = vsel %vm3183, %v3164, 0
    %v3371 = vsel %vm3183, %v3165, 0
    %v3374 = vsel %vm3183, %v3166, 0
    %3376 = vmatprep.subr.mxu0 0.0
    %3377 = vmatpush1.msra.mxu0 %v3167
    %3378 = vmatprep.subr.mxu0 0.0
    %3379 = vmatpush1.msra.mxu0 %v3168
    %3380 = vmatprep.subr.mxu0 0.0
    %3381 = vmatpush1.msra.mxu0 %v3169
    %3382 = vmatprep.subr.mxu0 0.0
    %3383 = vmatpush1.msra.mxu0 %v3170
    %3384 = vmatprep.subr.mxu0 0.0
    %3385 = vmatpush1.msra.mxu0 %v3171
    %3386 = vmatprep.subr.mxu0 0.0
    %3387 = vmatpush1.msra.mxu0 %v3172
    %3388 = vmatprep.subr.mxu0 0.0
    %3389 = vmatpush1.msra.mxu0 %v3173
    %3390 = vmatprep.subr.mxu0 0.0
    %3391 = vmatpush1.msra.mxu0 %v3174
    %3392 = vmatprep.subr.mxu0 0.0
    %3393 = vmatpush1.msra.mxu0 %v3175
    %3394 = vmatprep.subr.mxu0 0.0
    %3395 = vmatpush1.msra.mxu0 0.0
    %3396 = vmatprep.subr.mxu0 0.0
    %3397 = vmatpush1.msra.mxu0 0.0
    %3398 = vmatprep.subr.mxu0 0.0
    %3399 = vmatpush1.msra.mxu0 0.0
    %3400 = vmatprep.subr.mxu0 0.0
    %3401 = vmatpush1.msra.mxu0 0.0
    %3402 = vmatprep.subr.mxu0 0.0
    %3403 = vmatpush1.msra.mxu0 0.0
    %3404 = vmatprep.subr.mxu0 0.0
    %3405 = vmatpush1.msra.mxu0 0.0
    %3406 = vmatprep.subr.mxu0 0.0
    %3407 = vmatpush1.msra.mxu0 0.0
    %3408 = vmatprep.subr.mxu0 0.0
    %3409 = vmatpush1.msra.mxu0 0.0
    %3410 = vmatprep.subr.mxu0 0.0
    %3411 = vmatpush1.msra.mxu0 0.0
    %3412 = vmatprep.subr.mxu0 0.0
    %3413 = vmatpush1.msra.mxu0 0.0
    %3414 = vmatprep.subr.mxu0 0.0
    %3415 = vmatpush1.msra.mxu0 0.0
    %3416 = vmatprep.subr.mxu0 0.0
    %3417 = vmatpush1.msra.mxu0 0.0
    %3418 = vmatprep.subr.mxu0 0.0
    %3419 = vmatpush1.msra.mxu0 0.0
    %3420 = vmatprep.subr.mxu0 0.0
    %3421 = vmatpush1.msra.mxu0 0.0
    %3422 = vmatprep.subr.mxu0 0.0
    %3423 = vmatpush1.msra.mxu0 0.0
    %3424 = vmatprep.subr.mxu0 0.0
    %3425 = vmatpush1.msra.mxu0 0.0
    %3426 = vmatprep.subr.mxu0 0.0
    %3427 = vmatpush1.msra.mxu0 0.0
    %3428 = vmatprep.subr.mxu0 0.0
    %3429 = vmatpush1.msra.mxu0 0.0
    %3430 = vmatprep.subr.mxu0 0.0
    %3431 = vmatpush1.msra.mxu0 0.0
    %3432 = vmatprep.subr.mxu0 0.0
    %3433 = vmatpush1.msra.mxu0 0.0
    %3434 = vmatprep.subr.mxu0 0.0
    %3435 = vmatpush1.msra.mxu0 0.0
    %3436 = vmatprep.subr.mxu0 0.0
    %3437 = vmatpush1.msra.mxu0 0.0
    %3438 = vmatprep.subr.mxu0 0.0
    %3439 = vmatpush1.msra.mxu0 0.0
    %3440 = vmatprep.mubr.f32.mxu0 0.0
    %3441 = vmatmul.mubr.f32.gmra.mrb[0].mxu0 %v3185
    %v3442 = vpop.f32.mrb[0].mxu0
    %v3443 = vadd.f32 %v3181, %v3442
    %v3444 = vpop.f32.mrb[0].mxu0
    %3445 = vmatprep.mubr.f32.mxu0 0.0
    %3446 = vmatmul.mubr.f32.gmra.mrb[0].mxu0 %v3188
    %v3447 = vpop.f32.mrb[0].mxu0
    %v3448 = vadd.f32 %v3181, %v3447
    %v3449 = vpop.f32.mrb[0].mxu0
    %3450 = vmatprep.mubr.f32.mxu0 0.0
    %3451 = vmatmul.mubr.f32.gmra.mrb[0].mxu0 %v3191
    %v3452 = vpop.f32.mrb[0].mxu0
    %v3453 = vadd.f32 %v3181, %v3452
    %v3454 = vpop.f32.mrb[0].mxu0
    %3455 = vmatprep.mubr.f32.mxu0 0.0
    %3456 = vmatmul.mubr.f32.gmra.mrb[0].mxu0 %v3194
    %v3457 = vpop.f32.mrb[0].mxu0
    %v3458 = vadd.f32 %v3181, %v3457
    %v3459 = vpop.f32.mrb[0].mxu0
    %3460 = vmatprep.mubr.f32.mxu0 0.0
    %3461 = vmatmul.mubr.f32.gmra.mrb[0].mxu0 %v3197
    %v3462 = vpop.f32.mrb[0].mxu0
    %v3463 = vadd.f32 %v3181, %v3462
    %v3464 = vpop.f32.mrb[0].mxu0
    %3465 = vmatprep.mubr.f32.mxu0 0.0
    %3466 = vmatmul.mubr.f32.gmra.mrb[0].mxu0 %v3200
    %v3467 = vpop.f32.mrb[0].mxu0
    %v3468 = vadd.f32 %v3181, %v3467
    %v3469 = vpop.f32.mrb[0].mxu0
    %3470 = vmatprep.mubr.f32.mxu0 0.0
    %3471 = vmatmul.mubr.f32.gmra.mrb[0].mxu0 %v3203
    %v3472 = vpop.f32.mrb[0].mxu0
    %v3473 = vadd.f32 %v3181, %v3472
    %v3474 = vpop.f32.mrb[0].mxu0
    %3475 = vmatprep.mubr.f32.mxu0 0.0
    %3476 = vmatmul.mubr.f32.gmra.mrb[0].mxu0 %v3206
    %v3477 = vpop.f32.mrb[0].mxu0
    %v3478 = vadd.f32 %v3181, %v3477
    %v3479 = vpop.f32.mrb[0].mxu0
    %3480 = vmatprep.mubr.f32.mxu0 0.0
    %3481 = vmatmul.mubr.f32.gmra.mrb[0].mxu0 %v3209
    %v3482 = vpop.f32.mrb[0].mxu0
    %v3483 = vadd.f32 %v3181, %v3482
    %v3484 = vpop.f32.mrb[0].mxu0
    %3485 = vmatprep.mubr.f32.mxu0 0.0
    %3486 = vmatmul.mubr.f32.gmra.mrb[0].mxu0 %v3212
    %v3487 = vpop.f32.mrb[0].mxu0
    %v3488 = vadd.f32 %v3181, %v3487
    %v3489 = vpop.f32.mrb[0].mxu0
    %3490 = vmatprep.mubr.f32.mxu0 0.0
    %3491 = vmatmul.mubr.f32.gmra.mrb[0].mxu0 %v3215
    %v3492 = vpop.f32.mrb[0].mxu0
    %v3493 = vadd.f32 %v3181, %v3492
    %v3494 = vpop.f32.mrb[0].mxu0
    %3495 = vmatprep.mubr.f32.mxu0 0.0
    %3496 = vmatmul.mubr.f32.gmra.mrb[0].mxu0 %v3218
    %v3497 = vpop.f32.mrb[0].mxu0
    %v3498 = vadd.f32 %v3181, %v3497
    %v3499 = vpop.f32.mrb[0].mxu0
    %3500 = vmatprep.mubr.f32.mxu0 0.0
    %3501 = vmatmul.mubr.f32.gmra.mrb[0].mxu0 %v3221
    %v3502 = vpop.f32.mrb[0].mxu0
    %v3503 = vadd.f32 %v3181, %v3502
    %v3504 = vpop.f32.mrb[0].mxu0
    %3505 = vmatprep.mubr.f32.mxu0 0.0
    %3506 = vmatmul.mubr.f32.gmra.mrb[0].mxu0 %v3224
    %v3507 = vpop.f32.mrb[0].mxu0
    %v3508 = vadd.f32 %v3181, %v3507
    %v3509 = vpop.f32.mrb[0].mxu0
    %3510 = vmatprep.mubr.f32.mxu0 0.0
    %3511 = vmatmul.mubr.f32.gmra.mrb[0].mxu0 %v3227
    %v3512 = vpop.f32.mrb[0].mxu0
    %v3513 = vadd.f32 %v3181, %v3512
    %v3514 = vpop.f32.mrb[0].mxu0
    %3515 = vmatprep.mubr.f32.mxu0 0.0
    %3516 = vmatmul.mubr.f32.gmra.mrb[0].mxu0 %v3230
    %v3517 = vpop.f32.mrb[0].mxu0
    %v3518 = vadd.f32 %v3181, %v3517
    %v3519 = vpop.f32.mrb[0].mxu0
    %3520 = vmatprep.mubr.f32.mxu0 0.0
    %3521 = vmatmul.mubr.f32.gmra.mrb[0].mxu0 %v3233
    %v3522 = vpop.f32.mrb[0].mxu0
    %v3523 = vadd.f32 %v3181, %v3522
    %v3524 = vpop.f32.mrb[0].mxu0
    %3525 = vmatprep.mubr.f32.mxu0 0.0
    %3526 = vmatmul.mubr.f32.gmra.mrb[0].mxu0 %v3236
    %v3527 = vpop.f32.mrb[0].mxu0
    %v3528 = vadd.f32 %v3181, %v3527
    %v3529 = vpop.f32.mrb[0].mxu0
    %3530 = vmatprep.mubr.f32.mxu0 0.0
    %3531 = vmatmul.mubr.f32.gmra.mrb[0].mxu0 %v3239
    %v3532 = vpop.f32.mrb[0].mxu0
    %v3533 = vadd.f32 %v3181, %v3532
    %v3534 = vpop.f32.mrb[0].mxu0
    %3535 = vmatprep.mubr.f32.mxu0 0.0
    %3536 = vmatmul.mubr.f32.gmra.mrb[0].mxu0 %v3242
    %v3537 = vpop.f32.mrb[0].mxu0
    %v3538 = vadd.f32 %v3181, %v3537
    %v3539 = vpop.f32.mrb[0].mxu0
    %3540 = vmatprep.mubr.f32.mxu0 0.0
    %3541 = vmatmul.mubr.f32.gmra.mrb[0].mxu0 %v3245
    %v3542 = vpop.f32.mrb[0].mxu0
    %v3543 = vadd.f32 %v3181, %v3542
    %v3544 = vpop.f32.mrb[0].mxu0
    %3545 = vmatprep.mubr.f32.mxu0 0.0
    %3546 = vmatmul.mubr.f32.gmra.mrb[0].mxu0 %v3248
    %v3547 = vpop.f32.mrb[0].mxu0
    %v3548 = vadd.f32 %v3181, %v3547
    %v3549 = vpop.f32.mrb[0].mxu0
    %3550 = vmatprep.mubr.f32.mxu0 0.0
    %3551 = vmatmul.mubr.f32.gmra.mrb[0].mxu0 %v3251
    %v3552 = vpop.f32.mrb[0].mxu0
    %v3553 = vadd.f32 %v3181, %v3552
    %v3554 = vpop.f32.mrb[0].mxu0
    %3555 = vmatprep.mubr.f32.mxu0 0.0
    %3556 = vmatmul.mubr.f32.gmra.mrb[0].mxu0 %v3254
    %v3557 = vpop.f32.mrb[0].mxu0
    %v3558 = vadd.f32 %v3181, %v3557
    %v3559 = vpop.f32.mrb[0].mxu0
    %3560 = vmatprep.mubr.f32.mxu0 0.0
    %3561 = vmatmul.mubr.f32.gmra.mrb[0].mxu0 %v3257
    %v3562 = vpop.f32.mrb[0].mxu0
    %v3563 = vadd.f32 %v3181, %v3562
    %v3564 = vpop.f32.mrb[0].mxu0
    %3565 = vmatprep.mubr.f32.mxu0 0.0
    %3566 = vmatmul.mubr.f32.gmra.mrb[0].mxu0 %v3260
    %v3567 = vpop.f32.mrb[0].mxu0
    %v3568 = vadd.f32 %v3181, %v3567
    %v3569 = vpop.f32.mrb[0].mxu0
    %3570 = vmatprep.mubr.f32.mxu0 0.0
    %3571 = vmatmul.mubr.f32.gmra.mrb[0].mxu0 %v3263
    %v3572 = vpop.f32.mrb[0].mxu0
    %v3573 = vadd.f32 %v3181, %v3572
    %v3574 = vpop.f32.mrb[0].mxu0
    %3575 = vmatprep.mubr.f32.mxu0 0.0
    %3576 = vmatmul.mubr.f32.gmra.mrb[0].mxu0 %v3266
    %v3577 = vpop.f32.mrb[0].mxu0
    %v3578 = vadd.f32 %v3181, %v3577
    %v3579 = vpop.f32.mrb[0].mxu0
    %3580 = vmatprep.mubr.f32.mxu0 0.0
    %3581 = vmatmul.mubr.f32.gmra.mrb[0].mxu0 %v3269
    %v3582 = vpop.f32.mrb[0].mxu0
    %v3583 = vadd.f32 %v3181, %v3582
    %v3584 = vpop.f32.mrb[0].mxu0
    %3585 = vmatprep.mubr.f32.mxu0 0.0
    %3586 = vmatmul.mubr.f32.gmra.mrb[0].mxu0 %v3272
    %v3587 = vpop.f32.mrb[0].mxu0
    %v3588 = vadd.f32 %v3181, %v3587
    %v3589 = vpop.f32.mrb[0].mxu0
    %3590 = vmatprep.mubr.f32.mxu0 0.0
    %3591 = vmatmul.mubr.f32.gmra.mrb[0].mxu0 %v3275
    %v3592 = vpop.f32.mrb[0].mxu0
    %v3593 = vadd.f32 %v3181, %v3592
    %v3594 = vpop.f32.mrb[0].mxu0
    %3595 = vmatprep.mubr.f32.mxu0 0.0
    %3596 = vmatmul.mubr.f32.gmra.mrb[0].mxu0 %v3278
    %v3597 = vpop.f32.mrb[0].mxu0
    %v3598 = vadd.f32 %v3181, %v3597
    %v3599 = vpop.f32.mrb[0].mxu0
    %3600 = vmatprep.mubr.f32.mxu0 0.0
    %3601 = vmatmul.mubr.f32.gmra.mrb[0].mxu0 %v3281
    %v3602 = vpop.f32.mrb[0].mxu0
    %v3603 = vadd.f32 %v3181, %v3602
    %v3604 = vpop.f32.mrb[0].mxu0
    %3605 = vmatprep.mubr.f32.mxu0 0.0
    %3606 = vmatmul.mubr.f32.gmra.mrb[0].mxu0 %v3284
    %v3607 = vpop.f32.mrb[0].mxu0
    %v3608 = vadd.f32 %v3181, %v3607
    %v3609 = vpop.f32.mrb[0].mxu0
    %3610 = vmatprep.mubr.f32.mxu0 0.0
    %3611 = vmatmul.mubr.f32.gmra.mrb[0].mxu0 %v3287
    %v3612 = vpop.f32.mrb[0].mxu0
    %v3613 = vadd.f32 %v3181, %v3612
    %v3614 = vpop.f32.mrb[0].mxu0
    %3615 = vmatprep.mubr.f32.mxu0 0.0
    %3616 = vmatmul.mubr.f32.gmra.mrb[0].mxu0 %v3290
    %v3617 = vpop.f32.mrb[0].mxu0
    %v3618 = vadd.f32 %v3181, %v3617
    %v3619 = vpop.f32.mrb[0].mxu0
    %3620 = vmatprep.mubr.f32.mxu0 0.0
    %3621 = vmatmul.mubr.f32.gmra.mrb[0].mxu0 %v3293
    %v3622 = vpop.f32.mrb[0].mxu0
    %v3623 = vadd.f32 %v3181, %v3622
    %v3624 = vpop.f32.mrb[0].mxu0
    %3625 = vmatprep.mubr.f32.mxu0 0.0
    %3626 = vmatmul.mubr.f32.gmra.mrb[0].mxu0 %v3296
    %v3627 = vpop.f32.mrb[0].mxu0
    %v3628 = vadd.f32 %v3181, %v3627
    %v3629 = vpop.f32.mrb[0].mxu0
    %3630 = vmatprep.mubr.f32.mxu0 0.0
    %3631 = vmatmul.mubr.f32.gmra.mrb[0].mxu0 %v3299
    %v3632 = vpop.f32.mrb[0].mxu0
    %v3633 = vadd.f32 %v3181, %v3632
    %v3634 = vpop.f32.mrb[0].mxu0
    %3635 = vmatprep.mubr.f32.mxu0 0.0
    %3636 = vmatmul.mubr.f32.gmra.mrb[0].mxu0 %v3302
    %v3637 = vpop.f32.mrb[0].mxu0
    %v3638 = vadd.f32 %v3181, %v3637
    %v3639 = vpop.f32.mrb[0].mxu0
    %3640 = vmatprep.mubr.f32.mxu0 0.0
    %3641 = vmatmul.mubr.f32.gmra.mrb[0].mxu0 %v3305
    %v3642 = vpop.f32.mrb[0].mxu0
    %v3643 = vadd.f32 %v3181, %v3642
    %v3644 = vpop.f32.mrb[0].mxu0
    %3645 = vmatprep.mubr.f32.mxu0 0.0
    %3646 = vmatmul.mubr.f32.gmra.mrb[0].mxu0 %v3308
    %v3647 = vpop.f32.mrb[0].mxu0
    %v3648 = vadd.f32 %v3181, %v3647
    %v3649 = vpop.f32.mrb[0].mxu0
    %3650 = vmatprep.mubr.f32.mxu0 0.0
    %3651 = vmatmul.mubr.f32.gmra.mrb[0].mxu0 %v3311
    %v3652 = vpop.f32.mrb[0].mxu0
    %v3653 = vadd.f32 %v3181, %v3652
    %v3654 = vpop.f32.mrb[0].mxu0
    %3655 = vmatprep.mubr.f32.mxu0 0.0
    %3656 = vmatmul.mubr.f32.gmra.mrb[0].mxu0 %v3314
    %v3657 = vpop.f32.mrb[0].mxu0
    %v3658 = vadd.f32 %v3181, %v3657
    %v3659 = vpop.f32.mrb[0].mxu0
    %3660 = vmatprep.mubr.f32.mxu0 0.0
    %3661 = vmatmul.mubr.f32.gmra.mrb[0].mxu0 %v3317
    %v3662 = vpop.f32.mrb[0].mxu0
    %v3663 = vadd.f32 %v3181, %v3662
    %v3664 = vpop.f32.mrb[0].mxu0
    %3665 = vmatprep.mubr.f32.mxu0 0.0
    %3666 = vmatmul.mubr.f32.gmra.mrb[0].mxu0 %v3320
    %v3667 = vpop.f32.mrb[0].mxu0
    %v3668 = vadd.f32 %v3181, %v3667
    %v3669 = vpop.f32.mrb[0].mxu0
    %3670 = vmatprep.mubr.f32.mxu0 0.0
    %3671 = vmatmul.mubr.f32.gmra.mrb[0].mxu0 %v3323
    %v3672 = vpop.f32.mrb[0].mxu0
    %v3673 = vadd.f32 %v3181, %v3672
    %v3674 = vpop.f32.mrb[0].mxu0
    %3675 = vmatprep.mubr.f32.mxu0 0.0
    %3676 = vmatmul.mubr.f32.gmra.mrb[0].mxu0 %v3326
    %v3677 = vpop.f32.mrb[0].mxu0
    %v3678 = vadd.f32 %v3181, %v3677
    %v3679 = vpop.f32.mrb[0].mxu0
    %3680 = vmatprep.mubr.f32.mxu0 0.0
    %3681 = vmatmul.mubr.f32.gmra.mrb[0].mxu0 %v3329
    %v3682 = vpop.f32.mrb[0].mxu0
    %v3683 = vadd.f32 %v3181, %v3682
    %v3684 = vpop.f32.mrb[0].mxu0
    %3685 = vmatprep.mubr.f32.mxu0 0.0
    %3686 = vmatmul.mubr.f32.gmra.mrb[0].mxu0 %v3332
    %v3687 = vpop.f32.mrb[0].mxu0
    %v3688 = vadd.f32 %v3181, %v3687
    %v3689 = vpop.f32.mrb[0].mxu0
    %3690 = vmatprep.mubr.f32.mxu0 0.0
    %3691 = vmatmul.mubr.f32.gmra.mrb[0].mxu0 %v3335
    %v3692 = vpop.f32.mrb[0].mxu0
    %v3693 = vadd.f32 %v3181, %v3692
    %v3694 = vpop.f32.mrb[0].mxu0
    %3695 = vmatprep.mubr.f32.mxu0 0.0
    %3696 = vmatmul.mubr.f32.gmra.mrb[0].mxu0 %v3338
    %v3697 = vpop.f32.mrb[0].mxu0
    %v3698 = vadd.f32 %v3181, %v3697
    %v3699 = vpop.f32.mrb[0].mxu0
    %3700 = vmatprep.mubr.f32.mxu0 0.0
    %3701 = vmatmul.mubr.f32.gmra.mrb[0].mxu0 %v3341
    %v3702 = vpop.f32.mrb[0].mxu0
    %v3703 = vadd.f32 %v3181, %v3702
    %v3704 = vpop.f32.mrb[0].mxu0
    %3705 = vmatprep.mubr.f32.mxu0 0.0
    %3706 = vmatmul.mubr.f32.gmra.mrb[0].mxu0 %v3344
    %v3707 = vpop.f32.mrb[0].mxu0
    %v3708 = vadd.f32 %v3181, %v3707
    %v3709 = vpop.f32.mrb[0].mxu0
    %3710 = vmatprep.mubr.f32.mxu0 0.0
    %3711 = vmatmul.mubr.f32.gmra.mrb[0].mxu0 %v3347
    %v3712 = vpop.f32.mrb[0].mxu0
    %v3713 = vadd.f32 %v3181, %v3712
    %v3714 = vpop.f32.mrb[0].mxu0
    %3715 = vmatprep.mubr.f32.mxu0 0.0
    %3716 = vmatmul.mubr.f32.gmra.mrb[0].mxu0 %v3350
    %v3717 = vpop.f32.mrb[0].mxu0
    %v3718 = vadd.f32 %v3181, %v3717
    %v3719 = vpop.f32.mrb[0].mxu0
    %3720 = vmatprep.mubr.f32.mxu0 0.0
    %3721 = vmatmul.mubr.f32.gmra.mrb[0].mxu0 %v3353
    %v3722 = vpop.f32.mrb[0].mxu0
    %v3723 = vadd.f32 %v3181, %v3722
    %v3724 = vpop.f32.mrb[0].mxu0
    %3725 = vmatprep.mubr.f32.mxu0 0.0
    %3726 = vmatmul.mubr.f32.gmra.mrb[0].mxu0 %v3356
    %v3727 = vpop.f32.mrb[0].mxu0
    %v3728 = vadd.f32 %v3181, %v3727
    %v3729 = vpop.f32.mrb[0].mxu0
    %3730 = vmatprep.mubr.f32.mxu0 0.0
    %3731 = vmatmul.mubr.f32.gmra.mrb[0].mxu0 %v3359
    %v3732 = vpop.f32.mrb[0].mxu0
    %v3733 = vadd.f32 %v3181, %v3732
    %v3734 = vpop.f32.mrb[0].mxu0
    %3735 = vmatprep.mubr.f32.mxu0 0.0
    %3736 = vmatmul.mubr.f32.gmra.mrb[0].mxu0 %v3362
    %v3737 = vpop.f32.mrb[0].mxu0
    %v3738 = vadd.f32 %v3181, %v3737
    %v3739 = vpop.f32.mrb[0].mxu0
    %3740 = vmatprep.mubr.f32.mxu0 0.0
    %3741 = vmatmul.mubr.f32.gmra.mrb[0].mxu0 %v3365
    %v3742 = vpop.f32.mrb[0].mxu0
    %v3743 = vadd.f32 %v3181, %v3742
    %v3744 = vpop.f32.mrb[0].mxu0
    %3745 = vmatprep.mubr.f32.mxu0 0.0
    %3746 = vmatmul.mubr.f32.gmra.mrb[0].mxu0 %v3368
    %v3747 = vpop.f32.mrb[0].mxu0
    %v3748 = vadd.f32 %v3181, %v3747
    %v3749 = vpop.f32.mrb[0].mxu0
    %3750 = vmatprep.mubr.f32.mxu0 0.0
    %3751 = vmatmul.mubr.f32.gmra.mrb[0].mxu0 %v3371
    %v3752 = vpop.f32.mrb[0].mxu0
    %v3753 = vadd.f32 %v3181, %v3752
    %v3754 = vpop.f32.mrb[0].mxu0
    %3755 = vmatprep.mubr.f32.mxu0 0.0
    %3756 = vmatmul.mubr.f32.gmra.mrb[0].mxu0 %v3374
    %v3757 = vpop.f32.mrb[0].mxu0
    %v3758 = vadd.f32 %v3181, %v3757
    %v3759 = vpop.f32.mrb[0].mxu0
    %3760 = vdwg.mxu0
    %v3761 = vsel %vm2647, %v3443, 0.0
    %v3762 = vsel %vm2647, %v3448, 0.0
    %v3763 = vadd.f32 %v3761, %v3762
    %v3764 = vsel %vm2647, %v3453, 0.0
    %v3765 = vadd.f32 %v3763, %v3764
    %v3766 = vsel %vm2647, %v3458, 0.0
    %v3767 = vadd.f32 %v3765, %v3766
    %v3768 = vsel %vm2647, %v3463, 0.0
    %v3769 = vadd.f32 %v3767, %v3768
    %v3770 = vsel %vm2647, %v3468, 0.0
    %v3771 = vadd.f32 %v3769, %v3770
    %v3772 = vsel %vm2647, %v3473, 0.0
    %v3773 = vadd.f32 %v3771, %v3772
    %v3774 = vsel %vm2647, %v3478, 0.0
    %v3775 = vadd.f32 %v3773, %v3774
    %v3776 = vsel %vm2647, %v3483, 0.0
    %v3777 = vadd.f32 %v3775, %v3776
    %v3778 = vsel %vm2647, %v3488, 0.0
    %v3779 = vadd.f32 %v3777, %v3778
    %v3780 = vsel %vm2647, %v3493, 0.0
    %v3781 = vadd.f32 %v3779, %v3780
    %v3782 = vsel %vm2647, %v3498, 0.0
    %v3783 = vadd.f32 %v3781, %v3782
    %v3784 = vsel %vm2647, %v3503, 0.0
    %v3785 = vadd.f32 %v3783, %v3784
    %v3786 = vsel %vm2647, %v3508, 0.0
    %v3787 = vadd.f32 %v3785, %v3786
    %v3788 = vsel %vm2647, %v3513, 0.0
    %v3789 = vadd.f32 %v3787, %v3788
    %v3790 = vsel %vm2647, %v3518, 0.0
    %v3791 = vadd.f32 %v3789, %v3790
    %v3792 = vsel %vm2647, %v3523, 0.0
    %v3793 = vadd.f32 %v3791, %v3792
    %v3794 = vsel %vm2647, %v3528, 0.0
    %v3795 = vadd.f32 %v3793, %v3794
    %v3796 = vsel %vm2647, %v3533, 0.0
    %v3797 = vadd.f32 %v3795, %v3796
    %v3798 = vsel %vm2647, %v3538, 0.0
    %v3799 = vadd.f32 %v3797, %v3798
    %v3800 = vsel %vm2647, %v3543, 0.0
    %v3801 = vadd.f32 %v3799, %v3800
    %v3802 = vsel %vm2647, %v3548, 0.0
    %v3803 = vadd.f32 %v3801, %v3802
    %v3804 = vsel %vm2647, %v3553, 0.0
    %v3805 = vadd.f32 %v3803, %v3804
    %v3806 = vsel %vm2647, %v3558, 0.0
    %v3807 = vadd.f32 %v3805, %v3806
    %v3808 = vsel %vm2647, %v3563, 0.0
    %v3809 = vadd.f32 %v3807, %v3808
    %v3810 = vsel %vm2647, %v3568, 0.0
    %v3811 = vadd.f32 %v3809, %v3810
    %v3812 = vsel %vm2647, %v3573, 0.0
    %v3813 = vadd.f32 %v3811, %v3812
    %v3814 = vsel %vm2647, %v3578, 0.0
    %v3815 = vadd.f32 %v3813, %v3814
    %v3816 = vsel %vm2647, %v3583, 0.0
    %v3817 = vadd.f32 %v3815, %v3816
    %v3818 = vsel %vm2647, %v3588, 0.0
    %v3819 = vadd.f32 %v3817, %v3818
    %v3820 = vsel %vm2647, %v3593, 0.0
    %v3821 = vadd.f32 %v3819, %v3820
    %v3822 = vsel %vm2647, %v3598, 0.0
    %v3823 = vadd.f32 %v3821, %v3822
    %v3824 = vrot.slane %v3823, 4
    %v3825 = vadd.f32 %v3823, %v3824
    %v3826 = vrot.slane %v3825, 2
    %v3827 = vadd.f32 %v3825, %v3826
    %v3828 = vrot.slane %v3827, 1
    %v3829 = vadd.f32 %v3827, %v3828
    %v3830 = vsel %vm2647, %v3603, 0.0
    %v3831 = vsel %vm2647, %v3608, 0.0
    %v3832 = vadd.f32 %v3830, %v3831
    %v3833 = vsel %vm2647, %v3613, 0.0
    %v3834 = vadd.f32 %v3832, %v3833
    %v3835 = vsel %vm2647, %v3618, 0.0
    %v3836 = vadd.f32 %v3834, %v3835
    %v3837 = vsel %vm2647, %v3623, 0.0
    %v3838 = vadd.f32 %v3836, %v3837
    %v3839 = vsel %vm2647, %v3628, 0.0
    %v3840 = vadd.f32 %v3838, %v3839
    %v3841 = vsel %vm2647, %v3633, 0.0
    %v3842 = vadd.f32 %v3840, %v3841
    %v3843 = vsel %vm2647, %v3638, 0.0
    %v3844 = vadd.f32 %v3842, %v3843
    %v3845 = vsel %vm2647, %v3643, 0.0
    %v3846 = vadd.f32 %v3844, %v3845
    %v3847 = vsel %vm2647, %v3648, 0.0
    %v3848 = vadd.f32 %v3846, %v3847
    %v3849 = vsel %vm2647, %v3653, 0.0
    %v3850 = vadd.f32 %v3848, %v3849
    %v3851 = vsel %vm2647, %v3658, 0.0
    %v3852 = vadd.f32 %v3850, %v3851
    %v3853 = vsel %vm2647, %v3663, 0.0
    %v3854 = vadd.f32 %v3852, %v3853
    %v3855 = vsel %vm2647, %v3668, 0.0
    %v3856 = vadd.f32 %v3854, %v3855
    %v3857 = vsel %vm2647, %v3673, 0.0
    %v3858 = vadd.f32 %v3856, %v3857
    %v3859 = vsel %vm2647, %v3678, 0.0
    %v3860 = vadd.f32 %v3858, %v3859
    %v3861 = vsel %vm2647, %v3683, 0.0
    %v3862 = vadd.f32 %v3860, %v3861
    %v3863 = vsel %vm2647, %v3688, 0.0
    %v3864 = vadd.f32 %v3862, %v3863
    %v3865 = vsel %vm2647, %v3693, 0.0
    %v3866 = vadd.f32 %v3864, %v3865
    %v3867 = vsel %vm2647, %v3698, 0.0
    %v3868 = vadd.f32 %v3866, %v3867
    %v3869 = vsel %vm2647, %v3703, 0.0
    %v3870 = vadd.f32 %v3868, %v3869
    %v3871 = vsel %vm2647, %v3708, 0.0
    %v3872 = vadd.f32 %v3870, %v3871
    %v3873 = vsel %vm2647, %v3713, 0.0
    %v3874 = vadd.f32 %v3872, %v3873
    %v3875 = vsel %vm2647, %v3718, 0.0
    %v3876 = vadd.f32 %v3874, %v3875
    %v3877 = vsel %vm2647, %v3723, 0.0
    %v3878 = vadd.f32 %v3876, %v3877
    %v3879 = vsel %vm2647, %v3728, 0.0
    %v3880 = vadd.f32 %v3878, %v3879
    %v3881 = vsel %vm2647, %v3733, 0.0
    %v3882 = vadd.f32 %v3880, %v3881
    %v3883 = vsel %vm2647, %v3738, 0.0
    %v3884 = vadd.f32 %v3882, %v3883
    %v3885 = vsel %vm2647, %v3743, 0.0
    %v3886 = vadd.f32 %v3884, %v3885
    %v3887 = vsel %vm2647, %v3748, 0.0
    %v3888 = vadd.f32 %v3886, %v3887
    %v3889 = vsel %vm2647, %v3753, 0.0
    %v3890 = vadd.f32 %v3888, %v3889
    %v3891 = vsel %vm2647, %v3758, 0.0
    %v3892 = vadd.f32 %v3890, %v3891
    %v3893 = vrot.slane %v3892, 4
    %v3894 = vadd.f32 %v3892, %v3893
    %v3895 = vrot.slane %v3894, 2
    %v3896 = vadd.f32 %v3894, %v3895
    %v3897 = vrot.slane %v3896, 1
    %v3898 = vadd.f32 %v3896, %v3897
    %v3899 = vmul.f32 %v3443, %v3443
    %v3900 = vmul.f32 %v3448, %v3448
    %v3901 = vmul.f32 %v3453, %v3453
    %v3902 = vmul.f32 %v3458, %v3458
    %v3903 = vmul.f32 %v3463, %v3463
    %v3904 = vmul.f32 %v3468, %v3468
    %v3905 = vmul.f32 %v3473, %v3473
    %v3906 = vmul.f32 %v3478, %v3478
    %v3907 = vmul.f32 %v3483, %v3483
    %v3908 = vmul.f32 %v3488, %v3488
    %v3909 = vmul.f32 %v3493, %v3493
    %v3910 = vmul.f32 %v3498, %v3498
    %v3911 = vmul.f32 %v3503, %v3503
    %v3912 = vmul.f32 %v3508, %v3508
    %v3913 = vmul.f32 %v3513, %v3513
    %v3914 = vmul.f32 %v3518, %v3518
    %v3915 = vmul.f32 %v3523, %v3523
    %v3916 = vmul.f32 %v3528, %v3528
    %v3917 = vmul.f32 %v3533, %v3533
    %v3918 = vmul.f32 %v3538, %v3538
    %v3919 = vmul.f32 %v3543, %v3543
    %v3920 = vmul.f32 %v3548, %v3548
    %v3921 = vmul.f32 %v3553, %v3553
    %v3922 = vmul.f32 %v3558, %v3558
    %v3923 = vmul.f32 %v3563, %v3563
    %v3924 = vmul.f32 %v3568, %v3568
    %v3925 = vmul.f32 %v3573, %v3573
    %v3926 = vmul.f32 %v3578, %v3578
    %v3927 = vmul.f32 %v3583, %v3583
    %v3928 = vmul.f32 %v3588, %v3588
    %v3929 = vmul.f32 %v3593, %v3593
    %v3930 = vmul.f32 %v3598, %v3598
    %v3931 = vmul.f32 %v3603, %v3603
    %v3932 = vmul.f32 %v3608, %v3608
    %v3933 = vmul.f32 %v3613, %v3613
    %v3934 = vmul.f32 %v3618, %v3618
    %v3935 = vmul.f32 %v3623, %v3623
    %v3936 = vmul.f32 %v3628, %v3628
    %v3937 = vmul.f32 %v3633, %v3633
    %v3938 = vmul.f32 %v3638, %v3638
    %v3939 = vmul.f32 %v3643, %v3643
    %v3940 = vmul.f32 %v3648, %v3648
    %v3941 = vmul.f32 %v3653, %v3653
    %v3942 = vmul.f32 %v3658, %v3658
    %v3943 = vmul.f32 %v3663, %v3663
    %v3944 = vmul.f32 %v3668, %v3668
    %v3945 = vmul.f32 %v3673, %v3673
    %v3946 = vmul.f32 %v3678, %v3678
    %v3947 = vmul.f32 %v3683, %v3683
    %v3948 = vmul.f32 %v3688, %v3688
    %v3949 = vmul.f32 %v3693, %v3693
    %v3950 = vmul.f32 %v3698, %v3698
    %v3951 = vmul.f32 %v3703, %v3703
    %v3952 = vmul.f32 %v3708, %v3708
    %v3953 = vmul.f32 %v3713, %v3713
    %v3954 = vmul.f32 %v3718, %v3718
    %v3955 = vmul.f32 %v3723, %v3723
    %v3956 = vmul.f32 %v3728, %v3728
    %v3957 = vmul.f32 %v3733, %v3733
    %v3958 = vmul.f32 %v3738, %v3738
    %v3959 = vmul.f32 %v3743, %v3743
    %v3960 = vmul.f32 %v3748, %v3748
    %v3961 = vmul.f32 %v3753, %v3753
    %v3962 = vmul.f32 %v3758, %v3758
    %v3963 = vsel %vm2647, %v3899, 0.0
    %v3964 = vsel %vm2647, %v3900, 0.0
    %v3965 = vadd.f32 %v3963, %v3964
    %v3966 = vsel %vm2647, %v3901, 0.0
    %v3967 = vadd.f32 %v3965, %v3966
    %v3968 = vsel %vm2647, %v3902, 0.0
    %v3969 = vadd.f32 %v3967, %v3968
    %v3970 = vsel %vm2647, %v3903, 0.0
    %v3971 = vadd.f32 %v3969, %v3970
    %v3972 = vsel %vm2647, %v3904, 0.0
    %v3973 = vadd.f32 %v3971, %v3972
    %v3974 = vsel %vm2647, %v3905, 0.0
    %v3975 = vadd.f32 %v3973, %v3974
    %v3976 = vsel %vm2647, %v3906, 0.0
    %v3977 = vadd.f32 %v3975, %v3976
    %v3978 = vsel %vm2647, %v3907, 0.0
    %v3979 = vadd.f32 %v3977, %v3978
    %v3980 = vsel %vm2647, %v3908, 0.0
    %v3981 = vadd.f32 %v3979, %v3980
    %v3982 = vsel %vm2647, %v3909, 0.0
    %v3983 = vadd.f32 %v3981, %v3982
    %v3984 = vsel %vm2647, %v3910, 0.0
    %v3985 = vadd.f32 %v3983, %v3984
    %v3986 = vsel %vm2647, %v3911, 0.0
    %v3987 = vadd.f32 %v3985, %v3986
    %v3988 = vsel %vm2647, %v3912, 0.0
    %v3989 = vadd.f32 %v3987, %v3988
    %v3990 = vsel %vm2647, %v3913, 0.0
    %v3991 = vadd.f32 %v3989, %v3990
    %v3992 = vsel %vm2647, %v3914, 0.0
    %v3993 = vadd.f32 %v3991, %v3992
    %v3994 = vsel %vm2647, %v3915, 0.0
    %v3995 = vadd.f32 %v3993, %v3994
    %v3996 = vsel %vm2647, %v3916, 0.0
    %v3997 = vadd.f32 %v3995, %v3996
    %v3998 = vsel %vm2647, %v3917, 0.0
    %v3999 = vadd.f32 %v3997, %v3998
    %v4000 = vsel %vm2647, %v3918, 0.0
    %v4001 = vadd.f32 %v3999, %v4000
    %v4002 = vsel %vm2647, %v3919, 0.0
    %v4003 = vadd.f32 %v4001, %v4002
    %v4004 = vsel %vm2647, %v3920, 0.0
    %v4005 = vadd.f32 %v4003, %v4004
    %v4006 = vsel %vm2647, %v3921, 0.0
    %v4007 = vadd.f32 %v4005, %v4006
    %v4008 = vsel %vm2647, %v3922, 0.0
    %v4009 = vadd.f32 %v4007, %v4008
    %v4010 = vsel %vm2647, %v3923, 0.0
    %v4011 = vadd.f32 %v4009, %v4010
    %v4012 = vsel %vm2647, %v3924, 0.0
    %v4013 = vadd.f32 %v4011, %v4012
    %v4014 = vsel %vm2647, %v3925, 0.0
    %v4015 = vadd.f32 %v4013, %v4014
    %v4016 = vsel %vm2647, %v3926, 0.0
    %v4017 = vadd.f32 %v4015, %v4016
    %v4018 = vsel %vm2647, %v3927, 0.0
    %v4019 = vadd.f32 %v4017, %v4018
    %v4020 = vsel %vm2647, %v3928, 0.0
    %v4021 = vadd.f32 %v4019, %v4020
    %v4022 = vsel %vm2647, %v3929, 0.0
    %v4023 = vadd.f32 %v4021, %v4022
    %v4024 = vsel %vm2647, %v3930, 0.0
    %v4025 = vadd.f32 %v4023, %v4024
    %v4026 = vrot.slane %v4025, 4
    %v4027 = vadd.f32 %v4025, %v4026
    %v4028 = vrot.slane %v4027, 2
    %v4029 = vadd.f32 %v4027, %v4028
    %v4030 = vrot.slane %v4029, 1
    %v4031 = vadd.f32 %v4029, %v4030
    %v4032 = vsel %vm2647, %v3931, 0.0
    %v4033 = vsel %vm2647, %v3932, 0.0
    %v4034 = vadd.f32 %v4032, %v4033
    %v4035 = vsel %vm2647, %v3933, 0.0
    %v4036 = vadd.f32 %v4034, %v4035
    %v4037 = vsel %vm2647, %v3934, 0.0
    %v4038 = vadd.f32 %v4036, %v4037
    %v4039 = vsel %vm2647, %v3935, 0.0
    %v4040 = vadd.f32 %v4038, %v4039
    %v4041 = vsel %vm2647, %v3936, 0.0
    %v4042 = vadd.f32 %v4040, %v4041
    %v4043 = vsel %vm2647, %v3937, 0.0
    %v4044 = vadd.f32 %v4042, %v4043
    %v4045 = vsel %vm2647, %v3938, 0.0
    %v4046 = vadd.f32 %v4044, %v4045
    %v4047 = vsel %vm2647, %v3939, 0.0
    %v4048 = vadd.f32 %v4046, %v4047
    %v4049 = vsel %vm2647, %v3940, 0.0
    %v4050 = vadd.f32 %v4048, %v4049
    %v4051 = vsel %vm2647, %v3941, 0.0
    %v4052 = vadd.f32 %v4050, %v4051
    %v4053 = vsel %vm2647, %v3942, 0.0
    %v4054 = vadd.f32 %v4052, %v4053
    %v4055 = vsel %vm2647, %v3943, 0.0
    %v4056 = vadd.f32 %v4054, %v4055
    %v4057 = vsel %vm2647, %v3944, 0.0
    %v4058 = vadd.f32 %v4056, %v4057
    %v4059 = vsel %vm2647, %v3945, 0.0
    %v4060 = vadd.f32 %v4058, %v4059
    %v4061 = vsel %vm2647, %v3946, 0.0
    %v4062 = vadd.f32 %v4060, %v4061
    %v4063 = vsel %vm2647, %v3947, 0.0
    %v4064 = vadd.f32 %v4062, %v4063
    %v4065 = vsel %vm2647, %v3948, 0.0
    %v4066 = vadd.f32 %v4064, %v4065
    %v4067 = vsel %vm2647, %v3949, 0.0
    %v4068 = vadd.f32 %v4066, %v4067
    %v4069 = vsel %vm2647, %v3950, 0.0
    %v4070 = vadd.f32 %v4068, %v4069
    %v4071 = vsel %vm2647, %v3951, 0.0
    %v4072 = vadd.f32 %v4070, %v4071
    %v4073 = vsel %vm2647, %v3952, 0.0
    %v4074 = vadd.f32 %v4072, %v4073
    %v4075 = vsel %vm2647, %v3953, 0.0
    %v4076 = vadd.f32 %v4074, %v4075
    %v4077 = vsel %vm2647, %v3954, 0.0
    %v4078 = vadd.f32 %v4076, %v4077
    %v4079 = vsel %vm2647, %v3955, 0.0
    %v4080 = vadd.f32 %v4078, %v4079
    %v4081 = vsel %vm2647, %v3956, 0.0
    %v4082 = vadd.f32 %v4080, %v4081
    %v4083 = vsel %vm2647, %v3957, 0.0
    %v4084 = vadd.f32 %v4082, %v4083
    %v4085 = vsel %vm2647, %v3958, 0.0
    %v4086 = vadd.f32 %v4084, %v4085
    %v4087 = vsel %vm2647, %v3959, 0.0
    %v4088 = vadd.f32 %v4086, %v4087
    %v4089 = vsel %vm2647, %v3960, 0.0
    %v4090 = vadd.f32 %v4088, %v4089
    %v4091 = vsel %vm2647, %v3961, 0.0
    %v4092 = vadd.f32 %v4090, %v4091
    %v4093 = vsel %vm2647, %v3962, 0.0
    %v4094 = vadd.f32 %v4092, %v4093
    %v4095 = vrot.slane %v4094, 4
    %v4096 = vadd.f32 %v4094, %v4095
    %v4097 = vrot.slane %v4096, 2
    %v4098 = vadd.f32 %v4096, %v4097
    %v4099 = vrot.slane %v4098, 1
    %v4100 = vadd.f32 %v4098, %v4099
    %v4101 = vmul.f32 %v3829, 0.00390625
    %v4102 = vmul.f32 %v3898, 0.00390625
    %v4103 = vmul.f32 %v4031, 0.00390625
    %v4104 = vmul.f32 %v4100, 0.00390625
    %v4105 = vmul.f32 %v4101, %v4101
    %v4106 = vmul.f32 %v4102, %v4102
    %v4107 = vsub.f32 %v4103, %v4105
    %v4108 = vsub.f32 %v4104, %v4106
    %v4109 = vsub.f32 %v3443, %v4101
    %v4110 = vsub.f32 %v3448, %v4101
    %v4111 = vsub.f32 %v3453, %v4101
    %v4112 = vsub.f32 %v3458, %v4101
    %v4113 = vsub.f32 %v3463, %v4101
    %v4114 = vsub.f32 %v3468, %v4101
    %v4115 = vsub.f32 %v3473, %v4101
    %v4116 = vsub.f32 %v3478, %v4101
    %v4117 = vsub.f32 %v3483, %v4101
    %v4118 = vsub.f32 %v3488, %v4101
    %v4119 = vsub.f32 %v3493, %v4101
    %v4120 = vsub.f32 %v3498, %v4101
    %v4121 = vsub.f32 %v3503, %v4101
    %v4122 = vsub.f32 %v3508, %v4101
    %v4123 = vsub.f32 %v3513, %v4101
    %v4124 = vsub.f32 %v3518, %v4101
    %v4125 = vsub.f32 %v3523, %v4101
    %v4126 = vsub.f32 %v3528, %v4101
    %v4127 = vsub.f32 %v3533, %v4101
    %v4128 = vsub.f32 %v3538, %v4101
    %v4129 = vsub.f32 %v3543, %v4101
    %v4130 = vsub.f32 %v3548, %v4101
    %v4131 = vsub.f32 %v3553, %v4101
    %v4132 = vsub.f32 %v3558, %v4101
    %v4133 = vsub.f32 %v3563, %v4101
    %v4134 = vsub.f32 %v3568, %v4101
    %v4135 = vsub.f32 %v3573, %v4101
    %v4136 = vsub.f32 %v3578, %v4101
    %v4137 = vsub.f32 %v3583, %v4101
    %v4138 = vsub.f32 %v3588, %v4101
    %v4139 = vsub.f32 %v3593, %v4101
    %v4140 = vsub.f32 %v3598, %v4101
    %v4141 = vsub.f32 %v3603, %v4102
    %v4142 = vsub.f32 %v3608, %v4102
    %v4143 = vsub.f32 %v3613, %v4102
    %v4144 = vsub.f32 %v3618, %v4102
    %v4145 = vsub.f32 %v3623, %v4102
    %v4146 = vsub.f32 %v3628, %v4102
    %v4147 = vsub.f32 %v3633, %v4102
    %v4148 = vsub.f32 %v3638, %v4102
    %v4149 = vsub.f32 %v3643, %v4102
    %v4150 = vsub.f32 %v3648, %v4102
    %v4151 = vsub.f32 %v3653, %v4102
    %v4152 = vsub.f32 %v3658, %v4102
    %v4153 = vsub.f32 %v3663, %v4102
    %v4154 = vsub.f32 %v3668, %v4102
    %v4155 = vsub.f32 %v3673, %v4102
    %v4156 = vsub.f32 %v3678, %v4102
    %v4157 = vsub.f32 %v3683, %v4102
    %v4158 = vsub.f32 %v3688, %v4102
    %v4159 = vsub.f32 %v3693, %v4102
    %v4160 = vsub.f32 %v3698, %v4102
    %v4161 = vsub.f32 %v3703, %v4102
    %v4162 = vsub.f32 %v3708, %v4102
    %v4163 = vsub.f32 %v3713, %v4102
    %v4164 = vsub.f32 %v3718, %v4102
    %v4165 = vsub.f32 %v3723, %v4102
    %v4166 = vsub.f32 %v3728, %v4102
    %v4167 = vsub.f32 %v3733, %v4102
    %v4168 = vsub.f32 %v3738, %v4102
    %v4169 = vsub.f32 %v3743, %v4102
    %v4170 = vsub.f32 %v3748, %v4102
    %v4171 = vsub.f32 %v3753, %v4102
    %v4172 = vsub.f32 %v3758, %v4102
    %v4173 = vadd.f32 %v4107, 1e-05
    %v4174 = vadd.f32 %v4108, 1e-05
    %v4175 = vrsqrt.pop %v4173
    %v4176 = vrsqrt.pop %v4174
    %v4177 = vmul.f32 %v4109, %v4175
    %v4178 = vmul.f32 %v4110, %v4175
    %v4179 = vmul.f32 %v4111, %v4175
    %v4180 = vmul.f32 %v4112, %v4175
    %v4181 = vmul.f32 %v4113, %v4175
    %v4182 = vmul.f32 %v4114, %v4175
    %v4183 = vmul.f32 %v4115, %v4175
    %v4184 = vmul.f32 %v4116, %v4175
    %v4185 = vmul.f32 %v4117, %v4175
    %v4186 = vmul.f32 %v4118, %v4175
    %v4187 = vmul.f32 %v4119, %v4175
    %v4188 = vmul.f32 %v4120, %v4175
    %v4189 = vmul.f32 %v4121, %v4175
    %v4190 = vmul.f32 %v4122, %v4175
    %v4191 = vmul.f32 %v4123, %v4175
    %v4192 = vmul.f32 %v4124, %v4175
    %v4193 = vmul.f32 %v4125, %v4175
    %v4194 = vmul.f32 %v4126, %v4175
    %v4195 = vmul.f32 %v4127, %v4175
    %v4196 = vmul.f32 %v4128, %v4175
    %v4197 = vmul.f32 %v4129, %v4175
    %v4198 = vmul.f32 %v4130, %v4175
    %v4199 = vmul.f32 %v4131, %v4175
    %v4200 = vmul.f32 %v4132, %v4175
    %v4201 = vmul.f32 %v4133, %v4175
    %v4202 = vmul.f32 %v4134, %v4175
    %v4203 = vmul.f32 %v4135, %v4175
    %v4204 = vmul.f32 %v4136, %v4175
    %v4205 = vmul.f32 %v4137, %v4175
    %v4206 = vmul.f32 %v4138, %v4175
    %v4207 = vmul.f32 %v4139, %v4175
    %v4208 = vmul.f32 %v4140, %v4175
    %v4209 = vmul.f32 %v4141, %v4176
    %v4210 = vmul.f32 %v4142, %v4176
    %v4211 = vmul.f32 %v4143, %v4176
    %v4212 = vmul.f32 %v4144, %v4176
    %v4213 = vmul.f32 %v4145, %v4176
    %v4214 = vmul.f32 %v4146, %v4176
    %v4215 = vmul.f32 %v4147, %v4176
    %v4216 = vmul.f32 %v4148, %v4176
    %v4217 = vmul.f32 %v4149, %v4176
    %v4218 = vmul.f32 %v4150, %v4176
    %v4219 = vmul.f32 %v4151, %v4176
    %v4220 = vmul.f32 %v4152, %v4176
    %v4221 = vmul.f32 %v4153, %v4176
    %v4222 = vmul.f32 %v4154, %v4176
    %v4223 = vmul.f32 %v4155, %v4176
    %v4224 = vmul.f32 %v4156, %v4176
    %v4225 = vmul.f32 %v4157, %v4176
    %v4226 = vmul.f32 %v4158, %v4176
    %v4227 = vmul.f32 %v4159, %v4176
    %v4228 = vmul.f32 %v4160, %v4176
    %v4229 = vmul.f32 %v4161, %v4176
    %v4230 = vmul.f32 %v4162, %v4176
    %v4231 = vmul.f32 %v4163, %v4176
    %v4232 = vmul.f32 %v4164, %v4176
    %v4233 = vmul.f32 %v4165, %v4176
    %v4234 = vmul.f32 %v4166, %v4176
    %v4235 = vmul.f32 %v4167, %v4176
    %v4236 = vmul.f32 %v4168, %v4176
    %v4237 = vmul.f32 %v4169, %v4176
    %v4238 = vmul.f32 %v4170, %v4176
    %v4239 = vmul.f32 %v4171, %v4176
    %v4240 = vmul.f32 %v4172, %v4176
    %v4241 = vmax.f32 %v4177, 0.0
    %v4242 = vmax.f32 %v4178, 0.0
    %v4243 = vmax.f32 %v4179, 0.0
    %v4244 = vmax.f32 %v4180, 0.0
    %v4245 = vmax.f32 %v4181, 0.0
    %v4246 = vmax.f32 %v4182, 0.0
    %v4247 = vmax.f32 %v4183, 0.0
    %v4248 = vmax.f32 %v4184, 0.0
    %v4249 = vmax.f32 %v4185, 0.0
    %v4250 = vmax.f32 %v4186, 0.0
    %v4251 = vmax.f32 %v4187, 0.0
    %v4252 = vmax.f32 %v4188, 0.0
    %v4253 = vmax.f32 %v4189, 0.0
    %v4254 = vmax.f32 %v4190, 0.0
    %v4255 = vmax.f32 %v4191, 0.0
    %v4256 = vmax.f32 %v4192, 0.0
    %v4257 = vmax.f32 %v4193, 0.0
    %v4258 = vmax.f32 %v4194, 0.0
    %v4259 = vmax.f32 %v4195, 0.0
    %v4260 = vmax.f32 %v4196, 0.0
    %v4261 = vmax.f32 %v4197, 0.0
    %v4262 = vmax.f32 %v4198, 0.0
    %v4263 = vmax.f32 %v4199, 0.0
    %v4264 = vmax.f32 %v4200, 0.0
    %v4265 = vmax.f32 %v4201, 0.0
    %v4266 = vmax.f32 %v4202, 0.0
    %v4267 = vmax.f32 %v4203, 0.0
    %v4268 = vmax.f32 %v4204, 0.0
    %v4269 = vmax.f32 %v4205, 0.0
    %v4270 = vmax.f32 %v4206, 0.0
    %v4271 = vmax.f32 %v4207, 0.0
    %v4272 = vmax.f32 %v4208, 0.0
    %v4273 = vmax.f32 %v4209, 0.0
    %v4274 = vmax.f32 %v4210, 0.0
    %v4275 = vmax.f32 %v4211, 0.0
    %v4276 = vmax.f32 %v4212, 0.0
    %v4277 = vmax.f32 %v4213, 0.0
    %v4278 = vmax.f32 %v4214, 0.0
    %v4279 = vmax.f32 %v4215, 0.0
    %v4280 = vmax.f32 %v4216, 0.0
    %v4281 = vmax.f32 %v4217, 0.0
    %v4282 = vmax.f32 %v4218, 0.0
    %v4283 = vmax.f32 %v4219, 0.0
    %v4284 = vmax.f32 %v4220, 0.0
    %v4285 = vmax.f32 %v4221, 0.0
    %v4286 = vmax.f32 %v4222, 0.0
    %v4287 = vmax.f32 %v4223, 0.0
    %v4288 = vmax.f32 %v4224, 0.0
    %v4289 = vmax.f32 %v4225, 0.0
    %v4290 = vmax.f32 %v4226, 0.0
    %v4291 = vmax.f32 %v4227, 0.0
    %v4292 = vmax.f32 %v4228, 0.0
    %v4293 = vmax.f32 %v4229, 0.0
    %v4294 = vmax.f32 %v4230, 0.0
    %v4295 = vmax.f32 %v4231, 0.0
    %v4296 = vmax.f32 %v4232, 0.0
    %v4297 = vmax.f32 %v4233, 0.0
    %v4298 = vmax.f32 %v4234, 0.0
    %v4299 = vmax.f32 %v4235, 0.0
    %v4300 = vmax.f32 %v4236, 0.0
    %v4301 = vmax.f32 %v4237, 0.0
    %v4302 = vmax.f32 %v4238, 0.0
    %v4303 = vmax.f32 %v4239, 0.0
    %v4304 = vmax.f32 %v4240, 0.0
    %4305 = vst.msk [vmem:[#allocation2] sm:$0xff] %vm2647, 0.0
    %4306 = vst.msk [vmem:[#allocation2 + $0x8] sm:$0xff] %vm2647, 0.0
    %vm4307 = vcmask 58368
    %4308 = vst.msk [vmem:[#allocation2 + $0x10] sm:$0x3] %vm4307, 0.0
    %4309 = vst.msk [vmem:[#allocation2 + $0x1b0] sm:$0xff] %vm2647, 0.0
    %4310 = vst.msk [vmem:[#allocation2 + $0x1b8] sm:$0xff] %vm2647, 0.0
    %4311 = vst.msk [vmem:[#allocation2 + $0x1c0] sm:$0x3] %vm4307, 0.0
    %s4312 = scalar_lea.vmem [#allocation2], 408
    %4313 = vst.msk [vmem:[%s4312] sm:$0xff] %vm2647, 0.0
    %4314 = vst.msk [vmem:[%s4312 + $0x8] sm:$0xff] %vm2647, 0.0
    %4315 = vst.msk [vmem:[%s4312 + $0x10] sm:$0x3] %vm4307, 0.0
    %4316 = vst.msk [vmem:[%s4312 + $0x1b0] sm:$0xff] %vm2647, 0.0
    %4317 = vst.msk [vmem:[%s4312 + $0x1b8] sm:$0xff] %vm2647, 0.0
    %4318 = vst.msk [vmem:[%s4312 + $0x1c0] sm:$0x3] %vm4307, 0.0
    %vm4319 = vcmask 57344
    %4320 = vst.msk [vmem:[#allocation2] sm:$0x1] %vm4319, 0.0
    %4321 = vst.msk [vmem:[#allocation2 + $0x18] sm:$0x1] %vm4319, 0.0
    %4322 = vst.msk [vmem:[#allocation2 + $0x30] sm:$0x1] %vm4319, 0.0
    %4323 = vst.msk [vmem:[#allocation2 + $0x48] sm:$0x1] %vm4319, 0.0
    %4324 = vst.msk [vmem:[#allocation2 + $0x60] sm:$0x1] %vm4319, 0.0
    %4325 = vst.msk [vmem:[#allocation2 + $0x78] sm:$0x1] %vm4319, 0.0
    %4326 = vst.msk [vmem:[#allocation2 + $0x90] sm:$0x1] %vm4319, 0.0
    %4327 = vst.msk [vmem:[#allocation2 + $0xa8] sm:$0x1] %vm4319, 0.0
    %4328 = vst.msk [vmem:[#allocation2 + $0xc0] sm:$0x1] %vm4319, 0.0
    %4329 = vst.msk [vmem:[#allocation2 + $0xd8] sm:$0x1] %vm4319, 0.0
    %4330 = vst.msk [vmem:[#allocation2 + $0xf0] sm:$0x1] %vm4319, 0.0
    %4331 = vst.msk [vmem:[#allocation2 + $0x108] sm:$0x1] %vm4319, 0.0
    %4332 = vst.msk [vmem:[#allocation2 + $0x120] sm:$0x1] %vm4319, 0.0
    %4333 = vst.msk [vmem:[#allocation2 + $0x138] sm:$0x1] %vm4319, 0.0
    %4334 = vst.msk [vmem:[#allocation2 + $0x150] sm:$0x1] %vm4319, 0.0
    %4335 = vst.msk [vmem:[#allocation2 + $0x168] sm:$0x1] %vm4319, 0.0
    %4336 = vst.msk [vmem:[#allocation2 + $0x180] sm:$0x1] %vm4319, 0.0
    %4337 = vst.msk [vmem:[#allocation2 + $0x198] sm:$0x1] %vm4319, 0.0
    %4338 = vst.msk [vmem:[#allocation2 + $0x1b0] sm:$0x1] %vm4319, 0.0
    %4339 = vst.msk [vmem:[#allocation2 + $0x1c8] sm:$0x1] %vm4319, 0.0
    %4340 = vst.msk [vmem:[#allocation2 + $0x1e0] sm:$0x1] %vm4319, 0.0
    %4341 = vst.msk [vmem:[#allocation2 + $0x1f8] sm:$0x1] %vm4319, 0.0
    %4342 = vst.msk [vmem:[#allocation2 + $0x210] sm:$0x1] %vm4319, 0.0
    %4343 = vst.msk [vmem:[#allocation2 + $0x228] sm:$0x1] %vm4319, 0.0
    %4344 = vst.msk [vmem:[#allocation2 + $0x240] sm:$0x1] %vm4319, 0.0
    %4345 = vst.msk [vmem:[#allocation2 + $0x258] sm:$0x1] %vm4319, 0.0
    %4346 = vst.msk [vmem:[#allocation2 + $0x270] sm:$0x1] %vm4319, 0.0
    %4347 = vst.msk [vmem:[#allocation2 + $0x288] sm:$0x1] %vm4319, 0.0
    %4348 = vst.msk [vmem:[#allocation2 + $0x2a0] sm:$0x1] %vm4319, 0.0
    %4349 = vst.msk [vmem:[#allocation2 + $0x2b8] sm:$0x1] %vm4319, 0.0
    %4350 = vst.msk [vmem:[#allocation2 + $0x2d0] sm:$0x1] %vm4319, 0.0
    %4351 = vst.msk [vmem:[#allocation2 + $0x2e8] sm:$0x1] %vm4319, 0.0
    %4352 = vst.msk [vmem:[#allocation2 + $0x300] sm:$0x1] %vm4319, 0.0
    %4353 = vst.msk [vmem:[#allocation2 + $0x318] sm:$0x1] %vm4319, 0.0
    %4354 = vst.msk [vmem:[#allocation2 + $0x330] sm:$0x1] %vm4319, 0.0
    %4355 = vst.msk [vmem:[#allocation2 + $0x348] sm:$0x1] %vm4319, 0.0
    %4356 = vst.msk [vmem:[#allocation2 + $0x11] sm:$0x1] %vm4319, 0.0
    %4357 = vst.msk [vmem:[#allocation2 + $0x29] sm:$0x1] %vm4319, 0.0
    %4358 = vst.msk [vmem:[#allocation2 + $0x41] sm:$0x1] %vm4319, 0.0
    %4359 = vst.msk [vmem:[#allocation2 + $0x59] sm:$0x1] %vm4319, 0.0
    %4360 = vst.msk [vmem:[#allocation2 + $0x71] sm:$0x1] %vm4319, 0.0
    %4361 = vst.msk [vmem:[#allocation2 + $0x89] sm:$0x1] %vm4319, 0.0
    %4362 = vst.msk [vmem:[#allocation2 + $0xa1] sm:$0x1] %vm4319, 0.0
    %4363 = vst.msk [vmem:[#allocation2 + $0xb9] sm:$0x1] %vm4319, 0.0
    %4364 = vst.msk [vmem:[#allocation2 + $0xd1] sm:$0x1] %vm4319, 0.0
    %4365 = vst.msk [vmem:[#allocation2 + $0xe9] sm:$0x1] %vm4319, 0.0
    %4366 = vst.msk [vmem:[#allocation2 + $0x101] sm:$0x1] %vm4319, 0.0
    %4367 = vst.msk [vmem:[#allocation2 + $0x119] sm:$0x1] %vm4319, 0.0
    %4368 = vst.msk [vmem:[#allocation2 + $0x131] sm:$0x1] %vm4319, 0.0
    %4369 = vst.msk [vmem:[#allocation2 + $0x149] sm:$0x1] %vm4319, 0.0
    %4370 = vst.msk [vmem:[#allocation2 + $0x161] sm:$0x1] %vm4319, 0.0
    %4371 = vst.msk [vmem:[#allocation2 + $0x179] sm:$0x1] %vm4319, 0.0
    %4372 = vst.msk [vmem:[#allocation2 + $0x191] sm:$0x1] %vm4319, 0.0
    %4373 = vst.msk [vmem:[#allocation2 + $0x1a9] sm:$0x1] %vm4319, 0.0
    %4374 = vst.msk [vmem:[#allocation2 + $0x1c1] sm:$0x1] %vm4319, 0.0
    %4375 = vst.msk [vmem:[#allocation2 + $0x1d9] sm:$0x1] %vm4319, 0.0
    %4376 = vst.msk [vmem:[#allocation2 + $0x1f1] sm:$0x1] %vm4319, 0.0
    %4377 = vst.msk [vmem:[#allocation2 + $0x209] sm:$0x1] %vm4319, 0.0
    %4378 = vst.msk [vmem:[#allocation2 + $0x221] sm:$0x1] %vm4319, 0.0
    %4379 = vst.msk [vmem:[#allocation2 + $0x239] sm:$0x1] %vm4319, 0.0
    %4380 = vst.msk [vmem:[#allocation2 + $0x251] sm:$0x1] %vm4319, 0.0
    %4381 = vst.msk [vmem:[#allocation2 + $0x269] sm:$0x1] %vm4319, 0.0
    %4382 = vst.msk [vmem:[#allocation2 + $0x281] sm:$0x1] %vm4319, 0.0
    %4383 = vst.msk [vmem:[#allocation2 + $0x299] sm:$0x1] %vm4319, 0.0
    %4384 = vst.msk [vmem:[#allocation2 + $0x2b1] sm:$0x1] %vm4319, 0.0
    %4385 = vst.msk [vmem:[#allocation2 + $0x2c9] sm:$0x1] %vm4319, 0.0
    %4386 = vst.msk [vmem:[#allocation2 + $0x2e1] sm:$0x1] %vm4319, 0.0
    %4387 = vst.msk [vmem:[#allocation2 + $0x2f9] sm:$0x1] %vm4319, 0.0
    %4388 = vst.msk [vmem:[#allocation2 + $0x311] sm:$0x1] %vm4319, 0.0
    %4389 = vst.msk [vmem:[#allocation2 + $0x329] sm:$0x1] %vm4319, 0.0
    %4390 = vst.msk [vmem:[#allocation2 + $0x341] sm:$0x1] %vm4319, 0.0
    %4391 = vst.msk [vmem:[#allocation2 + $0x359] sm:$0x1] %vm4319, 0.0
    %s4392 = scalar_lea.vmem [#allocation2], 24
    %4393 = vst.msk [vmem:[%s4392 + $0x1] sm:$0xff] %vm2647, %v4241
    %4394 = vst.msk [vmem:[%s4392 + $0x9] sm:$0xff] %vm2647, %v4242
    %4395 = vst.msk [vmem:[%s4392 + $0x19] sm:$0xff] %vm2647, %v4243
    %4396 = vst.msk [vmem:[%s4392 + $0x21] sm:$0xff] %vm2647, %v4244
    %4397 = vst.msk [vmem:[%s4392 + $0x31] sm:$0xff] %vm2647, %v4245
    %4398 = vst.msk [vmem:[%s4392 + $0x39] sm:$0xff] %vm2647, %v4246
    %4399 = vst.msk [vmem:[%s4392 + $0x49] sm:$0xff] %vm2647, %v4247
    %4400 = vst.msk [vmem:[%s4392 + $0x51] sm:$0xff] %vm2647, %v4248
    %4401 = vst.msk [vmem:[%s4392 + $0x61] sm:$0xff] %vm2647, %v4249
    %4402 = vst.msk [vmem:[%s4392 + $0x69] sm:$0xff] %vm2647, %v4250
    %4403 = vst.msk [vmem:[%s4392 + $0x79] sm:$0xff] %vm2647, %v4251
    %4404 = vst.msk [vmem:[%s4392 + $0x81] sm:$0xff] %vm2647, %v4252
    %4405 = vst.msk [vmem:[%s4392 + $0x91] sm:$0xff] %vm2647, %v4253
    %4406 = vst.msk [vmem:[%s4392 + $0x99] sm:$0xff] %vm2647, %v4254
    %4407 = vst.msk [vmem:[%s4392 + $0xa9] sm:$0xff] %vm2647, %v4255
    %4408 = vst.msk [vmem:[%s4392 + $0xb1] sm:$0xff] %vm2647, %v4256
    %4409 = vst.msk [vmem:[%s4392 + $0xc1] sm:$0xff] %vm2647, %v4257
    %4410 = vst.msk [vmem:[%s4392 + $0xc9] sm:$0xff] %vm2647, %v4258
    %4411 = vst.msk [vmem:[%s4392 + $0xd9] sm:$0xff] %vm2647, %v4259
    %4412 = vst.msk [vmem:[%s4392 + $0xe1] sm:$0xff] %vm2647, %v4260
    %4413 = vst.msk [vmem:[%s4392 + $0xf1] sm:$0xff] %vm2647, %v4261
    %4414 = vst.msk [vmem:[%s4392 + $0xf9] sm:$0xff] %vm2647, %v4262
    %4415 = vst.msk [vmem:[%s4392 + $0x109] sm:$0xff] %vm2647, %v4263
    %4416 = vst.msk [vmem:[%s4392 + $0x111] sm:$0xff] %vm2647, %v4264
    %4417 = vst.msk [vmem:[%s4392 + $0x121] sm:$0xff] %vm2647, %v4265
    %4418 = vst.msk [vmem:[%s4392 + $0x129] sm:$0xff] %vm2647, %v4266
    %4419 = vst.msk [vmem:[%s4392 + $0x139] sm:$0xff] %vm2647, %v4267
    %4420 = vst.msk [vmem:[%s4392 + $0x141] sm:$0xff] %vm2647, %v4268
    %4421 = vst.msk [vmem:[%s4392 + $0x151] sm:$0xff] %vm2647, %v4269
    %4422 = vst.msk [vmem:[%s4392 + $0x159] sm:$0xff] %vm2647, %v4270
    %4423 = vst.msk [vmem:[%s4392 + $0x169] sm:$0xff] %vm2647, %v4271
    %4424 = vst.msk [vmem:[%s4392 + $0x171] sm:$0xff] %vm2647, %v4272
    %4425 = vst.msk [vmem:[%s4392 + $0x1b1] sm:$0xff] %vm2647, %v4273
    %4426 = vst.msk [vmem:[%s4392 + $0x1b9] sm:$0xff] %vm2647, %v4274
    %4427 = vst.msk [vmem:[%s4392 + $0x1c9] sm:$0xff] %vm2647, %v4275
    %4428 = vst.msk [vmem:[%s4392 + $0x1d1] sm:$0xff] %vm2647, %v4276
    %4429 = vst.msk [vmem:[%s4392 + $0x1e1] sm:$0xff] %vm2647, %v4277
    %4430 = vst.msk [vmem:[%s4392 + $0x1e9] sm:$0xff] %vm2647, %v4278
    %4431 = vst.msk [vmem:[%s4392 + $0x1f9] sm:$0xff] %vm2647, %v4279
    %4432 = vst.msk [vmem:[%s4392 + $0x201] sm:$0xff] %vm2647, %v4280
    %4433 = vst.msk [vmem:[%s4392 + $0x211] sm:$0xff] %vm2647, %v4281
    %4434 = vst.msk [vmem:[%s4392 + $0x219] sm:$0xff] %vm2647, %v4282
    %4435 = vst.msk [vmem:[%s4392 + $0x229] sm:$0xff] %vm2647, %v4283
    %4436 = vst.msk [vmem:[%s4392 + $0x231] sm:$0xff] %vm2647, %v4284
    %4437 = vst.msk [vmem:[%s4392 + $0x241] sm:$0xff] %vm2647, %v4285
    %4438 = vst.msk [vmem:[%s4392 + $0x249] sm:$0xff] %vm2647, %v4286
    %4439 = vst.msk [vmem:[%s4392 + $0x259] sm:$0xff] %vm2647, %v4287
    %4440 = vst.msk [vmem:[%s4392 + $0x261] sm:$0xff] %vm2647, %v4288
    %4441 = vst.msk [vmem:[%s4392 + $0x271] sm:$0xff] %vm2647, %v4289
    %4442 = vst.msk [vmem:[%s4392 + $0x279] sm:$0xff] %vm2647, %v4290
    %4443 = vst.msk [vmem:[%s4392 + $0x289] sm:$0xff] %vm2647, %v4291
    %4444 = vst.msk [vmem:[%s4392 + $0x291] sm:$0xff] %vm2647, %v4292
    %4445 = vst.msk [vmem:[%s4392 + $0x2a1] sm:$0xff] %vm2647, %v4293
    %4446 = vst.msk [vmem:[%s4392 + $0x2a9] sm:$0xff] %vm2647, %v4294
    %4447 = vst.msk [vmem:[%s4392 + $0x2b9] sm:$0xff] %vm2647, %v4295
    %4448 = vst.msk [vmem:[%s4392 + $0x2c1] sm:$0xff] %vm2647, %v4296
    %4449 = vst.msk [vmem:[%s4392 + $0x2d1] sm:$0xff] %vm2647, %v4297
    %4450 = vst.msk [vmem:[%s4392 + $0x2d9] sm:$0xff] %vm2647, %v4298
    %4451 = vst.msk [vmem:[%s4392 + $0x2e9] sm:$0xff] %vm2647, %v4299
    %4452 = vst.msk [vmem:[%s4392 + $0x2f1] sm:$0xff] %vm2647, %v4300
    %4453 = vst.msk [vmem:[%s4392 + $0x301] sm:$0xff] %vm2647, %v4301
    %4454 = vst.msk [vmem:[%s4392 + $0x309] sm:$0xff] %vm2647, %v4302
    %4455 = vst.msk [vmem:[%s4392 + $0x319] sm:$0xff] %vm2647, %v4303
    %4456 = vst.msk [vmem:[%s4392 + $0x321] sm:$0xff] %vm2647, %v4304
    %v4457 = vld [vmem:[#allocation2] sm:$0xff]
    %v4458 = vld [vmem:[#allocation2 + $0x8] sm:$0xff]
    %v4459 = vld [vmem:[#allocation2 + $0x18] sm:$0xff]
    %v4460 = vld [vmem:[#allocation2 + $0x20] sm:$0xff]
    %v4461 = vld [vmem:[#allocation2 + $0x30] sm:$0xff]
    %v4462 = vld [vmem:[#allocation2 + $0x38] sm:$0xff]
    %v4463 = vld [vmem:[#allocation2 + $0x48] sm:$0xff]
    %v4464 = vld [vmem:[#allocation2 + $0x50] sm:$0xff]
    %v4465 = vld [vmem:[#allocation2 + $0x60] sm:$0xff]
    %v4466 = vld [vmem:[#allocation2 + $0x68] sm:$0xff]
    %v4467 = vld [vmem:[#allocation2 + $0x78] sm:$0xff]
    %v4468 = vld [vmem:[#allocation2 + $0x80] sm:$0xff]
    %v4469 = vld [vmem:[#allocation2 + $0x90] sm:$0xff]
    %v4470 = vld [vmem:[#allocation2 + $0x98] sm:$0xff]
    %v4471 = vld [vmem:[#allocation2 + $0xa8] sm:$0xff]
    %v4472 = vld [vmem:[#allocation2 + $0xb0] sm:$0xff]
    %v4473 = vld [vmem:[#allocation2 + $0xc0] sm:$0xff]
    %v4474 = vld [vmem:[#allocation2 + $0xc8] sm:$0xff]
    %v4475 = vld [vmem:[#allocation2 + $0xd8] sm:$0xff]
    %v4476 = vld [vmem:[#allocation2 + $0xe0] sm:$0xff]
    %v4477 = vld [vmem:[#allocation2 + $0xf0] sm:$0xff]
    %v4478 = vld [vmem:[#allocation2 + $0xf8] sm:$0xff]
    %v4479 = vld [vmem:[#allocation2 + $0x108] sm:$0xff]
    %v4480 = vld [vmem:[#allocation2 + $0x110] sm:$0xff]
    %v4481 = vld [vmem:[#allocation2 + $0x120] sm:$0xff]
    %v4482 = vld [vmem:[#allocation2 + $0x128] sm:$0xff]
    %v4483 = vld [vmem:[#allocation2 + $0x138] sm:$0xff]
    %v4484 = vld [vmem:[#allocation2 + $0x140] sm:$0xff]
    %v4485 = vld [vmem:[#allocation2 + $0x150] sm:$0xff]
    %v4486 = vld [vmem:[#allocation2 + $0x158] sm:$0xff]
    %v4487 = vld [vmem:[#allocation2 + $0x168] sm:$0xff]
    %v4488 = vld [vmem:[#allocation2 + $0x170] sm:$0xff]
    %v4489 = vld [vmem:[#allocation2 + $0x1b0] sm:$0xff]
    %v4490 = vld [vmem:[#allocation2 + $0x1b8] sm:$0xff]
    %v4491 = vld [vmem:[#allocation2 + $0x1c8] sm:$0xff]
    %v4492 = vld [vmem:[#allocation2 + $0x1d0] sm:$0xff]
    %v4493 = vld [vmem:[#allocation2 + $0x1e0] sm:$0xff]
    %v4494 = vld [vmem:[#allocation2 + $0x1e8] sm:$0xff]
    %v4495 = vld [vmem:[#allocation2 + $0x1f8] sm:$0xff]
    %v4496 = vld [vmem:[#allocation2 + $0x200] sm:$0xff]
    %v4497 = vld [vmem:[#allocation2 + $0x210] sm:$0xff]
    %v4498 = vld [vmem:[#allocation2 + $0x218] sm:$0xff]
    %v4499 = vld [vmem:[#allocation2 + $0x228] sm:$0xff]
    %v4500 = vld [vmem:[#allocation2 + $0x230] sm:$0xff]
    %v4501 = vld [vmem:[#allocation2 + $0x240] sm:$0xff]
    %v4502 = vld [vmem:[#allocation2 + $0x248] sm:$0xff]
    %v4503 = vld [vmem:[#allocation2 + $0x258] sm:$0xff]
    %v4504 = vld [vmem:[#allocation2 + $0x260] sm:$0xff]
    %v4505 = vld [vmem:[#allocation2 + $0x270] sm:$0xff]
    %v4506 = vld [vmem:[#allocation2 + $0x278] sm:$0xff]
    %v4507 = vld [vmem:[#allocation2 + $0x288] sm:$0xff]
    %v4508 = vld [vmem:[#allocation2 + $0x290] sm:$0xff]
    %v4509 = vld [vmem:[#allocation2 + $0x2a0] sm:$0xff]
    %v4510 = vld [vmem:[#allocation2 + $0x2a8] sm:$0xff]
    %v4511 = vld [vmem:[#allocation2 + $0x2b8] sm:$0xff]
    %v4512 = vld [vmem:[#allocation2 + $0x2c0] sm:$0xff]
    %v4513 = vld [vmem:[#allocation2 + $0x2d0] sm:$0xff]
    %v4514 = vld [vmem:[#allocation2 + $0x2d8] sm:$0xff]
    %v4515 = vld [vmem:[#allocation2 + $0x2e8] sm:$0xff]
    %v4516 = vld [vmem:[#allocation2 + $0x2f0] sm:$0xff]
    %v4517 = vld [vmem:[#allocation2 + $0x300] sm:$0xff]
    %v4518 = vld [vmem:[#allocation2 + $0x308] sm:$0xff]
    %v4519 = vld [vmem:[#allocation2 + $0x318] sm:$0xff]
    %v4520 = vld [vmem:[#allocation2 + $0x320] sm:$0xff]
    %v4521 = vld [vmem:[#allocation2 + $0x1] sm:$0xff]
    %v4522 = vld [vmem:[#allocation2 + $0x9] sm:$0xff]
    %v4523 = vld [vmem:[#allocation2 + $0x19] sm:$0xff]
    %v4524 = vld [vmem:[#allocation2 + $0x21] sm:$0xff]
    %v4525 = vld [vmem:[#allocation2 + $0x31] sm:$0xff]
    %v4526 = vld [vmem:[#allocation2 + $0x39] sm:$0xff]
    %v4527 = vld [vmem:[#allocation2 + $0x49] sm:$0xff]
    %v4528 = vld [vmem:[#allocation2 + $0x51] sm:$0xff]
    %v4529 = vld [vmem:[#allocation2 + $0x61] sm:$0xff]
    %v4530 = vld [vmem:[#allocation2 + $0x69] sm:$0xff]
    %v4531 = vld [vmem:[#allocation2 + $0x79] sm:$0xff]
    %v4532 = vld [vmem:[#allocation2 + $0x81] sm:$0xff]
    %v4533 = vld [vmem:[#allocation2 + $0x91] sm:$0xff]
    %v4534 = vld [vmem:[#allocation2 + $0x99] sm:$0xff]
    %v4535 = vld [vmem:[#allocation2 + $0xa9] sm:$0xff]
    %v4536 = vld [vmem:[#allocation2 + $0xb1] sm:$0xff]
    %v4537 = vld [vmem:[#allocation2 + $0xc1] sm:$0xff]
    %v4538 = vld [vmem:[#allocation2 + $0xc9] sm:$0xff]
    %v4539 = vld [vmem:[#allocation2 + $0xd9] sm:$0xff]
    %v4540 = vld [vmem:[#allocation2 + $0xe1] sm:$0xff]
    %v4541 = vld [vmem:[#allocation2 + $0xf1] sm:$0xff]
    %v4542 = vld [vmem:[#allocation2 + $0xf9] sm:$0xff]
    %v4543 = vld [vmem:[#allocation2 + $0x109] sm:$0xff]
    %v4544 = vld [vmem:[#allocation2 + $0x111] sm:$0xff]
    %v4545 = vld [vmem:[#allocation2 + $0x121] sm:$0xff]
    %v4546 = vld [vmem:[#allocation2 + $0x129] sm:$0xff]
    %v4547 = vld [vmem:[#allocation2 + $0x139] sm:$0xff]
    %v4548 = vld [vmem:[#allocation2 + $0x141] sm:$0xff]
    %v4549 = vld [vmem:[#allocation2 + $0x151] sm:$0xff]
    %v4550 = vld [vmem:[#allocation2 + $0x159] sm:$0xff]
    %v4551 = vld [vmem:[#allocation2 + $0x169] sm:$0xff]
    %v4552 = vld [vmem:[#allocation2 + $0x171] sm:$0xff]
    %v4553 = vld [vmem:[#allocation2 + $0x1b1] sm:$0xff]
    %v4554 = vld [vmem:[#allocation2 + $0x1b9] sm:$0xff]
    %v4555 = vld [vmem:[#allocation2 + $0x1c9] sm:$0xff]
    %v4556 = vld [vmem:[#allocation2 + $0x1d1] sm:$0xff]
    %v4557 = vld [vmem:[#allocation2 + $0x1e1] sm:$0xff]
    %v4558 = vld [vmem:[#allocation2 + $0x1e9] sm:$0xff]
    %v4559 = vld [vmem:[#allocation2 + $0x1f9] sm:$0xff]
    %v4560 = vld [vmem:[#allocation2 + $0x201] sm:$0xff]
    %v4561 = vld [vmem:[#allocation2 + $0x211] sm:$0xff]
    %v4562 = vld [vmem:[#allocation2 + $0x219] sm:$0xff]
    %v4563 = vld [vmem:[#allocation2 + $0x229] sm:$0xff]
    %v4564 = vld [vmem:[#allocation2 + $0x231] sm:$0xff]
    %v4565 = vld [vmem:[#allocation2 + $0x241] sm:$0xff]
    %v4566 = vld [vmem:[#allocation2 + $0x249] sm:$0xff]
    %v4567 = vld [vmem:[#allocation2 + $0x259] sm:$0xff]
    %v4568 = vld [vmem:[#allocation2 + $0x261] sm:$0xff]
    %v4569 = vld [vmem:[#allocation2 + $0x271] sm:$0xff]
    %v4570 = vld [vmem:[#allocation2 + $0x279] sm:$0xff]
    %v4571 = vld [vmem:[#allocation2 + $0x289] sm:$0xff]
    %v4572 = vld [vmem:[#allocation2 + $0x291] sm:$0xff]
    %v4573 = vld [vmem:[#allocation2 + $0x2a1] sm:$0xff]
    %v4574 = vld [vmem:[#allocation2 + $0x2a9] sm:$0xff]
    %v4575 = vld [vmem:[#allocation2 + $0x2b9] sm:$0xff]
    %v4576 = vld [vmem:[#allocation2 + $0x2c1] sm:$0xff]
    %v4577 = vld [vmem:[#allocation2 + $0x2d1] sm:$0xff]
    %v4578 = vld [vmem:[#allocation2 + $0x2d9] sm:$0xff]
    %v4579 = vld [vmem:[#allocation2 + $0x2e9] sm:$0xff]
    %v4580 = vld [vmem:[#allocation2 + $0x2f1] sm:$0xff]
    %v4581 = vld [vmem:[#allocation2 + $0x301] sm:$0xff]
    %v4582 = vld [vmem:[#allocation2 + $0x309] sm:$0xff]
    %v4583 = vld [vmem:[#allocation2 + $0x319] sm:$0xff]
    %v4584 = vld [vmem:[#allocation2 + $0x321] sm:$0xff]
    %v4585 = vld [vmem:[#allocation2 + $0x2] sm:$0xff]
    %v4586 = vld [vmem:[#allocation2 + $0xa] sm:$0xff]
    %v4587 = vld [vmem:[#allocation2 + $0x1a] sm:$0xff]
    %v4588 = vld [vmem:[#allocation2 + $0x22] sm:$0xff]
    %v4589 = vld [vmem:[#allocation2 + $0x32] sm:$0xff]
    %v4590 = vld [vmem:[#allocation2 + $0x3a] sm:$0xff]
    %v4591 = vld [vmem:[#allocation2 + $0x4a] sm:$0xff]
    %v4592 = vld [vmem:[#allocation2 + $0x52] sm:$0xff]
    %v4593 = vld [vmem:[#allocation2 + $0x62] sm:$0xff]
    %v4594 = vld [vmem:[#allocation2 + $0x6a] sm:$0xff]
    %v4595 = vld [vmem:[#allocation2 + $0x7a] sm:$0xff]
    %v4596 = vld [vmem:[#allocation2 + $0x82] sm:$0xff]
    %v4597 = vld [vmem:[#allocation2 + $0x92] sm:$0xff]
    %v4598 = vld [vmem:[#allocation2 + $0x9a] sm:$0xff]
    %v4599 = vld [vmem:[#allocation2 + $0xaa] sm:$0xff]
    %v4600 = vld [vmem:[#allocation2 + $0xb2] sm:$0xff]
    %v4601 = vld [vmem:[#allocation2 + $0xc2] sm:$0xff]
    %v4602 = vld [vmem:[#allocation2 + $0xca] sm:$0xff]
    %v4603 = vld [vmem:[#allocation2 + $0xda] sm:$0xff]
    %v4604 = vld [vmem:[#allocation2 + $0xe2] sm:$0xff]
    %v4605 = vld [vmem:[#allocation2 + $0xf2] sm:$0xff]
    %v4606 = vld [vmem:[#allocation2 + $0xfa] sm:$0xff]
    %v4607 = vld [vmem:[#allocation2 + $0x10a] sm:$0xff]
    %v4608 = vld [vmem:[#allocation2 + $0x112] sm:$0xff]
    %v4609 = vld [vmem:[#allocation2 + $0x122] sm:$0xff]
    %v4610 = vld [vmem:[#allocation2 + $0x12a] sm:$0xff]
    %v4611 = vld [vmem:[#allocation2 + $0x13a] sm:$0xff]
    %v4612 = vld [vmem:[#allocation2 + $0x142] sm:$0xff]
    %v4613 = vld [vmem:[#allocation2 + $0x152] sm:$0xff]
    %v4614 = vld [vmem:[#allocation2 + $0x15a] sm:$0xff]
    %v4615 = vld [vmem:[#allocation2 + $0x16a] sm:$0xff]
    %v4616 = vld [vmem:[#allocation2 + $0x172] sm:$0xff]
    %v4617 = vld [vmem:[#allocation2 + $0x1b2] sm:$0xff]
    %v4618 = vld [vmem:[#allocation2 + $0x1ba] sm:$0xff]
    %v4619 = vld [vmem:[#allocation2 + $0x1ca] sm:$0xff]
    %v4620 = vld [vmem:[#allocation2 + $0x1d2] sm:$0xff]
    %v4621 = vld [vmem:[#allocation2 + $0x1e2] sm:$0xff]
    %v4622 = vld [vmem:[#allocation2 + $0x1ea] sm:$0xff]
    %v4623 = vld [vmem:[#allocation2 + $0x1fa] sm:$0xff]
    %v4624 = vld [vmem:[#allocation2 + $0x202] sm:$0xff]
    %v4625 = vld [vmem:[#allocation2 + $0x212] sm:$0xff]
    %v4626 = vld [vmem:[#allocation2 + $0x21a] sm:$0xff]
    %v4627 = vld [vmem:[#allocation2 + $0x22a] sm:$0xff]
    %v4628 = vld [vmem:[#allocation2 + $0x232] sm:$0xff]
    %v4629 = vld [vmem:[#allocation2 + $0x242] sm:$0xff]
    %v4630 = vld [vmem:[#allocation2 + $0x24a] sm:$0xff]
    %v4631 = vld [vmem:[#allocation2 + $0x25a] sm:$0xff]
    %v4632 = vld [vmem:[#allocation2 + $0x262] sm:$0xff]
    %v4633 = vld [vmem:[#allocation2 + $0x272] sm:$0xff]
    %v4634 = vld [vmem:[#allocation2 + $0x27a] sm:$0xff]
    %v4635 = vld [vmem:[#allocation2 + $0x28a] sm:$0xff]
    %v4636 = vld [vmem:[#allocation2 + $0x292] sm:$0xff]
    %v4637 = vld [vmem:[#allocation2 + $0x2a2] sm:$0xff]
    %v4638 = vld [vmem:[#allocation2 + $0x2aa] sm:$0xff]
    %v4639 = vld [vmem:[#allocation2 + $0x2ba] sm:$0xff]
    %v4640 = vld [vmem:[#allocation2 + $0x2c2] sm:$0xff]
    %v4641 = vld [vmem:[#allocation2 + $0x2d2] sm:$0xff]
    %v4642 = vld [vmem:[#allocation2 + $0x2da] sm:$0xff]
    %v4643 = vld [vmem:[#allocation2 + $0x2ea] sm:$0xff]
    %v4644 = vld [vmem:[#allocation2 + $0x2f2] sm:$0xff]
    %v4645 = vld [vmem:[#allocation2 + $0x302] sm:$0xff]
    %v4646 = vld [vmem:[#allocation2 + $0x30a] sm:$0xff]
    %v4647 = vld [vmem:[#allocation2 + $0x31a] sm:$0xff]
    %v4648 = vld [vmem:[#allocation2 + $0x322] sm:$0xff]
    %v4649 = vld [vmem:[%s4392] sm:$0xff]
    %v4650 = vld [vmem:[%s4392 + $0x8] sm:$0xff]
    %v4651 = vld [vmem:[%s4392 + $0x18] sm:$0xff]
    %v4652 = vld [vmem:[%s4392 + $0x20] sm:$0xff]
    %v4653 = vld [vmem:[%s4392 + $0x30] sm:$0xff]
    %v4654 = vld [vmem:[%s4392 + $0x38] sm:$0xff]
    %v4655 = vld [vmem:[%s4392 + $0x48] sm:$0xff]
    %v4656 = vld [vmem:[%s4392 + $0x50] sm:$0xff]
    %v4657 = vld [vmem:[%s4392 + $0x60] sm:$0xff]
    %v4658 = vld [vmem:[%s4392 + $0x68] sm:$0xff]
    %v4659 = vld [vmem:[%s4392 + $0x78] sm:$0xff]
    %v4660 = vld [vmem:[%s4392 + $0x80] sm:$0xff]
    %v4661 = vld [vmem:[%s4392 + $0x90] sm:$0xff]
    %v4662 = vld [vmem:[%s4392 + $0x98] sm:$0xff]
    %v4663 = vld [vmem:[%s4392 + $0xa8] sm:$0xff]
    %v4664 = vld [vmem:[%s4392 + $0xb0] sm:$0xff]
    %v4665 = vld [vmem:[%s4392 + $0xc0] sm:$0xff]
    %v4666 = vld [vmem:[%s4392 + $0xc8] sm:$0xff]
    %v4667 = vld [vmem:[%s4392 + $0xd8] sm:$0xff]
    %v4668 = vld [vmem:[%s4392 + $0xe0] sm:$0xff]
    %v4669 = vld [vmem:[%s4392 + $0xf0] sm:$0xff]
    %v4670 = vld [vmem:[%s4392 + $0xf8] sm:$0xff]
    %v4671 = vld [vmem:[%s4392 + $0x108] sm:$0xff]
    %v4672 = vld [vmem:[%s4392 + $0x110] sm:$0xff]
    %v4673 = vld [vmem:[%s4392 + $0x120] sm:$0xff]
    %v4674 = vld [vmem:[%s4392 + $0x128] sm:$0xff]
    %v4675 = vld [vmem:[%s4392 + $0x138] sm:$0xff]
    %v4676 = vld [vmem:[%s4392 + $0x140] sm:$0xff]
    %v4677 = vld [vmem:[%s4392 + $0x150] sm:$0xff]
    %v4678 = vld [vmem:[%s4392 + $0x158] sm:$0xff]
    %v4679 = vld [vmem:[%s4392 + $0x168] sm:$0xff]
    %v4680 = vld [vmem:[%s4392 + $0x170] sm:$0xff]
    %v4681 = vld [vmem:[%s4392 + $0x1b0] sm:$0xff]
    %v4682 = vld [vmem:[%s4392 + $0x1b8] sm:$0xff]
    %v4683 = vld [vmem:[%s4392 + $0x1c8] sm:$0xff]
    %v4684 = vld [vmem:[%s4392 + $0x1d0] sm:$0xff]
    %v4685 = vld [vmem:[%s4392 + $0x1e0] sm:$0xff]
    %v4686 = vld [vmem:[%s4392 + $0x1e8] sm:$0xff]
    %v4687 = vld [vmem:[%s4392 + $0x1f8] sm:$0xff]
    %v4688 = vld [vmem:[%s4392 + $0x200] sm:$0xff]
    %v4689 = vld [vmem:[%s4392 + $0x210] sm:$0xff]
    %v4690 = vld [vmem:[%s4392 + $0x218] sm:$0xff]
    %v4691 = vld [vmem:[%s4392 + $0x228] sm:$0xff]
    %v4692 = vld [vmem:[%s4392 + $0x230] sm:$0xff]
    %v4693 = vld [vmem:[%s4392 + $0x240] sm:$0xff]
    %v4694 = vld [vmem:[%s4392 + $0x248] sm:$0xff]
    %v4695 = vld [vmem:[%s4392 + $0x258] sm:$0xff]
    %v4696 = vld [vmem:[%s4392 + $0x260] sm:$0xff]
    %v4697 = vld [vmem:[%s4392 + $0x270] sm:$0xff]
    %v4698 = vld [vmem:[%s4392 + $0x278] sm:$0xff]
    %v4699 = vld [vmem:[%s4392 + $0x288] sm:$0xff]
    %v4700 = vld [vmem:[%s4392 + $0x290] sm:$0xff]
    %v4701 = vld [vmem:[%s4392 + $0x2a0] sm:$0xff]
    %v4702 = vld [vmem:[%s4392 + $0x2a8] sm:$0xff]
    %v4703 = vld [vmem:[%s4392 + $0x2b8] sm:$0xff]
    %v4704 = vld [vmem:[%s4392 + $0x2c0] sm:$0xff]
    %v4705 = vld [vmem:[%s4392 + $0x2d0] sm:$0xff]
    %v4706 = vld [vmem:[%s4392 + $0x2d8] sm:$0xff]
    %v4707 = vld [vmem:[%s4392 + $0x2e8] sm:$0xff]
    %v4708 = vld [vmem:[%s4392 + $0x2f0] sm:$0xff]
    %v4709 = vld [vmem:[%s4392 + $0x300] sm:$0xff]
    %v4710 = vld [vmem:[%s4392 + $0x308] sm:$0xff]
    %v4711 = vld [vmem:[%s4392 + $0x318] sm:$0xff]
    %v4712 = vld [vmem:[%s4392 + $0x320] sm:$0xff]
    %v4713 = vld [vmem:[%s4392 + $0x1] sm:$0xff]
    %v4714 = vld [vmem:[%s4392 + $0x9] sm:$0xff]
    %v4715 = vld [vmem:[%s4392 + $0x19] sm:$0xff]
    %v4716 = vld [vmem:[%s4392 + $0x21] sm:$0xff]
    %v4717 = vld [vmem:[%s4392 + $0x31] sm:$0xff]
    %v4718 = vld [vmem:[%s4392 + $0x39] sm:$0xff]
    %v4719 = vld [vmem:[%s4392 + $0x49] sm:$0xff]
    %v4720 = vld [vmem:[%s4392 + $0x51] sm:$0xff]
    %v4721 = vld [vmem:[%s4392 + $0x61] sm:$0xff]
    %v4722 = vld [vmem:[%s4392 + $0x69] sm:$0xff]
    %v4723 = vld [vmem:[%s4392 + $0x79] sm:$0xff]
    %v4724 = vld [vmem:[%s4392 + $0x81] sm:$0xff]
    %v4725 = vld [vmem:[%s4392 + $0x91] sm:$0xff]
    %v4726 = vld [vmem:[%s4392 + $0x99] sm:$0xff]
    %v4727 = vld [vmem:[%s4392 + $0xa9] sm:$0xff]
    %v4728 = vld [vmem:[%s4392 + $0xb1] sm:$0xff]
    %v4729 = vld [vmem:[%s4392 + $0xc1] sm:$0xff]
    %v4730 = vld [vmem:[%s4392 + $0xc9] sm:$0xff]
    %v4731 = vld [vmem:[%s4392 + $0xd9] sm:$0xff]
    %v4732 = vld [vmem:[%s4392 + $0xe1] sm:$0xff]
    %v4733 = vld [vmem:[%s4392 + $0xf1] sm:$0xff]
    %v4734 = vld [vmem:[%s4392 + $0xf9] sm:$0xff]
    %v4735 = vld [vmem:[%s4392 + $0x109] sm:$0xff]
    %v4736 = vld [vmem:[%s4392 + $0x111] sm:$0xff]
    %v4737 = vld [vmem:[%s4392 + $0x121] sm:$0xff]
    %v4738 = vld [vmem:[%s4392 + $0x129] sm:$0xff]
    %v4739 = vld [vmem:[%s4392 + $0x139] sm:$0xff]
    %v4740 = vld [vmem:[%s4392 + $0x141] sm:$0xff]
    %v4741 = vld [vmem:[%s4392 + $0x151] sm:$0xff]
    %v4742 = vld [vmem:[%s4392 + $0x159] sm:$0xff]
    %v4743 = vld [vmem:[%s4392 + $0x169] sm:$0xff]
    %v4744 = vld [vmem:[%s4392 + $0x171] sm:$0xff]
    %v4745 = vld [vmem:[%s4392 + $0x1b1] sm:$0xff]
    %v4746 = vld [vmem:[%s4392 + $0x1b9] sm:$0xff]
    %v4747 = vld [vmem:[%s4392 + $0x1c9] sm:$0xff]
    %v4748 = vld [vmem:[%s4392 + $0x1d1] sm:$0xff]
    %v4749 = vld [vmem:[%s4392 + $0x1e1] sm:$0xff]
    %v4750 = vld [vmem:[%s4392 + $0x1e9] sm:$0xff]
    %v4751 = vld [vmem:[%s4392 + $0x1f9] sm:$0xff]
    %v4752 = vld [vmem:[%s4392 + $0x201] sm:$0xff]
    %v4753 = vld [vmem:[%s4392 + $0x211] sm:$0xff]
    %v4754 = vld [vmem:[%s4392 + $0x219] sm:$0xff]
    %v4755 = vld [vmem:[%s4392 + $0x229] sm:$0xff]
    %v4756 = vld [vmem:[%s4392 + $0x231] sm:$0xff]
    %v4757 = vld [vmem:[%s4392 + $0x241] sm:$0xff]
    %v4758 = vld [vmem:[%s4392 + $0x249] sm:$0xff]
    %v4759 = vld [vmem:[%s4392 + $0x259] sm:$0xff]
    %v4760 = vld [vmem:[%s4392 + $0x261] sm:$0xff]
    %v4761 = vld [vmem:[%s4392 + $0x271] sm:$0xff]
    %v4762 = vld [vmem:[%s4392 + $0x279] sm:$0xff]
    %v4763 = vld [vmem:[%s4392 + $0x289] sm:$0xff]
    %v4764 = vld [vmem:[%s4392 + $0x291] sm:$0xff]
    %v4765 = vld [vmem:[%s4392 + $0x2a1] sm:$0xff]
    %v4766 = vld [vmem:[%s4392 + $0x2a9] sm:$0xff]
    %v4767 = vld [vmem:[%s4392 + $0x2b9] sm:$0xff]
    %v4768 = vld [vmem:[%s4392 + $0x2c1] sm:$0xff]
    %v4769 = vld [vmem:[%s4392 + $0x2d1] sm:$0xff]
    %v4770 = vld [vmem:[%s4392 + $0x2d9] sm:$0xff]
    %v4771 = vld [vmem:[%s4392 + $0x2e9] sm:$0xff]
    %v4772 = vld [vmem:[%s4392 + $0x2f1] sm:$0xff]
    %v4773 = vld [vmem:[%s4392 + $0x301] sm:$0xff]
    %v4774 = vld [vmem:[%s4392 + $0x309] sm:$0xff]
    %v4775 = vld [vmem:[%s4392 + $0x319] sm:$0xff]
    %v4776 = vld [vmem:[%s4392 + $0x321] sm:$0xff]
    %v4777 = vld [vmem:[%s4392 + $0x2] sm:$0xff]
    %v4778 = vld [vmem:[%s4392 + $0xa] sm:$0xff]
    %v4779 = vld [vmem:[%s4392 + $0x1a] sm:$0xff]
    %v4780 = vld [vmem:[%s4392 + $0x22] sm:$0xff]
    %v4781 = vld [vmem:[%s4392 + $0x32] sm:$0xff]
    %v4782 = vld [vmem:[%s4392 + $0x3a] sm:$0xff]
    %v4783 = vld [vmem:[%s4392 + $0x4a] sm:$0xff]
    %v4784 = vld [vmem:[%s4392 + $0x52] sm:$0xff]
    %v4785 = vld [vmem:[%s4392 + $0x62] sm:$0xff]
    %v4786 = vld [vmem:[%s4392 + $0x6a] sm:$0xff]
    %v4787 = vld [vmem:[%s4392 + $0x7a] sm:$0xff]
    %v4788 = vld [vmem:[%s4392 + $0x82] sm:$0xff]
    %v4789 = vld [vmem:[%s4392 + $0x92] sm:$0xff]
    %v4790 = vld [vmem:[%s4392 + $0x9a] sm:$0xff]
    %v4791 = vld [vmem:[%s4392 + $0xaa] sm:$0xff]
    %v4792 = vld [vmem:[%s4392 + $0xb2] sm:$0xff]
    %v4793 = vld [vmem:[%s4392 + $0xc2] sm:$0xff]
    %v4794 = vld [vmem:[%s4392 + $0xca] sm:$0xff]
    %v4795 = vld [vmem:[%s4392 + $0xda] sm:$0xff]
    %v4796 = vld [vmem:[%s4392 + $0xe2] sm:$0xff]
    %v4797 = vld [vmem:[%s4392 + $0xf2] sm:$0xff]
    %v4798 = vld [vmem:[%s4392 + $0xfa] sm:$0xff]
    %v4799 = vld [vmem:[%s4392 + $0x10a] sm:$0xff]
    %v4800 = vld [vmem:[%s4392 + $0x112] sm:$0xff]
    %v4801 = vld [vmem:[%s4392 + $0x122] sm:$0xff]
    %v4802 = vld [vmem:[%s4392 + $0x12a] sm:$0xff]
    %v4803 = vld [vmem:[%s4392 + $0x13a] sm:$0xff]
    %v4804 = vld [vmem:[%s4392 + $0x142] sm:$0xff]
    %v4805 = vld [vmem:[%s4392 + $0x152] sm:$0xff]
    %v4806 = vld [vmem:[%s4392 + $0x15a] sm:$0xff]
    %v4807 = vld [vmem:[%s4392 + $0x16a] sm:$0xff]
    %v4808 = vld [vmem:[%s4392 + $0x172] sm:$0xff]
    %v4809 = vld [vmem:[%s4392 + $0x1b2] sm:$0xff]
    %v4810 = vld [vmem:[%s4392 + $0x1ba] sm:$0xff]
    %v4811 = vld [vmem:[%s4392 + $0x1ca] sm:$0xff]
    %v4812 = vld [vmem:[%s4392 + $0x1d2] sm:$0xff]
    %v4813 = vld [vmem:[%s4392 + $0x1e2] sm:$0xff]
    %v4814 = vld [vmem:[%s4392 + $0x1ea] sm:$0xff]
    %v4815 = vld [vmem:[%s4392 + $0x1fa] sm:$0xff]
    %v4816 = vld [vmem:[%s4392 + $0x202] sm:$0xff]
    %v4817 = vld [vmem:[%s4392 + $0x212] sm:$0xff]
    %v4818 = vld [vmem:[%s4392 + $0x21a] sm:$0xff]
    %v4819 = vld [vmem:[%s4392 + $0x22a] sm:$0xff]
    %v4820 = vld [vmem:[%s4392 + $0x232] sm:$0xff]
    %v4821 = vld [vmem:[%s4392 + $0x242] sm:$0xff]
    %v4822 = vld [vmem:[%s4392 + $0x24a] sm:$0xff]
    %v4823 = vld [vmem:[%s4392 + $0x25a] sm:$0xff]
    %v4824 = vld [vmem:[%s4392 + $0x262] sm:$0xff]
    %v4825 = vld [vmem:[%s4392 + $0x272] sm:$0xff]
    %v4826 = vld [vmem:[%s4392 + $0x27a] sm:$0xff]
    %v4827 = vld [vmem:[%s4392 + $0x28a] sm:$0xff]
    %v4828 = vld [vmem:[%s4392 + $0x292] sm:$0xff]
    %v4829 = vld [vmem:[%s4392 + $0x2a2] sm:$0xff]
    %v4830 = vld [vmem:[%s4392 + $0x2aa] sm:$0xff]
    %v4831 = vld [vmem:[%s4392 + $0x2ba] sm:$0xff]
    %v4832 = vld [vmem:[%s4392 + $0x2c2] sm:$0xff]
    %v4833 = vld [vmem:[%s4392 + $0x2d2] sm:$0xff]
    %v4834 = vld [vmem:[%s4392 + $0x2da] sm:$0xff]
    %v4835 = vld [vmem:[%s4392 + $0x2ea] sm:$0xff]
    %v4836 = vld [vmem:[%s4392 + $0x2f2] sm:$0xff]
    %v4837 = vld [vmem:[%s4392 + $0x302] sm:$0xff]
    %v4838 = vld [vmem:[%s4392 + $0x30a] sm:$0xff]
    %v4839 = vld [vmem:[%s4392 + $0x31a] sm:$0xff]
    %v4840 = vld [vmem:[%s4392 + $0x322] sm:$0xff]
    %s4841 = scalar_lea.vmem [#allocation2], 48
    %v4842 = vld [vmem:[%s4841] sm:$0xff]
    %v4843 = vld [vmem:[%s4841 + $0x8] sm:$0xff]
    %v4844 = vld [vmem:[%s4841 + $0x18] sm:$0xff]
    %v4845 = vld [vmem:[%s4841 + $0x20] sm:$0xff]
    %v4846 = vld [vmem:[%s4841 + $0x30] sm:$0xff]
    %v4847 = vld [vmem:[%s4841 + $0x38] sm:$0xff]
    %v4848 = vld [vmem:[%s4841 + $0x48] sm:$0xff]
    %v4849 = vld [vmem:[%s4841 + $0x50] sm:$0xff]
    %v4850 = vld [vmem:[%s4841 + $0x60] sm:$0xff]
    %v4851 = vld [vmem:[%s4841 + $0x68] sm:$0xff]
    %v4852 = vld [vmem:[%s4841 + $0x78] sm:$0xff]
    %v4853 = vld [vmem:[%s4841 + $0x80] sm:$0xff]
    %v4854 = vld [vmem:[%s4841 + $0x90] sm:$0xff]
    %v4855 = vld [vmem:[%s4841 + $0x98] sm:$0xff]
    %v4856 = vld [vmem:[%s4841 + $0xa8] sm:$0xff]
    %v4857 = vld [vmem:[%s4841 + $0xb0] sm:$0xff]
    %v4858 = vld [vmem:[%s4841 + $0xc0] sm:$0xff]
    %v4859 = vld [vmem:[%s4841 + $0xc8] sm:$0xff]
    %v4860 = vld [vmem:[%s4841 + $0xd8] sm:$0xff]
    %v4861 = vld [vmem:[%s4841 + $0xe0] sm:$0xff]
    %v4862 = vld [vmem:[%s4841 + $0xf0] sm:$0xff]
    %v4863 = vld [vmem:[%s4841 + $0xf8] sm:$0xff]
    %v4864 = vld [vmem:[%s4841 + $0x108] sm:$0xff]
    %v4865 = vld [vmem:[%s4841 + $0x110] sm:$0xff]
    %v4866 = vld [vmem:[%s4841 + $0x120] sm:$0xff]
    %v4867 = vld [vmem:[%s4841 + $0x128] sm:$0xff]
    %v4868 = vld [vmem:[%s4841 + $0x138] sm:$0xff]
    %v4869 = vld [vmem:[%s4841 + $0x140] sm:$0xff]
    %v4870 = vld [vmem:[%s4841 + $0x150] sm:$0xff]
    %v4871 = vld [vmem:[%s4841 + $0x158] sm:$0xff]
    %v4872 = vld [vmem:[%s4841 + $0x168] sm:$0xff]
    %v4873 = vld [vmem:[%s4841 + $0x170] sm:$0xff]
    %v4874 = vld [vmem:[%s4841 + $0x1b0] sm:$0xff]
    %v4875 = vld [vmem:[%s4841 + $0x1b8] sm:$0xff]
    %v4876 = vld [vmem:[%s4841 + $0x1c8] sm:$0xff]
    %v4877 = vld [vmem:[%s4841 + $0x1d0] sm:$0xff]
    %v4878 = vld [vmem:[%s4841 + $0x1e0] sm:$0xff]
    %v4879 = vld [vmem:[%s4841 + $0x1e8] sm:$0xff]
    %v4880 = vld [vmem:[%s4841 + $0x1f8] sm:$0xff]
    %v4881 = vld [vmem:[%s4841 + $0x200] sm:$0xff]
    %v4882 = vld [vmem:[%s4841 + $0x210] sm:$0xff]
    %v4883 = vld [vmem:[%s4841 + $0x218] sm:$0xff]
    %v4884 = vld [vmem:[%s4841 + $0x228] sm:$0xff]
    %v4885 = vld [vmem:[%s4841 + $0x230] sm:$0xff]
    %v4886 = vld [vmem:[%s4841 + $0x240] sm:$0xff]
    %v4887 = vld [vmem:[%s4841 + $0x248] sm:$0xff]
    %v4888 = vld [vmem:[%s4841 + $0x258] sm:$0xff]
    %v4889 = vld [vmem:[%s4841 + $0x260] sm:$0xff]
    %v4890 = vld [vmem:[%s4841 + $0x270] sm:$0xff]
    %v4891 = vld [vmem:[%s4841 + $0x278] sm:$0xff]
    %v4892 = vld [vmem:[%s4841 + $0x288] sm:$0xff]
    %v4893 = vld [vmem:[%s4841 + $0x290] sm:$0xff]
    %v4894 = vld [vmem:[%s4841 + $0x2a0] sm:$0xff]
    %v4895 = vld [vmem:[%s4841 + $0x2a8] sm:$0xff]
    %v4896 = vld [vmem:[%s4841 + $0x2b8] sm:$0xff]
    %v4897 = vld [vmem:[%s4841 + $0x2c0] sm:$0xff]
    %v4898 = vld [vmem:[%s4841 + $0x2d0] sm:$0xff]
    %v4899 = vld [vmem:[%s4841 + $0x2d8] sm:$0xff]
    %v4900 = vld [vmem:[%s4841 + $0x2e8] sm:$0xff]
    %v4901 = vld [vmem:[%s4841 + $0x2f0] sm:$0xff]
    %v4902 = vld [vmem:[%s4841 + $0x300] sm:$0xff]
    %v4903 = vld [vmem:[%s4841 + $0x308] sm:$0xff]
    %v4904 = vld [vmem:[%s4841 + $0x318] sm:$0xff]
    %v4905 = vld [vmem:[%s4841 + $0x320] sm:$0xff]
    %v4906 = vld [vmem:[%s4841 + $0x1] sm:$0xff]
    %v4907 = vld [vmem:[%s4841 + $0x9] sm:$0xff]
    %v4908 = vld [vmem:[%s4841 + $0x19] sm:$0xff]
    %v4909 = vld [vmem:[%s4841 + $0x21] sm:$0xff]
    %v4910 = vld [vmem:[%s4841 + $0x31] sm:$0xff]
    %v4911 = vld [vmem:[%s4841 + $0x39] sm:$0xff]
    %v4912 = vld [vmem:[%s4841 + $0x49] sm:$0xff]
    %v4913 = vld [vmem:[%s4841 + $0x51] sm:$0xff]
    %v4914 = vld [vmem:[%s4841 + $0x61] sm:$0xff]
    %v4915 = vld [vmem:[%s4841 + $0x69] sm:$0xff]
    %v4916 = vld [vmem:[%s4841 + $0x79] sm:$0xff]
    %v4917 = vld [vmem:[%s4841 + $0x81] sm:$0xff]
    %v4918 = vld [vmem:[%s4841 + $0x91] sm:$0xff]
    %v4919 = vld [vmem:[%s4841 + $0x99] sm:$0xff]
    %v4920 = vld [vmem:[%s4841 + $0xa9] sm:$0xff]
    %v4921 = vld [vmem:[%s4841 + $0xb1] sm:$0xff]
    %v4922 = vld [vmem:[%s4841 + $0xc1] sm:$0xff]
    %v4923 = vld [vmem:[%s4841 + $0xc9] sm:$0xff]
    %v4924 = vld [vmem:[%s4841 + $0xd9] sm:$0xff]
    %v4925 = vld [vmem:[%s4841 + $0xe1] sm:$0xff]
    %v4926 = vld [vmem:[%s4841 + $0xf1] sm:$0xff]
    %v4927 = vld [vmem:[%s4841 + $0xf9] sm:$0xff]
    %v4928 = vld [vmem:[%s4841 + $0x109] sm:$0xff]
    %v4929 = vld [vmem:[%s4841 + $0x111] sm:$0xff]
    %v4930 = vld [vmem:[%s4841 + $0x121] sm:$0xff]
    %v4931 = vld [vmem:[%s4841 + $0x129] sm:$0xff]
    %v4932 = vld [vmem:[%s4841 + $0x139] sm:$0xff]
    %v4933 = vld [vmem:[%s4841 + $0x141] sm:$0xff]
    %v4934 = vld [vmem:[%s4841 + $0x151] sm:$0xff]
    %v4935 = vld [vmem:[%s4841 + $0x159] sm:$0xff]
    %v4936 = vld [vmem:[%s4841 + $0x169] sm:$0xff]
    %v4937 = vld [vmem:[%s4841 + $0x171] sm:$0xff]
    %v4938 = vld [vmem:[%s4841 + $0x1b1] sm:$0xff]
    %v4939 = vld [vmem:[%s4841 + $0x1b9] sm:$0xff]
    %v4940 = vld [vmem:[%s4841 + $0x1c9] sm:$0xff]
    %v4941 = vld [vmem:[%s4841 + $0x1d1] sm:$0xff]
    %v4942 = vld [vmem:[%s4841 + $0x1e1] sm:$0xff]
    %v4943 = vld [vmem:[%s4841 + $0x1e9] sm:$0xff]
    %v4944 = vld [vmem:[%s4841 + $0x1f9] sm:$0xff]
    %v4945 = vld [vmem:[%s4841 + $0x201] sm:$0xff]
    %v4946 = vld [vmem:[%s4841 + $0x211] sm:$0xff]
    %v4947 = vld [vmem:[%s4841 + $0x219] sm:$0xff]
    %v4948 = vld [vmem:[%s4841 + $0x229] sm:$0xff]
    %v4949 = vld [vmem:[%s4841 + $0x231] sm:$0xff]
    %v4950 = vld [vmem:[%s4841 + $0x241] sm:$0xff]
    %v4951 = vld [vmem:[%s4841 + $0x249] sm:$0xff]
    %v4952 = vld [vmem:[%s4841 + $0x259] sm:$0xff]
    %v4953 = vld [vmem:[%s4841 + $0x261] sm:$0xff]
    %v4954 = vld [vmem:[%s4841 + $0x271] sm:$0xff]
    %v4955 = vld [vmem:[%s4841 + $0x279] sm:$0xff]
    %v4956 = vld [vmem:[%s4841 + $0x289] sm:$0xff]
    %v4957 = vld [vmem:[%s4841 + $0x291] sm:$0xff]
    %v4958 = vld [vmem:[%s4841 + $0x2a1] sm:$0xff]
    %v4959 = vld [vmem:[%s4841 + $0x2a9] sm:$0xff]
    %v4960 = vld [vmem:[%s4841 + $0x2b9] sm:$0xff]
    %v4961 = vld [vmem:[%s4841 + $0x2c1] sm:$0xff]
    %v4962 = vld [vmem:[%s4841 + $0x2d1] sm:$0xff]
    %v4963 = vld [vmem:[%s4841 + $0x2d9] sm:$0xff]
    %v4964 = vld [vmem:[%s4841 + $0x2e9] sm:$0xff]
    %v4965 = vld [vmem:[%s4841 + $0x2f1] sm:$0xff]
    %v4966 = vld [vmem:[%s4841 + $0x301] sm:$0xff]
    %v4967 = vld [vmem:[%s4841 + $0x309] sm:$0xff]
    %v4968 = vld [vmem:[%s4841 + $0x319] sm:$0xff]
    %v4969 = vld [vmem:[%s4841 + $0x321] sm:$0xff]
    %v4970 = vld [vmem:[%s4841 + $0x2] sm:$0xff]
    %v4971 = vld [vmem:[%s4841 + $0xa] sm:$0xff]
    %v4972 = vld [vmem:[%s4841 + $0x1a] sm:$0xff]
    %v4973 = vld [vmem:[%s4841 + $0x22] sm:$0xff]
    %v4974 = vld [vmem:[%s4841 + $0x32] sm:$0xff]
    %v4975 = vld [vmem:[%s4841 + $0x3a] sm:$0xff]
    %v4976 = vld [vmem:[%s4841 + $0x4a] sm:$0xff]
    %v4977 = vld [vmem:[%s4841 + $0x52] sm:$0xff]
    %v4978 = vld [vmem:[%s4841 + $0x62] sm:$0xff]
    %v4979 = vld [vmem:[%s4841 + $0x6a] sm:$0xff]
    %v4980 = vld [vmem:[%s4841 + $0x7a] sm:$0xff]
    %v4981 = vld [vmem:[%s4841 + $0x82] sm:$0xff]
    %v4982 = vld [vmem:[%s4841 + $0x92] sm:$0xff]
    %v4983 = vld [vmem:[%s4841 + $0x9a] sm:$0xff]
    %v4984 = vld [vmem:[%s4841 + $0xaa] sm:$0xff]
    %v4985 = vld [vmem:[%s4841 + $0xb2] sm:$0xff]
    %v4986 = vld [vmem:[%s4841 + $0xc2] sm:$0xff]
    %v4987 = vld [vmem:[%s4841 + $0xca] sm:$0xff]
    %v4988 = vld [vmem:[%s4841 + $0xda] sm:$0xff]
    %v4989 = vld [vmem:[%s4841 + $0xe2] sm:$0xff]
    %v4990 = vld [vmem:[%s4841 + $0xf2] sm:$0xff]
    %v4991 = vld [vmem:[%s4841 + $0xfa] sm:$0xff]
    %v4992 = vld [vmem:[%s4841 + $0x10a] sm:$0xff]
    %v4993 = vld [vmem:[%s4841 + $0x112] sm:$0xff]
    %v4994 = vld [vmem:[%s4841 + $0x122] sm:$0xff]
    %v4995 = vld [vmem:[%s4841 + $0x12a] sm:$0xff]
    %v4996 = vld [vmem:[%s4841 + $0x13a] sm:$0xff]
    %v4997 = vld [vmem:[%s4841 + $0x142] sm:$0xff]
    %v4998 = vld [vmem:[%s4841 + $0x152] sm:$0xff]
    %v4999 = vld [vmem:[%s4841 + $0x15a] sm:$0xff]
    %v5000 = vld [vmem:[%s4841 + $0x16a] sm:$0xff]
    %v5001 = vld [vmem:[%s4841 + $0x172] sm:$0xff]
    %v5002 = vld [vmem:[%s4841 + $0x1b2] sm:$0xff]
    %v5003 = vld [vmem:[%s4841 + $0x1ba] sm:$0xff]
    %v5004 = vld [vmem:[%s4841 + $0x1ca] sm:$0xff]
    %v5005 = vld [vmem:[%s4841 + $0x1d2] sm:$0xff]
    %v5006 = vld [vmem:[%s4841 + $0x1e2] sm:$0xff]
    %v5007 = vld [vmem:[%s4841 + $0x1ea] sm:$0xff]
    %v5008 = vld [vmem:[%s4841 + $0x1fa] sm:$0xff]
    %v5009 = vld [vmem:[%s4841 + $0x202] sm:$0xff]
    %v5010 = vld [vmem:[%s4841 + $0x212] sm:$0xff]
    %v5011 = vld [vmem:[%s4841 + $0x21a] sm:$0xff]
    %v5012 = vld [vmem:[%s4841 + $0x22a] sm:$0xff]
    %v5013 = vld [vmem:[%s4841 + $0x232] sm:$0xff]
    %v5014 = vld [vmem:[%s4841 + $0x242] sm:$0xff]
    %v5015 = vld [vmem:[%s4841 + $0x24a] sm:$0xff]
    %v5016 = vld [vmem:[%s4841 + $0x25a] sm:$0xff]
    %v5017 = vld [vmem:[%s4841 + $0x262] sm:$0xff]
    %v5018 = vld [vmem:[%s4841 + $0x272] sm:$0xff]
    %v5019 = vld [vmem:[%s4841 + $0x27a] sm:$0xff]
    %v5020 = vld [vmem:[%s4841 + $0x28a] sm:$0xff]
    %v5021 = vld [vmem:[%s4841 + $0x292] sm:$0xff]
    %v5022 = vld [vmem:[%s4841 + $0x2a2] sm:$0xff]
    %v5023 = vld [vmem:[%s4841 + $0x2aa] sm:$0xff]
    %v5024 = vld [vmem:[%s4841 + $0x2ba] sm:$0xff]
    %v5025 = vld [vmem:[%s4841 + $0x2c2] sm:$0xff]
    %v5026 = vld [vmem:[%s4841 + $0x2d2] sm:$0xff]
    %v5027 = vld [vmem:[%s4841 + $0x2da] sm:$0xff]
    %v5028 = vld [vmem:[%s4841 + $0x2ea] sm:$0xff]
    %v5029 = vld [vmem:[%s4841 + $0x2f2] sm:$0xff]
    %v5030 = vld [vmem:[%s4841 + $0x302] sm:$0xff]
    %v5031 = vld [vmem:[%s4841 + $0x30a] sm:$0xff]
    %v5032 = vld [vmem:[%s4841 + $0x31a] sm:$0xff]
    %v5033 = vld [vmem:[%s4841 + $0x322] sm:$0xff]
    %5098 = vrot.lane.b32.xlu0 %v4521, 8
    %v5099 = vpop.permute.xlu0 %5098
    %5100 = vrot.lane.b32.xlu0 %v4522, 8
    %v5101 = vpop.permute.xlu0 %5100
    %5102 = vrot.lane.b32.xlu0 %v4523, 8
    %v5103 = vpop.permute.xlu0 %5102
    %5104 = vrot.lane.b32.xlu0 %v4524, 8
    %v5105 = vpop.permute.xlu0 %5104
    %5106 = vrot.lane.b32.xlu0 %v4525, 8
    %v5107 = vpop.permute.xlu0 %5106
    %5108 = vrot.lane.b32.xlu0 %v4526, 8
    %v5109 = vpop.permute.xlu0 %5108
    %5110 = vrot.lane.b32.xlu0 %v4527, 8
    %v5111 = vpop.permute.xlu0 %5110
    %5112 = vrot.lane.b32.xlu0 %v4528, 8
    %v5113 = vpop.permute.xlu0 %5112
    %5114 = vrot.lane.b32.xlu0 %v4529, 8
    %v5115 = vpop.permute.xlu0 %5114
    %5116 = vrot.lane.b32.xlu0 %v4530, 8
    %v5117 = vpop.permute.xlu0 %5116
    %5118 = vrot.lane.b32.xlu0 %v4531, 8
    %v5119 = vpop.permute.xlu0 %5118
    %5120 = vrot.lane.b32.xlu0 %v4532, 8
    %v5121 = vpop.permute.xlu0 %5120
    %5122 = vrot.lane.b32.xlu0 %v4533, 8
    %v5123 = vpop.permute.xlu0 %5122
    %5124 = vrot.lane.b32.xlu0 %v4534, 8
    %v5125 = vpop.permute.xlu0 %5124
    %5126 = vrot.lane.b32.xlu0 %v4535, 8
    %v5127 = vpop.permute.xlu0 %5126
    %5128 = vrot.lane.b32.xlu0 %v4536, 8
    %v5129 = vpop.permute.xlu0 %5128
    %5130 = vrot.lane.b32.xlu0 %v4537, 8
    %v5131 = vpop.permute.xlu0 %5130
    %5132 = vrot.lane.b32.xlu0 %v4538, 8
    %v5133 = vpop.permute.xlu0 %5132
    %5134 = vrot.lane.b32.xlu0 %v4539, 8
    %v5135 = vpop.permute.xlu0 %5134
    %5136 = vrot.lane.b32.xlu0 %v4540, 8
    %v5137 = vpop.permute.xlu0 %5136
    %5138 = vrot.lane.b32.xlu0 %v4541, 8
    %v5139 = vpop.permute.xlu0 %5138
    %5140 = vrot.lane.b32.xlu0 %v4542, 8
    %v5141 = vpop.permute.xlu0 %5140
    %5142 = vrot.lane.b32.xlu0 %v4543, 8
    %v5143 = vpop.permute.xlu0 %5142
    %5144 = vrot.lane.b32.xlu0 %v4544, 8
    %v5145 = vpop.permute.xlu0 %5144
    %5146 = vrot.lane.b32.xlu0 %v4545, 8
    %v5147 = vpop.permute.xlu0 %5146
    %5148 = vrot.lane.b32.xlu0 %v4546, 8
    %v5149 = vpop.permute.xlu0 %5148
    %5150 = vrot.lane.b32.xlu0 %v4547, 8
    %v5151 = vpop.permute.xlu0 %5150
    %5152 = vrot.lane.b32.xlu0 %v4548, 8
    %v5153 = vpop.permute.xlu0 %5152
    %5154 = vrot.lane.b32.xlu0 %v4549, 8
    %v5155 = vpop.permute.xlu0 %5154
    %5156 = vrot.lane.b32.xlu0 %v4550, 8
    %v5157 = vpop.permute.xlu0 %5156
    %5158 = vrot.lane.b32.xlu0 %v4551, 8
    %v5159 = vpop.permute.xlu0 %5158
    %5160 = vrot.lane.b32.xlu0 %v4552, 8
    %v5161 = vpop.permute.xlu0 %5160
    %5162 = vrot.lane.b32.xlu0 %v4553, 8
    %v5163 = vpop.permute.xlu0 %5162
    %5164 = vrot.lane.b32.xlu0 %v4554, 8
    %v5165 = vpop.permute.xlu0 %5164
    %5166 = vrot.lane.b32.xlu0 %v4555, 8
    %v5167 = vpop.permute.xlu0 %5166
    %5168 = vrot.lane.b32.xlu0 %v4556, 8
    %v5169 = vpop.permute.xlu0 %5168
    %5170 = vrot.lane.b32.xlu0 %v4557, 8
    %v5171 = vpop.permute.xlu0 %5170
    %5172 = vrot.lane.b32.xlu0 %v4558, 8
    %v5173 = vpop.permute.xlu0 %5172
    %5174 = vrot.lane.b32.xlu0 %v4559, 8
    %v5175 = vpop.permute.xlu0 %5174
    %5176 = vrot.lane.b32.xlu0 %v4560, 8
    %v5177 = vpop.permute.xlu0 %5176
    %5178 = vrot.lane.b32.xlu0 %v4561, 8
    %v5179 = vpop.permute.xlu0 %5178
    %5180 = vrot.lane.b32.xlu0 %v4562, 8
    %v5181 = vpop.permute.xlu0 %5180
    %5182 = vrot.lane.b32.xlu0 %v4563, 8
    %v5183 = vpop.permute.xlu0 %5182
    %5184 = vrot.lane.b32.xlu0 %v4564, 8
    %v5185 = vpop.permute.xlu0 %5184
    %5186 = vrot.lane.b32.xlu0 %v4565, 8
    %v5187 = vpop.permute.xlu0 %5186
    %5188 = vrot.lane.b32.xlu0 %v4566, 8
    %v5189 = vpop.permute.xlu0 %5188
    %5190 = vrot.lane.b32.xlu0 %v4567, 8
    %v5191 = vpop.permute.xlu0 %5190
    %5192 = vrot.lane.b32.xlu0 %v4568, 8
    %v5193 = vpop.permute.xlu0 %5192
    %5194 = vrot.lane.b32.xlu0 %v4569, 8
    %v5195 = vpop.permute.xlu0 %5194
    %5196 = vrot.lane.b32.xlu0 %v4570, 8
    %v5197 = vpop.permute.xlu0 %5196
    %5198 = vrot.lane.b32.xlu0 %v4571, 8
    %v5199 = vpop.permute.xlu0 %5198
    %5200 = vrot.lane.b32.xlu0 %v4572, 8
    %v5201 = vpop.permute.xlu0 %5200
    %5202 = vrot.lane.b32.xlu0 %v4573, 8
    %v5203 = vpop.permute.xlu0 %5202
    %5204 = vrot.lane.b32.xlu0 %v4574, 8
    %v5205 = vpop.permute.xlu0 %5204
    %5206 = vrot.lane.b32.xlu0 %v4575, 8
    %v5207 = vpop.permute.xlu0 %5206
    %5208 = vrot.lane.b32.xlu0 %v4576, 8
    %v5209 = vpop.permute.xlu0 %5208
    %5210 = vrot.lane.b32.xlu0 %v4577, 8
    %v5211 = vpop.permute.xlu0 %5210
    %5212 = vrot.lane.b32.xlu0 %v4578, 8
    %v5213 = vpop.permute.xlu0 %5212
    %5214 = vrot.lane.b32.xlu0 %v4579, 8
    %v5215 = vpop.permute.xlu0 %5214
    %5216 = vrot.lane.b32.xlu0 %v4580, 8
    %v5217 = vpop.permute.xlu0 %5216
    %5218 = vrot.lane.b32.xlu0 %v4581, 8
    %v5219 = vpop.permute.xlu0 %5218
    %5220 = vrot.lane.b32.xlu0 %v4582, 8
    %v5221 = vpop.permute.xlu0 %5220
    %5222 = vrot.lane.b32.xlu0 %v4583, 8
    %v5223 = vpop.permute.xlu0 %5222
    %5224 = vrot.lane.b32.xlu0 %v4584, 8
    %v5225 = vpop.permute.xlu0 %5224
    %5354 = vrot.lane.b32.xlu0 %v4585, 16
    %v5355 = vpop.permute.xlu0 %5354
    %5356 = vrot.lane.b32.xlu0 %v4586, 16
    %v5357 = vpop.permute.xlu0 %5356
    %5358 = vrot.lane.b32.xlu0 %v4587, 16
    %v5359 = vpop.permute.xlu0 %5358
    %5360 = vrot.lane.b32.xlu0 %v4588, 16
    %v5361 = vpop.permute.xlu0 %5360
    %5362 = vrot.lane.b32.xlu0 %v4589, 16
    %v5363 = vpop.permute.xlu0 %5362
    %5364 = vrot.lane.b32.xlu0 %v4590, 16
    %v5365 = vpop.permute.xlu0 %5364
    %5366 = vrot.lane.b32.xlu0 %v4591, 16
    %v5367 = vpop.permute.xlu0 %5366
    %5368 = vrot.lane.b32.xlu0 %v4592, 16
    %v5369 = vpop.permute.xlu0 %5368
    %5370 = vrot.lane.b32.xlu0 %v4593, 16
    %v5371 = vpop.permute.xlu0 %5370
    %5372 = vrot.lane.b32.xlu0 %v4594, 16
    %v5373 = vpop.permute.xlu0 %5372
    %5374 = vrot.lane.b32.xlu0 %v4595, 16
    %v5375 = vpop.permute.xlu0 %5374
    %5376 = vrot.lane.b32.xlu0 %v4596, 16
    %v5377 = vpop.permute.xlu0 %5376
    %5378 = vrot.lane.b32.xlu0 %v4597, 16
    %v5379 = vpop.permute.xlu0 %5378
    %5380 = vrot.lane.b32.xlu0 %v4598, 16
    %v5381 = vpop.permute.xlu0 %5380
    %5382 = vrot.lane.b32.xlu0 %v4599, 16
    %v5383 = vpop.permute.xlu0 %5382
    %5384 = vrot.lane.b32.xlu0 %v4600, 16
    %v5385 = vpop.permute.xlu0 %5384
    %5386 = vrot.lane.b32.xlu0 %v4601, 16
    %v5387 = vpop.permute.xlu0 %5386
    %5388 = vrot.lane.b32.xlu0 %v4602, 16
    %v5389 = vpop.permute.xlu0 %5388
    %5390 = vrot.lane.b32.xlu0 %v4603, 16
    %v5391 = vpop.permute.xlu0 %5390
    %5392 = vrot.lane.b32.xlu0 %v4604, 16
    %v5393 = vpop.permute.xlu0 %5392
    %5394 = vrot.lane.b32.xlu0 %v4605, 16
    %v5395 = vpop.permute.xlu0 %5394
    %5396 = vrot.lane.b32.xlu0 %v4606, 16
    %v5397 = vpop.permute.xlu0 %5396
    %5398 = vrot.lane.b32.xlu0 %v4607, 16
    %v5399 = vpop.permute.xlu0 %5398
    %5400 = vrot.lane.b32.xlu0 %v4608, 16
    %v5401 = vpop.permute.xlu0 %5400
    %5402 = vrot.lane.b32.xlu0 %v4609, 16
    %v5403 = vpop.permute.xlu0 %5402
    %5404 = vrot.lane.b32.xlu0 %v4610, 16
    %v5405 = vpop.permute.xlu0 %5404
    %5406 = vrot.lane.b32.xlu0 %v4611, 16
    %v5407 = vpop.permute.xlu0 %5406
    %5408 = vrot.lane.b32.xlu0 %v4612, 16
    %v5409 = vpop.permute.xlu0 %5408
    %5410 = vrot.lane.b32.xlu0 %v4613, 16
    %v5411 = vpop.permute.xlu0 %5410
    %5412 = vrot.lane.b32.xlu0 %v4614, 16
    %v5413 = vpop.permute.xlu0 %5412
    %5414 = vrot.lane.b32.xlu0 %v4615, 16
    %v5415 = vpop.permute.xlu0 %5414
    %5416 = vrot.lane.b32.xlu0 %v4616, 16
    %v5417 = vpop.permute.xlu0 %5416
    %5418 = vrot.lane.b32.xlu0 %v4617, 16
    %v5419 = vpop.permute.xlu0 %5418
    %5420 = vrot.lane.b32.xlu0 %v4618, 16
    %v5421 = vpop.permute.xlu0 %5420
    %5422 = vrot.lane.b32.xlu0 %v4619, 16
    %v5423 = vpop.permute.xlu0 %5422
    %5424 = vrot.lane.b32.xlu0 %v4620, 16
    %v5425 = vpop.permute.xlu0 %5424
    %5426 = vrot.lane.b32.xlu0 %v4621, 16
    %v5427 = vpop.permute.xlu0 %5426
    %5428 = vrot.lane.b32.xlu0 %v4622, 16
    %v5429 = vpop.permute.xlu0 %5428
    %5430 = vrot.lane.b32.xlu0 %v4623, 16
    %v5431 = vpop.permute.xlu0 %5430
    %5432 = vrot.lane.b32.xlu0 %v4624, 16
    %v5433 = vpop.permute.xlu0 %5432
    %5434 = vrot.lane.b32.xlu0 %v4625, 16
    %v5435 = vpop.permute.xlu0 %5434
    %5436 = vrot.lane.b32.xlu0 %v4626, 16
    %v5437 = vpop.permute.xlu0 %5436
    %5438 = vrot.lane.b32.xlu0 %v4627, 16
    %v5439 = vpop.permute.xlu0 %5438
    %5440 = vrot.lane.b32.xlu0 %v4628, 16
    %v5441 = vpop.permute.xlu0 %5440
    %5442 = vrot.lane.b32.xlu0 %v4629, 16
    %v5443 = vpop.permute.xlu0 %5442
    %5444 = vrot.lane.b32.xlu0 %v4630, 16
    %v5445 = vpop.permute.xlu0 %5444
    %5446 = vrot.lane.b32.xlu0 %v4631, 16
    %v5447 = vpop.permute.xlu0 %5446
    %5448 = vrot.lane.b32.xlu0 %v4632, 16
    %v5449 = vpop.permute.xlu0 %5448
    %5450 = vrot.lane.b32.xlu0 %v4633, 16
    %v5451 = vpop.permute.xlu0 %5450
    %5452 = vrot.lane.b32.xlu0 %v4634, 16
    %v5453 = vpop.permute.xlu0 %5452
    %5454 = vrot.lane.b32.xlu0 %v4635, 16
    %v5455 = vpop.permute.xlu0 %5454
    %5456 = vrot.lane.b32.xlu0 %v4636, 16
    %v5457 = vpop.permute.xlu0 %5456
    %5458 = vrot.lane.b32.xlu0 %v4637, 16
    %v5459 = vpop.permute.xlu0 %5458
    %5460 = vrot.lane.b32.xlu0 %v4638, 16
    %v5461 = vpop.permute.xlu0 %5460
    %5462 = vrot.lane.b32.xlu0 %v4639, 16
    %v5463 = vpop.permute.xlu0 %5462
    %5464 = vrot.lane.b32.xlu0 %v4640, 16
    %v5465 = vpop.permute.xlu0 %5464
    %5466 = vrot.lane.b32.xlu0 %v4641, 16
    %v5467 = vpop.permute.xlu0 %5466
    %5468 = vrot.lane.b32.xlu0 %v4642, 16
    %v5469 = vpop.permute.xlu0 %5468
    %5470 = vrot.lane.b32.xlu0 %v4643, 16
    %v5471 = vpop.permute.xlu0 %5470
    %5472 = vrot.lane.b32.xlu0 %v4644, 16
    %v5473 = vpop.permute.xlu0 %5472
    %5474 = vrot.lane.b32.xlu0 %v4645, 16
    %v5475 = vpop.permute.xlu0 %5474
    %5476 = vrot.lane.b32.xlu0 %v4646, 16
    %v5477 = vpop.permute.xlu0 %5476
    %5478 = vrot.lane.b32.xlu0 %v4647, 16
    %v5479 = vpop.permute.xlu0 %5478
    %5480 = vrot.lane.b32.xlu0 %v4648, 16
    %v5481 = vpop.permute.xlu0 %5480
    %5610 = vrot.lane.b32.xlu0 %v4649, 24
    %v5611 = vpop.permute.xlu0 %5610
    %5612 = vrot.lane.b32.xlu0 %v4650, 24
    %v5613 = vpop.permute.xlu0 %5612
    %5614 = vrot.lane.b32.xlu0 %v4651, 24
    %v5615 = vpop.permute.xlu0 %5614
    %5616 = vrot.lane.b32.xlu0 %v4652, 24
    %v5617 = vpop.permute.xlu0 %5616
    %5618 = vrot.lane.b32.xlu0 %v4653, 24
    %v5619 = vpop.permute.xlu0 %5618
    %5620 = vrot.lane.b32.xlu0 %v4654, 24
    %v5621 = vpop.permute.xlu0 %5620
    %5622 = vrot.lane.b32.xlu0 %v4655, 24
    %v5623 = vpop.permute.xlu0 %5622
    %5624 = vrot.lane.b32.xlu0 %v4656, 24
    %v5625 = vpop.permute.xlu0 %5624
    %5626 = vrot.lane.b32.xlu0 %v4657, 24
    %v5627 = vpop.permute.xlu0 %5626
    %5628 = vrot.lane.b32.xlu0 %v4658, 24
    %v5629 = vpop.permute.xlu0 %5628
    %5630 = vrot.lane.b32.xlu0 %v4659, 24
    %v5631 = vpop.permute.xlu0 %5630
    %5632 = vrot.lane.b32.xlu0 %v4660, 24
    %v5633 = vpop.permute.xlu0 %5632
    %5634 = vrot.lane.b32.xlu0 %v4661, 24
    %v5635 = vpop.permute.xlu0 %5634
    %5636 = vrot.lane.b32.xlu0 %v4662, 24
    %v5637 = vpop.permute.xlu0 %5636
    %5638 = vrot.lane.b32.xlu0 %v4663, 24
    %v5639 = vpop.permute.xlu0 %5638
    %5640 = vrot.lane.b32.xlu0 %v4664, 24
    %v5641 = vpop.permute.xlu0 %5640
    %5642 = vrot.lane.b32.xlu0 %v4665, 24
    %v5643 = vpop.permute.xlu0 %5642
    %5644 = vrot.lane.b32.xlu0 %v4666, 24
    %v5645 = vpop.permute.xlu0 %5644
    %5646 = vrot.lane.b32.xlu0 %v4667, 24
    %v5647 = vpop.permute.xlu0 %5646
    %5648 = vrot.lane.b32.xlu0 %v4668, 24
    %v5649 = vpop.permute.xlu0 %5648
    %5650 = vrot.lane.b32.xlu0 %v4669, 24
    %v5651 = vpop.permute.xlu0 %5650
    %5652 = vrot.lane.b32.xlu0 %v4670, 24
    %v5653 = vpop.permute.xlu0 %5652
    %5654 = vrot.lane.b32.xlu0 %v4671, 24
    %v5655 = vpop.permute.xlu0 %5654
    %5656 = vrot.lane.b32.xlu0 %v4672, 24
    %v5657 = vpop.permute.xlu0 %5656
    %5658 = vrot.lane.b32.xlu0 %v4673, 24
    %v5659 = vpop.permute.xlu0 %5658
    %5660 = vrot.lane.b32.xlu0 %v4674, 24
    %v5661 = vpop.permute.xlu0 %5660
    %5662 = vrot.lane.b32.xlu0 %v4675, 24
    %v5663 = vpop.permute.xlu0 %5662
    %5664 = vrot.lane.b32.xlu0 %v4676, 24
    %v5665 = vpop.permute.xlu0 %5664
    %5666 = vrot.lane.b32.xlu0 %v4677, 24
    %v5667 = vpop.permute.xlu0 %5666
    %5668 = vrot.lane.b32.xlu0 %v4678, 24
    %v5669 = vpop.permute.xlu0 %5668
    %5670 = vrot.lane.b32.xlu0 %v4679, 24
    %v5671 = vpop.permute.xlu0 %5670
    %5672 = vrot.lane.b32.xlu0 %v4680, 24
    %v5673 = vpop.permute.xlu0 %5672
    %5674 = vrot.lane.b32.xlu0 %v4681, 24
    %v5675 = vpop.permute.xlu0 %5674
    %5676 = vrot.lane.b32.xlu0 %v4682, 24
    %v5677 = vpop.permute.xlu0 %5676
    %5678 = vrot.lane.b32.xlu0 %v4683, 24
    %v5679 = vpop.permute.xlu0 %5678
    %5680 = vrot.lane.b32.xlu0 %v4684, 24
    %v5681 = vpop.permute.xlu0 %5680
    %5682 = vrot.lane.b32.xlu0 %v4685, 24
    %v5683 = vpop.permute.xlu0 %5682
    %5684 = vrot.lane.b32.xlu0 %v4686, 24
    %v5685 = vpop.permute.xlu0 %5684
    %5686 = vrot.lane.b32.xlu0 %v4687, 24
    %v5687 = vpop.permute.xlu0 %5686
    %5688 = vrot.lane.b32.xlu0 %v4688, 24
    %v5689 = vpop.permute.xlu0 %5688
    %5690 = vrot.lane.b32.xlu0 %v4689, 24
    %v5691 = vpop.permute.xlu0 %5690
    %5692 = vrot.lane.b32.xlu0 %v4690, 24
    %v5693 = vpop.permute.xlu0 %5692
    %5694 = vrot.lane.b32.xlu0 %v4691, 24
    %v5695 = vpop.permute.xlu0 %5694
    %5696 = vrot.lane.b32.xlu0 %v4692, 24
    %v5697 = vpop.permute.xlu0 %5696
    %5698 = vrot.lane.b32.xlu0 %v4693, 24
    %v5699 = vpop.permute.xlu0 %5698
    %5700 = vrot.lane.b32.xlu0 %v4694, 24
    %v5701 = vpop.permute.xlu0 %5700
    %5702 = vrot.lane.b32.xlu0 %v4695, 24
    %v5703 = vpop.permute.xlu0 %5702
    %5704 = vrot.lane.b32.xlu0 %v4696, 24
    %v5705 = vpop.permute.xlu0 %5704
    %5706 = vrot.lane.b32.xlu0 %v4697, 24
    %v5707 = vpop.permute.xlu0 %5706
    %5708 = vrot.lane.b32.xlu0 %v4698, 24
    %v5709 = vpop.permute.xlu0 %5708
    %5710 = vrot.lane.b32.xlu0 %v4699, 24
    %v5711 = vpop.permute.xlu0 %5710
    %5712 = vrot.lane.b32.xlu0 %v4700, 24
    %v5713 = vpop.permute.xlu0 %5712
    %5714 = vrot.lane.b32.xlu0 %v4701, 24
    %v5715 = vpop.permute.xlu0 %5714
    %5716 = vrot.lane.b32.xlu0 %v4702, 24
    %v5717 = vpop.permute.xlu0 %5716
    %5718 = vrot.lane.b32.xlu0 %v4703, 24
    %v5719 = vpop.permute.xlu0 %5718
    %5720 = vrot.lane.b32.xlu0 %v4704, 24
    %v5721 = vpop.permute.xlu0 %5720
    %5722 = vrot.lane.b32.xlu0 %v4705, 24
    %v5723 = vpop.permute.xlu0 %5722
    %5724 = vrot.lane.b32.xlu0 %v4706, 24
    %v5725 = vpop.permute.xlu0 %5724
    %5726 = vrot.lane.b32.xlu0 %v4707, 24
    %v5727 = vpop.permute.xlu0 %5726
    %5728 = vrot.lane.b32.xlu0 %v4708, 24
    %v5729 = vpop.permute.xlu0 %5728
    %5730 = vrot.lane.b32.xlu0 %v4709, 24
    %v5731 = vpop.permute.xlu0 %5730
    %5732 = vrot.lane.b32.xlu0 %v4710, 24
    %v5733 = vpop.permute.xlu0 %5732
    %5734 = vrot.lane.b32.xlu0 %v4711, 24
    %v5735 = vpop.permute.xlu0 %5734
    %5736 = vrot.lane.b32.xlu0 %v4712, 24
    %v5737 = vpop.permute.xlu0 %5736
    %5866 = vrot.lane.b32.xlu0 %v4713, 32
    %v5867 = vpop.permute.xlu0 %5866
    %5868 = vrot.lane.b32.xlu0 %v4714, 32
    %v5869 = vpop.permute.xlu0 %5868
    %5870 = vrot.lane.b32.xlu0 %v4715, 32
    %v5871 = vpop.permute.xlu0 %5870
    %5872 = vrot.lane.b32.xlu0 %v4716, 32
    %v5873 = vpop.permute.xlu0 %5872
    %5874 = vrot.lane.b32.xlu0 %v4717, 32
    %v5875 = vpop.permute.xlu0 %5874
    %5876 = vrot.lane.b32.xlu0 %v4718, 32
    %v5877 = vpop.permute.xlu0 %5876
    %5878 = vrot.lane.b32.xlu0 %v4719, 32
    %v5879 = vpop.permute.xlu0 %5878
    %5880 = vrot.lane.b32.xlu0 %v4720, 32
    %v5881 = vpop.permute.xlu0 %5880
    %5882 = vrot.lane.b32.xlu0 %v4721, 32
    %v5883 = vpop.permute.xlu0 %5882
    %5884 = vrot.lane.b32.xlu0 %v4722, 32
    %v5885 = vpop.permute.xlu0 %5884
    %5886 = vrot.lane.b32.xlu0 %v4723, 32
    %v5887 = vpop.permute.xlu0 %5886
    %5888 = vrot.lane.b32.xlu0 %v4724, 32
    %v5889 = vpop.permute.xlu0 %5888
    %5890 = vrot.lane.b32.xlu0 %v4725, 32
    %v5891 = vpop.permute.xlu0 %5890
    %5892 = vrot.lane.b32.xlu0 %v4726, 32
    %v5893 = vpop.permute.xlu0 %5892
    %5894 = vrot.lane.b32.xlu0 %v4727, 32
    %v5895 = vpop.permute.xlu0 %5894
    %5896 = vrot.lane.b32.xlu0 %v4728, 32
    %v5897 = vpop.permute.xlu0 %5896
    %5898 = vrot.lane.b32.xlu0 %v4729, 32
    %v5899 = vpop.permute.xlu0 %5898
    %5900 = vrot.lane.b32.xlu0 %v4730, 32
    %v5901 = vpop.permute.xlu0 %5900
    %5902 = vrot.lane.b32.xlu0 %v4731, 32
    %v5903 = vpop.permute.xlu0 %5902
    %5904 = vrot.lane.b32.xlu0 %v4732, 32
    %v5905 = vpop.permute.xlu0 %5904
    %5906 = vrot.lane.b32.xlu0 %v4733, 32
    %v5907 = vpop.permute.xlu0 %5906
    %5908 = vrot.lane.b32.xlu0 %v4734, 32
    %v5909 = vpop.permute.xlu0 %5908
    %5910 = vrot.lane.b32.xlu0 %v4735, 32
    %v5911 = vpop.permute.xlu0 %5910
    %5912 = vrot.lane.b32.xlu0 %v4736, 32
    %v5913 = vpop.permute.xlu0 %5912
    %5914 = vrot.lane.b32.xlu0 %v4737, 32
    %v5915 = vpop.permute.xlu0 %5914
    %5916 = vrot.lane.b32.xlu0 %v4738, 32
    %v5917 = vpop.permute.xlu0 %5916
    %5918 = vrot.lane.b32.xlu0 %v4739, 32
    %v5919 = vpop.permute.xlu0 %5918
    %5920 = vrot.lane.b32.xlu0 %v4740, 32
    %v5921 = vpop.permute.xlu0 %5920
    %5922 = vrot.lane.b32.xlu0 %v4741, 32
    %v5923 = vpop.permute.xlu0 %5922
    %5924 = vrot.lane.b32.xlu0 %v4742, 32
    %v5925 = vpop.permute.xlu0 %5924
    %5926 = vrot.lane.b32.xlu0 %v4743, 32
    %v5927 = vpop.permute.xlu0 %5926
    %5928 = vrot.lane.b32.xlu0 %v4744, 32
    %v5929 = vpop.permute.xlu0 %5928
    %5930 = vrot.lane.b32.xlu0 %v4745, 32
    %v5931 = vpop.permute.xlu0 %5930
    %5932 = vrot.lane.b32.xlu0 %v4746, 32
    %v5933 = vpop.permute.xlu0 %5932
    %5934 = vrot.lane.b32.xlu0 %v4747, 32
    %v5935 = vpop.permute.xlu0 %5934
    %5936 = vrot.lane.b32.xlu0 %v4748, 32
    %v5937 = vpop.permute.xlu0 %5936
    %5938 = vrot.lane.b32.xlu0 %v4749, 32
    %v5939 = vpop.permute.xlu0 %5938
    %5940 = vrot.lane.b32.xlu0 %v4750, 32
    %v5941 = vpop.permute.xlu0 %5940
    %5942 = vrot.lane.b32.xlu0 %v4751, 32
    %v5943 = vpop.permute.xlu0 %5942
    %5944 = vrot.lane.b32.xlu0 %v4752, 32
    %v5945 = vpop.permute.xlu0 %5944
    %5946 = vrot.lane.b32.xlu0 %v4753, 32
    %v5947 = vpop.permute.xlu0 %5946
    %5948 = vrot.lane.b32.xlu0 %v4754, 32
    %v5949 = vpop.permute.xlu0 %5948
    %5950 = vrot.lane.b32.xlu0 %v4755, 32
    %v5951 = vpop.permute.xlu0 %5950
    %5952 = vrot.lane.b32.xlu0 %v4756, 32
    %v5953 = vpop.permute.xlu0 %5952
    %5954 = vrot.lane.b32.xlu0 %v4757, 32
    %v5955 = vpop.permute.xlu0 %5954
    %5956 = vrot.lane.b32.xlu0 %v4758, 32
    %v5957 = vpop.permute.xlu0 %5956
    %5958 = vrot.lane.b32.xlu0 %v4759, 32
    %v5959 = vpop.permute.xlu0 %5958
    %5960 = vrot.lane.b32.xlu0 %v4760, 32
    %v5961 = vpop.permute.xlu0 %5960
    %5962 = vrot.lane.b32.xlu0 %v4761, 32
    %v5963 = vpop.permute.xlu0 %5962
    %5964 = vrot.lane.b32.xlu0 %v4762, 32
    %v5965 = vpop.permute.xlu0 %5964
    %5966 = vrot.lane.b32.xlu0 %v4763, 32
    %v5967 = vpop.permute.xlu0 %5966
    %5968 = vrot.lane.b32.xlu0 %v4764, 32
    %v5969 = vpop.permute.xlu0 %5968
    %5970 = vrot.lane.b32.xlu0 %v4765, 32
    %v5971 = vpop.permute.xlu0 %5970
    %5972 = vrot.lane.b32.xlu0 %v4766, 32
    %v5973 = vpop.permute.xlu0 %5972
    %5974 = vrot.lane.b32.xlu0 %v4767, 32
    %v5975 = vpop.permute.xlu0 %5974
    %5976 = vrot.lane.b32.xlu0 %v4768, 32
    %v5977 = vpop.permute.xlu0 %5976
    %5978 = vrot.lane.b32.xlu0 %v4769, 32
    %v5979 = vpop.permute.xlu0 %5978
    %5980 = vrot.lane.b32.xlu0 %v4770, 32
    %v5981 = vpop.permute.xlu0 %5980
    %5982 = vrot.lane.b32.xlu0 %v4771, 32
    %v5983 = vpop.permute.xlu0 %5982
    %5984 = vrot.lane.b32.xlu0 %v4772, 32
    %v5985 = vpop.permute.xlu0 %5984
    %5986 = vrot.lane.b32.xlu0 %v4773, 32
    %v5987 = vpop.permute.xlu0 %5986
    %5988 = vrot.lane.b32.xlu0 %v4774, 32
    %v5989 = vpop.permute.xlu0 %5988
    %5990 = vrot.lane.b32.xlu0 %v4775, 32
    %v5991 = vpop.permute.xlu0 %5990
    %5992 = vrot.lane.b32.xlu0 %v4776, 32
    %v5993 = vpop.permute.xlu0 %5992
    %6122 = vrot.lane.b32.xlu0 %v4777, 40
    %v6123 = vpop.permute.xlu0 %6122
    %6124 = vrot.lane.b32.xlu0 %v4778, 40
    %v6125 = vpop.permute.xlu0 %6124
    %6126 = vrot.lane.b32.xlu0 %v4779, 40
    %v6127 = vpop.permute.xlu0 %6126
    %6128 = vrot.lane.b32.xlu0 %v4780, 40
    %v6129 = vpop.permute.xlu0 %6128
    %6130 = vrot.lane.b32.xlu0 %v4781, 40
    %v6131 = vpop.permute.xlu0 %6130
    %6132 = vrot.lane.b32.xlu0 %v4782, 40
    %v6133 = vpop.permute.xlu0 %6132
    %6134 = vrot.lane.b32.xlu0 %v4783, 40
    %v6135 = vpop.permute.xlu0 %6134
    %6136 = vrot.lane.b32.xlu0 %v4784, 40
    %v6137 = vpop.permute.xlu0 %6136
    %6138 = vrot.lane.b32.xlu0 %v4785, 40
    %v6139 = vpop.permute.xlu0 %6138
    %6140 = vrot.lane.b32.xlu0 %v4786, 40
    %v6141 = vpop.permute.xlu0 %6140
    %6142 = vrot.lane.b32.xlu0 %v4787, 40
    %v6143 = vpop.permute.xlu0 %6142
    %6144 = vrot.lane.b32.xlu0 %v4788, 40
    %v6145 = vpop.permute.xlu0 %6144
    %6146 = vrot.lane.b32.xlu0 %v4789, 40
    %v6147 = vpop.permute.xlu0 %6146
    %6148 = vrot.lane.b32.xlu0 %v4790, 40
    %v6149 = vpop.permute.xlu0 %6148
    %6150 = vrot.lane.b32.xlu0 %v4791, 40
    %v6151 = vpop.permute.xlu0 %6150
    %6152 = vrot.lane.b32.xlu0 %v4792, 40
    %v6153 = vpop.permute.xlu0 %6152
    %6154 = vrot.lane.b32.xlu0 %v4793, 40
    %v6155 = vpop.permute.xlu0 %6154
    %6156 = vrot.lane.b32.xlu0 %v4794, 40
    %v6157 = vpop.permute.xlu0 %6156
    %6158 = vrot.lane.b32.xlu0 %v4795, 40
    %v6159 = vpop.permute.xlu0 %6158
    %6160 = vrot.lane.b32.xlu0 %v4796, 40
    %v6161 = vpop.permute.xlu0 %6160
    %6162 = vrot.lane.b32.xlu0 %v4797, 40
    %v6163 = vpop.permute.xlu0 %6162
    %6164 = vrot.lane.b32.xlu0 %v4798, 40
    %v6165 = vpop.permute.xlu0 %6164
    %6166 = vrot.lane.b32.xlu0 %v4799, 40
    %v6167 = vpop.permute.xlu0 %6166
    %6168 = vrot.lane.b32.xlu0 %v4800, 40
    %v6169 = vpop.permute.xlu0 %6168
    %6170 = vrot.lane.b32.xlu0 %v4801, 40
    %v6171 = vpop.permute.xlu0 %6170
    %6172 = vrot.lane.b32.xlu0 %v4802, 40
    %v6173 = vpop.permute.xlu0 %6172
    %6174 = vrot.lane.b32.xlu0 %v4803, 40
    %v6175 = vpop.permute.xlu0 %6174
    %6176 = vrot.lane.b32.xlu0 %v4804, 40
    %v6177 = vpop.permute.xlu0 %6176
    %6178 = vrot.lane.b32.xlu0 %v4805, 40
    %v6179 = vpop.permute.xlu0 %6178
    %6180 = vrot.lane.b32.xlu0 %v4806, 40
    %v6181 = vpop.permute.xlu0 %6180
    %6182 = vrot.lane.b32.xlu0 %v4807, 40
    %v6183 = vpop.permute.xlu0 %6182
    %6184 = vrot.lane.b32.xlu0 %v4808, 40
    %v6185 = vpop.permute.xlu0 %6184
    %6186 = vrot.lane.b32.xlu0 %v4809, 40
    %v6187 = vpop.permute.xlu0 %6186
    %6188 = vrot.lane.b32.xlu0 %v4810, 40
    %v6189 = vpop.permute.xlu0 %6188
    %6190 = vrot.lane.b32.xlu0 %v4811, 40
    %v6191 = vpop.permute.xlu0 %6190
    %6192 = vrot.lane.b32.xlu0 %v4812, 40
    %v6193 = vpop.permute.xlu0 %6192
    %6194 = vrot.lane.b32.xlu0 %v4813, 40
    %v6195 = vpop.permute.xlu0 %6194
    %6196 = vrot.lane.b32.xlu0 %v4814, 40
    %v6197 = vpop.permute.xlu0 %6196
    %6198 = vrot.lane.b32.xlu0 %v4815, 40
    %v6199 = vpop.permute.xlu0 %6198
    %6200 = vrot.lane.b32.xlu0 %v4816, 40
    %v6201 = vpop.permute.xlu0 %6200
    %6202 = vrot.lane.b32.xlu0 %v4817, 40
    %v6203 = vpop.permute.xlu0 %6202
    %6204 = vrot.lane.b32.xlu0 %v4818, 40
    %v6205 = vpop.permute.xlu0 %6204
    %6206 = vrot.lane.b32.xlu0 %v4819, 40
    %v6207 = vpop.permute.xlu0 %6206
    %6208 = vrot.lane.b32.xlu0 %v4820, 40
    %v6209 = vpop.permute.xlu0 %6208
    %6210 = vrot.lane.b32.xlu0 %v4821, 40
    %v6211 = vpop.permute.xlu0 %6210
    %6212 = vrot.lane.b32.xlu0 %v4822, 40
    %v6213 = vpop.permute.xlu0 %6212
    %6214 = vrot.lane.b32.xlu0 %v4823, 40
    %v6215 = vpop.permute.xlu0 %6214
    %6216 = vrot.lane.b32.xlu0 %v4824, 40
    %v6217 = vpop.permute.xlu0 %6216
    %6218 = vrot.lane.b32.xlu0 %v4825, 40
    %v6219 = vpop.permute.xlu0 %6218
    %6220 = vrot.lane.b32.xlu0 %v4826, 40
    %v6221 = vpop.permute.xlu0 %6220
    %6222 = vrot.lane.b32.xlu0 %v4827, 40
    %v6223 = vpop.permute.xlu0 %6222
    %6224 = vrot.lane.b32.xlu0 %v4828, 40
    %v6225 = vpop.permute.xlu0 %6224
    %6226 = vrot.lane.b32.xlu0 %v4829, 40
    %v6227 = vpop.permute.xlu0 %6226
    %6228 = vrot.lane.b32.xlu0 %v4830, 40
    %v6229 = vpop.permute.xlu0 %6228
    %6230 = vrot.lane.b32.xlu0 %v4831, 40
    %v6231 = vpop.permute.xlu0 %6230
    %6232 = vrot.lane.b32.xlu0 %v4832, 40
    %v6233 = vpop.permute.xlu0 %6232
    %6234 = vrot.lane.b32.xlu0 %v4833, 40
    %v6235 = vpop.permute.xlu0 %6234
    %6236 = vrot.lane.b32.xlu0 %v4834, 40
    %v6237 = vpop.permute.xlu0 %6236
    %6238 = vrot.lane.b32.xlu0 %v4835, 40
    %v6239 = vpop.permute.xlu0 %6238
    %6240 = vrot.lane.b32.xlu0 %v4836, 40
    %v6241 = vpop.permute.xlu0 %6240
    %6242 = vrot.lane.b32.xlu0 %v4837, 40
    %v6243 = vpop.permute.xlu0 %6242
    %6244 = vrot.lane.b32.xlu0 %v4838, 40
    %v6245 = vpop.permute.xlu0 %6244
    %6246 = vrot.lane.b32.xlu0 %v4839, 40
    %v6247 = vpop.permute.xlu0 %6246
    %6248 = vrot.lane.b32.xlu0 %v4840, 40
    %v6249 = vpop.permute.xlu0 %6248
    %6378 = vrot.lane.b32.xlu0 %v4842, 48
    %v6379 = vpop.permute.xlu0 %6378
    %6380 = vrot.lane.b32.xlu0 %v4843, 48
    %v6381 = vpop.permute.xlu0 %6380
    %6382 = vrot.lane.b32.xlu0 %v4844, 48
    %v6383 = vpop.permute.xlu0 %6382
    %6384 = vrot.lane.b32.xlu0 %v4845, 48
    %v6385 = vpop.permute.xlu0 %6384
    %6386 = vrot.lane.b32.xlu0 %v4846, 48
    %v6387 = vpop.permute.xlu0 %6386
    %6388 = vrot.lane.b32.xlu0 %v4847, 48
    %v6389 = vpop.permute.xlu0 %6388
    %6390 = vrot.lane.b32.xlu0 %v4848, 48
    %v6391 = vpop.permute.xlu0 %6390
    %6392 = vrot.lane.b32.xlu0 %v4849, 48
    %v6393 = vpop.permute.xlu0 %6392
    %6394 = vrot.lane.b32.xlu0 %v4850, 48
    %v6395 = vpop.permute.xlu0 %6394
    %6396 = vrot.lane.b32.xlu0 %v4851, 48
    %v6397 = vpop.permute.xlu0 %6396
    %6398 = vrot.lane.b32.xlu0 %v4852, 48
    %v6399 = vpop.permute.xlu0 %6398
    %6400 = vrot.lane.b32.xlu0 %v4853, 48
    %v6401 = vpop.permute.xlu0 %6400
    %6402 = vrot.lane.b32.xlu0 %v4854, 48
    %v6403 = vpop.permute.xlu0 %6402
    %6404 = vrot.lane.b32.xlu0 %v4855, 48
    %v6405 = vpop.permute.xlu0 %6404
    %6406 = vrot.lane.b32.xlu0 %v4856, 48
    %v6407 = vpop.permute.xlu0 %6406
    %6408 = vrot.lane.b32.xlu0 %v4857, 48
    %v6409 = vpop.permute.xlu0 %6408
    %6410 = vrot.lane.b32.xlu0 %v4858, 48
    %v6411 = vpop.permute.xlu0 %6410
    %6412 = vrot.lane.b32.xlu0 %v4859, 48
    %v6413 = vpop.permute.xlu0 %6412
    %6414 = vrot.lane.b32.xlu0 %v4860, 48
    %v6415 = vpop.permute.xlu0 %6414
    %6416 = vrot.lane.b32.xlu0 %v4861, 48
    %v6417 = vpop.permute.xlu0 %6416
    %6418 = vrot.lane.b32.xlu0 %v4862, 48
    %v6419 = vpop.permute.xlu0 %6418
    %6420 = vrot.lane.b32.xlu0 %v4863, 48
    %v6421 = vpop.permute.xlu0 %6420
    %6422 = vrot.lane.b32.xlu0 %v4864, 48
    %v6423 = vpop.permute.xlu0 %6422
    %6424 = vrot.lane.b32.xlu0 %v4865, 48
    %v6425 = vpop.permute.xlu0 %6424
    %6426 = vrot.lane.b32.xlu0 %v4866, 48
    %v6427 = vpop.permute.xlu0 %6426
    %6428 = vrot.lane.b32.xlu0 %v4867, 48
    %v6429 = vpop.permute.xlu0 %6428
    %6430 = vrot.lane.b32.xlu0 %v4868, 48
    %v6431 = vpop.permute.xlu0 %6430
    %6432 = vrot.lane.b32.xlu0 %v4869, 48
    %v6433 = vpop.permute.xlu0 %6432
    %6434 = vrot.lane.b32.xlu0 %v4870, 48
    %v6435 = vpop.permute.xlu0 %6434
    %6436 = vrot.lane.b32.xlu0 %v4871, 48
    %v6437 = vpop.permute.xlu0 %6436
    %6438 = vrot.lane.b32.xlu0 %v4872, 48
    %v6439 = vpop.permute.xlu0 %6438
    %6440 = vrot.lane.b32.xlu0 %v4873, 48
    %v6441 = vpop.permute.xlu0 %6440
    %6442 = vrot.lane.b32.xlu0 %v4874, 48
    %v6443 = vpop.permute.xlu0 %6442
    %6444 = vrot.lane.b32.xlu0 %v4875, 48
    %v6445 = vpop.permute.xlu0 %6444
    %6446 = vrot.lane.b32.xlu0 %v4876, 48
    %v6447 = vpop.permute.xlu0 %6446
    %6448 = vrot.lane.b32.xlu0 %v4877, 48
    %v6449 = vpop.permute.xlu0 %6448
    %6450 = vrot.lane.b32.xlu0 %v4878, 48
    %v6451 = vpop.permute.xlu0 %6450
    %6452 = vrot.lane.b32.xlu0 %v4879, 48
    %v6453 = vpop.permute.xlu0 %6452
    %6454 = vrot.lane.b32.xlu0 %v4880, 48
    %v6455 = vpop.permute.xlu0 %6454
    %6456 = vrot.lane.b32.xlu0 %v4881, 48
    %v6457 = vpop.permute.xlu0 %6456
    %6458 = vrot.lane.b32.xlu0 %v4882, 48
    %v6459 = vpop.permute.xlu0 %6458
    %6460 = vrot.lane.b32.xlu0 %v4883, 48
    %v6461 = vpop.permute.xlu0 %6460
    %6462 = vrot.lane.b32.xlu0 %v4884, 48
    %v6463 = vpop.permute.xlu0 %6462
    %6464 = vrot.lane.b32.xlu0 %v4885, 48
    %v6465 = vpop.permute.xlu0 %6464
    %6466 = vrot.lane.b32.xlu0 %v4886, 48
    %v6467 = vpop.permute.xlu0 %6466
    %6468 = vrot.lane.b32.xlu0 %v4887, 48
    %v6469 = vpop.permute.xlu0 %6468
    %6470 = vrot.lane.b32.xlu0 %v4888, 48
    %v6471 = vpop.permute.xlu0 %6470
    %6472 = vrot.lane.b32.xlu0 %v4889, 48
    %v6473 = vpop.permute.xlu0 %6472
    %6474 = vrot.lane.b32.xlu0 %v4890, 48
    %v6475 = vpop.permute.xlu0 %6474
    %6476 = vrot.lane.b32.xlu0 %v4891, 48
    %v6477 = vpop.permute.xlu0 %6476
    %6478 = vrot.lane.b32.xlu0 %v4892, 48
    %v6479 = vpop.permute.xlu0 %6478
    %6480 = vrot.lane.b32.xlu0 %v4893, 48
    %v6481 = vpop.permute.xlu0 %6480
    %6482 = vrot.lane.b32.xlu0 %v4894, 48
    %v6483 = vpop.permute.xlu0 %6482
    %6484 = vrot.lane.b32.xlu0 %v4895, 48
    %v6485 = vpop.permute.xlu0 %6484
    %6486 = vrot.lane.b32.xlu0 %v4896, 48
    %v6487 = vpop.permute.xlu0 %6486
    %6488 = vrot.lane.b32.xlu0 %v4897, 48
    %v6489 = vpop.permute.xlu0 %6488
    %6490 = vrot.lane.b32.xlu0 %v4898, 48
    %v6491 = vpop.permute.xlu0 %6490
    %6492 = vrot.lane.b32.xlu0 %v4899, 48
    %v6493 = vpop.permute.xlu0 %6492
    %6494 = vrot.lane.b32.xlu0 %v4900, 48
    %v6495 = vpop.permute.xlu0 %6494
    %6496 = vrot.lane.b32.xlu0 %v4901, 48
    %v6497 = vpop.permute.xlu0 %6496
    %6498 = vrot.lane.b32.xlu0 %v4902, 48
    %v6499 = vpop.permute.xlu0 %6498
    %6500 = vrot.lane.b32.xlu0 %v4903, 48
    %v6501 = vpop.permute.xlu0 %6500
    %6502 = vrot.lane.b32.xlu0 %v4904, 48
    %v6503 = vpop.permute.xlu0 %6502
    %6504 = vrot.lane.b32.xlu0 %v4905, 48
    %v6505 = vpop.permute.xlu0 %6504
    %6634 = vrot.lane.b32.xlu0 %v4906, 56
    %v6635 = vpop.permute.xlu0 %6634
    %6636 = vrot.lane.b32.xlu0 %v4907, 56
    %v6637 = vpop.permute.xlu0 %6636
    %6638 = vrot.lane.b32.xlu0 %v4908, 56
    %v6639 = vpop.permute.xlu0 %6638
    %6640 = vrot.lane.b32.xlu0 %v4909, 56
    %v6641 = vpop.permute.xlu0 %6640
    %6642 = vrot.lane.b32.xlu0 %v4910, 56
    %v6643 = vpop.permute.xlu0 %6642
    %6644 = vrot.lane.b32.xlu0 %v4911, 56
    %v6645 = vpop.permute.xlu0 %6644
    %6646 = vrot.lane.b32.xlu0 %v4912, 56
    %v6647 = vpop.permute.xlu0 %6646
    %6648 = vrot.lane.b32.xlu0 %v4913, 56
    %v6649 = vpop.permute.xlu0 %6648
    %6650 = vrot.lane.b32.xlu0 %v4914, 56
    %v6651 = vpop.permute.xlu0 %6650
    %6652 = vrot.lane.b32.xlu0 %v4915, 56
    %v6653 = vpop.permute.xlu0 %6652
    %6654 = vrot.lane.b32.xlu0 %v4916, 56
    %v6655 = vpop.permute.xlu0 %6654
    %6656 = vrot.lane.b32.xlu0 %v4917, 56
    %v6657 = vpop.permute.xlu0 %6656
    %6658 = vrot.lane.b32.xlu0 %v4918, 56
    %v6659 = vpop.permute.xlu0 %6658
    %6660 = vrot.lane.b32.xlu0 %v4919, 56
    %v6661 = vpop.permute.xlu0 %6660
    %6662 = vrot.lane.b32.xlu0 %v4920, 56
    %v6663 = vpop.permute.xlu0 %6662
    %6664 = vrot.lane.b32.xlu0 %v4921, 56
    %v6665 = vpop.permute.xlu0 %6664
    %6666 = vrot.lane.b32.xlu0 %v4922, 56
    %v6667 = vpop.permute.xlu0 %6666
    %6668 = vrot.lane.b32.xlu0 %v4923, 56
    %v6669 = vpop.permute.xlu0 %6668
    %6670 = vrot.lane.b32.xlu0 %v4924, 56
    %v6671 = vpop.permute.xlu0 %6670
    %6672 = vrot.lane.b32.xlu0 %v4925, 56
    %v6673 = vpop.permute.xlu0 %6672
    %6674 = vrot.lane.b32.xlu0 %v4926, 56
    %v6675 = vpop.permute.xlu0 %6674
    %6676 = vrot.lane.b32.xlu0 %v4927, 56
    %v6677 = vpop.permute.xlu0 %6676
    %6678 = vrot.lane.b32.xlu0 %v4928, 56
    %v6679 = vpop.permute.xlu0 %6678
    %6680 = vrot.lane.b32.xlu0 %v4929, 56
    %v6681 = vpop.permute.xlu0 %6680
    %6682 = vrot.lane.b32.xlu0 %v4930, 56
    %v6683 = vpop.permute.xlu0 %6682
    %6684 = vrot.lane.b32.xlu0 %v4931, 56
    %v6685 = vpop.permute.xlu0 %6684
    %6686 = vrot.lane.b32.xlu0 %v4932, 56
    %v6687 = vpop.permute.xlu0 %6686
    %6688 = vrot.lane.b32.xlu0 %v4933, 56
    %v6689 = vpop.permute.xlu0 %6688
    %6690 = vrot.lane.b32.xlu0 %v4934, 56
    %v6691 = vpop.permute.xlu0 %6690
    %6692 = vrot.lane.b32.xlu0 %v4935, 56
    %v6693 = vpop.permute.xlu0 %6692
    %6694 = vrot.lane.b32.xlu0 %v4936, 56
    %v6695 = vpop.permute.xlu0 %6694
    %6696 = vrot.lane.b32.xlu0 %v4937, 56
    %v6697 = vpop.permute.xlu0 %6696
    %6698 = vrot.lane.b32.xlu0 %v4938, 56
    %v6699 = vpop.permute.xlu0 %6698
    %6700 = vrot.lane.b32.xlu0 %v4939, 56
    %v6701 = vpop.permute.xlu0 %6700
    %6702 = vrot.lane.b32.xlu0 %v4940, 56
    %v6703 = vpop.permute.xlu0 %6702
    %6704 = vrot.lane.b32.xlu0 %v4941, 56
    %v6705 = vpop.permute.xlu0 %6704
    %6706 = vrot.lane.b32.xlu0 %v4942, 56
    %v6707 = vpop.permute.xlu0 %6706
    %6708 = vrot.lane.b32.xlu0 %v4943, 56
    %v6709 = vpop.permute.xlu0 %6708
    %6710 = vrot.lane.b32.xlu0 %v4944, 56
    %v6711 = vpop.permute.xlu0 %6710
    %6712 = vrot.lane.b32.xlu0 %v4945, 56
    %v6713 = vpop.permute.xlu0 %6712
    %6714 = vrot.lane.b32.xlu0 %v4946, 56
    %v6715 = vpop.permute.xlu0 %6714
    %6716 = vrot.lane.b32.xlu0 %v4947, 56
    %v6717 = vpop.permute.xlu0 %6716
    %6718 = vrot.lane.b32.xlu0 %v4948, 56
    %v6719 = vpop.permute.xlu0 %6718
    %6720 = vrot.lane.b32.xlu0 %v4949, 56
    %v6721 = vpop.permute.xlu0 %6720
    %6722 = vrot.lane.b32.xlu0 %v4950, 56
    %v6723 = vpop.permute.xlu0 %6722
    %6724 = vrot.lane.b32.xlu0 %v4951, 56
    %v6725 = vpop.permute.xlu0 %6724
    %6726 = vrot.lane.b32.xlu0 %v4952, 56
    %v6727 = vpop.permute.xlu0 %6726
    %6728 = vrot.lane.b32.xlu0 %v4953, 56
    %v6729 = vpop.permute.xlu0 %6728
    %6730 = vrot.lane.b32.xlu0 %v4954, 56
    %v6731 = vpop.permute.xlu0 %6730
    %6732 = vrot.lane.b32.xlu0 %v4955, 56
    %v6733 = vpop.permute.xlu0 %6732
    %6734 = vrot.lane.b32.xlu0 %v4956, 56
    %v6735 = vpop.permute.xlu0 %6734
    %6736 = vrot.lane.b32.xlu0 %v4957, 56
    %v6737 = vpop.permute.xlu0 %6736
    %6738 = vrot.lane.b32.xlu0 %v4958, 56
    %v6739 = vpop.permute.xlu0 %6738
    %6740 = vrot.lane.b32.xlu0 %v4959, 56
    %v6741 = vpop.permute.xlu0 %6740
    %6742 = vrot.lane.b32.xlu0 %v4960, 56
    %v6743 = vpop.permute.xlu0 %6742
    %6744 = vrot.lane.b32.xlu0 %v4961, 56
    %v6745 = vpop.permute.xlu0 %6744
    %6746 = vrot.lane.b32.xlu0 %v4962, 56
    %v6747 = vpop.permute.xlu0 %6746
    %6748 = vrot.lane.b32.xlu0 %v4963, 56
    %v6749 = vpop.permute.xlu0 %6748
    %6750 = vrot.lane.b32.xlu0 %v4964, 56
    %v6751 = vpop.permute.xlu0 %6750
    %6752 = vrot.lane.b32.xlu0 %v4965, 56
    %v6753 = vpop.permute.xlu0 %6752
    %6754 = vrot.lane.b32.xlu0 %v4966, 56
    %v6755 = vpop.permute.xlu0 %6754
    %6756 = vrot.lane.b32.xlu0 %v4967, 56
    %v6757 = vpop.permute.xlu0 %6756
    %6758 = vrot.lane.b32.xlu0 %v4968, 56
    %v6759 = vpop.permute.xlu0 %6758
    %6760 = vrot.lane.b32.xlu0 %v4969, 56
    %v6761 = vpop.permute.xlu0 %6760
    %6890 = vrot.lane.b32.xlu0 %v4970, 64
    %v6891 = vpop.permute.xlu0 %6890
    %6892 = vrot.lane.b32.xlu0 %v4971, 64
    %v6893 = vpop.permute.xlu0 %6892
    %6894 = vrot.lane.b32.xlu0 %v4972, 64
    %v6895 = vpop.permute.xlu0 %6894
    %6896 = vrot.lane.b32.xlu0 %v4973, 64
    %v6897 = vpop.permute.xlu0 %6896
    %6898 = vrot.lane.b32.xlu0 %v4974, 64
    %v6899 = vpop.permute.xlu0 %6898
    %6900 = vrot.lane.b32.xlu0 %v4975, 64
    %v6901 = vpop.permute.xlu0 %6900
    %6902 = vrot.lane.b32.xlu0 %v4976, 64
    %v6903 = vpop.permute.xlu0 %6902
    %6904 = vrot.lane.b32.xlu0 %v4977, 64
    %v6905 = vpop.permute.xlu0 %6904
    %6906 = vrot.lane.b32.xlu0 %v4978, 64
    %v6907 = vpop.permute.xlu0 %6906
    %6908 = vrot.lane.b32.xlu0 %v4979, 64
    %v6909 = vpop.permute.xlu0 %6908
    %6910 = vrot.lane.b32.xlu0 %v4980, 64
    %v6911 = vpop.permute.xlu0 %6910
    %6912 = vrot.lane.b32.xlu0 %v4981, 64
    %v6913 = vpop.permute.xlu0 %6912
    %6914 = vrot.lane.b32.xlu0 %v4982, 64
    %v6915 = vpop.permute.xlu0 %6914
    %6916 = vrot.lane.b32.xlu0 %v4983, 64
    %v6917 = vpop.permute.xlu0 %6916
    %6918 = vrot.lane.b32.xlu0 %v4984, 64
    %v6919 = vpop.permute.xlu0 %6918
    %6920 = vrot.lane.b32.xlu0 %v4985, 64
    %v6921 = vpop.permute.xlu0 %6920
    %6922 = vrot.lane.b32.xlu0 %v4986, 64
    %v6923 = vpop.permute.xlu0 %6922
    %6924 = vrot.lane.b32.xlu0 %v4987, 64
    %v6925 = vpop.permute.xlu0 %6924
    %6926 = vrot.lane.b32.xlu0 %v4988, 64
    %v6927 = vpop.permute.xlu0 %6926
    %6928 = vrot.lane.b32.xlu0 %v4989, 64
    %v6929 = vpop.permute.xlu0 %6928
    %6930 = vrot.lane.b32.xlu0 %v4990, 64
    %v6931 = vpop.permute.xlu0 %6930
    %6932 = vrot.lane.b32.xlu0 %v4991, 64
    %v6933 = vpop.permute.xlu0 %6932
    %6934 = vrot.lane.b32.xlu0 %v4992, 64
    %v6935 = vpop.permute.xlu0 %6934
    %6936 = vrot.lane.b32.xlu0 %v4993, 64
    %v6937 = vpop.permute.xlu0 %6936
    %6938 = vrot.lane.b32.xlu0 %v4994, 64
    %v6939 = vpop.permute.xlu0 %6938
    %6940 = vrot.lane.b32.xlu0 %v4995, 64
    %v6941 = vpop.permute.xlu0 %6940
    %6942 = vrot.lane.b32.xlu0 %v4996, 64
    %v6943 = vpop.permute.xlu0 %6942
    %6944 = vrot.lane.b32.xlu0 %v4997, 64
    %v6945 = vpop.permute.xlu0 %6944
    %6946 = vrot.lane.b32.xlu0 %v4998, 64
    %v6947 = vpop.permute.xlu0 %6946
    %6948 = vrot.lane.b32.xlu0 %v4999, 64
    %v6949 = vpop.permute.xlu0 %6948
    %6950 = vrot.lane.b32.xlu0 %v5000, 64
    %v6951 = vpop.permute.xlu0 %6950
    %6952 = vrot.lane.b32.xlu0 %v5001, 64
    %v6953 = vpop.permute.xlu0 %6952
    %6954 = vrot.lane.b32.xlu0 %v5002, 64
    %v6955 = vpop.permute.xlu0 %6954
    %6956 = vrot.lane.b32.xlu0 %v5003, 64
    %v6957 = vpop.permute.xlu0 %6956
    %6958 = vrot.lane.b32.xlu0 %v5004, 64
    %v6959 = vpop.permute.xlu0 %6958
    %6960 = vrot.lane.b32.xlu0 %v5005, 64
    %v6961 = vpop.permute.xlu0 %6960
    %6962 = vrot.lane.b32.xlu0 %v5006, 64
    %v6963 = vpop.permute.xlu0 %6962
    %6964 = vrot.lane.b32.xlu0 %v5007, 64
    %v6965 = vpop.permute.xlu0 %6964
    %6966 = vrot.lane.b32.xlu0 %v5008, 64
    %v6967 = vpop.permute.xlu0 %6966
    %6968 = vrot.lane.b32.xlu0 %v5009, 64
    %v6969 = vpop.permute.xlu0 %6968
    %6970 = vrot.lane.b32.xlu0 %v5010, 64
    %v6971 = vpop.permute.xlu0 %6970
    %6972 = vrot.lane.b32.xlu0 %v5011, 64
    %v6973 = vpop.permute.xlu0 %6972
    %6974 = vrot.lane.b32.xlu0 %v5012, 64
    %v6975 = vpop.permute.xlu0 %6974
    %6976 = vrot.lane.b32.xlu0 %v5013, 64
    %v6977 = vpop.permute.xlu0 %6976
    %6978 = vrot.lane.b32.xlu0 %v5014, 64
    %v6979 = vpop.permute.xlu0 %6978
    %6980 = vrot.lane.b32.xlu0 %v5015, 64
    %v6981 = vpop.permute.xlu0 %6980
    %6982 = vrot.lane.b32.xlu0 %v5016, 64
    %v6983 = vpop.permute.xlu0 %6982
    %6984 = vrot.lane.b32.xlu0 %v5017, 64
    %v6985 = vpop.permute.xlu0 %6984
    %6986 = vrot.lane.b32.xlu0 %v5018, 64
    %v6987 = vpop.permute.xlu0 %6986
    %6988 = vrot.lane.b32.xlu0 %v5019, 64
    %v6989 = vpop.permute.xlu0 %6988
    %6990 = vrot.lane.b32.xlu0 %v5020, 64
    %v6991 = vpop.permute.xlu0 %6990
    %6992 = vrot.lane.b32.xlu0 %v5021, 64
    %v6993 = vpop.permute.xlu0 %6992
    %6994 = vrot.lane.b32.xlu0 %v5022, 64
    %v6995 = vpop.permute.xlu0 %6994
    %6996 = vrot.lane.b32.xlu0 %v5023, 64
    %v6997 = vpop.permute.xlu0 %6996
    %6998 = vrot.lane.b32.xlu0 %v5024, 64
    %v6999 = vpop.permute.xlu0 %6998
    %7000 = vrot.lane.b32.xlu0 %v5025, 64
    %v7001 = vpop.permute.xlu0 %7000
    %7002 = vrot.lane.b32.xlu0 %v5026, 64
    %v7003 = vpop.permute.xlu0 %7002
    %7004 = vrot.lane.b32.xlu0 %v5027, 64
    %v7005 = vpop.permute.xlu0 %7004
    %7006 = vrot.lane.b32.xlu0 %v5028, 64
    %v7007 = vpop.permute.xlu0 %7006
    %7008 = vrot.lane.b32.xlu0 %v5029, 64
    %v7009 = vpop.permute.xlu0 %7008
    %7010 = vrot.lane.b32.xlu0 %v5030, 64
    %v7011 = vpop.permute.xlu0 %7010
    %7012 = vrot.lane.b32.xlu0 %v5031, 64
    %v7013 = vpop.permute.xlu0 %7012
    %7014 = vrot.lane.b32.xlu0 %v5032, 64
    %v7015 = vpop.permute.xlu0 %7014
    %7016 = vrot.lane.b32.xlu0 %v5033, 64
    %v7017 = vpop.permute.xlu0 %7016
    %v7082 = vsel %vm2647, %v4457, %v5099
    %v7083 = vsel %vm2647, %v4458, %v5101
    %v7084 = vsel %vm2647, %v4459, %v5103
    %v7085 = vsel %vm2647, %v4460, %v5105
    %v7086 = vsel %vm2647, %v4461, %v5107
    %v7087 = vsel %vm2647, %v4462, %v5109
    %v7088 = vsel %vm2647, %v4463, %v5111
    %v7089 = vsel %vm2647, %v4464, %v5113
    %v7090 = vsel %vm2647, %v4465, %v5115
    %v7091 = vsel %vm2647, %v4466, %v5117
    %v7092 = vsel %vm2647, %v4467, %v5119
    %v7093 = vsel %vm2647, %v4468, %v5121
    %v7094 = vsel %vm2647, %v4469, %v5123
    %v7095 = vsel %vm2647, %v4470, %v5125
    %v7096 = vsel %vm2647, %v4471, %v5127
    %v7097 = vsel %vm2647, %v4472, %v5129
    %v7098 = vsel %vm2647, %v4473, %v5131
    %v7099 = vsel %vm2647, %v4474, %v5133
    %v7100 = vsel %vm2647, %v4475, %v5135
    %v7101 = vsel %vm2647, %v4476, %v5137
    %v7102 = vsel %vm2647, %v4477, %v5139
    %v7103 = vsel %vm2647, %v4478, %v5141
    %v7104 = vsel %vm2647, %v4479, %v5143
    %v7105 = vsel %vm2647, %v4480, %v5145
    %v7106 = vsel %vm2647, %v4481, %v5147
    %v7107 = vsel %vm2647, %v4482, %v5149
    %v7108 = vsel %vm2647, %v4483, %v5151
    %v7109 = vsel %vm2647, %v4484, %v5153
    %v7110 = vsel %vm2647, %v4485, %v5155
    %v7111 = vsel %vm2647, %v4486, %v5157
    %v7112 = vsel %vm2647, %v4487, %v5159
    %v7113 = vsel %vm2647, %v4488, %v5161
    %v7114 = vsel %vm2647, %v4489, %v5163
    %v7115 = vsel %vm2647, %v4490, %v5165
    %v7116 = vsel %vm2647, %v4491, %v5167
    %v7117 = vsel %vm2647, %v4492, %v5169
    %v7118 = vsel %vm2647, %v4493, %v5171
    %v7119 = vsel %vm2647, %v4494, %v5173
    %v7120 = vsel %vm2647, %v4495, %v5175
    %v7121 = vsel %vm2647, %v4496, %v5177
    %v7122 = vsel %vm2647, %v4497, %v5179
    %v7123 = vsel %vm2647, %v4498, %v5181
    %v7124 = vsel %vm2647, %v4499, %v5183
    %v7125 = vsel %vm2647, %v4500, %v5185
    %v7126 = vsel %vm2647, %v4501, %v5187
    %v7127 = vsel %vm2647, %v4502, %v5189
    %v7128 = vsel %vm2647, %v4503, %v5191
    %v7129 = vsel %vm2647, %v4504, %v5193
    %v7130 = vsel %vm2647, %v4505, %v5195
    %v7131 = vsel %vm2647, %v4506, %v5197
    %v7132 = vsel %vm2647, %v4507, %v5199
    %v7133 = vsel %vm2647, %v4508, %v5201
    %v7134 = vsel %vm2647, %v4509, %v5203
    %v7135 = vsel %vm2647, %v4510, %v5205
    %v7136 = vsel %vm2647, %v4511, %v5207
    %v7137 = vsel %vm2647, %v4512, %v5209
    %v7138 = vsel %vm2647, %v4513, %v5211
    %v7139 = vsel %vm2647, %v4514, %v5213
    %v7140 = vsel %vm2647, %v4515, %v5215
    %v7141 = vsel %vm2647, %v4516, %v5217
    %v7142 = vsel %vm2647, %v4517, %v5219
    %v7143 = vsel %vm2647, %v4518, %v5221
    %v7144 = vsel %vm2647, %v4519, %v5223
    %v7145 = vsel %vm2647, %v4520, %v5225
    %v7146 = vsel %vm2712, %v7082, %v5355
    %v7147 = vsel %vm2712, %v7083, %v5357
    %v7148 = vsel %vm2712, %v7084, %v5359
    %v7149 = vsel %vm2712, %v7085, %v5361
    %v7150 = vsel %vm2712, %v7086, %v5363
    %v7151 = vsel %vm2712, %v7087, %v5365
    %v7152 = vsel %vm2712, %v7088, %v5367
    %v7153 = vsel %vm2712, %v7089, %v5369
    %v7154 = vsel %vm2712, %v7090, %v5371
    %v7155 = vsel %vm2712, %v7091, %v5373
    %v7156 = vsel %vm2712, %v7092, %v5375
    %v7157 = vsel %vm2712, %v7093, %v5377
    %v7158 = vsel %vm2712, %v7094, %v5379
    %v7159 = vsel %vm2712, %v7095, %v5381
    %v7160 = vsel %vm2712, %v7096, %v5383
    %v7161 = vsel %vm2712, %v7097, %v5385
    %v7162 = vsel %vm2712, %v7098, %v5387
    %v7163 = vsel %vm2712, %v7099, %v5389
    %v7164 = vsel %vm2712, %v7100, %v5391
    %v7165 = vsel %vm2712, %v7101, %v5393
    %v7166 = vsel %vm2712, %v7102, %v5395
    %v7167 = vsel %vm2712, %v7103, %v5397
    %v7168 = vsel %vm2712, %v7104, %v5399
    %v7169 = vsel %vm2712, %v7105, %v5401
    %v7170 = vsel %vm2712, %v7106, %v5403
    %v7171 = vsel %vm2712, %v7107, %v5405
    %v7172 = vsel %vm2712, %v7108, %v5407
    %v7173 = vsel %vm2712, %v7109, %v5409
    %v7174 = vsel %vm2712, %v7110, %v5411
    %v7175 = vsel %vm2712, %v7111, %v5413
    %v7176 = vsel %vm2712, %v7112, %v5415
    %v7177 = vsel %vm2712, %v7113, %v5417
    %v7178 = vsel %vm2712, %v7114, %v5419
    %v7179 = vsel %vm2712, %v7115, %v5421
    %v7180 = vsel %vm2712, %v7116, %v5423
    %v7181 = vsel %vm2712, %v7117, %v5425
    %v7182 = vsel %vm2712, %v7118, %v5427
    %v7183 = vsel %vm2712, %v7119, %v5429
    %v7184 = vsel %vm2712, %v7120, %v5431
    %v7185 = vsel %vm2712, %v7121, %v5433
    %v7186 = vsel %vm2712, %v7122, %v5435
    %v7187 = vsel %vm2712, %v7123, %v5437
    %v7188 = vsel %vm2712, %v7124, %v5439
    %v7189 = vsel %vm2712, %v7125, %v5441
    %v7190 = vsel %vm2712, %v7126, %v5443
    %v7191 = vsel %vm2712, %v7127, %v5445
    %v7192 = vsel %vm2712, %v7128, %v5447
    %v7193 = vsel %vm2712, %v7129, %v5449
    %v7194 = vsel %vm2712, %v7130, %v5451
    %v7195 = vsel %vm2712, %v7131, %v5453
    %v7196 = vsel %vm2712, %v7132, %v5455
    %v7197 = vsel %vm2712, %v7133, %v5457
    %v7198 = vsel %vm2712, %v7134, %v5459
    %v7199 = vsel %vm2712, %v7135, %v5461
    %v7200 = vsel %vm2712, %v7136, %v5463
    %v7201 = vsel %vm2712, %v7137, %v5465
    %v7202 = vsel %vm2712, %v7138, %v5467
    %v7203 = vsel %vm2712, %v7139, %v5469
    %v7204 = vsel %vm2712, %v7140, %v5471
    %v7205 = vsel %vm2712, %v7141, %v5473
    %v7206 = vsel %vm2712, %v7142, %v5475
    %v7207 = vsel %vm2712, %v7143, %v5477
    %v7208 = vsel %vm2712, %v7144, %v5479
    %v7209 = vsel %vm2712, %v7145, %v5481
    %v7210 = vsel %vm2777, %v7146, %v5611
    %v7211 = vsel %vm2777, %v7147, %v5613
    %v7212 = vsel %vm2777, %v7148, %v5615
    %v7213 = vsel %vm2777, %v7149, %v5617
    %v7214 = vsel %vm2777, %v7150, %v5619
    %v7215 = vsel %vm2777, %v7151, %v5621
    %v7216 = vsel %vm2777, %v7152, %v5623
    %v7217 = vsel %vm2777, %v7153, %v5625
    %v7218 = vsel %vm2777, %v7154, %v5627
    %v7219 = vsel %vm2777, %v7155, %v5629
    %v7220 = vsel %vm2777, %v7156, %v5631
    %v7221 = vsel %vm2777, %v7157, %v5633
    %v7222 = vsel %vm2777, %v7158, %v5635
    %v7223 = vsel %vm2777, %v7159, %v5637
    %v7224 = vsel %vm2777, %v7160, %v5639
    %v7225 = vsel %vm2777, %v7161, %v5641
    %v7226 = vsel %vm2777, %v7162, %v5643
    %v7227 = vsel %vm2777, %v7163, %v5645
    %v7228 = vsel %vm2777, %v7164, %v5647
    %v7229 = vsel %vm2777, %v7165, %v5649
    %v7230 = vsel %vm2777, %v7166, %v5651
    %v7231 = vsel %vm2777, %v7167, %v5653
    %v7232 = vsel %vm2777, %v7168, %v5655
    %v7233 = vsel %vm2777, %v7169, %v5657
    %v7234 = vsel %vm2777, %v7170, %v5659
    %v7235 = vsel %vm2777, %v7171, %v5661
    %v7236 = vsel %vm2777, %v7172, %v5663
    %v7237 = vsel %vm2777, %v7173, %v5665
    %v7238 = vsel %vm2777, %v7174, %v5667
    %v7239 = vsel %vm2777, %v7175, %v5669
    %v7240 = vsel %vm2777, %v7176, %v5671
    %v7241 = vsel %vm2777, %v7177, %v5673
    %v7242 = vsel %vm2777, %v7178, %v5675
    %v7243 = vsel %vm2777, %v7179, %v5677
    %v7244 = vsel %vm2777, %v7180, %v5679
    %v7245 = vsel %vm2777, %v7181, %v5681
    %v7246 = vsel %vm2777, %v7182, %v5683
    %v7247 = vsel %vm2777, %v7183, %v5685
    %v7248 = vsel %vm2777, %v7184, %v5687
    %v7249 = vsel %vm2777, %v7185, %v5689
    %v7250 = vsel %vm2777, %v7186, %v5691
    %v7251 = vsel %vm2777, %v7187, %v5693
    %v7252 = vsel %vm2777, %v7188, %v5695
    %v7253 = vsel %vm2777, %v7189, %v5697
    %v7254 = vsel %vm2777, %v7190, %v5699
    %v7255 = vsel %vm2777, %v7191, %v5701
    %v7256 = vsel %vm2777, %v7192, %v5703
    %v7257 = vsel %vm2777, %v7193, %v5705
    %v7258 = vsel %vm2777, %v7194, %v5707
    %v7259 = vsel %vm2777, %v7195, %v5709
    %v7260 = vsel %vm2777, %v7196, %v5711
    %v7261 = vsel %vm2777, %v7197, %v5713
    %v7262 = vsel %vm2777, %v7198, %v5715
    %v7263 = vsel %vm2777, %v7199, %v5717
    %v7264 = vsel %vm2777, %v7200, %v5719
    %v7265 = vsel %vm2777, %v7201, %v5721
    %v7266 = vsel %vm2777, %v7202, %v5723
    %v7267 = vsel %vm2777, %v7203, %v5725
    %v7268 = vsel %vm2777, %v7204, %v5727
    %v7269 = vsel %vm2777, %v7205, %v5729
    %v7270 = vsel %vm2777, %v7206, %v5731
    %v7271 = vsel %vm2777, %v7207, %v5733
    %v7272 = vsel %vm2777, %v7208, %v5735
    %v7273 = vsel %vm2777, %v7209, %v5737
    %v7274 = vsel %vm2842, %v7210, %v5867
    %v7275 = vsel %vm2842, %v7211, %v5869
    %v7276 = vsel %vm2842, %v7212, %v5871
    %v7277 = vsel %vm2842, %v7213, %v5873
    %v7278 = vsel %vm2842, %v7214, %v5875
    %v7279 = vsel %vm2842, %v7215, %v5877
    %v7280 = vsel %vm2842, %v7216, %v5879
    %v7281 = vsel %vm2842, %v7217, %v5881
    %v7282 = vsel %vm2842, %v7218, %v5883
    %v7283 = vsel %vm2842, %v7219, %v5885
    %v7284 = vsel %vm2842, %v7220, %v5887
    %v7285 = vsel %vm2842, %v7221, %v5889
    %v7286 = vsel %vm2842, %v7222, %v5891
    %v7287 = vsel %vm2842, %v7223, %v5893
    %v7288 = vsel %vm2842, %v7224, %v5895
    %v7289 = vsel %vm2842, %v7225, %v5897
    %v7290 = vsel %vm2842, %v7226, %v5899
    %v7291 = vsel %vm2842, %v7227, %v5901
    %v7292 = vsel %vm2842, %v7228, %v5903
    %v7293 = vsel %vm2842, %v7229, %v5905
    %v7294 = vsel %vm2842, %v7230, %v5907
    %v7295 = vsel %vm2842, %v7231, %v5909
    %v7296 = vsel %vm2842, %v7232, %v5911
    %v7297 = vsel %vm2842, %v7233, %v5913
    %v7298 = vsel %vm2842, %v7234, %v5915
    %v7299 = vsel %vm2842, %v7235, %v5917
    %v7300 = vsel %vm2842, %v7236, %v5919
    %v7301 = vsel %vm2842, %v7237, %v5921
    %v7302 = vsel %vm2842, %v7238, %v5923
    %v7303 = vsel %vm2842, %v7239, %v5925
    %v7304 = vsel %vm2842, %v7240, %v5927
    %v7305 = vsel %vm2842, %v7241, %v5929
    %v7306 = vsel %vm2842, %v7242, %v5931
    %v7307 = vsel %vm2842, %v7243, %v5933
    %v7308 = vsel %vm2842, %v7244, %v5935
    %v7309 = vsel %vm2842, %v7245, %v5937
    %v7310 = vsel %vm2842, %v7246, %v5939
    %v7311 = vsel %vm2842, %v7247, %v5941
    %v7312 = vsel %vm2842, %v7248, %v5943
    %v7313 = vsel %vm2842, %v7249, %v5945
    %v7314 = vsel %vm2842, %v7250, %v5947
    %v7315 = vsel %vm2842, %v7251, %v5949
    %v7316 = vsel %vm2842, %v7252, %v5951
    %v7317 = vsel %vm2842, %v7253, %v5953
    %v7318 = vsel %vm2842, %v7254, %v5955
    %v7319 = vsel %vm2842, %v7255, %v5957
    %v7320 = vsel %vm2842, %v7256, %v5959
    %v7321 = vsel %vm2842, %v7257, %v5961
    %v7322 = vsel %vm2842, %v7258, %v5963
    %v7323 = vsel %vm2842, %v7259, %v5965
    %v7324 = vsel %vm2842, %v7260, %v5967
    %v7325 = vsel %vm2842, %v7261, %v5969
    %v7326 = vsel %vm2842, %v7262, %v5971
    %v7327 = vsel %vm2842, %v7263, %v5973
    %v7328 = vsel %vm2842, %v7264, %v5975
    %v7329 = vsel %vm2842, %v7265, %v5977
    %v7330 = vsel %vm2842, %v7266, %v5979
    %v7331 = vsel %vm2842, %v7267, %v5981
    %v7332 = vsel %vm2842, %v7268, %v5983
    %v7333 = vsel %vm2842, %v7269, %v5985
    %v7334 = vsel %vm2842, %v7270, %v5987
    %v7335 = vsel %vm2842, %v7271, %v5989
    %v7336 = vsel %vm2842, %v7272, %v5991
    %v7337 = vsel %vm2842, %v7273, %v5993
    %v7338 = vsel %vm2907, %v7274, %v6123
    %v7339 = vsel %vm2907, %v7275, %v6125
    %v7340 = vsel %vm2907, %v7276, %v6127
    %v7341 = vsel %vm2907, %v7277, %v6129
    %v7342 = vsel %vm2907, %v7278, %v6131
    %v7343 = vsel %vm2907, %v7279, %v6133
    %v7344 = vsel %vm2907, %v7280, %v6135
    %v7345 = vsel %vm2907, %v7281, %v6137
    %v7346 = vsel %vm2907, %v7282, %v6139
    %v7347 = vsel %vm2907, %v7283, %v6141
    %v7348 = vsel %vm2907, %v7284, %v6143
    %v7349 = vsel %vm2907, %v7285, %v6145
    %v7350 = vsel %vm2907, %v7286, %v6147
    %v7351 = vsel %vm2907, %v7287, %v6149
    %v7352 = vsel %vm2907, %v7288, %v6151
    %v7353 = vsel %vm2907, %v7289, %v6153
    %v7354 = vsel %vm2907, %v7290, %v6155
    %v7355 = vsel %vm2907, %v7291, %v6157
    %v7356 = vsel %vm2907, %v7292, %v6159
    %v7357 = vsel %vm2907, %v7293, %v6161
    %v7358 = vsel %vm2907, %v7294, %v6163
    %v7359 = vsel %vm2907, %v7295, %v6165
    %v7360 = vsel %vm2907, %v7296, %v6167
    %v7361 = vsel %vm2907, %v7297, %v6169
    %v7362 = vsel %vm2907, %v7298, %v6171
    %v7363 = vsel %vm2907, %v7299, %v6173
    %v7364 = vsel %vm2907, %v7300, %v6175
    %v7365 = vsel %vm2907, %v7301, %v6177
    %v7366 = vsel %vm2907, %v7302, %v6179
    %v7367 = vsel %vm2907, %v7303, %v6181
    %v7368 = vsel %vm2907, %v7304, %v6183
    %v7369 = vsel %vm2907, %v7305, %v6185
    %v7370 = vsel %vm2907, %v7306, %v6187
    %v7371 = vsel %vm2907, %v7307, %v6189
    %v7372 = vsel %vm2907, %v7308, %v6191
    %v7373 = vsel %vm2907, %v7309, %v6193
    %v7374 = vsel %vm2907, %v7310, %v6195
    %v7375 = vsel %vm2907, %v7311, %v6197
    %v7376 = vsel %vm2907, %v7312, %v6199
    %v7377 = vsel %vm2907, %v7313, %v6201
    %v7378 = vsel %vm2907, %v7314, %v6203
    %v7379 = vsel %vm2907, %v7315, %v6205
    %v7380 = vsel %vm2907, %v7316, %v6207
    %v7381 = vsel %vm2907, %v7317, %v6209
    %v7382 = vsel %vm2907, %v7318, %v6211
    %v7383 = vsel %vm2907, %v7319, %v6213
    %v7384 = vsel %vm2907, %v7320, %v6215
    %v7385 = vsel %vm2907, %v7321, %v6217
    %v7386 = vsel %vm2907, %v7322, %v6219
    %v7387 = vsel %vm2907, %v7323, %v6221
    %v7388 = vsel %vm2907, %v7324, %v6223
    %v7389 = vsel %vm2907, %v7325, %v6225
    %v7390 = vsel %vm2907, %v7326, %v6227
    %v7391 = vsel %vm2907, %v7327, %v6229
    %v7392 = vsel %vm2907, %v7328, %v6231
    %v7393 = vsel %vm2907, %v7329, %v6233
    %v7394 = vsel %vm2907, %v7330, %v6235
    %v7395 = vsel %vm2907, %v7331, %v6237
    %v7396 = vsel %vm2907, %v7332, %v6239
    %v7397 = vsel %vm2907, %v7333, %v6241
    %v7398 = vsel %vm2907, %v7334, %v6243
    %v7399 = vsel %vm2907, %v7335, %v6245
    %v7400 = vsel %vm2907, %v7336, %v6247
    %v7401 = vsel %vm2907, %v7337, %v6249
    %v7402 = vsel %vm2972, %v7338, %v6379
    %v7403 = vsel %vm2972, %v7339, %v6381
    %v7404 = vsel %vm2972, %v7340, %v6383
    %v7405 = vsel %vm2972, %v7341, %v6385
    %v7406 = vsel %vm2972, %v7342, %v6387
    %v7407 = vsel %vm2972, %v7343, %v6389
    %v7408 = vsel %vm2972, %v7344, %v6391
    %v7409 = vsel %vm2972, %v7345, %v6393
    %v7410 = vsel %vm2972, %v7346, %v6395
    %v7411 = vsel %vm2972, %v7347, %v6397
    %v7412 = vsel %vm2972, %v7348, %v6399
    %v7413 = vsel %vm2972, %v7349, %v6401
    %v7414 = vsel %vm2972, %v7350, %v6403
    %v7415 = vsel %vm2972, %v7351, %v6405
    %v7416 = vsel %vm2972, %v7352, %v6407
    %v7417 = vsel %vm2972, %v7353, %v6409
    %v7418 = vsel %vm2972, %v7354, %v6411
    %v7419 = vsel %vm2972, %v7355, %v6413
    %v7420 = vsel %vm2972, %v7356, %v6415
    %v7421 = vsel %vm2972, %v7357, %v6417
    %v7422 = vsel %vm2972, %v7358, %v6419
    %v7423 = vsel %vm2972, %v7359, %v6421
    %v7424 = vsel %vm2972, %v7360, %v6423
    %v7425 = vsel %vm2972, %v7361, %v6425
    %v7426 = vsel %vm2972, %v7362, %v6427
    %v7427 = vsel %vm2972, %v7363, %v6429
    %v7428 = vsel %vm2972, %v7364, %v6431
    %v7429 = vsel %vm2972, %v7365, %v6433
    %v7430 = vsel %vm2972, %v7366, %v6435
    %v7431 = vsel %vm2972, %v7367, %v6437
    %v7432 = vsel %vm2972, %v7368, %v6439
    %v7433 = vsel %vm2972, %v7369, %v6441
    %v7434 = vsel %vm2972, %v7370, %v6443
    %v7435 = vsel %vm2972, %v7371, %v6445
    %v7436 = vsel %vm2972, %v7372, %v6447
    %v7437 = vsel %vm2972, %v7373, %v6449
    %v7438 = vsel %vm2972, %v7374, %v6451
    %v7439 = vsel %vm2972, %v7375, %v6453
    %v7440 = vsel %vm2972, %v7376, %v6455
    %v7441 = vsel %vm2972, %v7377, %v6457
    %v7442 = vsel %vm2972, %v7378, %v6459
    %v7443 = vsel %vm2972, %v7379, %v6461
    %v7444 = vsel %vm2972, %v7380, %v6463
    %v7445 = vsel %vm2972, %v7381, %v6465
    %v7446 = vsel %vm2972, %v7382, %v6467
    %v7447 = vsel %vm2972, %v7383, %v6469
    %v7448 = vsel %vm2972, %v7384, %v6471
    %v7449 = vsel %vm2972, %v7385, %v6473
    %v7450 = vsel %vm2972, %v7386, %v6475
    %v7451 = vsel %vm2972, %v7387, %v6477
    %v7452 = vsel %vm2972, %v7388, %v6479
    %v7453 = vsel %vm2972, %v7389, %v6481
    %v7454 = vsel %vm2972, %v7390, %v6483
    %v7455 = vsel %vm2972, %v7391, %v6485
    %v7456 = vsel %vm2972, %v7392, %v6487
    %v7457 = vsel %vm2972, %v7393, %v6489
    %v7458 = vsel %vm2972, %v7394, %v6491
    %v7459 = vsel %vm2972, %v7395, %v6493
    %v7460 = vsel %vm2972, %v7396, %v6495
    %v7461 = vsel %vm2972, %v7397, %v6497
    %v7462 = vsel %vm2972, %v7398, %v6499
    %v7463 = vsel %vm2972, %v7399, %v6501
    %v7464 = vsel %vm2972, %v7400, %v6503
    %v7465 = vsel %vm2972, %v7401, %v6505
    %v7466 = vsel %vm3037, %v7402, %v6635
    %v7467 = vsel %vm3037, %v7403, %v6637
    %v7468 = vsel %vm3037, %v7404, %v6639
    %v7469 = vsel %vm3037, %v7405, %v6641
    %v7470 = vsel %vm3037, %v7406, %v6643
    %v7471 = vsel %vm3037, %v7407, %v6645
    %v7472 = vsel %vm3037, %v7408, %v6647
    %v7473 = vsel %vm3037, %v7409, %v6649
    %v7474 = vsel %vm3037, %v7410, %v6651
    %v7475 = vsel %vm3037, %v7411, %v6653
    %v7476 = vsel %vm3037, %v7412, %v6655
    %v7477 = vsel %vm3037, %v7413, %v6657
    %v7478 = vsel %vm3037, %v7414, %v6659
    %v7479 = vsel %vm3037, %v7415, %v6661
    %v7480 = vsel %vm3037, %v7416, %v6663
    %v7481 = vsel %vm3037, %v7417, %v6665
    %v7482 = vsel %vm3037, %v7418, %v6667
    %v7483 = vsel %vm3037, %v7419, %v6669
    %v7484 = vsel %vm3037, %v7420, %v6671
    %v7485 = vsel %vm3037, %v7421, %v6673
    %v7486 = vsel %vm3037, %v7422, %v6675
    %v7487 = vsel %vm3037, %v7423, %v6677
    %v7488 = vsel %vm3037, %v7424, %v6679
    %v7489 = vsel %vm3037, %v7425, %v6681
    %v7490 = vsel %vm3037, %v7426, %v6683
    %v7491 = vsel %vm3037, %v7427, %v6685
    %v7492 = vsel %vm3037, %v7428, %v6687
    %v7493 = vsel %vm3037, %v7429, %v6689
    %v7494 = vsel %vm3037, %v7430, %v6691
    %v7495 = vsel %vm3037, %v7431, %v6693
    %v7496 = vsel %vm3037, %v7432, %v6695
    %v7497 = vsel %vm3037, %v7433, %v6697
    %v7498 = vsel %vm3037, %v7434, %v6699
    %v7499 = vsel %vm3037, %v7435, %v6701
    %v7500 = vsel %vm3037, %v7436, %v6703
    %v7501 = vsel %vm3037, %v7437, %v6705
    %v7502 = vsel %vm3037, %v7438, %v6707
    %v7503 = vsel %vm3037, %v7439, %v6709
    %v7504 = vsel %vm3037, %v7440, %v6711
    %v7505 = vsel %vm3037, %v7441, %v6713
    %v7506 = vsel %vm3037, %v7442, %v6715
    %v7507 = vsel %vm3037, %v7443, %v6717
    %v7508 = vsel %vm3037, %v7444, %v6719
    %v7509 = vsel %vm3037, %v7445, %v6721
    %v7510 = vsel %vm3037, %v7446, %v6723
    %v7511 = vsel %vm3037, %v7447, %v6725
    %v7512 = vsel %vm3037, %v7448, %v6727
    %v7513 = vsel %vm3037, %v7449, %v6729
    %v7514 = vsel %vm3037, %v7450, %v6731
    %v7515 = vsel %vm3037, %v7451, %v6733
    %v7516 = vsel %vm3037, %v7452, %v6735
    %v7517 = vsel %vm3037, %v7453, %v6737
    %v7518 = vsel %vm3037, %v7454, %v6739
    %v7519 = vsel %vm3037, %v7455, %v6741
    %v7520 = vsel %vm3037, %v7456, %v6743
    %v7521 = vsel %vm3037, %v7457, %v6745
    %v7522 = vsel %vm3037, %v7458, %v6747
    %v7523 = vsel %vm3037, %v7459, %v6749
    %v7524 = vsel %vm3037, %v7460, %v6751
    %v7525 = vsel %vm3037, %v7461, %v6753
    %v7526 = vsel %vm3037, %v7462, %v6755
    %v7527 = vsel %vm3037, %v7463, %v6757
    %v7528 = vsel %vm3037, %v7464, %v6759
    %v7529 = vsel %vm3037, %v7465, %v6761
    %v7530 = vsel %vm3102, %v7466, %v6891
    %v7531 = vsel %vm3102, %v7467, %v6893
    %v7532 = vsel %vm3102, %v7468, %v6895
    %v7533 = vsel %vm3102, %v7469, %v6897
    %v7534 = vsel %vm3102, %v7470, %v6899
    %v7535 = vsel %vm3102, %v7471, %v6901
    %v7536 = vsel %vm3102, %v7472, %v6903
    %v7537 = vsel %vm3102, %v7473, %v6905
    %v7538 = vsel %vm3102, %v7474, %v6907
    %v7539 = vsel %vm3102, %v7475, %v6909
    %v7540 = vsel %vm3102, %v7476, %v6911
    %v7541 = vsel %vm3102, %v7477, %v6913
    %v7542 = vsel %vm3102, %v7478, %v6915
    %v7543 = vsel %vm3102, %v7479, %v6917
    %v7544 = vsel %vm3102, %v7480, %v6919
    %v7545 = vsel %vm3102, %v7481, %v6921
    %v7546 = vsel %vm3102, %v7482, %v6923
    %v7547 = vsel %vm3102, %v7483, %v6925
    %v7548 = vsel %vm3102, %v7484, %v6927
    %v7549 = vsel %vm3102, %v7485, %v6929
    %v7550 = vsel %vm3102, %v7486, %v6931
    %v7551 = vsel %vm3102, %v7487, %v6933
    %v7552 = vsel %vm3102, %v7488, %v6935
    %v7553 = vsel %vm3102, %v7489, %v6937
    %v7554 = vsel %vm3102, %v7490, %v6939
    %v7555 = vsel %vm3102, %v7491, %v6941
    %v7556 = vsel %vm3102, %v7492, %v6943
    %v7557 = vsel %vm3102, %v7493, %v6945
    %v7558 = vsel %vm3102, %v7494, %v6947
    %v7559 = vsel %vm3102, %v7495, %v6949
    %v7560 = vsel %vm3102, %v7496, %v6951
    %v7561 = vsel %vm3102, %v7497, %v6953
    %v7562 = vsel %vm3102, %v7498, %v6955
    %v7563 = vsel %vm3102, %v7499, %v6957
    %v7564 = vsel %vm3102, %v7500, %v6959
    %v7565 = vsel %vm3102, %v7501, %v6961
    %v7566 = vsel %vm3102, %v7502, %v6963
    %v7567 = vsel %vm3102, %v7503, %v6965
    %v7568 = vsel %vm3102, %v7504, %v6967
    %v7569 = vsel %vm3102, %v7505, %v6969
    %v7570 = vsel %vm3102, %v7506, %v6971
    %v7571 = vsel %vm3102, %v7507, %v6973
    %v7572 = vsel %vm3102, %v7508, %v6975
    %v7573 = vsel %vm3102, %v7509, %v6977
    %v7574 = vsel %vm3102, %v7510, %v6979
    %v7575 = vsel %vm3102, %v7511, %v6981
    %v7576 = vsel %vm3102, %v7512, %v6983
    %v7577 = vsel %vm3102, %v7513, %v6985
    %v7578 = vsel %vm3102, %v7514, %v6987
    %v7579 = vsel %vm3102, %v7515, %v6989
    %v7580 = vsel %vm3102, %v7516, %v6991
    %v7581 = vsel %vm3102, %v7517, %v6993
    %v7582 = vsel %vm3102, %v7518, %v6995
    %v7583 = vsel %vm3102, %v7519, %v6997
    %v7584 = vsel %vm3102, %v7520, %v6999
    %v7585 = vsel %vm3102, %v7521, %v7001
    %v7586 = vsel %vm3102, %v7522, %v7003
    %v7587 = vsel %vm3102, %v7523, %v7005
    %v7588 = vsel %vm3102, %v7524, %v7007
    %v7589 = vsel %vm3102, %v7525, %v7009
    %v7590 = vsel %vm3102, %v7526, %v7011
    %v7591 = vsel %vm3102, %v7527, %v7013
    %v7592 = vsel %vm3102, %v7528, %v7015
    %v7593 = vsel %vm3102, %v7529, %v7017
    %v7594 = vld [vmem:[%s3] sm:$0xff]
    %v7595 = vld [vmem:[%s3 + $0x8] sm:$0xff]
    %v7596 = vld [vmem:[%s3 + $0x10] sm:$0xff]
    %v7597 = vld [vmem:[%s3 + $0x18] sm:$0xff]
    %v7598 = vld [vmem:[%s3 + $0x20] sm:$0xff]
    %v7599 = vld [vmem:[%s3 + $0x28] sm:$0xff]
    %v7600 = vld [vmem:[%s3 + $0x30] sm:$0xff]
    %v7601 = vld [vmem:[%s3 + $0x38] sm:$0xff]
    %v7602 = vld [vmem:[%s3 + $0x40] sm:$0xff]
    %v7603 = vld [vmem:[%s4] sm:$0x1]
    %v7605 = vlaneseq
    %v7606 = vshrl.u32 %v7605, 7
    %v7607 = vsub.s32 0, %v7606
    %v7608 = vrot.slane %v7603, %v7607
    %v7611 = vsel %vm3183, %v7530, 0
    %v7614 = vsel %vm3183, %v7531, 0
    %v7617 = vsel %vm3183, %v7532, 0
    %v7620 = vsel %vm3183, %v7533, 0
    %v7623 = vsel %vm3183, %v7534, 0
    %v7626 = vsel %vm3183, %v7535, 0
    %v7629 = vsel %vm3183, %v7536, 0
    %v7632 = vsel %vm3183, %v7537, 0
    %v7635 = vsel %vm3183, %v7538, 0
    %v7638 = vsel %vm3183, %v7539, 0
    %v7641 = vsel %vm3183, %v7540, 0
    %v7644 = vsel %vm3183, %v7541, 0
    %v7647 = vsel %vm3183, %v7542, 0
    %v7650 = vsel %vm3183, %v7543, 0
    %v7653 = vsel %vm3183, %v7544, 0
    %v7656 = vsel %vm3183, %v7545, 0
    %v7659 = vsel %vm3183, %v7546, 0
    %v7662 = vsel %vm3183, %v7547, 0
    %v7665 = vsel %vm3183, %v7548, 0
    %v7668 = vsel %vm3183, %v7549, 0
    %v7671 = vsel %vm3183, %v7550, 0
    %v7674 = vsel %vm3183, %v7551, 0
    %v7677 = vsel %vm3183, %v7552, 0
    %v7680 = vsel %vm3183, %v7553, 0
    %v7683 = vsel %vm3183, %v7554, 0
    %v7686 = vsel %vm3183, %v7555, 0
    %v7689 = vsel %vm3183, %v7556, 0
    %v7692 = vsel %vm3183, %v7557, 0
    %v7695 = vsel %vm3183, %v7558, 0
    %v7698 = vsel %vm3183, %v7559, 0
    %v7701 = vsel %vm3183, %v7560, 0
    %v7704 = vsel %vm3183, %v7561, 0
    %v7707 = vsel %vm3183, %v7562, 0
    %v7710 = vsel %vm3183, %v7563, 0
    %v7713 = vsel %vm3183, %v7564, 0
    %v7716 = vsel %vm3183, %v7565, 0
    %v7719 = vsel %vm3183, %v7566, 0
    %v7722 = vsel %vm3183, %v7567, 0
    %v7725 = vsel %vm3183, %v7568, 0
    %v7728 = vsel %vm3183, %v7569, 0
    %v7731 = vsel %vm3183, %v7570, 0
    %v7734 = vsel %vm3183, %v7571, 0
    %v7737 = vsel %vm3183, %v7572, 0
    %v7740 = vsel %vm3183, %v7573, 0
    %v7743 = vsel %vm3183, %v7574, 0
    %v7746 = vsel %vm3183, %v7575, 0
    %v7749 = vsel %vm3183, %v7576, 0
    %v7752 = vsel %vm3183, %v7577, 0
    %v7755 = vsel %vm3183, %v7578, 0
    %v7758 = vsel %vm3183, %v7579, 0
    %v7761 = vsel %vm3183, %v7580, 0
    %v7764 = vsel %vm3183, %v7581, 0
    %v7767 = vsel %vm3183, %v7582, 0
    %v7770 = vsel %vm3183, %v7583, 0
    %v7773 = vsel %vm3183, %v7584, 0
    %v7776 = vsel %vm3183, %v7585, 0
    %v7779 = vsel %vm3183, %v7586, 0
    %v7782 = vsel %vm3183, %v7587, 0
    %v7785 = vsel %vm3183, %v7588, 0
    %v7788 = vsel %vm3183, %v7589, 0
    %v7791 = vsel %vm3183, %v7590, 0
    %v7794 = vsel %vm3183, %v7591, 0
    %v7797 = vsel %vm3183, %v7592, 0
    %v7800 = vsel %vm3183, %v7593, 0
    %7802 = vmatprep.subr.mxu0 0.0
    %7803 = vmatpush1.msra.mxu0 %v7594
    %7804 = vmatprep.subr.mxu0 0.0
    %7805 = vmatpush1.msra.mxu0 %v7595
    %7806 = vmatprep.subr.mxu0 0.0
    %7807 = vmatpush1.msra.mxu0 %v7596
    %7808 = vmatprep.subr.mxu0 0.0
    %7809 = vmatpush1.msra.mxu0 %v7597
    %7810 = vmatprep.subr.mxu0 0.0
    %7811 = vmatpush1.msra.mxu0 %v7598
    %7812 = vmatprep.subr.mxu0 0.0
    %7813 = vmatpush1.msra.mxu0 %v7599
    %7814 = vmatprep.subr.mxu0 0.0
    %7815 = vmatpush1.msra.mxu0 %v7600
    %7816 = vmatprep.subr.mxu0 0.0
    %7817 = vmatpush1.msra.mxu0 %v7601
    %7818 = vmatprep.subr.mxu0 0.0
    %7819 = vmatpush1.msra.mxu0 %v7602
    %7820 = vmatprep.subr.mxu0 0.0
    %7821 = vmatpush1.msra.mxu0 0.0
    %7822 = vmatprep.subr.mxu0 0.0
    %7823 = vmatpush1.msra.mxu0 0.0
    %7824 = vmatprep.subr.mxu0 0.0
    %7825 = vmatpush1.msra.mxu0 0.0
    %7826 = vmatprep.subr.mxu0 0.0
    %7827 = vmatpush1.msra.mxu0 0.0
    %7828 = vmatprep.subr.mxu0 0.0
    %7829 = vmatpush1.msra.mxu0 0.0
    %7830 = vmatprep.subr.mxu0 0.0
    %7831 = vmatpush1.msra.mxu0 0.0
    %7832 = vmatprep.subr.mxu0 0.0
    %7833 = vmatpush1.msra.mxu0 0.0
    %7834 = vmatprep.subr.mxu0 0.0
    %7835 = vmatpush1.msra.mxu0 0.0
    %7836 = vmatprep.subr.mxu0 0.0
    %7837 = vmatpush1.msra.mxu0 0.0
    %7838 = vmatprep.subr.mxu0 0.0
    %7839 = vmatpush1.msra.mxu0 0.0
    %7840 = vmatprep.subr.mxu0 0.0
    %7841 = vmatpush1.msra.mxu0 0.0
    %7842 = vmatprep.subr.mxu0 0.0
    %7843 = vmatpush1.msra.mxu0 0.0
    %7844 = vmatprep.subr.mxu0 0.0
    %7845 = vmatpush1.msra.mxu0 0.0
    %7846 = vmatprep.subr.mxu0 0.0
    %7847 = vmatpush1.msra.mxu0 0.0
    %7848 = vmatprep.subr.mxu0 0.0
    %7849 = vmatpush1.msra.mxu0 0.0
    %7850 = vmatprep.subr.mxu0 0.0
    %7851 = vmatpush1.msra.mxu0 0.0
    %7852 = vmatprep.subr.mxu0 0.0
    %7853 = vmatpush1.msra.mxu0 0.0
    %7854 = vmatprep.subr.mxu0 0.0
    %7855 = vmatpush1.msra.mxu0 0.0
    %7856 = vmatprep.subr.mxu0 0.0
    %7857 = vmatpush1.msra.mxu0 0.0
    %7858 = vmatprep.subr.mxu0 0.0
    %7859 = vmatpush1.msra.mxu0 0.0
    %7860 = vmatprep.subr.mxu0 0.0
    %7861 = vmatpush1.msra.mxu0 0.0
    %7862 = vmatprep.subr.mxu0 0.0
    %7863 = vmatpush1.msra.mxu0 0.0
    %7864 = vmatprep.subr.mxu0 0.0
    %7865 = vmatpush1.msra.mxu0 0.0
    %7866 = vmatprep.mubr.f32.mxu0 0.0
    %7867 = vmatmul.mubr.f32.gmra.mrb[0].mxu0 %v7611
    %v7868 = vpop.f32.mrb[0].mxu0
    %v7869 = vadd.f32 %v7608, %v7868
    %v7870 = vpop.f32.mrb[0].mxu0
    %7871 = vmatprep.mubr.f32.mxu0 0.0
    %7872 = vmatmul.mubr.f32.gmra.mrb[0].mxu0 %v7614
    %v7873 = vpop.f32.mrb[0].mxu0
    %v7874 = vadd.f32 %v7608, %v7873
    %v7875 = vpop.f32.mrb[0].mxu0
    %7876 = vmatprep.mubr.f32.mxu0 0.0
    %7877 = vmatmul.mubr.f32.gmra.mrb[0].mxu0 %v7617
    %v7878 = vpop.f32.mrb[0].mxu0
    %v7879 = vadd.f32 %v7608, %v7878
    %v7880 = vpop.f32.mrb[0].mxu0
    %7881 = vmatprep.mubr.f32.mxu0 0.0
    %7882 = vmatmul.mubr.f32.gmra.mrb[0].mxu0 %v7620
    %v7883 = vpop.f32.mrb[0].mxu0
    %v7884 = vadd.f32 %v7608, %v7883
    %v7885 = vpop.f32.mrb[0].mxu0
    %7886 = vmatprep.mubr.f32.mxu0 0.0
    %7887 = vmatmul.mubr.f32.gmra.mrb[0].mxu0 %v7623
    %v7888 = vpop.f32.mrb[0].mxu0
    %v7889 = vadd.f32 %v7608, %v7888
    %v7890 = vpop.f32.mrb[0].mxu0
    %7891 = vmatprep.mubr.f32.mxu0 0.0
    %7892 = vmatmul.mubr.f32.gmra.mrb[0].mxu0 %v7626
    %v7893 = vpop.f32.mrb[0].mxu0
    %v7894 = vadd.f32 %v7608, %v7893
    %v7895 = vpop.f32.mrb[0].mxu0
    %7896 = vmatprep.mubr.f32.mxu0 0.0
    %7897 = vmatmul.mubr.f32.gmra.mrb[0].mxu0 %v7629
    %v7898 = vpop.f32.mrb[0].mxu0
    %v7899 = vadd.f32 %v7608, %v7898
    %v7900 = vpop.f32.mrb[0].mxu0
    %7901 = vmatprep.mubr.f32.mxu0 0.0
    %7902 = vmatmul.mubr.f32.gmra.mrb[0].mxu0 %v7632
    %v7903 = vpop.f32.mrb[0].mxu0
    %v7904 = vadd.f32 %v7608, %v7903
    %v7905 = vpop.f32.mrb[0].mxu0
    %7906 = vmatprep.mubr.f32.mxu0 0.0
    %7907 = vmatmul.mubr.f32.gmra.mrb[0].mxu0 %v7635
    %v7908 = vpop.f32.mrb[0].mxu0
    %v7909 = vadd.f32 %v7608, %v7908
    %v7910 = vpop.f32.mrb[0].mxu0
    %7911 = vmatprep.mubr.f32.mxu0 0.0
    %7912 = vmatmul.mubr.f32.gmra.mrb[0].mxu0 %v7638
    %v7913 = vpop.f32.mrb[0].mxu0
    %v7914 = vadd.f32 %v7608, %v7913
    %v7915 = vpop.f32.mrb[0].mxu0
    %7916 = vmatprep.mubr.f32.mxu0 0.0
    %7917 = vmatmul.mubr.f32.gmra.mrb[0].mxu0 %v7641
    %v7918 = vpop.f32.mrb[0].mxu0
    %v7919 = vadd.f32 %v7608, %v7918
    %v7920 = vpop.f32.mrb[0].mxu0
    %7921 = vmatprep.mubr.f32.mxu0 0.0
    %7922 = vmatmul.mubr.f32.gmra.mrb[0].mxu0 %v7644
    %v7923 = vpop.f32.mrb[0].mxu0
    %v7924 = vadd.f32 %v7608, %v7923
    %v7925 = vpop.f32.mrb[0].mxu0
    %7926 = vmatprep.mubr.f32.mxu0 0.0
    %7927 = vmatmul.mubr.f32.gmra.mrb[0].mxu0 %v7647
    %v7928 = vpop.f32.mrb[0].mxu0
    %v7929 = vadd.f32 %v7608, %v7928
    %v7930 = vpop.f32.mrb[0].mxu0
    %7931 = vmatprep.mubr.f32.mxu0 0.0
    %7932 = vmatmul.mubr.f32.gmra.mrb[0].mxu0 %v7650
    %v7933 = vpop.f32.mrb[0].mxu0
    %v7934 = vadd.f32 %v7608, %v7933
    %v7935 = vpop.f32.mrb[0].mxu0
    %7936 = vmatprep.mubr.f32.mxu0 0.0
    %7937 = vmatmul.mubr.f32.gmra.mrb[0].mxu0 %v7653
    %v7938 = vpop.f32.mrb[0].mxu0
    %v7939 = vadd.f32 %v7608, %v7938
    %v7940 = vpop.f32.mrb[0].mxu0
    %7941 = vmatprep.mubr.f32.mxu0 0.0
    %7942 = vmatmul.mubr.f32.gmra.mrb[0].mxu0 %v7656
    %v7943 = vpop.f32.mrb[0].mxu0
    %v7944 = vadd.f32 %v7608, %v7943
    %v7945 = vpop.f32.mrb[0].mxu0
    %7946 = vmatprep.mubr.f32.mxu0 0.0
    %7947 = vmatmul.mubr.f32.gmra.mrb[0].mxu0 %v7659
    %v7948 = vpop.f32.mrb[0].mxu0
    %v7949 = vadd.f32 %v7608, %v7948
    %v7950 = vpop.f32.mrb[0].mxu0
    %7951 = vmatprep.mubr.f32.mxu0 0.0
    %7952 = vmatmul.mubr.f32.gmra.mrb[0].mxu0 %v7662
    %v7953 = vpop.f32.mrb[0].mxu0
    %v7954 = vadd.f32 %v7608, %v7953
    %v7955 = vpop.f32.mrb[0].mxu0
    %7956 = vmatprep.mubr.f32.mxu0 0.0
    %7957 = vmatmul.mubr.f32.gmra.mrb[0].mxu0 %v7665
    %v7958 = vpop.f32.mrb[0].mxu0
    %v7959 = vadd.f32 %v7608, %v7958
    %v7960 = vpop.f32.mrb[0].mxu0
    %7961 = vmatprep.mubr.f32.mxu0 0.0
    %7962 = vmatmul.mubr.f32.gmra.mrb[0].mxu0 %v7668
    %v7963 = vpop.f32.mrb[0].mxu0
    %v7964 = vadd.f32 %v7608, %v7963
    %v7965 = vpop.f32.mrb[0].mxu0
    %7966 = vmatprep.mubr.f32.mxu0 0.0
    %7967 = vmatmul.mubr.f32.gmra.mrb[0].mxu0 %v7671
    %v7968 = vpop.f32.mrb[0].mxu0
    %v7969 = vadd.f32 %v7608, %v7968
    %v7970 = vpop.f32.mrb[0].mxu0
    %7971 = vmatprep.mubr.f32.mxu0 0.0
    %7972 = vmatmul.mubr.f32.gmra.mrb[0].mxu0 %v7674
    %v7973 = vpop.f32.mrb[0].mxu0
    %v7974 = vadd.f32 %v7608, %v7973
    %v7975 = vpop.f32.mrb[0].mxu0
    %7976 = vmatprep.mubr.f32.mxu0 0.0
    %7977 = vmatmul.mubr.f32.gmra.mrb[0].mxu0 %v7677
    %v7978 = vpop.f32.mrb[0].mxu0
    %v7979 = vadd.f32 %v7608, %v7978
    %v7980 = vpop.f32.mrb[0].mxu0
    %7981 = vmatprep.mubr.f32.mxu0 0.0
    %7982 = vmatmul.mubr.f32.gmra.mrb[0].mxu0 %v7680
    %v7983 = vpop.f32.mrb[0].mxu0
    %v7984 = vadd.f32 %v7608, %v7983
    %v7985 = vpop.f32.mrb[0].mxu0
    %7986 = vmatprep.mubr.f32.mxu0 0.0
    %7987 = vmatmul.mubr.f32.gmra.mrb[0].mxu0 %v7683
    %v7988 = vpop.f32.mrb[0].mxu0
    %v7989 = vadd.f32 %v7608, %v7988
    %v7990 = vpop.f32.mrb[0].mxu0
    %7991 = vmatprep.mubr.f32.mxu0 0.0
    %7992 = vmatmul.mubr.f32.gmra.mrb[0].mxu0 %v7686
    %v7993 = vpop.f32.mrb[0].mxu0
    %v7994 = vadd.f32 %v7608, %v7993
    %v7995 = vpop.f32.mrb[0].mxu0
    %7996 = vmatprep.mubr.f32.mxu0 0.0
    %7997 = vmatmul.mubr.f32.gmra.mrb[0].mxu0 %v7689
    %v7998 = vpop.f32.mrb[0].mxu0
    %v7999 = vadd.f32 %v7608, %v7998
    %v8000 = vpop.f32.mrb[0].mxu0
    %8001 = vmatprep.mubr.f32.mxu0 0.0
    %8002 = vmatmul.mubr.f32.gmra.mrb[0].mxu0 %v7692
    %v8003 = vpop.f32.mrb[0].mxu0
    %v8004 = vadd.f32 %v7608, %v8003
    %v8005 = vpop.f32.mrb[0].mxu0
    %8006 = vmatprep.mubr.f32.mxu0 0.0
    %8007 = vmatmul.mubr.f32.gmra.mrb[0].mxu0 %v7695
    %v8008 = vpop.f32.mrb[0].mxu0
    %v8009 = vadd.f32 %v7608, %v8008
    %v8010 = vpop.f32.mrb[0].mxu0
    %8011 = vmatprep.mubr.f32.mxu0 0.0
    %8012 = vmatmul.mubr.f32.gmra.mrb[0].mxu0 %v7698
    %v8013 = vpop.f32.mrb[0].mxu0
    %v8014 = vadd.f32 %v7608, %v8013
    %v8015 = vpop.f32.mrb[0].mxu0
    %8016 = vmatprep.mubr.f32.mxu0 0.0
    %8017 = vmatmul.mubr.f32.gmra.mrb[0].mxu0 %v7701
    %v8018 = vpop.f32.mrb[0].mxu0
    %v8019 = vadd.f32 %v7608, %v8018
    %v8020 = vpop.f32.mrb[0].mxu0
    %8021 = vmatprep.mubr.f32.mxu0 0.0
    %8022 = vmatmul.mubr.f32.gmra.mrb[0].mxu0 %v7704
    %v8023 = vpop.f32.mrb[0].mxu0
    %v8024 = vadd.f32 %v7608, %v8023
    %v8025 = vpop.f32.mrb[0].mxu0
    %8026 = vmatprep.mubr.f32.mxu0 0.0
    %8027 = vmatmul.mubr.f32.gmra.mrb[0].mxu0 %v7707
    %v8028 = vpop.f32.mrb[0].mxu0
    %v8029 = vadd.f32 %v7608, %v8028
    %v8030 = vpop.f32.mrb[0].mxu0
    %8031 = vmatprep.mubr.f32.mxu0 0.0
    %8032 = vmatmul.mubr.f32.gmra.mrb[0].mxu0 %v7710
    %v8033 = vpop.f32.mrb[0].mxu0
    %v8034 = vadd.f32 %v7608, %v8033
    %v8035 = vpop.f32.mrb[0].mxu0
    %8036 = vmatprep.mubr.f32.mxu0 0.0
    %8037 = vmatmul.mubr.f32.gmra.mrb[0].mxu0 %v7713
    %v8038 = vpop.f32.mrb[0].mxu0
    %v8039 = vadd.f32 %v7608, %v8038
    %v8040 = vpop.f32.mrb[0].mxu0
    %8041 = vmatprep.mubr.f32.mxu0 0.0
    %8042 = vmatmul.mubr.f32.gmra.mrb[0].mxu0 %v7716
    %v8043 = vpop.f32.mrb[0].mxu0
    %v8044 = vadd.f32 %v7608, %v8043
    %v8045 = vpop.f32.mrb[0].mxu0
    %8046 = vmatprep.mubr.f32.mxu0 0.0
    %8047 = vmatmul.mubr.f32.gmra.mrb[0].mxu0 %v7719
    %v8048 = vpop.f32.mrb[0].mxu0
    %v8049 = vadd.f32 %v7608, %v8048
    %v8050 = vpop.f32.mrb[0].mxu0
    %8051 = vmatprep.mubr.f32.mxu0 0.0
    %8052 = vmatmul.mubr.f32.gmra.mrb[0].mxu0 %v7722
    %v8053 = vpop.f32.mrb[0].mxu0
    %v8054 = vadd.f32 %v7608, %v8053
    %v8055 = vpop.f32.mrb[0].mxu0
    %8056 = vmatprep.mubr.f32.mxu0 0.0
    %8057 = vmatmul.mubr.f32.gmra.mrb[0].mxu0 %v7725
    %v8058 = vpop.f32.mrb[0].mxu0
    %v8059 = vadd.f32 %v7608, %v8058
    %v8060 = vpop.f32.mrb[0].mxu0
    %8061 = vmatprep.mubr.f32.mxu0 0.0
    %8062 = vmatmul.mubr.f32.gmra.mrb[0].mxu0 %v7728
    %v8063 = vpop.f32.mrb[0].mxu0
    %v8064 = vadd.f32 %v7608, %v8063
    %v8065 = vpop.f32.mrb[0].mxu0
    %8066 = vmatprep.mubr.f32.mxu0 0.0
    %8067 = vmatmul.mubr.f32.gmra.mrb[0].mxu0 %v7731
    %v8068 = vpop.f32.mrb[0].mxu0
    %v8069 = vadd.f32 %v7608, %v8068
    %v8070 = vpop.f32.mrb[0].mxu0
    %8071 = vmatprep.mubr.f32.mxu0 0.0
    %8072 = vmatmul.mubr.f32.gmra.mrb[0].mxu0 %v7734
    %v8073 = vpop.f32.mrb[0].mxu0
    %v8074 = vadd.f32 %v7608, %v8073
    %v8075 = vpop.f32.mrb[0].mxu0
    %8076 = vmatprep.mubr.f32.mxu0 0.0
    %8077 = vmatmul.mubr.f32.gmra.mrb[0].mxu0 %v7737
    %v8078 = vpop.f32.mrb[0].mxu0
    %v8079 = vadd.f32 %v7608, %v8078
    %v8080 = vpop.f32.mrb[0].mxu0
    %8081 = vmatprep.mubr.f32.mxu0 0.0
    %8082 = vmatmul.mubr.f32.gmra.mrb[0].mxu0 %v7740
    %v8083 = vpop.f32.mrb[0].mxu0
    %v8084 = vadd.f32 %v7608, %v8083
    %v8085 = vpop.f32.mrb[0].mxu0
    %8086 = vmatprep.mubr.f32.mxu0 0.0
    %8087 = vmatmul.mubr.f32.gmra.mrb[0].mxu0 %v7743
    %v8088 = vpop.f32.mrb[0].mxu0
    %v8089 = vadd.f32 %v7608, %v8088
    %v8090 = vpop.f32.mrb[0].mxu0
    %8091 = vmatprep.mubr.f32.mxu0 0.0
    %8092 = vmatmul.mubr.f32.gmra.mrb[0].mxu0 %v7746
    %v8093 = vpop.f32.mrb[0].mxu0
    %v8094 = vadd.f32 %v7608, %v8093
    %v8095 = vpop.f32.mrb[0].mxu0
    %8096 = vmatprep.mubr.f32.mxu0 0.0
    %8097 = vmatmul.mubr.f32.gmra.mrb[0].mxu0 %v7749
    %v8098 = vpop.f32.mrb[0].mxu0
    %v8099 = vadd.f32 %v7608, %v8098
    %v8100 = vpop.f32.mrb[0].mxu0
    %8101 = vmatprep.mubr.f32.mxu0 0.0
    %8102 = vmatmul.mubr.f32.gmra.mrb[0].mxu0 %v7752
    %v8103 = vpop.f32.mrb[0].mxu0
    %v8104 = vadd.f32 %v7608, %v8103
    %v8105 = vpop.f32.mrb[0].mxu0
    %8106 = vmatprep.mubr.f32.mxu0 0.0
    %8107 = vmatmul.mubr.f32.gmra.mrb[0].mxu0 %v7755
    %v8108 = vpop.f32.mrb[0].mxu0
    %v8109 = vadd.f32 %v7608, %v8108
    %v8110 = vpop.f32.mrb[0].mxu0
    %8111 = vmatprep.mubr.f32.mxu0 0.0
    %8112 = vmatmul.mubr.f32.gmra.mrb[0].mxu0 %v7758
    %v8113 = vpop.f32.mrb[0].mxu0
    %v8114 = vadd.f32 %v7608, %v8113
    %v8115 = vpop.f32.mrb[0].mxu0
    %8116 = vmatprep.mubr.f32.mxu0 0.0
    %8117 = vmatmul.mubr.f32.gmra.mrb[0].mxu0 %v7761
    %v8118 = vpop.f32.mrb[0].mxu0
    %v8119 = vadd.f32 %v7608, %v8118
    %v8120 = vpop.f32.mrb[0].mxu0
    %8121 = vmatprep.mubr.f32.mxu0 0.0
    %8122 = vmatmul.mubr.f32.gmra.mrb[0].mxu0 %v7764
    %v8123 = vpop.f32.mrb[0].mxu0
    %v8124 = vadd.f32 %v7608, %v8123
    %v8125 = vpop.f32.mrb[0].mxu0
    %8126 = vmatprep.mubr.f32.mxu0 0.0
    %8127 = vmatmul.mubr.f32.gmra.mrb[0].mxu0 %v7767
    %v8128 = vpop.f32.mrb[0].mxu0
    %v8129 = vadd.f32 %v7608, %v8128
    %v8130 = vpop.f32.mrb[0].mxu0
    %8131 = vmatprep.mubr.f32.mxu0 0.0
    %8132 = vmatmul.mubr.f32.gmra.mrb[0].mxu0 %v7770
    %v8133 = vpop.f32.mrb[0].mxu0
    %v8134 = vadd.f32 %v7608, %v8133
    %v8135 = vpop.f32.mrb[0].mxu0
    %8136 = vmatprep.mubr.f32.mxu0 0.0
    %8137 = vmatmul.mubr.f32.gmra.mrb[0].mxu0 %v7773
    %v8138 = vpop.f32.mrb[0].mxu0
    %v8139 = vadd.f32 %v7608, %v8138
    %v8140 = vpop.f32.mrb[0].mxu0
    %8141 = vmatprep.mubr.f32.mxu0 0.0
    %8142 = vmatmul.mubr.f32.gmra.mrb[0].mxu0 %v7776
    %v8143 = vpop.f32.mrb[0].mxu0
    %v8144 = vadd.f32 %v7608, %v8143
    %v8145 = vpop.f32.mrb[0].mxu0
    %8146 = vmatprep.mubr.f32.mxu0 0.0
    %8147 = vmatmul.mubr.f32.gmra.mrb[0].mxu0 %v7779
    %v8148 = vpop.f32.mrb[0].mxu0
    %v8149 = vadd.f32 %v7608, %v8148
    %v8150 = vpop.f32.mrb[0].mxu0
    %8151 = vmatprep.mubr.f32.mxu0 0.0
    %8152 = vmatmul.mubr.f32.gmra.mrb[0].mxu0 %v7782
    %v8153 = vpop.f32.mrb[0].mxu0
    %v8154 = vadd.f32 %v7608, %v8153
    %v8155 = vpop.f32.mrb[0].mxu0
    %8156 = vmatprep.mubr.f32.mxu0 0.0
    %8157 = vmatmul.mubr.f32.gmra.mrb[0].mxu0 %v7785
    %v8158 = vpop.f32.mrb[0].mxu0
    %v8159 = vadd.f32 %v7608, %v8158
    %v8160 = vpop.f32.mrb[0].mxu0
    %8161 = vmatprep.mubr.f32.mxu0 0.0
    %8162 = vmatmul.mubr.f32.gmra.mrb[0].mxu0 %v7788
    %v8163 = vpop.f32.mrb[0].mxu0
    %v8164 = vadd.f32 %v7608, %v8163
    %v8165 = vpop.f32.mrb[0].mxu0
    %8166 = vmatprep.mubr.f32.mxu0 0.0
    %8167 = vmatmul.mubr.f32.gmra.mrb[0].mxu0 %v7791
    %v8168 = vpop.f32.mrb[0].mxu0
    %v8169 = vadd.f32 %v7608, %v8168
    %v8170 = vpop.f32.mrb[0].mxu0
    %8171 = vmatprep.mubr.f32.mxu0 0.0
    %8172 = vmatmul.mubr.f32.gmra.mrb[0].mxu0 %v7794
    %v8173 = vpop.f32.mrb[0].mxu0
    %v8174 = vadd.f32 %v7608, %v8173
    %v8175 = vpop.f32.mrb[0].mxu0
    %8176 = vmatprep.mubr.f32.mxu0 0.0
    %8177 = vmatmul.mubr.f32.gmra.mrb[0].mxu0 %v7797
    %v8178 = vpop.f32.mrb[0].mxu0
    %v8179 = vadd.f32 %v7608, %v8178
    %v8180 = vpop.f32.mrb[0].mxu0
    %8181 = vmatprep.mubr.f32.mxu0 0.0
    %8182 = vmatmul.mubr.f32.gmra.mrb[0].mxu0 %v7800
    %v8183 = vpop.f32.mrb[0].mxu0
    %v8184 = vadd.f32 %v7608, %v8183
    %v8185 = vpop.f32.mrb[0].mxu0
    %8186 = vdwg.mxu0
    %v8187 = vsel %vm2647, %v7869, 0.0
    %v8188 = vsel %vm2647, %v7874, 0.0
    %v8189 = vadd.f32 %v8187, %v8188
    %v8190 = vsel %vm2647, %v7879, 0.0
    %v8191 = vadd.f32 %v8189, %v8190
    %v8192 = vsel %vm2647, %v7884, 0.0
    %v8193 = vadd.f32 %v8191, %v8192
    %v8194 = vsel %vm2647, %v7889, 0.0
    %v8195 = vadd.f32 %v8193, %v8194
    %v8196 = vsel %vm2647, %v7894, 0.0
    %v8197 = vadd.f32 %v8195, %v8196
    %v8198 = vsel %vm2647, %v7899, 0.0
    %v8199 = vadd.f32 %v8197, %v8198
    %v8200 = vsel %vm2647, %v7904, 0.0
    %v8201 = vadd.f32 %v8199, %v8200
    %v8202 = vsel %vm2647, %v7909, 0.0
    %v8203 = vadd.f32 %v8201, %v8202
    %v8204 = vsel %vm2647, %v7914, 0.0
    %v8205 = vadd.f32 %v8203, %v8204
    %v8206 = vsel %vm2647, %v7919, 0.0
    %v8207 = vadd.f32 %v8205, %v8206
    %v8208 = vsel %vm2647, %v7924, 0.0
    %v8209 = vadd.f32 %v8207, %v8208
    %v8210 = vsel %vm2647, %v7929, 0.0
    %v8211 = vadd.f32 %v8209, %v8210
    %v8212 = vsel %vm2647, %v7934, 0.0
    %v8213 = vadd.f32 %v8211, %v8212
    %v8214 = vsel %vm2647, %v7939, 0.0
    %v8215 = vadd.f32 %v8213, %v8214
    %v8216 = vsel %vm2647, %v7944, 0.0
    %v8217 = vadd.f32 %v8215, %v8216
    %v8218 = vsel %vm2647, %v7949, 0.0
    %v8219 = vadd.f32 %v8217, %v8218
    %v8220 = vsel %vm2647, %v7954, 0.0
    %v8221 = vadd.f32 %v8219, %v8220
    %v8222 = vsel %vm2647, %v7959, 0.0
    %v8223 = vadd.f32 %v8221, %v8222
    %v8224 = vsel %vm2647, %v7964, 0.0
    %v8225 = vadd.f32 %v8223, %v8224
    %v8226 = vsel %vm2647, %v7969, 0.0
    %v8227 = vadd.f32 %v8225, %v8226
    %v8228 = vsel %vm2647, %v7974, 0.0
    %v8229 = vadd.f32 %v8227, %v8228
    %v8230 = vsel %vm2647, %v7979, 0.0
    %v8231 = vadd.f32 %v8229, %v8230
    %v8232 = vsel %vm2647, %v7984, 0.0
    %v8233 = vadd.f32 %v8231, %v8232
    %v8234 = vsel %vm2647, %v7989, 0.0
    %v8235 = vadd.f32 %v8233, %v8234
    %v8236 = vsel %vm2647, %v7994, 0.0
    %v8237 = vadd.f32 %v8235, %v8236
    %v8238 = vsel %vm2647, %v7999, 0.0
    %v8239 = vadd.f32 %v8237, %v8238
    %v8240 = vsel %vm2647, %v8004, 0.0
    %v8241 = vadd.f32 %v8239, %v8240
    %v8242 = vsel %vm2647, %v8009, 0.0
    %v8243 = vadd.f32 %v8241, %v8242
    %v8244 = vsel %vm2647, %v8014, 0.0
    %v8245 = vadd.f32 %v8243, %v8244
    %v8246 = vsel %vm2647, %v8019, 0.0
    %v8247 = vadd.f32 %v8245, %v8246
    %v8248 = vsel %vm2647, %v8024, 0.0
    %v8249 = vadd.f32 %v8247, %v8248
    %v8250 = vrot.slane %v8249, 4
    %v8251 = vadd.f32 %v8249, %v8250
    %v8252 = vrot.slane %v8251, 2
    %v8253 = vadd.f32 %v8251, %v8252
    %v8254 = vrot.slane %v8253, 1
    %v8255 = vadd.f32 %v8253, %v8254
    %v8256 = vsel %vm2647, %v8029, 0.0
    %v8257 = vsel %vm2647, %v8034, 0.0
    %v8258 = vadd.f32 %v8256, %v8257
    %v8259 = vsel %vm2647, %v8039, 0.0
    %v8260 = vadd.f32 %v8258, %v8259
    %v8261 = vsel %vm2647, %v8044, 0.0
    %v8262 = vadd.f32 %v8260, %v8261
    %v8263 = vsel %vm2647, %v8049, 0.0
    %v8264 = vadd.f32 %v8262, %v8263
    %v8265 = vsel %vm2647, %v8054, 0.0
    %v8266 = vadd.f32 %v8264, %v8265
    %v8267 = vsel %vm2647, %v8059, 0.0
    %v8268 = vadd.f32 %v8266, %v8267
    %v8269 = vsel %vm2647, %v8064, 0.0
    %v8270 = vadd.f32 %v8268, %v8269
    %v8271 = vsel %vm2647, %v8069, 0.0
    %v8272 = vadd.f32 %v8270, %v8271
    %v8273 = vsel %vm2647, %v8074, 0.0
    %v8274 = vadd.f32 %v8272, %v8273
    %v8275 = vsel %vm2647, %v8079, 0.0
    %v8276 = vadd.f32 %v8274, %v8275
    %v8277 = vsel %vm2647, %v8084, 0.0
    %v8278 = vadd.f32 %v8276, %v8277
    %v8279 = vsel %vm2647, %v8089, 0.0
    %v8280 = vadd.f32 %v8278, %v8279
    %v8281 = vsel %vm2647, %v8094, 0.0
    %v8282 = vadd.f32 %v8280, %v8281
    %v8283 = vsel %vm2647, %v8099, 0.0
    %v8284 = vadd.f32 %v8282, %v8283
    %v8285 = vsel %vm2647, %v8104, 0.0
    %v8286 = vadd.f32 %v8284, %v8285
    %v8287 = vsel %vm2647, %v8109, 0.0
    %v8288 = vadd.f32 %v8286, %v8287
    %v8289 = vsel %vm2647, %v8114, 0.0
    %v8290 = vadd.f32 %v8288, %v8289
    %v8291 = vsel %vm2647, %v8119, 0.0
    %v8292 = vadd.f32 %v8290, %v8291
    %v8293 = vsel %vm2647, %v8124, 0.0
    %v8294 = vadd.f32 %v8292, %v8293
    %v8295 = vsel %vm2647, %v8129, 0.0
    %v8296 = vadd.f32 %v8294, %v8295
    %v8297 = vsel %vm2647, %v8134, 0.0
    %v8298 = vadd.f32 %v8296, %v8297
    %v8299 = vsel %vm2647, %v8139, 0.0
    %v8300 = vadd.f32 %v8298, %v8299
    %v8301 = vsel %vm2647, %v8144, 0.0
    %v8302 = vadd.f32 %v8300, %v8301
    %v8303 = vsel %vm2647, %v8149, 0.0
    %v8304 = vadd.f32 %v8302, %v8303
    %v8305 = vsel %vm2647, %v8154, 0.0
    %v8306 = vadd.f32 %v8304, %v8305
    %v8307 = vsel %vm2647, %v8159, 0.0
    %v8308 = vadd.f32 %v8306, %v8307
    %v8309 = vsel %vm2647, %v8164, 0.0
    %v8310 = vadd.f32 %v8308, %v8309
    %v8311 = vsel %vm2647, %v8169, 0.0
    %v8312 = vadd.f32 %v8310, %v8311
    %v8313 = vsel %vm2647, %v8174, 0.0
    %v8314 = vadd.f32 %v8312, %v8313
    %v8315 = vsel %vm2647, %v8179, 0.0
    %v8316 = vadd.f32 %v8314, %v8315
    %v8317 = vsel %vm2647, %v8184, 0.0
    %v8318 = vadd.f32 %v8316, %v8317
    %v8319 = vrot.slane %v8318, 4
    %v8320 = vadd.f32 %v8318, %v8319
    %v8321 = vrot.slane %v8320, 2
    %v8322 = vadd.f32 %v8320, %v8321
    %v8323 = vrot.slane %v8322, 1
    %v8324 = vadd.f32 %v8322, %v8323
    %v8325 = vmul.f32 %v7869, %v7869
    %v8326 = vmul.f32 %v7874, %v7874
    %v8327 = vmul.f32 %v7879, %v7879
    %v8328 = vmul.f32 %v7884, %v7884
    %v8329 = vmul.f32 %v7889, %v7889
    %v8330 = vmul.f32 %v7894, %v7894
    %v8331 = vmul.f32 %v7899, %v7899
    %v8332 = vmul.f32 %v7904, %v7904
    %v8333 = vmul.f32 %v7909, %v7909
    %v8334 = vmul.f32 %v7914, %v7914
    %v8335 = vmul.f32 %v7919, %v7919
    %v8336 = vmul.f32 %v7924, %v7924
    %v8337 = vmul.f32 %v7929, %v7929
    %v8338 = vmul.f32 %v7934, %v7934
    %v8339 = vmul.f32 %v7939, %v7939
    %v8340 = vmul.f32 %v7944, %v7944
    %v8341 = vmul.f32 %v7949, %v7949
    %v8342 = vmul.f32 %v7954, %v7954
    %v8343 = vmul.f32 %v7959, %v7959
    %v8344 = vmul.f32 %v7964, %v7964
    %v8345 = vmul.f32 %v7969, %v7969
    %v8346 = vmul.f32 %v7974, %v7974
    %v8347 = vmul.f32 %v7979, %v7979
    %v8348 = vmul.f32 %v7984, %v7984
    %v8349 = vmul.f32 %v7989, %v7989
    %v8350 = vmul.f32 %v7994, %v7994
    %v8351 = vmul.f32 %v7999, %v7999
    %v8352 = vmul.f32 %v8004, %v8004
    %v8353 = vmul.f32 %v8009, %v8009
    %v8354 = vmul.f32 %v8014, %v8014
    %v8355 = vmul.f32 %v8019, %v8019
    %v8356 = vmul.f32 %v8024, %v8024
    %v8357 = vmul.f32 %v8029, %v8029
    %v8358 = vmul.f32 %v8034, %v8034
    %v8359 = vmul.f32 %v8039, %v8039
    %v8360 = vmul.f32 %v8044, %v8044
    %v8361 = vmul.f32 %v8049, %v8049
    %v8362 = vmul.f32 %v8054, %v8054
    %v8363 = vmul.f32 %v8059, %v8059
    %v8364 = vmul.f32 %v8064, %v8064
    %v8365 = vmul.f32 %v8069, %v8069
    %v8366 = vmul.f32 %v8074, %v8074
    %v8367 = vmul.f32 %v8079, %v8079
    %v8368 = vmul.f32 %v8084, %v8084
    %v8369 = vmul.f32 %v8089, %v8089
    %v8370 = vmul.f32 %v8094, %v8094
    %v8371 = vmul.f32 %v8099, %v8099
    %v8372 = vmul.f32 %v8104, %v8104
    %v8373 = vmul.f32 %v8109, %v8109
    %v8374 = vmul.f32 %v8114, %v8114
    %v8375 = vmul.f32 %v8119, %v8119
    %v8376 = vmul.f32 %v8124, %v8124
    %v8377 = vmul.f32 %v8129, %v8129
    %v8378 = vmul.f32 %v8134, %v8134
    %v8379 = vmul.f32 %v8139, %v8139
    %v8380 = vmul.f32 %v8144, %v8144
    %v8381 = vmul.f32 %v8149, %v8149
    %v8382 = vmul.f32 %v8154, %v8154
    %v8383 = vmul.f32 %v8159, %v8159
    %v8384 = vmul.f32 %v8164, %v8164
    %v8385 = vmul.f32 %v8169, %v8169
    %v8386 = vmul.f32 %v8174, %v8174
    %v8387 = vmul.f32 %v8179, %v8179
    %v8388 = vmul.f32 %v8184, %v8184
    %v8389 = vsel %vm2647, %v8325, 0.0
    %v8390 = vsel %vm2647, %v8326, 0.0
    %v8391 = vadd.f32 %v8389, %v8390
    %v8392 = vsel %vm2647, %v8327, 0.0
    %v8393 = vadd.f32 %v8391, %v8392
    %v8394 = vsel %vm2647, %v8328, 0.0
    %v8395 = vadd.f32 %v8393, %v8394
    %v8396 = vsel %vm2647, %v8329, 0.0
    %v8397 = vadd.f32 %v8395, %v8396
    %v8398 = vsel %vm2647, %v8330, 0.0
    %v8399 = vadd.f32 %v8397, %v8398
    %v8400 = vsel %vm2647, %v8331, 0.0
    %v8401 = vadd.f32 %v8399, %v8400
    %v8402 = vsel %vm2647, %v8332, 0.0
    %v8403 = vadd.f32 %v8401, %v8402
    %v8404 = vsel %vm2647, %v8333, 0.0
    %v8405 = vadd.f32 %v8403, %v8404
    %v8406 = vsel %vm2647, %v8334, 0.0
    %v8407 = vadd.f32 %v8405, %v8406
    %v8408 = vsel %vm2647, %v8335, 0.0
    %v8409 = vadd.f32 %v8407, %v8408
    %v8410 = vsel %vm2647, %v8336, 0.0
    %v8411 = vadd.f32 %v8409, %v8410
    %v8412 = vsel %vm2647, %v8337, 0.0
    %v8413 = vadd.f32 %v8411, %v8412
    %v8414 = vsel %vm2647, %v8338, 0.0
    %v8415 = vadd.f32 %v8413, %v8414
    %v8416 = vsel %vm2647, %v8339, 0.0
    %v8417 = vadd.f32 %v8415, %v8416
    %v8418 = vsel %vm2647, %v8340, 0.0
    %v8419 = vadd.f32 %v8417, %v8418
    %v8420 = vsel %vm2647, %v8341, 0.0
    %v8421 = vadd.f32 %v8419, %v8420
    %v8422 = vsel %vm2647, %v8342, 0.0
    %v8423 = vadd.f32 %v8421, %v8422
    %v8424 = vsel %vm2647, %v8343, 0.0
    %v8425 = vadd.f32 %v8423, %v8424
    %v8426 = vsel %vm2647, %v8344, 0.0
    %v8427 = vadd.f32 %v8425, %v8426
    %v8428 = vsel %vm2647, %v8345, 0.0
    %v8429 = vadd.f32 %v8427, %v8428
    %v8430 = vsel %vm2647, %v8346, 0.0
    %v8431 = vadd.f32 %v8429, %v8430
    %v8432 = vsel %vm2647, %v8347, 0.0
    %v8433 = vadd.f32 %v8431, %v8432
    %v8434 = vsel %vm2647, %v8348, 0.0
    %v8435 = vadd.f32 %v8433, %v8434
    %v8436 = vsel %vm2647, %v8349, 0.0
    %v8437 = vadd.f32 %v8435, %v8436
    %v8438 = vsel %vm2647, %v8350, 0.0
    %v8439 = vadd.f32 %v8437, %v8438
    %v8440 = vsel %vm2647, %v8351, 0.0
    %v8441 = vadd.f32 %v8439, %v8440
    %v8442 = vsel %vm2647, %v8352, 0.0
    %v8443 = vadd.f32 %v8441, %v8442
    %v8444 = vsel %vm2647, %v8353, 0.0
    %v8445 = vadd.f32 %v8443, %v8444
    %v8446 = vsel %vm2647, %v8354, 0.0
    %v8447 = vadd.f32 %v8445, %v8446
    %v8448 = vsel %vm2647, %v8355, 0.0
    %v8449 = vadd.f32 %v8447, %v8448
    %v8450 = vsel %vm2647, %v8356, 0.0
    %v8451 = vadd.f32 %v8449, %v8450
    %v8452 = vrot.slane %v8451, 4
    %v8453 = vadd.f32 %v8451, %v8452
    %v8454 = vrot.slane %v8453, 2
    %v8455 = vadd.f32 %v8453, %v8454
    %v8456 = vrot.slane %v8455, 1
    %v8457 = vadd.f32 %v8455, %v8456
    %v8458 = vsel %vm2647, %v8357, 0.0
    %v8459 = vsel %vm2647, %v8358, 0.0
    %v8460 = vadd.f32 %v8458, %v8459
    %v8461 = vsel %vm2647, %v8359, 0.0
    %v8462 = vadd.f32 %v8460, %v8461
    %v8463 = vsel %vm2647, %v8360, 0.0
    %v8464 = vadd.f32 %v8462, %v8463
    %v8465 = vsel %vm2647, %v8361, 0.0
    %v8466 = vadd.f32 %v8464, %v8465
    %v8467 = vsel %vm2647, %v8362, 0.0
    %v8468 = vadd.f32 %v8466, %v8467
    %v8469 = vsel %vm2647, %v8363, 0.0
    %v8470 = vadd.f32 %v8468, %v8469
    %v8471 = vsel %vm2647, %v8364, 0.0
    %v8472 = vadd.f32 %v8470, %v8471
    %v8473 = vsel %vm2647, %v8365, 0.0
    %v8474 = vadd.f32 %v8472, %v8473
    %v8475 = vsel %vm2647, %v8366, 0.0
    %v8476 = vadd.f32 %v8474, %v8475
    %v8477 = vsel %vm2647, %v8367, 0.0
    %v8478 = vadd.f32 %v8476, %v8477
    %v8479 = vsel %vm2647, %v8368, 0.0
    %v8480 = vadd.f32 %v8478, %v8479
    %v8481 = vsel %vm2647, %v8369, 0.0
    %v8482 = vadd.f32 %v8480, %v8481
    %v8483 = vsel %vm2647, %v8370, 0.0
    %v8484 = vadd.f32 %v8482, %v8483
    %v8485 = vsel %vm2647, %v8371, 0.0
    %v8486 = vadd.f32 %v8484, %v8485
    %v8487 = vsel %vm2647, %v8372, 0.0
    %v8488 = vadd.f32 %v8486, %v8487
    %v8489 = vsel %vm2647, %v8373, 0.0
    %v8490 = vadd.f32 %v8488, %v8489
    %v8491 = vsel %vm2647, %v8374, 0.0
    %v8492 = vadd.f32 %v8490, %v8491
    %v8493 = vsel %vm2647, %v8375, 0.0
    %v8494 = vadd.f32 %v8492, %v8493
    %v8495 = vsel %vm2647, %v8376, 0.0
    %v8496 = vadd.f32 %v8494, %v8495
    %v8497 = vsel %vm2647, %v8377, 0.0
    %v8498 = vadd.f32 %v8496, %v8497
    %v8499 = vsel %vm2647, %v8378, 0.0
    %v8500 = vadd.f32 %v8498, %v8499
    %v8501 = vsel %vm2647, %v8379, 0.0
    %v8502 = vadd.f32 %v8500, %v8501
    %v8503 = vsel %vm2647, %v8380, 0.0
    %v8504 = vadd.f32 %v8502, %v8503
    %v8505 = vsel %vm2647, %v8381, 0.0
    %v8506 = vadd.f32 %v8504, %v8505
    %v8507 = vsel %vm2647, %v8382, 0.0
    %v8508 = vadd.f32 %v8506, %v8507
    %v8509 = vsel %vm2647, %v8383, 0.0
    %v8510 = vadd.f32 %v8508, %v8509
    %v8511 = vsel %vm2647, %v8384, 0.0
    %v8512 = vadd.f32 %v8510, %v8511
    %v8513 = vsel %vm2647, %v8385, 0.0
    %v8514 = vadd.f32 %v8512, %v8513
    %v8515 = vsel %vm2647, %v8386, 0.0
    %v8516 = vadd.f32 %v8514, %v8515
    %v8517 = vsel %vm2647, %v8387, 0.0
    %v8518 = vadd.f32 %v8516, %v8517
    %v8519 = vsel %vm2647, %v8388, 0.0
    %v8520 = vadd.f32 %v8518, %v8519
    %v8521 = vrot.slane %v8520, 4
    %v8522 = vadd.f32 %v8520, %v8521
    %v8523 = vrot.slane %v8522, 2
    %v8524 = vadd.f32 %v8522, %v8523
    %v8525 = vrot.slane %v8524, 1
    %v8526 = vadd.f32 %v8524, %v8525
    %v8527 = vmul.f32 %v8255, 0.00390625
    %v8528 = vmul.f32 %v8324, 0.00390625
    %v8529 = vmul.f32 %v8457, 0.00390625
    %v8530 = vmul.f32 %v8526, 0.00390625
    %v8531 = vmul.f32 %v8527, %v8527
    %v8532 = vmul.f32 %v8528, %v8528
    %v8533 = vsub.f32 %v8529, %v8531
    %v8534 = vsub.f32 %v8530, %v8532
    %v8535 = vsub.f32 %v7869, %v8527
    %v8536 = vsub.f32 %v7874, %v8527
    %v8537 = vsub.f32 %v7879, %v8527
    %v8538 = vsub.f32 %v7884, %v8527
    %v8539 = vsub.f32 %v7889, %v8527
    %v8540 = vsub.f32 %v7894, %v8527
    %v8541 = vsub.f32 %v7899, %v8527
    %v8542 = vsub.f32 %v7904, %v8527
    %v8543 = vsub.f32 %v7909, %v8527
    %v8544 = vsub.f32 %v7914, %v8527
    %v8545 = vsub.f32 %v7919, %v8527
    %v8546 = vsub.f32 %v7924, %v8527
    %v8547 = vsub.f32 %v7929, %v8527
    %v8548 = vsub.f32 %v7934, %v8527
    %v8549 = vsub.f32 %v7939, %v8527
    %v8550 = vsub.f32 %v7944, %v8527
    %v8551 = vsub.f32 %v7949, %v8527
    %v8552 = vsub.f32 %v7954, %v8527
    %v8553 = vsub.f32 %v7959, %v8527
    %v8554 = vsub.f32 %v7964, %v8527
    %v8555 = vsub.f32 %v7969, %v8527
    %v8556 = vsub.f32 %v7974, %v8527
    %v8557 = vsub.f32 %v7979, %v8527
    %v8558 = vsub.f32 %v7984, %v8527
    %v8559 = vsub.f32 %v7989, %v8527
    %v8560 = vsub.f32 %v7994, %v8527
    %v8561 = vsub.f32 %v7999, %v8527
    %v8562 = vsub.f32 %v8004, %v8527
    %v8563 = vsub.f32 %v8009, %v8527
    %v8564 = vsub.f32 %v8014, %v8527
    %v8565 = vsub.f32 %v8019, %v8527
    %v8566 = vsub.f32 %v8024, %v8527
    %v8567 = vsub.f32 %v8029, %v8528
    %v8568 = vsub.f32 %v8034, %v8528
    %v8569 = vsub.f32 %v8039, %v8528
    %v8570 = vsub.f32 %v8044, %v8528
    %v8571 = vsub.f32 %v8049, %v8528
    %v8572 = vsub.f32 %v8054, %v8528
    %v8573 = vsub.f32 %v8059, %v8528
    %v8574 = vsub.f32 %v8064, %v8528
    %v8575 = vsub.f32 %v8069, %v8528
    %v8576 = vsub.f32 %v8074, %v8528
    %v8577 = vsub.f32 %v8079, %v8528
    %v8578 = vsub.f32 %v8084, %v8528
    %v8579 = vsub.f32 %v8089, %v8528
    %v8580 = vsub.f32 %v8094, %v8528
    %v8581 = vsub.f32 %v8099, %v8528
    %v8582 = vsub.f32 %v8104, %v8528
    %v8583 = vsub.f32 %v8109, %v8528
    %v8584 = vsub.f32 %v8114, %v8528
    %v8585 = vsub.f32 %v8119, %v8528
    %v8586 = vsub.f32 %v8124, %v8528
    %v8587 = vsub.f32 %v8129, %v8528
    %v8588 = vsub.f32 %v8134, %v8528
    %v8589 = vsub.f32 %v8139, %v8528
    %v8590 = vsub.f32 %v8144, %v8528
    %v8591 = vsub.f32 %v8149, %v8528
    %v8592 = vsub.f32 %v8154, %v8528
    %v8593 = vsub.f32 %v8159, %v8528
    %v8594 = vsub.f32 %v8164, %v8528
    %v8595 = vsub.f32 %v8169, %v8528
    %v8596 = vsub.f32 %v8174, %v8528
    %v8597 = vsub.f32 %v8179, %v8528
    %v8598 = vsub.f32 %v8184, %v8528
    %v8599 = vadd.f32 %v8533, 1e-05
    %v8600 = vadd.f32 %v8534, 1e-05
    %v8601 = vrsqrt.pop %v8599
    %v8602 = vrsqrt.pop %v8600
    %v8603 = vmul.f32 %v8535, %v8601
    %v8604 = vmul.f32 %v8536, %v8601
    %v8605 = vmul.f32 %v8537, %v8601
    %v8606 = vmul.f32 %v8538, %v8601
    %v8607 = vmul.f32 %v8539, %v8601
    %v8608 = vmul.f32 %v8540, %v8601
    %v8609 = vmul.f32 %v8541, %v8601
    %v8610 = vmul.f32 %v8542, %v8601
    %v8611 = vmul.f32 %v8543, %v8601
    %v8612 = vmul.f32 %v8544, %v8601
    %v8613 = vmul.f32 %v8545, %v8601
    %v8614 = vmul.f32 %v8546, %v8601
    %v8615 = vmul.f32 %v8547, %v8601
    %v8616 = vmul.f32 %v8548, %v8601
    %v8617 = vmul.f32 %v8549, %v8601
    %v8618 = vmul.f32 %v8550, %v8601
    %v8619 = vmul.f32 %v8551, %v8601
    %v8620 = vmul.f32 %v8552, %v8601
    %v8621 = vmul.f32 %v8553, %v8601
    %v8622 = vmul.f32 %v8554, %v8601
    %v8623 = vmul.f32 %v8555, %v8601
    %v8624 = vmul.f32 %v8556, %v8601
    %v8625 = vmul.f32 %v8557, %v8601
    %v8626 = vmul.f32 %v8558, %v8601
    %v8627 = vmul.f32 %v8559, %v8601
    %v8628 = vmul.f32 %v8560, %v8601
    %v8629 = vmul.f32 %v8561, %v8601
    %v8630 = vmul.f32 %v8562, %v8601
    %v8631 = vmul.f32 %v8563, %v8601
    %v8632 = vmul.f32 %v8564, %v8601
    %v8633 = vmul.f32 %v8565, %v8601
    %v8634 = vmul.f32 %v8566, %v8601
    %v8635 = vmul.f32 %v8567, %v8602
    %v8636 = vmul.f32 %v8568, %v8602
    %v8637 = vmul.f32 %v8569, %v8602
    %v8638 = vmul.f32 %v8570, %v8602
    %v8639 = vmul.f32 %v8571, %v8602
    %v8640 = vmul.f32 %v8572, %v8602
    %v8641 = vmul.f32 %v8573, %v8602
    %v8642 = vmul.f32 %v8574, %v8602
    %v8643 = vmul.f32 %v8575, %v8602
    %v8644 = vmul.f32 %v8576, %v8602
    %v8645 = vmul.f32 %v8577, %v8602
    %v8646 = vmul.f32 %v8578, %v8602
    %v8647 = vmul.f32 %v8579, %v8602
    %v8648 = vmul.f32 %v8580, %v8602
    %v8649 = vmul.f32 %v8581, %v8602
    %v8650 = vmul.f32 %v8582, %v8602
    %v8651 = vmul.f32 %v8583, %v8602
    %v8652 = vmul.f32 %v8584, %v8602
    %v8653 = vmul.f32 %v8585, %v8602
    %v8654 = vmul.f32 %v8586, %v8602
    %v8655 = vmul.f32 %v8587, %v8602
    %v8656 = vmul.f32 %v8588, %v8602
    %v8657 = vmul.f32 %v8589, %v8602
    %v8658 = vmul.f32 %v8590, %v8602
    %v8659 = vmul.f32 %v8591, %v8602
    %v8660 = vmul.f32 %v8592, %v8602
    %v8661 = vmul.f32 %v8593, %v8602
    %v8662 = vmul.f32 %v8594, %v8602
    %v8663 = vmul.f32 %v8595, %v8602
    %v8664 = vmul.f32 %v8596, %v8602
    %v8665 = vmul.f32 %v8597, %v8602
    %v8666 = vmul.f32 %v8598, %v8602
    %v8667 = vld [vmem:[%s213 + $0x1] sm:$0xff]
    %v8668 = vld [vmem:[%s213 + $0x9] sm:$0xff]
    %v8669 = vld [vmem:[%s213 + $0x19] sm:$0xff]
    %v8670 = vld [vmem:[%s213 + $0x21] sm:$0xff]
    %v8671 = vld [vmem:[%s213 + $0x31] sm:$0xff]
    %v8672 = vld [vmem:[%s213 + $0x39] sm:$0xff]
    %v8673 = vld [vmem:[%s213 + $0x49] sm:$0xff]
    %v8674 = vld [vmem:[%s213 + $0x51] sm:$0xff]
    %v8675 = vld [vmem:[%s213 + $0x61] sm:$0xff]
    %v8676 = vld [vmem:[%s213 + $0x69] sm:$0xff]
    %v8677 = vld [vmem:[%s213 + $0x79] sm:$0xff]
    %v8678 = vld [vmem:[%s213 + $0x81] sm:$0xff]
    %v8679 = vld [vmem:[%s213 + $0x91] sm:$0xff]
    %v8680 = vld [vmem:[%s213 + $0x99] sm:$0xff]
    %v8681 = vld [vmem:[%s213 + $0xa9] sm:$0xff]
    %v8682 = vld [vmem:[%s213 + $0xb1] sm:$0xff]
    %v8683 = vld [vmem:[%s213 + $0xc1] sm:$0xff]
    %v8684 = vld [vmem:[%s213 + $0xc9] sm:$0xff]
    %v8685 = vld [vmem:[%s213 + $0xd9] sm:$0xff]
    %v8686 = vld [vmem:[%s213 + $0xe1] sm:$0xff]
    %v8687 = vld [vmem:[%s213 + $0xf1] sm:$0xff]
    %v8688 = vld [vmem:[%s213 + $0xf9] sm:$0xff]
    %v8689 = vld [vmem:[%s213 + $0x109] sm:$0xff]
    %v8690 = vld [vmem:[%s213 + $0x111] sm:$0xff]
    %v8691 = vld [vmem:[%s213 + $0x121] sm:$0xff]
    %v8692 = vld [vmem:[%s213 + $0x129] sm:$0xff]
    %v8693 = vld [vmem:[%s213 + $0x139] sm:$0xff]
    %v8694 = vld [vmem:[%s213 + $0x141] sm:$0xff]
    %v8695 = vld [vmem:[%s213 + $0x151] sm:$0xff]
    %v8696 = vld [vmem:[%s213 + $0x159] sm:$0xff]
    %v8697 = vld [vmem:[%s213 + $0x169] sm:$0xff]
    %v8698 = vld [vmem:[%s213 + $0x171] sm:$0xff]
    %v8699 = vld [vmem:[%s213 + $0x1b1] sm:$0xff]
    %v8700 = vld [vmem:[%s213 + $0x1b9] sm:$0xff]
    %v8701 = vld [vmem:[%s213 + $0x1c9] sm:$0xff]
    %v8702 = vld [vmem:[%s213 + $0x1d1] sm:$0xff]
    %v8703 = vld [vmem:[%s213 + $0x1e1] sm:$0xff]
    %v8704 = vld [vmem:[%s213 + $0x1e9] sm:$0xff]
    %v8705 = vld [vmem:[%s213 + $0x1f9] sm:$0xff]
    %v8706 = vld [vmem:[%s213 + $0x201] sm:$0xff]
    %v8707 = vld [vmem:[%s213 + $0x211] sm:$0xff]
    %v8708 = vld [vmem:[%s213 + $0x219] sm:$0xff]
    %v8709 = vld [vmem:[%s213 + $0x229] sm:$0xff]
    %v8710 = vld [vmem:[%s213 + $0x231] sm:$0xff]
    %v8711 = vld [vmem:[%s213 + $0x241] sm:$0xff]
    %v8712 = vld [vmem:[%s213 + $0x249] sm:$0xff]
    %v8713 = vld [vmem:[%s213 + $0x259] sm:$0xff]
    %v8714 = vld [vmem:[%s213 + $0x261] sm:$0xff]
    %v8715 = vld [vmem:[%s213 + $0x271] sm:$0xff]
    %v8716 = vld [vmem:[%s213 + $0x279] sm:$0xff]
    %v8717 = vld [vmem:[%s213 + $0x289] sm:$0xff]
    %v8718 = vld [vmem:[%s213 + $0x291] sm:$0xff]
    %v8719 = vld [vmem:[%s213 + $0x2a1] sm:$0xff]
    %v8720 = vld [vmem:[%s213 + $0x2a9] sm:$0xff]
    %v8721 = vld [vmem:[%s213 + $0x2b9] sm:$0xff]
    %v8722 = vld [vmem:[%s213 + $0x2c1] sm:$0xff]
    %v8723 = vld [vmem:[%s213 + $0x2d1] sm:$0xff]
    %v8724 = vld [vmem:[%s213 + $0x2d9] sm:$0xff]
    %v8725 = vld [vmem:[%s213 + $0x2e9] sm:$0xff]
    %v8726 = vld [vmem:[%s213 + $0x2f1] sm:$0xff]
    %v8727 = vld [vmem:[%s213 + $0x301] sm:$0xff]
    %v8728 = vld [vmem:[%s213 + $0x309] sm:$0xff]
    %v8729 = vld [vmem:[%s213 + $0x319] sm:$0xff]
    %v8730 = vld [vmem:[%s213 + $0x321] sm:$0xff]
    %v8731 = vadd.f32 %v8603, %v8667
    %v8732 = vadd.f32 %v8604, %v8668
    %v8733 = vadd.f32 %v8605, %v8669
    %v8734 = vadd.f32 %v8606, %v8670
    %v8735 = vadd.f32 %v8607, %v8671
    %v8736 = vadd.f32 %v8608, %v8672
    %v8737 = vadd.f32 %v8609, %v8673
    %v8738 = vadd.f32 %v8610, %v8674
    %v8739 = vadd.f32 %v8611, %v8675
    %v8740 = vadd.f32 %v8612, %v8676
    %v8741 = vadd.f32 %v8613, %v8677
    %v8742 = vadd.f32 %v8614, %v8678
    %v8743 = vadd.f32 %v8615, %v8679
    %v8744 = vadd.f32 %v8616, %v8680
    %v8745 = vadd.f32 %v8617, %v8681
    %v8746 = vadd.f32 %v8618, %v8682
    %v8747 = vadd.f32 %v8619, %v8683
    %v8748 = vadd.f32 %v8620, %v8684
    %v8749 = vadd.f32 %v8621, %v8685
    %v8750 = vadd.f32 %v8622, %v8686
    %v8751 = vadd.f32 %v8623, %v8687
    %v8752 = vadd.f32 %v8624, %v8688
    %v8753 = vadd.f32 %v8625, %v8689
    %v8754 = vadd.f32 %v8626, %v8690
    %v8755 = vadd.f32 %v8627, %v8691
    %v8756 = vadd.f32 %v8628, %v8692
    %v8757 = vadd.f32 %v8629, %v8693
    %v8758 = vadd.f32 %v8630, %v8694
    %v8759 = vadd.f32 %v8631, %v8695
    %v8760 = vadd.f32 %v8632, %v8696
    %v8761 = vadd.f32 %v8633, %v8697
    %v8762 = vadd.f32 %v8634, %v8698
    %v8763 = vadd.f32 %v8635, %v8699
    %v8764 = vadd.f32 %v8636, %v8700
    %v8765 = vadd.f32 %v8637, %v8701
    %v8766 = vadd.f32 %v8638, %v8702
    %v8767 = vadd.f32 %v8639, %v8703
    %v8768 = vadd.f32 %v8640, %v8704
    %v8769 = vadd.f32 %v8641, %v8705
    %v8770 = vadd.f32 %v8642, %v8706
    %v8771 = vadd.f32 %v8643, %v8707
    %v8772 = vadd.f32 %v8644, %v8708
    %v8773 = vadd.f32 %v8645, %v8709
    %v8774 = vadd.f32 %v8646, %v8710
    %v8775 = vadd.f32 %v8647, %v8711
    %v8776 = vadd.f32 %v8648, %v8712
    %v8777 = vadd.f32 %v8649, %v8713
    %v8778 = vadd.f32 %v8650, %v8714
    %v8779 = vadd.f32 %v8651, %v8715
    %v8780 = vadd.f32 %v8652, %v8716
    %v8781 = vadd.f32 %v8653, %v8717
    %v8782 = vadd.f32 %v8654, %v8718
    %v8783 = vadd.f32 %v8655, %v8719
    %v8784 = vadd.f32 %v8656, %v8720
    %v8785 = vadd.f32 %v8657, %v8721
    %v8786 = vadd.f32 %v8658, %v8722
    %v8787 = vadd.f32 %v8659, %v8723
    %v8788 = vadd.f32 %v8660, %v8724
    %v8789 = vadd.f32 %v8661, %v8725
    %v8790 = vadd.f32 %v8662, %v8726
    %v8791 = vadd.f32 %v8663, %v8727
    %v8792 = vadd.f32 %v8664, %v8728
    %v8793 = vadd.f32 %v8665, %v8729
    %v8794 = vadd.f32 %v8666, %v8730
    %8795 = vxpose.xlu0.b32.start [1/16] %v8731, 128
    %8796 = vxpose.xlu0.b32.cont [2/16] %v8732, 128
    %8797 = vxpose.xlu0.b32.cont [3/16] %v8733, 128
    %8798 = vxpose.xlu0.b32.cont [4/16] %v8734, 128
    %8799 = vxpose.xlu0.b32.cont [5/16] %v8735, 128
    %8800 = vxpose.xlu0.b32.cont [6/16] %v8736, 128
    %8801 = vxpose.xlu0.b32.cont [7/16] %v8737, 128
    %8802 = vxpose.xlu0.b32.cont [8/16] %v8738, 128
    %8803 = vxpose.xlu0.b32.cont [9/16] %v8739, 128
    %8804 = vxpose.xlu0.b32.cont [10/16] %v8740, 128
    %8805 = vxpose.xlu0.b32.cont [11/16] %v8741, 128
    %8806 = vxpose.xlu0.b32.cont [12/16] %v8742, 128
    %8807 = vxpose.xlu0.b32.cont [13/16] %v8743, 128
    %8808 = vxpose.xlu0.b32.cont [14/16] %v8744, 128
    %8809 = vxpose.xlu0.b32.cont [15/16] %v8745, 128
    %8810 = vxpose.xlu0.b32.end [16/16] %v8746, 128
    %v8811 = vpop.trf.xlu0
    %v8812 = vpop.trf.xlu0
    %v8813 = vpop.trf.xlu0
    %v8814 = vpop.trf.xlu0
    %v8815 = vpop.trf.xlu0
    %v8816 = vpop.trf.xlu0
    %v8817 = vpop.trf.xlu0
    %v8818 = vpop.trf.xlu0
    %v8819 = vpop.trf.xlu0
    %v8820 = vpop.trf.xlu0
    %v8821 = vpop.trf.xlu0
    %v8822 = vpop.trf.xlu0
    %v8823 = vpop.trf.xlu0
    %v8824 = vpop.trf.xlu0
    %v8825 = vpop.trf.xlu0
    %v8826 = vpop.trf.xlu0
    %8827 = vxpose.xlu0.b32.start [1/16] %v8747, 128
    %8828 = vxpose.xlu0.b32.cont [2/16] %v8748, 128
    %8829 = vxpose.xlu0.b32.cont [3/16] %v8749, 128
    %8830 = vxpose.xlu0.b32.cont [4/16] %v8750, 128
    %8831 = vxpose.xlu0.b32.cont [5/16] %v8751, 128
    %8832 = vxpose.xlu0.b32.cont [6/16] %v8752, 128
    %8833 = vxpose.xlu0.b32.cont [7/16] %v8753, 128
    %8834 = vxpose.xlu0.b32.cont [8/16] %v8754, 128
    %8835 = vxpose.xlu0.b32.cont [9/16] %v8755, 128
    %8836 = vxpose.xlu0.b32.cont [10/16] %v8756, 128
    %8837 = vxpose.xlu0.b32.cont [11/16] %v8757, 128
    %8838 = vxpose.xlu0.b32.cont [12/16] %v8758, 128
    %8839 = vxpose.xlu0.b32.cont [13/16] %v8759, 128
    %8840 = vxpose.xlu0.b32.cont [14/16] %v8760, 128
    %8841 = vxpose.xlu0.b32.cont [15/16] %v8761, 128
    %8842 = vxpose.xlu0.b32.end [16/16] %v8762, 128
    %v8843 = vpop.trf.xlu0
    %v8844 = vpop.trf.xlu0
    %v8845 = vpop.trf.xlu0
    %v8846 = vpop.trf.xlu0
    %v8847 = vpop.trf.xlu0
    %v8848 = vpop.trf.xlu0
    %v8849 = vpop.trf.xlu0
    %v8850 = vpop.trf.xlu0
    %v8851 = vpop.trf.xlu0
    %v8852 = vpop.trf.xlu0
    %v8853 = vpop.trf.xlu0
    %v8854 = vpop.trf.xlu0
    %v8855 = vpop.trf.xlu0
    %v8856 = vpop.trf.xlu0
    %v8857 = vpop.trf.xlu0
    %v8858 = vpop.trf.xlu0
    %8859 = vxpose.xlu0.b32.start [1/16] %v8763, 128
    %8860 = vxpose.xlu0.b32.cont [2/16] %v8764, 128
    %8861 = vxpose.xlu0.b32.cont [3/16] %v8765, 128
    %8862 = vxpose.xlu0.b32.cont [4/16] %v8766, 128
    %8863 = vxpose.xlu0.b32.cont [5/16] %v8767, 128
    %8864 = vxpose.xlu0.b32.cont [6/16] %v8768, 128
    %8865 = vxpose.xlu0.b32.cont [7/16] %v8769, 128
    %8866 = vxpose.xlu0.b32.cont [8/16] %v8770, 128
    %8867 = vxpose.xlu0.b32.cont [9/16] %v8771, 128
    %8868 = vxpose.xlu0.b32.cont [10/16] %v8772, 128
    %8869 = vxpose.xlu0.b32.cont [11/16] %v8773, 128
    %8870 = vxpose.xlu0.b32.cont [12/16] %v8774, 128
    %8871 = vxpose.xlu0.b32.cont [13/16] %v8775, 128
    %8872 = vxpose.xlu0.b32.cont [14/16] %v8776, 128
    %8873 = vxpose.xlu0.b32.cont [15/16] %v8777, 128
    %8874 = vxpose.xlu0.b32.end [16/16] %v8778, 128
    %v8875 = vpop.trf.xlu0
    %v8876 = vpop.trf.xlu0
    %v8877 = vpop.trf.xlu0
    %v8878 = vpop.trf.xlu0
    %v8879 = vpop.trf.xlu0
    %v8880 = vpop.trf.xlu0
    %v8881 = vpop.trf.xlu0
    %v8882 = vpop.trf.xlu0
    %v8883 = vpop.trf.xlu0
    %v8884 = vpop.trf.xlu0
    %v8885 = vpop.trf.xlu0
    %v8886 = vpop.trf.xlu0
    %v8887 = vpop.trf.xlu0
    %v8888 = vpop.trf.xlu0
    %v8889 = vpop.trf.xlu0
    %v8890 = vpop.trf.xlu0
    %8891 = vxpose.xlu0.b32.start [1/16] %v8779, 128
    %8892 = vxpose.xlu0.b32.cont [2/16] %v8780, 128
    %8893 = vxpose.xlu0.b32.cont [3/16] %v8781, 128
    %8894 = vxpose.xlu0.b32.cont [4/16] %v8782, 128
    %8895 = vxpose.xlu0.b32.cont [5/16] %v8783, 128
    %8896 = vxpose.xlu0.b32.cont [6/16] %v8784, 128
    %8897 = vxpose.xlu0.b32.cont [7/16] %v8785, 128
    %8898 = vxpose.xlu0.b32.cont [8/16] %v8786, 128
    %8899 = vxpose.xlu0.b32.cont [9/16] %v8787, 128
    %8900 = vxpose.xlu0.b32.cont [10/16] %v8788, 128
    %8901 = vxpose.xlu0.b32.cont [11/16] %v8789, 128
    %8902 = vxpose.xlu0.b32.cont [12/16] %v8790, 128
    %8903 = vxpose.xlu0.b32.cont [13/16] %v8791, 128
    %8904 = vxpose.xlu0.b32.cont [14/16] %v8792, 128
    %8905 = vxpose.xlu0.b32.cont [15/16] %v8793, 128
    %8906 = vxpose.xlu0.b32.end [16/16] %v8794, 128
    %v8907 = vpop.trf.xlu0
    %v8908 = vpop.trf.xlu0
    %v8909 = vpop.trf.xlu0
    %v8910 = vpop.trf.xlu0
    %v8911 = vpop.trf.xlu0
    %v8912 = vpop.trf.xlu0
    %v8913 = vpop.trf.xlu0
    %v8914 = vpop.trf.xlu0
    %v8915 = vpop.trf.xlu0
    %v8916 = vpop.trf.xlu0
    %v8917 = vpop.trf.xlu0
    %v8918 = vpop.trf.xlu0
    %v8919 = vpop.trf.xlu0
    %v8920 = vpop.trf.xlu0
    %v8921 = vpop.trf.xlu0
    %v8922 = vpop.trf.xlu0
    %8923 = vst [vmem:[#allocation3] sm:$0xff] %v8811
    %8924 = vst [vmem:[#allocation3 + $0x8] sm:$0xff] %v8843
    %8925 = vst [vmem:[#allocation3 + $0x10] sm:$0xff] %v8875
    %8926 = vst [vmem:[#allocation3 + $0x18] sm:$0xff] %v8907
    // Predicated region
    $region22: #{tpu_custom_call.1} parent=1 // pred_check
      _
    $region23: #{tpu_custom_call.1} parent=1 // pred_check_branch
      %8928 = sbr.rel (0) target = $region25
    $region24: #{tpu_custom_call.1} parent=1 // pred_region
      %s8930 = ssub.s32 512, 512
      %8931 = vsyncadd [#allocation4], %s8930
      %s8933 = sshll.u32 [#allocation3], 4
      %s8934 = int_to_ptr.vmem [resolvable:$true] %s8933
      %8936 = dma.vmem_to_hbm [thread:$0]  %s8934, 512, %s5, [#allocation4]
    $region25: #{tpu_custom_call.1} parent=1 // pred_fallthru
      _
    // Predicated region
    $region26: #{tpu_custom_call.1} parent=1 // pred_check
      _
    $region27: #{tpu_custom_call.1} parent=1 // pred_check_branch
      %8938 = sbr.rel (0) target = $region29
    $region28: #{tpu_custom_call.1} parent=1 // pred_region
      %8939 = dma.done [#allocation4], 512
    $region29: #{tpu_custom_call.1} parent=1 // pred_fallthru
      _
    %8940 = vsyncpa [#allocation4], 1

</llo_original>
